<compile_context>
chip_gen: v6e
topology: v6e:2x2x1
jax: 0.10.0
libtpu: 0.0.40
codegen_flags: <defaults>
</compile_context>

<pallas_src>
import numpy as np
import jax
import jax.numpy as jnp
from jax import lax
from jax.experimental import pallas as pl
from jax.experimental.pallas import tpu as pltpu


def _leaky(x, slope=0.2):
    return jnp.where(x > 0.0, x, slope * x)


def crb_fused_kernel(f1_ref, f2_ref, w1_ref, b1_ref, w2_ref, b2_ref,
                     caw1_ref, cab1_ref, caw2_ref, cab2_ref,
                     out_ref, xpad_scr, a1pad_scr):
    """Fused CRB layer for one batch element.

    f1_ref   : (1, H, W, nf1)   f32   residual / first feature map (NHWC)
    f2_ref   : (1, H, W, nf2)   f32   second feature map (NHWC)
    w1_ref   : (9*Ccat, Ccat)   bf16  conv1 weights, rows = (ky, kx, cin)
    b1_ref   : (1, Ccat)        f32
    w2_ref   : (9*Ccat, nf1)    bf16  conv2 weights
    b2_ref   : (1, nf1)         f32
    caw1_ref : (nred, nf1)      f32   CA squeeze 1x1 (row j -> out ch j)
    cab1_ref : (nred, 1)        f32
    caw2_ref : (nred, nf1)      f32   CA excite  1x1 (row j -> in  ch j)
    cab2_ref : (1, nf1)         f32
    out_ref  : (1, nf1, H*W)    f32   lane-dense, already NCHW-flattened
    xpad_scr : (H+2, W+2, Ccat) bf16  zero-padded concat([f1, f2])
    a1pad_scr: (H+2, W+2, Ccat) bf16  zero-padded conv1 activation
    """
    H, W, nf1 = f1_ref.shape[1], f1_ref.shape[2], f1_ref.shape[3]
    nf2 = f2_ref.shape[3]
    ccat = nf1 + nf2
    hw = H * W
    Hp, Wp = H + 2, W + 2

    # --- stage 0: zero ONLY the 1-pixel halo, every grid step (megacore-safe);
    # the interior of both scratches is fully overwritten below.
    zrow = jnp.zeros((1, Wp, ccat), jnp.bfloat16)
    zcol = jnp.zeros((Hp, 1, ccat), jnp.bfloat16)
    for scr in (xpad_scr, a1pad_scr):
        scr[0:1, :, :] = zrow
        scr[H + 1:H + 2, :, :] = zrow
        scr[:, 0:1, :] = zcol
        scr[:, W + 1:W + 2, :] = zcol

    # --- in-kernel concat -> bf16 padded scratch (only the MXU consumes it).
    xpad_scr[1:H + 1, 1:W + 1, 0:nf1] = f1_ref[0].astype(jnp.bfloat16)
    xpad_scr[1:H + 1, 1:W + 1, nf1:ccat] = f2_ref[0].astype(jnp.bfloat16)

    def conv3x3(src_scr, w_ref, cin, cout):
        # 3x3 "same" conv as 9 accumulating MXU dots (M=H*W, K=cin, N=cout),
        # f32 accumulation, static unrolled loop.
        acc = jnp.zeros((hw, cout), jnp.float32)
        for dy in range(3):
            for dx in range(3):
                k = dy * 3 + dx
                xk = src_scr[dy:dy + H, dx:dx + W, :].reshape(hw, cin)
                acc = acc + jnp.dot(xk, w_ref[k * cin:(k + 1) * cin, :],
                                    preferred_element_type=jnp.float32)
        return acc

    # --- conv1 (3x3) + bias + LeakyReLU(0.2); restage as bf16 padded activation.
    a1 = _leaky(conv3x3(xpad_scr, w1_ref, ccat, ccat) + b1_ref[...])
    a1pad_scr[1:H + 1, 1:W + 1, :] = a1.reshape(H, W, ccat).astype(jnp.bfloat16)

    # --- conv2 (3x3) + bias ---
    y = conv3x3(a1pad_scr, w2_ref, ccat, nf1) + b2_ref[...]         # (hw, nf1) f32

    # --- CALayer: global avg pool -> 1x1 -> LReLU -> 1x1 -> sigmoid ---
    avg = jnp.sum(y, axis=0, keepdims=True) * (1.0 / float(hw))     # (1, nf1)
    z = _leaky(jnp.sum(caw1_ref[...] * avg, axis=1, keepdims=True)
               + cab1_ref[...])                                     # (nred, 1)
    s = jax.nn.sigmoid(jnp.sum(z * caw2_ref[...], axis=0, keepdims=True)
                       + cab2_ref[...])                             # (1, nf1)

    # --- channel scale + residual; store transposed so the large H*W axis is
    # the lane dimension (dense vst) and the result is already NCHW-flattened.
    out_val = y * s + f1_ref[0].reshape(hw, nf1)                    # (hw, nf1)
    out_ref[0] = jnp.transpose(out_val, (1, 0))                     # (nf1, hw)


def crb_layer_forward(f1_nchw, f2_nchw, params):
    """CRB_Layer forward. Inputs/outputs are PyTorch NCHW; kernel is NHWC-in,
    NCHW-flattened-out (so only the inputs need a layout transpose)."""
    f1 = jnp.transpose(f1_nchw, (0, 2, 3, 1)).astype(jnp.float32)   # (N,H,W,nf1)
    f2 = jnp.transpose(f2_nchw, (0, 2, 3, 1)).astype(jnp.float32)   # (N,H,W,nf2)
    N, H, W, nf1 = f1.shape
    nf2 = f2.shape[-1]
    ccat = nf1 + nf2
    hw = H * W
    nred = params["ca_w1"].shape[0]

    # Flatten conv weights to (9*Cin, Cout) once; feed the MXU bf16 (f32 accum).
    w1 = params["w1"].reshape(9 * ccat, ccat).astype(jnp.bfloat16)
    w2 = params["w2"].reshape(9 * ccat, nf1).astype(jnp.bfloat16)

    # VMEM budget: two bf16 padded scratches + double-buffered I/O blocks +
    # (double-buffered) weights; generous headroom, capped at v7x's 64 MiB.
    scratch_b = 2 * (H + 2) * (W + 2) * ccat * 2
    io_b = 2 * 4 * (H * W * nf1 + H * W * nf2 + nf1 * hw)
    wgt_b = 2 * (2 * (w1.size + w2.size)
                 + 4 * (ccat + nf1 + 2 * nred * nf1 + nred))
    vmem_limit = int(min(64 * 1024 * 1024,
                         max(32 * 1024 * 1024, 4 * (scratch_b + io_b + wgt_b))))

    cost = pl.CostEstimate(
        flops=int(N * (2 * hw * 9 * ccat * (ccat + nf1)
                       + 6 * hw * nf1 + 4 * nred * nf1)),
        transcendentals=int(N * nf1),
        bytes_accessed=int(f1.nbytes + f2.nbytes + N * nf1 * hw * 4
                           + 2 * (w1.size + w2.size)
                           + 4 * (ccat + nf1 + 2 * nred * nf1 + nred)),
    )

    out_t = pl.pallas_call(
        crb_fused_kernel,
        out_shape=jax.ShapeDtypeStruct((N, nf1, hw), jnp.float32),
        grid_spec=pltpu.PrefetchScalarGridSpec(
            num_scalar_prefetch=0,
            grid=(N,),
            in_specs=[
                pl.BlockSpec((1, H, W, nf1), lambda b: (b, 0, 0, 0)),
                pl.BlockSpec((1, H, W, nf2), lambda b: (b, 0, 0, 0)),
                # Grid-invariant params (constant index_map -> fetched once).
                pl.BlockSpec((9 * ccat, ccat), lambda b: (0, 0)),
                pl.BlockSpec((1, ccat), lambda b: (0, 0)),
                pl.BlockSpec((9 * ccat, nf1), lambda b: (0, 0)),
                pl.BlockSpec((1, nf1), lambda b: (0, 0)),
                pl.BlockSpec((nred, nf1), lambda b: (0, 0)),
                pl.BlockSpec((nred, 1), lambda b: (0, 0)),
                pl.BlockSpec((nred, nf1), lambda b: (0, 0)),
                pl.BlockSpec((1, nf1), lambda b: (0, 0)),
            ],
            out_specs=pl.BlockSpec((1, nf1, hw), lambda b: (b, 0, 0)),
            scratch_shapes=[
                pltpu.VMEM((H + 2, W + 2, ccat), jnp.bfloat16),
                pltpu.VMEM((H + 2, W + 2, ccat), jnp.bfloat16),
            ],
        ),
        # Independent batch elements -> shard across TensorCores on v7x.
        compiler_params=pltpu.CompilerParams(
            dimension_semantics=("parallel",),
            vmem_limit_bytes=vmem_limit),
        cost_estimate=cost,
    )(f1, f2, w1, params["b1"], w2, params["b2"],
      params["ca_w1"], params["ca_b1"], params["ca_w2"], params["ca_b2"])

    # (N, nf1, H*W) is already NCHW-flattened: reshape only, no transpose.
    f1_new = out_t.reshape(N, nf1, H, W)
    return [f1_new, f2_nchw]


def init_params(key, nf1, nf2, reduction=16):
    """Deterministic synthetic parameters in kernel-native (HWIO) layout."""
    ccat = nf1 + nf2
    nred = max(nf1 // reduction, 1)
    ks = jax.random.split(key, 8)
    return {
        "w1":    jax.random.normal(ks[0], (3, 3, ccat, ccat), jnp.float32) * 0.05,
        "b1":    jax.random.normal(ks[1], (1, ccat), jnp.float32) * 0.05,
        "w2":    jax.random.normal(ks[2], (3, 3, ccat, nf1), jnp.float32) * 0.05,
        "b2":    jax.random.normal(ks[3], (1, nf1), jnp.float32) * 0.05,
        "ca_w1": jax.random.normal(ks[4], (nred, nf1), jnp.float32) * 0.05,
        "ca_b1": jax.random.normal(ks[5], (nred, 1), jnp.float32) * 0.05,
        "ca_w2": jax.random.normal(ks[6], (nred, nf1), jnp.float32) * 0.05,
        "ca_b2": jax.random.normal(ks[7], (1, nf1), jnp.float32) * 0.05,
    }


def reference_forward(f1_nchw, f2_nchw, params):
    """Pure-JAX (f32) reference mirroring the PyTorch module semantics."""
    f1 = jnp.transpose(f1_nchw, (0, 2, 3, 1)).astype(jnp.float32)
    f2 = jnp.transpose(f2_nchw, (0, 2, 3, 1)).astype(jnp.float32)
    x = jnp.concatenate([f1, f2], axis=-1)
    dn = ("NHWC", "HWIO", "NHWC")
    y = lax.conv_general_dilated(x, params["w1"], (1, 1), "SAME",
                                 dimension_numbers=dn) + params["b1"].reshape(1, 1, 1, -1)
    y = jnp.where(y > 0, y, 0.2 * y)
    y = lax.conv_general_dilated(y, params["w2"], (1, 1), "SAME",
                                 dimension_numbers=dn) + params["b2"].reshape(1, 1, 1, -1)
    avg = jnp.mean(y, axis=(1, 2))                                   # (N, nf1)
    z = avg @ params["ca_w1"].T + params["ca_b1"].reshape(1, -1)     # (N, nred)
    z = jnp.where(z > 0, z, 0.2 * z)
    s = jax.nn.sigmoid(z @ params["ca_w2"] + params["ca_b2"].reshape(1, -1))
    out = y * s[:, None, None, :] + f1
    return [jnp.transpose(out, (0, 3, 1, 2)), f2_nchw]


if __name__ == "__main__":
    key = jax.random.PRNGKey(0)
    k1, k2, kp = jax.random.split(key, 3)

    # H = W = 16 so each conv dot has M = H*W = 256 (per review: amortize grid
    # overhead and keep the MXU M dimension >= 256).
    N, nf1, nf2, H, W = 2, 16, 16, 16, 16
    f1 = jax.random.normal(k1, (N, nf1, H, W), jnp.float32)
    f2 = jax.random.normal(k2, (N, nf2, H, W), jnp.float32)
    params = init_params(kp, nf1, nf2)

    out = crb_layer_forward(f1, f2, params)
    out = jax.block_until_ready(out)

    ref = reference_forward(f1, f2, params)
    # bf16 MXU operands (f32 accumulation) vs. the f32 reference -> looser tol.
    np.testing.assert_allclose(np.asarray(out[0]), np.asarray(ref[0]),
                               rtol=2e-2, atol=2e-2)
    np.testing.assert_allclose(np.asarray(out[1]), np.asarray(f2), rtol=0, atol=0)

    print("KERNEL_OK")
</pallas_src>

<mosaic_0001>
module attributes {stable_mosaic.version = 11 : i64} {
  func.func @crb_fused_kernel(%arg0: i32, %arg1: memref<1x16x16x16xf32, #tpu.memory_space<vmem>>, %arg2: memref<1x16x16x16xf32, #tpu.memory_space<vmem>>, %arg3: memref<288x32xbf16, #tpu.memory_space<vmem>>, %arg4: memref<1x32xf32, #tpu.memory_space<vmem>>, %arg5: memref<288x16xbf16, #tpu.memory_space<vmem>>, %arg6: memref<1x16xf32, #tpu.memory_space<vmem>>, %arg7: memref<1x16xf32, #tpu.memory_space<vmem>>, %arg8: memref<1x1xf32, #tpu.memory_space<vmem>>, %arg9: memref<1x16xf32, #tpu.memory_space<vmem>>, %arg10: memref<1x16xf32, #tpu.memory_space<vmem>>, %arg11: memref<1x16x256xf32, #tpu.memory_space<vmem>>, %arg12: memref<18x18x32xbf16, #tpu.memory_space<vmem>>, %arg13: memref<18x18x32xbf16, #tpu.memory_space<vmem>>) attributes {dimension_semantics = [#tpu.dimension_semantics<parallel>], iteration_bounds = array<i64: 2>, scalar_prefetch = 0 : i64, scratch_operands = 2 : i64, tpu.core_type = #tpu.core_type<tc>, window_params = [{transform_indices = @transform_0, window_bounds = array<i64: 1, 16, 16, 16>}, {transform_indices = @transform_1, window_bounds = array<i64: 1, 16, 16, 16>}, {pipeline_mode = #tpu.pipeline_mode<synchronous>, transform_indices = @transform_2, window_bounds = array<i64: 288, 32>}, {pipeline_mode = #tpu.pipeline_mode<synchronous>, transform_indices = @transform_3, window_bounds = array<i64: 1, 32>}, {pipeline_mode = #tpu.pipeline_mode<synchronous>, transform_indices = @transform_4, window_bounds = array<i64: 288, 16>}, {pipeline_mode = #tpu.pipeline_mode<synchronous>, transform_indices = @transform_5, window_bounds = array<i64: 1, 16>}, {pipeline_mode = #tpu.pipeline_mode<synchronous>, transform_indices = @transform_6, window_bounds = array<i64: 1, 16>}, {pipeline_mode = #tpu.pipeline_mode<synchronous>, transform_indices = @transform_7, window_bounds = array<i64: 1, 1>}, {pipeline_mode = #tpu.pipeline_mode<synchronous>, transform_indices = @transform_8, window_bounds = array<i64: 1, 16>}, {pipeline_mode = #tpu.pipeline_mode<synchronous>, transform_indices = @transform_9, window_bounds = array<i64: 1, 16>}, {transform_indices = @transform_10, window_bounds = array<i64: 1, 16, 256>}]} {
    %cst = arith.constant 0.000000e+00 : bf16
    %0 = vector.broadcast %cst : bf16 to vector<1x18x32xbf16>
    %cst_0 = arith.constant 0.000000e+00 : bf16
    %1 = vector.broadcast %cst_0 : bf16 to vector<18x1x32xbf16>
    %c0 = arith.constant 0 : index
    %c0_1 = arith.constant 0 : index
    %c0_2 = arith.constant 0 : index
    %2 = vector.load %arg12[%c0, %c0_1, %c0_2] : memref<18x18x32xbf16, #tpu.memory_space<vmem>>, vector<1x18x32xbf16>
    tpu.vector_store %arg12[%c0, %c0_1, %c0_2], %0 {strides = array<i32>} : memref<18x18x32xbf16, #tpu.memory_space<vmem>>, vector<1x18x32xbf16>,
    %c17 = arith.constant 17 : index
    %c0_3 = arith.constant 0 : index
    %c0_4 = arith.constant 0 : index
    %3 = vector.load %arg12[%c17, %c0_3, %c0_4] : memref<18x18x32xbf16, #tpu.memory_space<vmem>>, vector<1x18x32xbf16>
    tpu.vector_store %arg12[%c17, %c0_3, %c0_4], %0 {strides = array<i32>} : memref<18x18x32xbf16, #tpu.memory_space<vmem>>, vector<1x18x32xbf16>,
    %c0_5 = arith.constant 0 : index
    %c0_6 = arith.constant 0 : index
    %c0_7 = arith.constant 0 : index
    %4 = vector.load %arg12[%c0_5, %c0_6, %c0_7] : memref<18x18x32xbf16, #tpu.memory_space<vmem>>, vector<18x1x32xbf16>
    tpu.vector_store %arg12[%c0_5, %c0_6, %c0_7], %1 {strides = array<i32>} : memref<18x18x32xbf16, #tpu.memory_space<vmem>>, vector<18x1x32xbf16>,
    %c0_8 = arith.constant 0 : index
    %c17_9 = arith.constant 17 : index
    %c0_10 = arith.constant 0 : index
    %5 = vector.load %arg12[%c0_8, %c17_9, %c0_10] : memref<18x18x32xbf16, #tpu.memory_space<vmem>>, vector<18x1x32xbf16>
    tpu.vector_store %arg12[%c0_8, %c17_9, %c0_10], %1 {strides = array<i32>} : memref<18x18x32xbf16, #tpu.memory_space<vmem>>, vector<18x1x32xbf16>,
    %c0_11 = arith.constant 0 : index
    %c0_12 = arith.constant 0 : index
    %c0_13 = arith.constant 0 : index
    %6 = vector.load %arg13[%c0_11, %c0_12, %c0_13] : memref<18x18x32xbf16, #tpu.memory_space<vmem>>, vector<1x18x32xbf16>
    tpu.vector_store %arg13[%c0_11, %c0_12, %c0_13], %0 {strides = array<i32>} : memref<18x18x32xbf16, #tpu.memory_space<vmem>>, vector<1x18x32xbf16>,
    %c17_14 = arith.constant 17 : index
    %c0_15 = arith.constant 0 : index
    %c0_16 = arith.constant 0 : index
    %7 = vector.load %arg13[%c17_14, %c0_15, %c0_16] : memref<18x18x32xbf16, #tpu.memory_space<vmem>>, vector<1x18x32xbf16>
    tpu.vector_store %arg13[%c17_14, %c0_15, %c0_16], %0 {strides = array<i32>} : memref<18x18x32xbf16, #tpu.memory_space<vmem>>, vector<1x18x32xbf16>,
    %c0_17 = arith.constant 0 : index
    %c0_18 = arith.constant 0 : index
    %c0_19 = arith.constant 0 : index
    %8 = vector.load %arg13[%c0_17, %c0_18, %c0_19] : memref<18x18x32xbf16, #tpu.memory_space<vmem>>, vector<18x1x32xbf16>
    tpu.vector_store %arg13[%c0_17, %c0_18, %c0_19], %1 {strides = array<i32>} : memref<18x18x32xbf16, #tpu.memory_space<vmem>>, vector<18x1x32xbf16>,
    %c0_20 = arith.constant 0 : index
    %c17_21 = arith.constant 17 : index
    %c0_22 = arith.constant 0 : index
    %9 = vector.load %arg13[%c0_20, %c17_21, %c0_22] : memref<18x18x32xbf16, #tpu.memory_space<vmem>>, vector<18x1x32xbf16>
    tpu.vector_store %arg13[%c0_20, %c17_21, %c0_22], %1 {strides = array<i32>} : memref<18x18x32xbf16, #tpu.memory_space<vmem>>, vector<18x1x32xbf16>,
    %c0_23 = arith.constant 0 : index
    %c0_24 = arith.constant 0 : index
    %c0_25 = arith.constant 0 : index
    %c0_26 = arith.constant 0 : index
    %10 = vector.load %arg1[%c0_23, %c0_24, %c0_25, %c0_26] : memref<1x16x16x16xf32, #tpu.memory_space<vmem>>, vector<1x16x16x16xf32>
    %11 = vector.shape_cast %10 : vector<1x16x16x16xf32> to vector<16x16x16xf32>
    %12 = arith.truncf %11 : vector<16x16x16xf32> to vector<16x16x16xbf16>
    %c1 = arith.constant 1 : index
    %c1_27 = arith.constant 1 : index
    %c0_28 = arith.constant 0 : index
    %13 = vector.load %arg12[%c1, %c1_27, %c0_28] : memref<18x18x32xbf16, #tpu.memory_space<vmem>>, vector<16x16x16xbf16>
    tpu.vector_store %arg12[%c1, %c1_27, %c0_28], %12 {strides = array<i32>} : memref<18x18x32xbf16, #tpu.memory_space<vmem>>, vector<16x16x16xbf16>,
    %c0_29 = arith.constant 0 : index
    %c0_30 = arith.constant 0 : index
    %c0_31 = arith.constant 0 : index
    %c0_32 = arith.constant 0 : index
    %14 = vector.load %arg2[%c0_29, %c0_30, %c0_31, %c0_32] : memref<1x16x16x16xf32, #tpu.memory_space<vmem>>, vector<1x16x16x16xf32>
    %15 = vector.shape_cast %14 : vector<1x16x16x16xf32> to vector<16x16x16xf32>
    %16 = arith.truncf %15 : vector<16x16x16xf32> to vector<16x16x16xbf16>
    %c1_33 = arith.constant 1 : index
    %c1_34 = arith.constant 1 : index
    %c16 = arith.constant 16 : index
    %17 = vector.load %arg12[%c1_33, %c1_34, %c16] : memref<18x18x32xbf16, #tpu.memory_space<vmem>>, vector<16x16x16xbf16>
    tpu.vector_store %arg12[%c1_33, %c1_34, %c16], %16 {strides = array<i32>} : memref<18x18x32xbf16, #tpu.memory_space<vmem>>, vector<16x16x16xbf16>,
    %cst_35 = arith.constant 0.000000e+00 : f32
    %18 = vector.broadcast %cst_35 : f32 to vector<256x32xf32>
    %c0_36 = arith.constant 0 : index
    %c0_37 = arith.constant 0 : index
    %c0_38 = arith.constant 0 : index
    %19 = vector.load %arg12[%c0_36, %c0_37, %c0_38] : memref<18x18x32xbf16, #tpu.memory_space<vmem>>, vector<16x16x32xbf16>
    %20 = vector.shape_cast %19 : vector<16x16x32xbf16> to vector<256x32xbf16>
    %c0_39 = arith.constant 0 : index
    %c0_40 = arith.constant 0 : index
    %21 = vector.load %arg3[%c0_39, %c0_40] : memref<288x32xbf16, #tpu.memory_space<vmem>>, vector<32x32xbf16>
    %cst_41 = arith.constant dense<0.000000e+00> : vector<256x32xf32>
    %22 = tpu.matmul %20, %21, %cst_41 {dimension_numbers = #tpu.dot_dimension_numbers<[1], [0], [0], [1], [0, 0, 1, 1], [], []>} : vector<256x32xbf16>, vector<32x32xbf16>, vector<256x32xf32> -> vector<256x32xf32>
    %23 = arith.addf %18, %22 : vector<256x32xf32>
    %c0_42 = arith.constant 0 : index
    %c1_43 = arith.constant 1 : index
    %c0_44 = arith.constant 0 : index
    %24 = vector.load %arg12[%c0_42, %c1_43, %c0_44] : memref<18x18x32xbf16, #tpu.memory_space<vmem>>, vector<16x16x32xbf16>
    %25 = vector.shape_cast %24 : vector<16x16x32xbf16> to vector<256x32xbf16>
    %c32 = arith.constant 32 : index
    %c0_45 = arith.constant 0 : index
    %26 = vector.load %arg3[%c32, %c0_45] : memref<288x32xbf16, #tpu.memory_space<vmem>>, vector<32x32xbf16>
    %cst_46 = arith.constant dense<0.000000e+00> : vector<256x32xf32>
    %27 = tpu.matmul %25, %26, %cst_46 {dimension_numbers = #tpu.dot_dimension_numbers<[1], [0], [0], [1], [0, 0, 1, 1], [], []>} : vector<256x32xbf16>, vector<32x32xbf16>, vector<256x32xf32> -> vector<256x32xf32>
    %28 = arith.addf %23, %27 : vector<256x32xf32>
    %c0_47 = arith.constant 0 : index
    %c2 = arith.constant 2 : index
    %c0_48 = arith.constant 0 : index
    %29 = vector.load %arg12[%c0_47, %c2, %c0_48] : memref<18x18x32xbf16, #tpu.memory_space<vmem>>, vector<16x16x32xbf16>
    %30 = vector.shape_cast %29 : vector<16x16x32xbf16> to vector<256x32xbf16>
    %c64 = arith.constant 64 : index
    %c0_49 = arith.constant 0 : index
    %31 = vector.load %arg3[%c64, %c0_49] : memref<288x32xbf16, #tpu.memory_space<vmem>>, vector<32x32xbf16>
    %cst_50 = arith.constant dense<0.000000e+00> : vector<256x32xf32>
    %32 = tpu.matmul %30, %31, %cst_50 {dimension_numbers = #tpu.dot_dimension_numbers<[1], [0], [0], [1], [0, 0, 1, 1], [], []>} : vector<256x32xbf16>, vector<32x32xbf16>, vector<256x32xf32> -> vector<256x32xf32>
    %33 = arith.addf %28, %32 : vector<256x32xf32>
    %c1_51 = arith.constant 1 : index
    %c0_52 = arith.constant 0 : index
    %c0_53 = arith.constant 0 : index
    %34 = vector.load %arg12[%c1_51, %c0_52, %c0_53] : memref<18x18x32xbf16, #tpu.memory_space<vmem>>, vector<16x16x32xbf16>
    %35 = vector.shape_cast %34 : vector<16x16x32xbf16> to vector<256x32xbf16>
    %c96 = arith.constant 96 : index
    %c0_54 = arith.constant 0 : index
    %36 = vector.load %arg3[%c96, %c0_54] : memref<288x32xbf16, #tpu.memory_space<vmem>>, vector<32x32xbf16>
    %cst_55 = arith.constant dense<0.000000e+00> : vector<256x32xf32>
    %37 = tpu.matmul %35, %36, %cst_55 {dimension_numbers = #tpu.dot_dimension_numbers<[1], [0], [0], [1], [0, 0, 1, 1], [], []>} : vector<256x32xbf16>, vector<32x32xbf16>, vector<256x32xf32> -> vector<256x32xf32>
    %38 = arith.addf %33, %37 : vector<256x32xf32>
    %c1_56 = arith.constant 1 : index
    %c1_57 = arith.constant 1 : index
    %c0_58 = arith.constant 0 : index
    %39 = vector.load %arg12[%c1_56, %c1_57, %c0_58] : memref<18x18x32xbf16, #tpu.memory_space<vmem>>, vector<16x16x32xbf16>
    %40 = vector.shape_cast %39 : vector<16x16x32xbf16> to vector<256x32xbf16>
    %c128 = arith.constant 128 : index
    %c0_59 = arith.constant 0 : index
    %41 = vector.load %arg3[%c128, %c0_59] : memref<288x32xbf16, #tpu.memory_space<vmem>>, vector<32x32xbf16>
    %cst_60 = arith.constant dense<0.000000e+00> : vector<256x32xf32>
    %42 = tpu.matmul %40, %41, %cst_60 {dimension_numbers = #tpu.dot_dimension_numbers<[1], [0], [0], [1], [0, 0, 1, 1], [], []>} : vector<256x32xbf16>, vector<32x32xbf16>, vector<256x32xf32> -> vector<256x32xf32>
    %43 = arith.addf %38, %42 : vector<256x32xf32>
    %c1_61 = arith.constant 1 : index
    %c2_62 = arith.constant 2 : index
    %c0_63 = arith.constant 0 : index
    %44 = vector.load %arg12[%c1_61, %c2_62, %c0_63] : memref<18x18x32xbf16, #tpu.memory_space<vmem>>, vector<16x16x32xbf16>
    %45 = vector.shape_cast %44 : vector<16x16x32xbf16> to vector<256x32xbf16>
    %c160 = arith.constant 160 : index
    %c0_64 = arith.constant 0 : index
    %46 = vector.load %arg3[%c160, %c0_64] : memref<288x32xbf16, #tpu.memory_space<vmem>>, vector<32x32xbf16>
    %cst_65 = arith.constant dense<0.000000e+00> : vector<256x32xf32>
    %47 = tpu.matmul %45, %46, %cst_65 {dimension_numbers = #tpu.dot_dimension_numbers<[1], [0], [0], [1], [0, 0, 1, 1], [], []>} : vector<256x32xbf16>, vector<32x32xbf16>, vector<256x32xf32> -> vector<256x32xf32>
    %48 = arith.addf %43, %47 : vector<256x32xf32>
    %c2_66 = arith.constant 2 : index
    %c0_67 = arith.constant 0 : index
    %c0_68 = arith.constant 0 : index
    %49 = vector.load %arg12[%c2_66, %c0_67, %c0_68] : memref<18x18x32xbf16, #tpu.memory_space<vmem>>, vector<16x16x32xbf16>
    %50 = vector.shape_cast %49 : vector<16x16x32xbf16> to vector<256x32xbf16>
    %c192 = arith.constant 192 : index
    %c0_69 = arith.constant 0 : index
    %51 = vector.load %arg3[%c192, %c0_69] : memref<288x32xbf16, #tpu.memory_space<vmem>>, vector<32x32xbf16>
    %cst_70 = arith.constant dense<0.000000e+00> : vector<256x32xf32>
    %52 = tpu.matmul %50, %51, %cst_70 {dimension_numbers = #tpu.dot_dimension_numbers<[1], [0], [0], [1], [0, 0, 1, 1], [], []>} : vector<256x32xbf16>, vector<32x32xbf16>, vector<256x32xf32> -> vector<256x32xf32>
    %53 = arith.addf %48, %52 : vector<256x32xf32>
    %c2_71 = arith.constant 2 : index
    %c1_72 = arith.constant 1 : index
    %c0_73 = arith.constant 0 : index
    %54 = vector.load %arg12[%c2_71, %c1_72, %c0_73] : memref<18x18x32xbf16, #tpu.memory_space<vmem>>, vector<16x16x32xbf16>
    %55 = vector.shape_cast %54 : vector<16x16x32xbf16> to vector<256x32xbf16>
    %c224 = arith.constant 224 : index
    %c0_74 = arith.constant 0 : index
    %56 = vector.load %arg3[%c224, %c0_74] : memref<288x32xbf16, #tpu.memory_space<vmem>>, vector<32x32xbf16>
    %cst_75 = arith.constant dense<0.000000e+00> : vector<256x32xf32>
    %57 = tpu.matmul %55, %56, %cst_75 {dimension_numbers = #tpu.dot_dimension_numbers<[1], [0], [0], [1], [0, 0, 1, 1], [], []>} : vector<256x32xbf16>, vector<32x32xbf16>, vector<256x32xf32> -> vector<256x32xf32>
    %58 = arith.addf %53, %57 : vector<256x32xf32>
    %c2_76 = arith.constant 2 : index
    %c2_77 = arith.constant 2 : index
    %c0_78 = arith.constant 0 : index
    %59 = vector.load %arg12[%c2_76, %c2_77, %c0_78] : memref<18x18x32xbf16, #tpu.memory_space<vmem>>, vector<16x16x32xbf16>
    %60 = vector.shape_cast %59 : vector<16x16x32xbf16> to vector<256x32xbf16>
    %c256 = arith.constant 256 : index
    %c0_79 = arith.constant 0 : index
    %61 = vector.load %arg3[%c256, %c0_79] : memref<288x32xbf16, #tpu.memory_space<vmem>>, vector<32x32xbf16>
    %cst_80 = arith.constant dense<0.000000e+00> : vector<256x32xf32>
    %62 = tpu.matmul %60, %61, %cst_80 {dimension_numbers = #tpu.dot_dimension_numbers<[1], [0], [0], [1], [0, 0, 1, 1], [], []>} : vector<256x32xbf16>, vector<32x32xbf16>, vector<256x32xf32> -> vector<256x32xf32>
    %63 = arith.addf %58, %62 : vector<256x32xf32>
    %c0_81 = arith.constant 0 : index
    %c0_82 = arith.constant 0 : index
    %64 = vector.load %arg4[%c0_81, %c0_82] : memref<1x32xf32, #tpu.memory_space<vmem>>, vector<1x32xf32>
    %65 = vector.broadcast %64 : vector<1x32xf32> to vector<256x32xf32>
    %66 = arith.addf %63, %65 : vector<256x32xf32>
    %cst_83 = arith.constant 0.000000e+00 : f32
    %67 = vector.broadcast %cst_83 : f32 to vector<256x32xf32>
    %68 = arith.cmpf ogt, %66, %67 : vector<256x32xf32>
    %cst_84 = arith.constant 2.000000e-01 : f32
    %69 = vector.broadcast %cst_84 : f32 to vector<256x32xf32>
    %70 = arith.mulf %69, %66 : vector<256x32xf32>
    %71 = arith.select %68, %66, %70 : vector<256x32xi1>, vector<256x32xf32>
    %72 = vector.shape_cast %71 : vector<256x32xf32> to vector<16x16x32xf32>
    %73 = arith.truncf %72 : vector<16x16x32xf32> to vector<16x16x32xbf16>
    %c1_85 = arith.constant 1 : index
    %c1_86 = arith.constant 1 : index
    %c0_87 = arith.constant 0 : index
    %74 = vector.load %arg13[%c1_85, %c1_86, %c0_87] : memref<18x18x32xbf16, #tpu.memory_space<vmem>>, vector<16x16x32xbf16>
    tpu.vector_store %arg13[%c1_85, %c1_86, %c0_87], %73 {strides = array<i32>} : memref<18x18x32xbf16, #tpu.memory_space<vmem>>, vector<16x16x32xbf16>,
    %cst_88 = arith.constant 0.000000e+00 : f32
    %75 = vector.broadcast %cst_88 : f32 to vector<256x16xf32>
    %c0_89 = arith.constant 0 : index
    %c0_90 = arith.constant 0 : index
    %c0_91 = arith.constant 0 : index
    %76 = vector.load %arg13[%c0_89, %c0_90, %c0_91] : memref<18x18x32xbf16, #tpu.memory_space<vmem>>, vector<16x16x32xbf16>
    %77 = vector.shape_cast %76 : vector<16x16x32xbf16> to vector<256x32xbf16>
    %c0_92 = arith.constant 0 : index
    %c0_93 = arith.constant 0 : index
    %78 = vector.load %arg5[%c0_92, %c0_93] : memref<288x16xbf16, #tpu.memory_space<vmem>>, vector<32x16xbf16>
    %cst_94 = arith.constant dense<0.000000e+00> : vector<256x16xf32>
    %79 = tpu.matmul %77, %78, %cst_94 {dimension_numbers = #tpu.dot_dimension_numbers<[1], [0], [0], [1], [0, 0, 1, 1], [], []>} : vector<256x32xbf16>, vector<32x16xbf16>, vector<256x16xf32> -> vector<256x16xf32>
    %80 = arith.addf %75, %79 : vector<256x16xf32>
    %c0_95 = arith.constant 0 : index
    %c1_96 = arith.constant 1 : index
    %c0_97 = arith.constant 0 : index
    %81 = vector.load %arg13[%c0_95, %c1_96, %c0_97] : memref<18x18x32xbf16, #tpu.memory_space<vmem>>, vector<16x16x32xbf16>
    %82 = vector.shape_cast %81 : vector<16x16x32xbf16> to vector<256x32xbf16>
    %c32_98 = arith.constant 32 : index
    %c0_99 = arith.constant 0 : index
    %83 = vector.load %arg5[%c32_98, %c0_99] : memref<288x16xbf16, #tpu.memory_space<vmem>>, vector<32x16xbf16>
    %cst_100 = arith.constant dense<0.000000e+00> : vector<256x16xf32>
    %84 = tpu.matmul %82, %83, %cst_100 {dimension_numbers = #tpu.dot_dimension_numbers<[1], [0], [0], [1], [0, 0, 1, 1], [], []>} : vector<256x32xbf16>, vector<32x16xbf16>, vector<256x16xf32> -> vector<256x16xf32>
    %85 = arith.addf %80, %84 : vector<256x16xf32>
    %c0_101 = arith.constant 0 : index
    %c2_102 = arith.constant 2 : index
    %c0_103 = arith.constant 0 : index
    %86 = vector.load %arg13[%c0_101, %c2_102, %c0_103] : memref<18x18x32xbf16, #tpu.memory_space<vmem>>, vector<16x16x32xbf16>
    %87 = vector.shape_cast %86 : vector<16x16x32xbf16> to vector<256x32xbf16>
    %c64_104 = arith.constant 64 : index
    %c0_105 = arith.constant 0 : index
    %88 = vector.load %arg5[%c64_104, %c0_105] : memref<288x16xbf16, #tpu.memory_space<vmem>>, vector<32x16xbf16>
    %cst_106 = arith.constant dense<0.000000e+00> : vector<256x16xf32>
    %89 = tpu.matmul %87, %88, %cst_106 {dimension_numbers = #tpu.dot_dimension_numbers<[1], [0], [0], [1], [0, 0, 1, 1], [], []>} : vector<256x32xbf16>, vector<32x16xbf16>, vector<256x16xf32> -> vector<256x16xf32>
    %90 = arith.addf %85, %89 : vector<256x16xf32>
    %c1_107 = arith.constant 1 : index
    %c0_108 = arith.constant 0 : index
    %c0_109 = arith.constant 0 : index
    %91 = vector.load %arg13[%c1_107, %c0_108, %c0_109] : memref<18x18x32xbf16, #tpu.memory_space<vmem>>, vector<16x16x32xbf16>
    %92 = vector.shape_cast %91 : vector<16x16x32xbf16> to vector<256x32xbf16>
    %c96_110 = arith.constant 96 : index
    %c0_111 = arith.constant 0 : index
    %93 = vector.load %arg5[%c96_110, %c0_111] : memref<288x16xbf16, #tpu.memory_space<vmem>>, vector<32x16xbf16>
    %cst_112 = arith.constant dense<0.000000e+00> : vector<256x16xf32>
    %94 = tpu.matmul %92, %93, %cst_112 {dimension_numbers = #tpu.dot_dimension_numbers<[1], [0], [0], [1], [0, 0, 1, 1], [], []>} : vector<256x32xbf16>, vector<32x16xbf16>, vector<256x16xf32> -> vector<256x16xf32>
    %95 = arith.addf %90, %94 : vector<256x16xf32>
    %c1_113 = arith.constant 1 : index
    %c1_114 = arith.constant 1 : index
    %c0_115 = arith.constant 0 : index
    %96 = vector.load %arg13[%c1_113, %c1_114, %c0_115] : memref<18x18x32xbf16, #tpu.memory_space<vmem>>, vector<16x16x32xbf16>
    %97 = vector.shape_cast %96 : vector<16x16x32xbf16> to vector<256x32xbf16>
    %c128_116 = arith.constant 128 : index
    %c0_117 = arith.constant 0 : index
    %98 = vector.load %arg5[%c128_116, %c0_117] : memref<288x16xbf16, #tpu.memory_space<vmem>>, vector<32x16xbf16>
    %cst_118 = arith.constant dense<0.000000e+00> : vector<256x16xf32>
    %99 = tpu.matmul %97, %98, %cst_118 {dimension_numbers = #tpu.dot_dimension_numbers<[1], [0], [0], [1], [0, 0, 1, 1], [], []>} : vector<256x32xbf16>, vector<32x16xbf16>, vector<256x16xf32> -> vector<256x16xf32>
    %100 = arith.addf %95, %99 : vector<256x16xf32>
    %c1_119 = arith.constant 1 : index
    %c2_120 = arith.constant 2 : index
    %c0_121 = arith.constant 0 : index
    %101 = vector.load %arg13[%c1_119, %c2_120, %c0_121] : memref<18x18x32xbf16, #tpu.memory_space<vmem>>, vector<16x16x32xbf16>
    %102 = vector.shape_cast %101 : vector<16x16x32xbf16> to vector<256x32xbf16>
    %c160_122 = arith.constant 160 : index
    %c0_123 = arith.constant 0 : index
    %103 = vector.load %arg5[%c160_122, %c0_123] : memref<288x16xbf16, #tpu.memory_space<vmem>>, vector<32x16xbf16>
    %cst_124 = arith.constant dense<0.000000e+00> : vector<256x16xf32>
    %104 = tpu.matmul %102, %103, %cst_124 {dimension_numbers = #tpu.dot_dimension_numbers<[1], [0], [0], [1], [0, 0, 1, 1], [], []>} : vector<256x32xbf16>, vector<32x16xbf16>, vector<256x16xf32> -> vector<256x16xf32>
    %105 = arith.addf %100, %104 : vector<256x16xf32>
    %c2_125 = arith.constant 2 : index
    %c0_126 = arith.constant 0 : index
    %c0_127 = arith.constant 0 : index
    %106 = vector.load %arg13[%c2_125, %c0_126, %c0_127] : memref<18x18x32xbf16, #tpu.memory_space<vmem>>, vector<16x16x32xbf16>
    %107 = vector.shape_cast %106 : vector<16x16x32xbf16> to vector<256x32xbf16>
    %c192_128 = arith.constant 192 : index
    %c0_129 = arith.constant 0 : index
    %108 = vector.load %arg5[%c192_128, %c0_129] : memref<288x16xbf16, #tpu.memory_space<vmem>>, vector<32x16xbf16>
    %cst_130 = arith.constant dense<0.000000e+00> : vector<256x16xf32>
    %109 = tpu.matmul %107, %108, %cst_130 {dimension_numbers = #tpu.dot_dimension_numbers<[1], [0], [0], [1], [0, 0, 1, 1], [], []>} : vector<256x32xbf16>, vector<32x16xbf16>, vector<256x16xf32> -> vector<256x16xf32>
    %110 = arith.addf %105, %109 : vector<256x16xf32>
    %c2_131 = arith.constant 2 : index
    %c1_132 = arith.constant 1 : index
    %c0_133 = arith.constant 0 : index
    %111 = vector.load %arg13[%c2_131, %c1_132, %c0_133] : memref<18x18x32xbf16, #tpu.memory_space<vmem>>, vector<16x16x32xbf16>
    %112 = vector.shape_cast %111 : vector<16x16x32xbf16> to vector<256x32xbf16>
    %c224_134 = arith.constant 224 : index
    %c0_135 = arith.constant 0 : index
    %113 = vector.load %arg5[%c224_134, %c0_135] : memref<288x16xbf16, #tpu.memory_space<vmem>>, vector<32x16xbf16>
    %cst_136 = arith.constant dense<0.000000e+00> : vector<256x16xf32>
    %114 = tpu.matmul %112, %113, %cst_136 {dimension_numbers = #tpu.dot_dimension_numbers<[1], [0], [0], [1], [0, 0, 1, 1], [], []>} : vector<256x32xbf16>, vector<32x16xbf16>, vector<256x16xf32> -> vector<256x16xf32>
    %115 = arith.addf %110, %114 : vector<256x16xf32>
    %c2_137 = arith.constant 2 : index
    %c2_138 = arith.constant 2 : index
    %c0_139 = arith.constant 0 : index
    %116 = vector.load %arg13[%c2_137, %c2_138, %c0_139] : memref<18x18x32xbf16, #tpu.memory_space<vmem>>, vector<16x16x32xbf16>
    %117 = vector.shape_cast %116 : vector<16x16x32xbf16> to vector<256x32xbf16>
    %c256_140 = arith.constant 256 : index
    %c0_141 = arith.constant 0 : index
    %118 = vector.load %arg5[%c256_140, %c0_141] : memref<288x16xbf16, #tpu.memory_space<vmem>>, vector<32x16xbf16>
    %cst_142 = arith.constant dense<0.000000e+00> : vector<256x16xf32>
    %119 = tpu.matmul %117, %118, %cst_142 {dimension_numbers = #tpu.dot_dimension_numbers<[1], [0], [0], [1], [0, 0, 1, 1], [], []>} : vector<256x32xbf16>, vector<32x16xbf16>, vector<256x16xf32> -> vector<256x16xf32>
    %120 = arith.addf %115, %119 : vector<256x16xf32>
    %c0_143 = arith.constant 0 : index
    %c0_144 = arith.constant 0 : index
    %121 = vector.load %arg6[%c0_143, %c0_144] : memref<1x16xf32, #tpu.memory_space<vmem>>, vector<1x16xf32>
    %122 = vector.broadcast %121 : vector<1x16xf32> to vector<256x16xf32>
    %123 = arith.addf %120, %122 : vector<256x16xf32>
    %cst_145 = arith.constant dense<0.000000e+00> : vector<16xf32>
    %124 = vector.multi_reduction <add>, %123, %cst_145 [0] : vector<256x16xf32> to vector<16xf32>
    %125 = vector.shape_cast %124 : vector<16xf32> to vector<1x16xf32>
    %cst_146 = arith.constant 3.906250e-03 : f32
    %126 = vector.broadcast %cst_146 : f32 to vector<1x16xf32>
    %127 = arith.mulf %125, %126 : vector<1x16xf32>
    %c0_147 = arith.constant 0 : index
    %c0_148 = arith.constant 0 : index
    %128 = vector.load %arg7[%c0_147, %c0_148] : memref<1x16xf32, #tpu.memory_space<vmem>>, vector<1x16xf32>
    %129 = arith.mulf %128, %127 : vector<1x16xf32>
    %cst_149 = arith.constant dense<0.000000e+00> : vector<1xf32>
    %130 = vector.multi_reduction <add>, %129, %cst_149 [1] : vector<1x16xf32> to vector<1xf32>
    %131 = vector.shape_cast %130 : vector<1xf32> to vector<1x1xf32>
    %c0_150 = arith.constant 0 : index
    %c0_151 = arith.constant 0 : index
    %132 = vector.load %arg8[%c0_150, %c0_151] : memref<1x1xf32, #tpu.memory_space<vmem>>, vector<1x1xf32>
    %133 = arith.addf %131, %132 : vector<1x1xf32>
    %cst_152 = arith.constant 0.000000e+00 : f32
    %134 = vector.broadcast %cst_152 : f32 to vector<1x1xf32>
    %135 = arith.cmpf ogt, %133, %134 : vector<1x1xf32>
    %cst_153 = arith.constant 2.000000e-01 : f32
    %136 = vector.broadcast %cst_153 : f32 to vector<1x1xf32>
    %137 = arith.mulf %136, %133 : vector<1x1xf32>
    %138 = arith.select %135, %133, %137 : vector<1x1xi1>, vector<1x1xf32>
    %c0_154 = arith.constant 0 : index
    %c0_155 = arith.constant 0 : index
    %139 = vector.load %arg9[%c0_154, %c0_155] : memref<1x16xf32, #tpu.memory_space<vmem>>, vector<1x16xf32>
    %140 = vector.broadcast %138 : vector<1x1xf32> to vector<1x16xf32>
    %141 = arith.mulf %140, %139 : vector<1x16xf32>
    %cst_156 = arith.constant dense<0.000000e+00> : vector<16xf32>
    %142 = vector.multi_reduction <add>, %141, %cst_156 [0] : vector<1x16xf32> to vector<16xf32>
    %143 = vector.shape_cast %142 : vector<16xf32> to vector<1x16xf32>
    %c0_157 = arith.constant 0 : index
    %c0_158 = arith.constant 0 : index
    %144 = vector.load %arg10[%c0_157, %c0_158] : memref<1x16xf32, #tpu.memory_space<vmem>>, vector<1x16xf32>
    %145 = arith.addf %143, %144 : vector<1x16xf32>
    %146 = arith.negf %145 : vector<1x16xf32>
    %147 = math.exp %146 : vector<1x16xf32>
    %cst_159 = arith.constant 1.000000e+00 : f32
    %148 = vector.broadcast %cst_159 : f32 to vector<1x16xf32>
    %149 = arith.addf %148, %147 : vector<1x16xf32>
    %150 = arith.divf %148, %149 : vector<1x16xf32>
    %151 = vector.broadcast %150 : vector<1x16xf32> to vector<256x16xf32>
    %152 = arith.mulf %123, %151 : vector<256x16xf32>
    %c0_160 = arith.constant 0 : index
    %c0_161 = arith.constant 0 : index
    %c0_162 = arith.constant 0 : index
    %c0_163 = arith.constant 0 : index
    %153 = vector.load %arg1[%c0_160, %c0_161, %c0_162, %c0_163] : memref<1x16x16x16xf32, #tpu.memory_space<vmem>>, vector<1x16x16x16xf32>
    %154 = vector.shape_cast %153 : vector<1x16x16x16xf32> to vector<16x16x16xf32>
    %155 = vector.shape_cast %154 : vector<16x16x16xf32> to vector<256x16xf32>
    %156 = arith.addf %152, %155 : vector<256x16xf32>
    %157 = tpu.transpose %156, [1, 0] : vector<256x16xf32> -> vector<16x256xf32>
    %c0_164 = arith.constant 0 : index
    %c0_165 = arith.constant 0 : index
    %c0_166 = arith.constant 0 : index
    %158 = vector.load %arg11[%c0_164, %c0_165, %c0_166] : memref<1x16x256xf32, #tpu.memory_space<vmem>>, vector<1x16x256xf32>
    %159 = vector.shape_cast %158 : vector<1x16x256xf32> to vector<16x256xf32>
    %160 = vector.shape_cast %157 : vector<16x256xf32> to vector<1x16x256xf32>
    tpu.vector_store %arg11[%c0_164, %c0_165, %c0_166], %160 {strides = array<i32>} : memref<1x16x256xf32, #tpu.memory_space<vmem>>, vector<1x16x256xf32>,
    return
  }
  func.func @transform_0(%arg0: i32) -> (i32, i32, i32, i32) {
    %c0_i32 = arith.constant 0 : i32
    %c0_i32_0 = arith.constant 0 : i32
    %c0_i32_1 = arith.constant 0 : i32
    %c0_i32_2 = arith.constant 0 : i32
    return %arg0, %c0_i32, %c0_i32_0, %c0_i32_1 : i32, i32, i32, i32
  }
  func.func @transform_1(%arg0: i32) -> (i32, i32, i32, i32) {
    %c0_i32 = arith.constant 0 : i32
    %c0_i32_0 = arith.constant 0 : i32
    %c0_i32_1 = arith.constant 0 : i32
    %c0_i32_2 = arith.constant 0 : i32
    return %arg0, %c0_i32, %c0_i32_0, %c0_i32_1 : i32, i32, i32, i32
  }
  func.func @transform_2(%arg0: i32) -> (i32, i32) {
    %c0_i32 = arith.constant 0 : i32
    %c0_i32_0 = arith.constant 0 : i32
    %c0_i32_1 = arith.constant 0 : i32
    return %c0_i32, %c0_i32_0 : i32, i32
  }
  func.func @transform_3(%arg0: i32) -> (i32, i32) {
    %c0_i32 = arith.constant 0 : i32
    %c0_i32_0 = arith.constant 0 : i32
    %c0_i32_1 = arith.constant 0 : i32
    return %c0_i32, %c0_i32_0 : i32, i32
  }
  func.func @transform_4(%arg0: i32) -> (i32, i32) {
    %c0_i32 = arith.constant 0 : i32
    %c0_i32_0 = arith.constant 0 : i32
    %c0_i32_1 = arith.constant 0 : i32
    return %c0_i32, %c0_i32_0 : i32, i32
  }
  func.func @transform_5(%arg0: i32) -> (i32, i32) {
    %c0_i32 = arith.constant 0 : i32
    %c0_i32_0 = arith.constant 0 : i32
    %c0_i32_1 = arith.constant 0 : i32
    return %c0_i32, %c0_i32_0 : i32, i32
  }
  func.func @transform_6(%arg0: i32) -> (i32, i32) {
    %c0_i32 = arith.constant 0 : i32
    %c0_i32_0 = arith.constant 0 : i32
    %c0_i32_1 = arith.constant 0 : i32
    return %c0_i32, %c0_i32_0 : i32, i32
  }
  func.func @transform_7(%arg0: i32) -> (i32, i32) {
    %c0_i32 = arith.constant 0 : i32
    %c0_i32_0 = arith.constant 0 : i32
    %c0_i32_1 = arith.constant 0 : i32
    return %c0_i32, %c0_i32_0 : i32, i32
  }
  func.func @transform_8(%arg0: i32) -> (i32, i32) {
    %c0_i32 = arith.constant 0 : i32
    %c0_i32_0 = arith.constant 0 : i32
    %c0_i32_1 = arith.constant 0 : i32
    return %c0_i32, %c0_i32_0 : i32, i32
  }
  func.func @transform_9(%arg0: i32) -> (i32, i32) {
    %c0_i32 = arith.constant 0 : i32
    %c0_i32_0 = arith.constant 0 : i32
    %c0_i32_1 = arith.constant 0 : i32
    return %c0_i32, %c0_i32_0 : i32, i32
  }
  func.func @transform_10(%arg0: i32) -> (i32, i32, i32) {
    %c0_i32 = arith.constant 0 : i32
    %c0_i32_0 = arith.constant 0 : i32
    %c0_i32_1 = arith.constant 0 : i32
    return %arg0, %c0_i32, %c0_i32_0 : i32, i32, i32
  }
}

</mosaic_0001>

<llo_original>
// kernel: tpu_custom_call.1
$region0: #{tpu_custom_call.1}
  #allocation0 [shape = 'u32[]', space=smem, size = 0x4, offset = 0x4, fixed_abs, tag = 'smem constant byte address 0x4 - core index']
  #allocation1 [shape = 'u32[144,128]{1,0:T(1,128)}', space=vmem, size = 0x12000, scoped, tag = 'internal scratch']
  #allocation2 [shape = 'bf16[18,18,32]{2,1,0:T(8,128)(2,1)}', space=vmem, size = 0x1b000, scoped, tag = 'scratch operand']
  #allocation3 [shape = 'bf16[18,18,32]{2,1,0:T(8,128)(2,1)}', space=vmem, size = 0x1b000, scoped, tag = 'scratch operand']
  #allocation4 [shape = 'f32[1,1]{1,0:T(1,128)S(1)}', space=vmem, size = 0x200, scoped, tag = 'scoped memory for tpu_custom_call.1']
  %s0 = inlined_call_operand.hbm [shape: f32[2,16,16,16], index: 0, kind: input, shape index: {}]
  %s1 = inlined_call_operand.hbm [shape: f32[2,16,16,16], index: 1, kind: input, shape index: {}]
  %s2 = inlined_call_operand.vmem [shape: bf16[288,32], index: 2, kind: input, shape index: {}]
  %s3 = inlined_call_operand.vmem [shape: f32[1,32], index: 3, kind: input, shape index: {}]
  %s4 = inlined_call_operand.vmem [shape: bf16[288,16], index: 4, kind: input, shape index: {}]
  %s5 = inlined_call_operand.vmem [shape: f32[1,16], index: 5, kind: input, shape index: {}]
  %s6 = inlined_call_operand.vmem [shape: f32[1,16], index: 6, kind: input, shape index: {}]
  %s7 = inlined_call_operand.<no memory space> [shape: f32[1,1], index: 7, kind: input, shape index: {}]
  %s8 = inlined_call_operand.vmem [shape: f32[1,16], index: 8, kind: input, shape index: {}]
  %s9 = inlined_call_operand.vmem [shape: f32[1,16], index: 9, kind: input, shape index: {}]
  %s10 = inlined_call_operand.hbm [shape: f32[2,16,256], index: 10, kind: output, shape index: {}]
  %s11 = sld [smem:[#allocation0]]
  $region81: #{tpu_custom_call.1} parent=0
    _
  %s13 = ssub.s32 1, %s11
  %s14 = scalar_select 0, %s13, %s11
  %v15 = vstv %s7
  %16 = vst [vmem:[#allocation4] sm:$0x1] %v15
  $region1: #{tpu_custom_call.1} parent=0
    #allocation5 [shape = 'u8[262144]{0}', space=vmem, size = 0x40000, scoped, tag = 'input window, operand 0']
    #allocation6 [shape = 's32[2]{0}', space=sflag, size = 0x8, scoped, tag = 'scoped memory for tpu_custom_call.1']
    #allocation7 [shape = 's32[2]{0}', space=sflag, size = 0x8, scoped, tag = 'scoped memory for tpu_custom_call.1']
    #allocation8 [shape = 'u8[262144]{0}', space=vmem, size = 0x40000, scoped, tag = 'input window, operand 1']
    #allocation9 [shape = 's32[2]{0}', space=sflag, size = 0x8, scoped, tag = 'scoped memory for tpu_custom_call.1']
    #allocation10 [shape = 'u8[32768]{0}', space=vmem, size = 0x8000, scoped, tag = 'output window, operand 0']
    %17 = vsyncpa [#allocation6], 0
    %s18 = scalar_lea.sflag [#allocation6], 1
    %19 = vsyncpa %s18, 0
    %20 = vsyncpa [#allocation9], 0
    %s21 = scalar_lea.sflag [#allocation9], 1
    %22 = vsyncpa %s21, 0
    %23 = vsyncpa [#allocation7], 0
    %s24 = scalar_lea.sflag [#allocation7], 1
    %25 = vsyncpa %s24, 0
    loop: start=0, step=1, limit=4
    $region2: #{tpu_custom_call.1} parent=1 // loop_pre_header
      _
    $region3: #{tpu_custom_call.1} parent=1 // loop_header
      %s27 = sphi 0, %s31
      %p28 = scmp.ge.s32.totalorder %s27, 4
      %s37 = sphi 0, %s39
      %s40 = sphi 0, %s37
      %s41 = sphi 0, %s40
      %s57 = sphi 0, %s41
      %s63 = sphi 0, %s65
      %s66 = sphi 0, %s63
      %s67 = sphi 0, %s66
      %s83 = sphi 0, %s67
      %s87 = sphi 0, %s87
      %s89 = sphi 0, %s87
      %s90 = sphi 0, %s89
      %s104 = sphi 0, %s90
      %s108 = sphi 0, %s108
      %s110 = sphi 0, %s108
      %s111 = sphi 0, %s110
      %s125 = sphi 0, %s111
      %s129 = sphi 0, %s129
      %s131 = sphi 0, %s129
      %s132 = sphi 0, %s131
      %s146 = sphi 0, %s132
      %s150 = sphi 0, %s150
      %s152 = sphi 0, %s150
      %s153 = sphi 0, %s152
      %s167 = sphi 0, %s153
      %s171 = sphi 0, %s171
      %s173 = sphi 0, %s171
      %s174 = sphi 0, %s173
      %s188 = sphi 0, %s174
      %s192 = sphi 0, %s192
      %s194 = sphi 0, %s192
      %s195 = sphi 0, %s194
      %s209 = sphi 0, %s195
      %s213 = sphi 0, %s213
      %s215 = sphi 0, %s213
      %s216 = sphi 0, %s215
      %s230 = sphi 0, %s216
      %s234 = sphi 0, %s234
      %s236 = sphi 0, %s234
      %s237 = sphi 0, %s236
      %s251 = sphi 0, %s237
      %s257 = sphi 0, %s259
      %s260 = sphi 0, %s257
      %s261 = sphi 0, %s260
      %s277 = sphi 0, %s261
    $region4: #{tpu_custom_call.1} parent=1 // loop_header_branch
      %30 = sbr.rel (%p28) target = $region8
    $region5: #{tpu_custom_call.1} parent=1 // loop_body
      %s32 = ssub.s32 %s27, 1
      %s33 = ssub.s32 %s27, 2
      %s34 = sadd.s32 %s27, 1
      %s35 = ssub.s32 %s27, %s34
      %p36 = scmp.eq.s32.totalorder %s35, 0
      %s38 = sadd.s32 %s37, 1
      %s39 = scalar_select %p36, %s37, %s38
      %p42 = pneg %p36
      %p43 = scmp.eq.s32.totalorder %s27, 1
      %p44 = por %p42, %p43
      %p45 = scmp.ne.s32.totalorder %s37, %s40
      %p46 = scmp.eq.s32.totalorder %s27, 0
      %p47 = por %p45, %p46
      %p48 = scmp.ne.s32.totalorder %s37, %s40
      %p49 = scmp.eq.s32.totalorder %s32, 1
      %p50 = por %p48, %p49
      %p51 = scmp.ne.s32.totalorder %s40, %s41
      %p52 = scmp.eq.s32.totalorder %s32, 0
      %p53 = por %p51, %p52
      %p54 = scmp.ne.s32.totalorder %s40, %s41
      %p55 = scmp.eq.s32.totalorder %s33, 1
      %p56 = por %p54, %p55
      %p58 = scmp.ne.s32.totalorder %s41, %s57
      %p59 = scmp.eq.s32.totalorder %s33, 0
      %p60 = por %p58, %p59
      %s61 = ssub.s32 %s27, %s34
      %p62 = scmp.eq.s32.totalorder %s61, 0
      %s64 = sadd.s32 %s63, 1
      %s65 = scalar_select %p62, %s63, %s64
      %p68 = pneg %p62
      %p69 = scmp.eq.s32.totalorder %s27, 1
      %p70 = por %p68, %p69
      %p71 = scmp.ne.s32.totalorder %s63, %s66
      %p72 = scmp.eq.s32.totalorder %s27, 0
      %p73 = por %p71, %p72
      %p74 = scmp.ne.s32.totalorder %s63, %s66
      %p75 = scmp.eq.s32.totalorder %s32, 1
      %p76 = por %p74, %p75
      %p77 = scmp.ne.s32.totalorder %s66, %s67
      %p78 = scmp.eq.s32.totalorder %s32, 0
      %p79 = por %p77, %p78
      %p80 = scmp.ne.s32.totalorder %s66, %s67
      %p81 = scmp.eq.s32.totalorder %s33, 1
      %p82 = por %p80, %p81
      %p84 = scmp.ne.s32.totalorder %s67, %s83
      %p85 = scmp.eq.s32.totalorder %s33, 0
      %p86 = por %p84, %p85
      %s88 = sadd.s32 %s87, 1
      %p91 = scmp.eq.s32.totalorder %s27, 1
      %p92 = scmp.ne.s32.totalorder %s87, %s89
      %p93 = scmp.eq.s32.totalorder %s27, 0
      %p94 = por %p92, %p93
      %p95 = scmp.ne.s32.totalorder %s87, %s89
      %p96 = scmp.eq.s32.totalorder %s32, 1
      %p97 = por %p95, %p96
      %p98 = scmp.ne.s32.totalorder %s89, %s90
      %p99 = scmp.eq.s32.totalorder %s32, 0
      %p100 = por %p98, %p99
      %p101 = scmp.ne.s32.totalorder %s89, %s90
      %p102 = scmp.eq.s32.totalorder %s33, 1
      %p103 = por %p101, %p102
      %p105 = scmp.ne.s32.totalorder %s90, %s104
      %p106 = scmp.eq.s32.totalorder %s33, 0
      %p107 = por %p105, %p106
      %s109 = sadd.s32 %s108, 1
      %p112 = scmp.eq.s32.totalorder %s27, 1
      %p113 = scmp.ne.s32.totalorder %s108, %s110
      %p114 = scmp.eq.s32.totalorder %s27, 0
      %p115 = por %p113, %p114
      %p116 = scmp.ne.s32.totalorder %s108, %s110
      %p117 = scmp.eq.s32.totalorder %s32, 1
      %p118 = por %p116, %p117
      %p119 = scmp.ne.s32.totalorder %s110, %s111
      %p120 = scmp.eq.s32.totalorder %s32, 0
      %p121 = por %p119, %p120
      %p122 = scmp.ne.s32.totalorder %s110, %s111
      %p123 = scmp.eq.s32.totalorder %s33, 1
      %p124 = por %p122, %p123
      %p126 = scmp.ne.s32.totalorder %s111, %s125
      %p127 = scmp.eq.s32.totalorder %s33, 0
      %p128 = por %p126, %p127
      %s130 = sadd.s32 %s129, 1
      %p133 = scmp.eq.s32.totalorder %s27, 1
      %p134 = scmp.ne.s32.totalorder %s129, %s131
      %p135 = scmp.eq.s32.totalorder %s27, 0
      %p136 = por %p134, %p135
      %p137 = scmp.ne.s32.totalorder %s129, %s131
      %p138 = scmp.eq.s32.totalorder %s32, 1
      %p139 = por %p137, %p138
      %p140 = scmp.ne.s32.totalorder %s131, %s132
      %p141 = scmp.eq.s32.totalorder %s32, 0
      %p142 = por %p140, %p141
      %p143 = scmp.ne.s32.totalorder %s131, %s132
      %p144 = scmp.eq.s32.totalorder %s33, 1
      %p145 = por %p143, %p144
      %p147 = scmp.ne.s32.totalorder %s132, %s146
      %p148 = scmp.eq.s32.totalorder %s33, 0
      %p149 = por %p147, %p148
      %s151 = sadd.s32 %s150, 1
      %p154 = scmp.eq.s32.totalorder %s27, 1
      %p155 = scmp.ne.s32.totalorder %s150, %s152
      %p156 = scmp.eq.s32.totalorder %s27, 0
      %p157 = por %p155, %p156
      %p158 = scmp.ne.s32.totalorder %s150, %s152
      %p159 = scmp.eq.s32.totalorder %s32, 1
      %p160 = por %p158, %p159
      %p161 = scmp.ne.s32.totalorder %s152, %s153
      %p162 = scmp.eq.s32.totalorder %s32, 0
      %p163 = por %p161, %p162
      %p164 = scmp.ne.s32.totalorder %s152, %s153
      %p165 = scmp.eq.s32.totalorder %s33, 1
      %p166 = por %p164, %p165
      %p168 = scmp.ne.s32.totalorder %s153, %s167
      %p169 = scmp.eq.s32.totalorder %s33, 0
      %p170 = por %p168, %p169
      %s172 = sadd.s32 %s171, 1
      %p175 = scmp.eq.s32.totalorder %s27, 1
      %p176 = scmp.ne.s32.totalorder %s171, %s173
      %p177 = scmp.eq.s32.totalorder %s27, 0
      %p178 = por %p176, %p177
      %p179 = scmp.ne.s32.totalorder %s171, %s173
      %p180 = scmp.eq.s32.totalorder %s32, 1
      %p181 = por %p179, %p180
      %p182 = scmp.ne.s32.totalorder %s173, %s174
      %p183 = scmp.eq.s32.totalorder %s32, 0
      %p184 = por %p182, %p183
      %p185 = scmp.ne.s32.totalorder %s173, %s174
      %p186 = scmp.eq.s32.totalorder %s33, 1
      %p187 = por %p185, %p186
      %p189 = scmp.ne.s32.totalorder %s174, %s188
      %p190 = scmp.eq.s32.totalorder %s33, 0
      %p191 = por %p189, %p190
      %s193 = sadd.s32 %s192, 1
      %p196 = scmp.eq.s32.totalorder %s27, 1
      %p197 = scmp.ne.s32.totalorder %s192, %s194
      %p198 = scmp.eq.s32.totalorder %s27, 0
      %p199 = por %p197, %p198
      %p200 = scmp.ne.s32.totalorder %s192, %s194
      %p201 = scmp.eq.s32.totalorder %s32, 1
      %p202 = por %p200, %p201
      %p203 = scmp.ne.s32.totalorder %s194, %s195
      %p204 = scmp.eq.s32.totalorder %s32, 0
      %p205 = por %p203, %p204
      %p206 = scmp.ne.s32.totalorder %s194, %s195
      %p207 = scmp.eq.s32.totalorder %s33, 1
      %p208 = por %p206, %p207
      %p210 = scmp.ne.s32.totalorder %s195, %s209
      %p211 = scmp.eq.s32.totalorder %s33, 0
      %p212 = por %p210, %p211
      %s214 = sadd.s32 %s213, 1
      %p217 = scmp.eq.s32.totalorder %s27, 1
      %p218 = scmp.ne.s32.totalorder %s213, %s215
      %p219 = scmp.eq.s32.totalorder %s27, 0
      %p220 = por %p218, %p219
      %p221 = scmp.ne.s32.totalorder %s213, %s215
      %p222 = scmp.eq.s32.totalorder %s32, 1
      %p223 = por %p221, %p222
      %p224 = scmp.ne.s32.totalorder %s215, %s216
      %p225 = scmp.eq.s32.totalorder %s32, 0
      %p226 = por %p224, %p225
      %p227 = scmp.ne.s32.totalorder %s215, %s216
      %p228 = scmp.eq.s32.totalorder %s33, 1
      %p229 = por %p227, %p228
      %p231 = scmp.ne.s32.totalorder %s216, %s230
      %p232 = scmp.eq.s32.totalorder %s33, 0
      %p233 = por %p231, %p232
      %s235 = sadd.s32 %s234, 1
      %p238 = scmp.eq.s32.totalorder %s27, 1
      %p239 = scmp.ne.s32.totalorder %s234, %s236
      %p240 = scmp.eq.s32.totalorder %s27, 0
      %p241 = por %p239, %p240
      %p242 = scmp.ne.s32.totalorder %s234, %s236
      %p243 = scmp.eq.s32.totalorder %s32, 1
      %p244 = por %p242, %p243
      %p245 = scmp.ne.s32.totalorder %s236, %s237
      %p246 = scmp.eq.s32.totalorder %s32, 0
      %p247 = por %p245, %p246
      %p248 = scmp.ne.s32.totalorder %s236, %s237
      %p249 = scmp.eq.s32.totalorder %s33, 1
      %p250 = por %p248, %p249
      %p252 = scmp.ne.s32.totalorder %s237, %s251
      %p253 = scmp.eq.s32.totalorder %s33, 0
      %p254 = por %p252, %p253
      %s255 = ssub.s32 %s27, %s34
      %p256 = scmp.eq.s32.totalorder %s255, 0
      %s258 = sadd.s32 %s257, 1
      %s259 = scalar_select %p256, %s257, %s258
      %p262 = pneg %p256
      %p263 = scmp.eq.s32.totalorder %s27, 1
      %p264 = por %p262, %p263
      %p265 = scmp.ne.s32.totalorder %s257, %s260
      %p266 = scmp.eq.s32.totalorder %s27, 0
      %p267 = por %p265, %p266
      %p268 = scmp.ne.s32.totalorder %s257, %s260
      %p269 = scmp.eq.s32.totalorder %s32, 1
      %p270 = por %p268, %p269
      %p271 = scmp.ne.s32.totalorder %s260, %s261
      %p272 = scmp.eq.s32.totalorder %s32, 0
      %p273 = por %p271, %p272
      %p274 = scmp.ne.s32.totalorder %s260, %s261
      %p275 = scmp.eq.s32.totalorder %s33, 1
      %p276 = por %p274, %p275
      %p278 = scmp.ne.s32.totalorder %s261, %s277
      %p279 = scmp.eq.s32.totalorder %s33, 0
      %p280 = por %p278, %p279
      %p281 = scmp.le.s32.totalorder 1, %s27
      %p282 = scmp.lt.s32.totalorder %s27, 3
      %p283 = pnand %p281, %p282
      %p284 = pneg %p283
      // Predicated region
      $region9: #{tpu_custom_call.1} parent=5 // pred_check
        _
      $region10: #{tpu_custom_call.1} parent=5 // pred_check_branch
        %286 = sbr.rel (%p283) target = $region12
      $region11: #{tpu_custom_call.1} parent=5 // pred_region
        %s287 = ssub.s32 %s27, 1
        // Predicated region
        $region13: #{tpu_custom_call.1} parent=11 // pred_check
          %p288 = pneg %p100
        $region14: #{tpu_custom_call.1} parent=11 // pred_check_branch
          %290 = sbr.rel (%p288) target = $region16
        $region15: #{tpu_custom_call.1} parent=11 // pred_region
          _
        $region16: #{tpu_custom_call.1} parent=11 // pred_fallthru
          _
        // Predicated region
        $region17: #{tpu_custom_call.1} parent=11 // pred_check
          %p291 = pneg %p121
        $region18: #{tpu_custom_call.1} parent=11 // pred_check_branch
          %293 = sbr.rel (%p291) target = $region20
        $region19: #{tpu_custom_call.1} parent=11 // pred_region
          _
        $region20: #{tpu_custom_call.1} parent=11 // pred_fallthru
          _
        // Predicated region
        $region21: #{tpu_custom_call.1} parent=11 // pred_check
          %p294 = pneg %p142
        $region22: #{tpu_custom_call.1} parent=11 // pred_check_branch
          %296 = sbr.rel (%p294) target = $region24
        $region23: #{tpu_custom_call.1} parent=11 // pred_region
          _
        $region24: #{tpu_custom_call.1} parent=11 // pred_fallthru
          _
        // Predicated region
        $region25: #{tpu_custom_call.1} parent=11 // pred_check
          %p297 = pneg %p163
        $region26: #{tpu_custom_call.1} parent=11 // pred_check_branch
          %299 = sbr.rel (%p297) target = $region28
        $region27: #{tpu_custom_call.1} parent=11 // pred_region
          _
        $region28: #{tpu_custom_call.1} parent=11 // pred_fallthru
          _
        // Predicated region
        $region29: #{tpu_custom_call.1} parent=11 // pred_check
          %p300 = pneg %p184
        $region30: #{tpu_custom_call.1} parent=11 // pred_check_branch
          %302 = sbr.rel (%p300) target = $region32
        $region31: #{tpu_custom_call.1} parent=11 // pred_region
          _
        $region32: #{tpu_custom_call.1} parent=11 // pred_fallthru
          _
        // Predicated region
        $region33: #{tpu_custom_call.1} parent=11 // pred_check
          %p303 = pneg %p205
        $region34: #{tpu_custom_call.1} parent=11 // pred_check_branch
          %305 = sbr.rel (%p303) target = $region36
        $region35: #{tpu_custom_call.1} parent=11 // pred_region
          _
        $region36: #{tpu_custom_call.1} parent=11 // pred_fallthru
          _
        // Predicated region
        $region37: #{tpu_custom_call.1} parent=11 // pred_check
          %p306 = pneg %p226
        $region38: #{tpu_custom_call.1} parent=11 // pred_check_branch
          %308 = sbr.rel (%p306) target = $region40
        $region39: #{tpu_custom_call.1} parent=11 // pred_region
          _
        $region40: #{tpu_custom_call.1} parent=11 // pred_fallthru
          _
        // Predicated region
        $region41: #{tpu_custom_call.1} parent=11 // pred_check
          %p309 = pneg %p247
        $region42: #{tpu_custom_call.1} parent=11 // pred_check_branch
          %311 = sbr.rel (%p309) target = $region44
        $region43: #{tpu_custom_call.1} parent=11 // pred_region
          _
        $region44: #{tpu_custom_call.1} parent=11 // pred_fallthru
          _
      $region12: #{tpu_custom_call.1} parent=5 // pred_fallthru
        _
      %p312 = scmp.lt.s32.totalorder %s27, 2
      // Predicated region
      $region45: #{tpu_custom_call.1} parent=5 // pred_check
        %p313 = pneg %p312
      $region46: #{tpu_custom_call.1} parent=5 // pred_check_branch
        %315 = sbr.rel (%p313) target = $region48
      $region47: #{tpu_custom_call.1} parent=5 // pred_region
        // Predicated region
        $region49: #{tpu_custom_call.1} parent=47 // pred_check
          %p316 = pneg %p47
        $region50: #{tpu_custom_call.1} parent=47 // pred_check_branch
          %318 = sbr.rel (%p316) target = $region52
        $region51: #{tpu_custom_call.1} parent=47 // pred_region
          %s319 = sand.u32 %s37, 1
          %s320 = scalar_lea.sflag [#allocation6], %s319
          %s321 = sand.u32 %s37, 1
          %s322 = smul.addr %s321, 256
          %s323 = scalar_lea.vmem [#allocation5], %s322
          %s325 = ssub.s32 4096, 4096
          %326 = vsyncadd %s320, %s325
          %s327 = smul.addr %s27, 32
          %s328 = smul.addr %s327, 128
          %s329 = scalar_lea.hbm %s0, %s328
          %s330 = sshll.u32 %s323, 4
          %s331 = int_to_ptr.vmem [resolvable:$true] %s330
          %336 = dma.hbm_to_vmem [thread:$0]  %s329, 4096, %s331, %s320, 128, 128, 8
        $region52: #{tpu_custom_call.1} parent=47 // pred_fallthru
          _
        // Predicated region
        $region53: #{tpu_custom_call.1} parent=47 // pred_check
          %p337 = pneg %p73
        $region54: #{tpu_custom_call.1} parent=47 // pred_check_branch
          %339 = sbr.rel (%p337) target = $region56
        $region55: #{tpu_custom_call.1} parent=47 // pred_region
          %s340 = sand.u32 %s63, 1
          %s341 = scalar_lea.sflag [#allocation9], %s340
          %s342 = sand.u32 %s63, 1
          %s343 = smul.addr %s342, 256
          %s344 = scalar_lea.vmem [#allocation8], %s343
          %s346 = ssub.s32 4096, 4096
          %347 = vsyncadd %s341, %s346
          %s348 = smul.addr %s27, 32
          %s349 = smul.addr %s348, 128
          %s350 = scalar_lea.hbm %s1, %s349
          %s351 = sshll.u32 %s344, 4
          %s352 = int_to_ptr.vmem [resolvable:$true] %s351
          %357 = dma.hbm_to_vmem [thread:$0]  %s350, 4096, %s352, %s341, 128, 128, 8
        $region56: #{tpu_custom_call.1} parent=47 // pred_fallthru
          _
      $region48: #{tpu_custom_call.1} parent=5 // pred_fallthru
        _
      %p358 = scmp.le.s32.totalorder 1, %s27
      %p359 = scmp.lt.s32.totalorder %s27, 3
      %p360 = pnand %p358, %p359
      %p361 = pneg %p360
      // Predicated region
      $region57: #{tpu_custom_call.1} parent=5 // pred_check
        _
      $region58: #{tpu_custom_call.1} parent=5 // pred_check_branch
        %363 = sbr.rel (%p360) target = $region60
      $region59: #{tpu_custom_call.1} parent=5 // pred_region
        %s364 = ssub.s32 %s27, 1
        %s365 = sand.u32 %s40, 1
        %s366 = scalar_lea.sflag [#allocation6], %s365
        %s367 = sand.u32 %s40, 1
        %s368 = smul.addr %s367, 256
        %s369 = scalar_lea.vmem [#allocation5], %s368
        // Predicated region
        $region61: #{tpu_custom_call.1} parent=59 // pred_check
          %p370 = pneg %p53
        $region62: #{tpu_custom_call.1} parent=59 // pred_check_branch
          %372 = sbr.rel (%p370) target = $region64
        $region63: #{tpu_custom_call.1} parent=59 // pred_region
          %373 = dma.done %s366, 4096
        $region64: #{tpu_custom_call.1} parent=59 // pred_fallthru
          _
        %s374 = sand.u32 %s66, 1
        %s375 = scalar_lea.sflag [#allocation9], %s374
        %s376 = sand.u32 %s66, 1
        %s377 = smul.addr %s376, 256
        %s378 = scalar_lea.vmem [#allocation8], %s377
        // Predicated region
        $region65: #{tpu_custom_call.1} parent=59 // pred_check
          %p379 = pneg %p79
        $region66: #{tpu_custom_call.1} parent=59 // pred_check_branch
          %381 = sbr.rel (%p379) target = $region68
        $region67: #{tpu_custom_call.1} parent=59 // pred_region
          %382 = dma.done %s375, 4096
        $region68: #{tpu_custom_call.1} parent=59 // pred_fallthru
          _
        %s383 = sand.u32 %s40, 1
        %s384 = scalar_lea.sflag [#allocation6], %s383
        %s385 = sand.u32 %s40, 1
        %s386 = smul.addr %s385, 256
        %s387 = scalar_lea.vmem [#allocation5], %s386
        %p388 = pneg %p53
        %p389 = pneg %p50
        %s390 = sand.u32 %s66, 1
        %s391 = scalar_lea.sflag [#allocation9], %s390
        %s392 = sand.u32 %s66, 1
        %s393 = smul.addr %s392, 256
        %s394 = scalar_lea.vmem [#allocation8], %s393
        %p395 = pneg %p79
        %p396 = pneg %p76
        %p397 = pneg %p100
        %p398 = pneg %p97
        %p399 = pneg %p121
        %p400 = pneg %p118
        %p401 = pneg %p142
        %p402 = pneg %p139
        %p403 = pneg %p163
        %p404 = pneg %p160
        %p405 = pneg %p184
        %p406 = pneg %p181
        %p407 = pneg %p205
        %p408 = pneg %p202
        %p409 = pneg %p226
        %p410 = pneg %p223
        %p411 = pneg %p247
        %p412 = pneg %p244
        %p413 = pneg %p273
        %p414 = pneg %p270
        %s415 = sand.u32 %s260, 1
        %s416 = scalar_lea.sflag [#allocation7], %s415
        %s417 = sand.u32 %s260, 1
        %s418 = smul.addr %s417, 32
        %s419 = scalar_lea.vmem [#allocation10], %s418
        %vm421 = vcmask 257024
        %422 = vst.msk [vmem:[#allocation2] sm:$0xf] %vm421, 0
        %423 = vst.msk [vmem:[#allocation2 + $0x4] sm:$0xf] %vm421, 0
        %vm424 = vcmask 253952
        %425 = vst.msk [vmem:[#allocation2 + $0x8] sm:$0x1] %vm424, 0
        %s426 = scalar_lea.vmem [#allocation2], 204
        %427 = vst.msk [vmem:[%s426] sm:$0xf] %vm421, 0
        %428 = vst.msk [vmem:[%s426 + $0x4] sm:$0xf] %vm421, 0
        %429 = vst.msk [vmem:[%s426 + $0x8] sm:$0x1] %vm424, 0
        %vm430 = vcmask 253952
        %vm431 = vsmask.f32 256
        %vm432 = vmand %vm430, %vm431
        %v433 = vld [vmem:[#allocation2] sm:$0x1]
        %v434 = vsel %vm432, 0, %v433
        %435 = vst [vmem:[#allocation2] sm:$0x1] %v434
        %v436 = vld [vmem:[#allocation2 + $0xc] sm:$0x1]
        %v437 = vsel %vm432, 0, %v436
        %438 = vst [vmem:[#allocation2 + $0xc] sm:$0x1] %v437
        %v439 = vld [vmem:[#allocation2 + $0x18] sm:$0x1]
        %v440 = vsel %vm432, 0, %v439
        %441 = vst [vmem:[#allocation2 + $0x18] sm:$0x1] %v440
        %v442 = vld [vmem:[#allocation2 + $0x24] sm:$0x1]
        %v443 = vsel %vm432, 0, %v442
        %444 = vst [vmem:[#allocation2 + $0x24] sm:$0x1] %v443
        %v445 = vld [vmem:[#allocation2 + $0x30] sm:$0x1]
        %v446 = vsel %vm432, 0, %v445
        %447 = vst [vmem:[#allocation2 + $0x30] sm:$0x1] %v446
        %v448 = vld [vmem:[#allocation2 + $0x3c] sm:$0x1]
        %v449 = vsel %vm432, 0, %v448
        %450 = vst [vmem:[#allocation2 + $0x3c] sm:$0x1] %v449
        %v451 = vld [vmem:[#allocation2 + $0x48] sm:$0x1]
        %v452 = vsel %vm432, 0, %v451
        %453 = vst [vmem:[#allocation2 + $0x48] sm:$0x1] %v452
        %v454 = vld [vmem:[#allocation2 + $0x54] sm:$0x1]
        %v455 = vsel %vm432, 0, %v454
        %456 = vst [vmem:[#allocation2 + $0x54] sm:$0x1] %v455
        %v457 = vld [vmem:[#allocation2 + $0x60] sm:$0x1]
        %v458 = vsel %vm432, 0, %v457
        %459 = vst [vmem:[#allocation2 + $0x60] sm:$0x1] %v458
        %v460 = vld [vmem:[#allocation2 + $0x6c] sm:$0x1]
        %v461 = vsel %vm432, 0, %v460
        %462 = vst [vmem:[#allocation2 + $0x6c] sm:$0x1] %v461
        %v463 = vld [vmem:[#allocation2 + $0x78] sm:$0x1]
        %v464 = vsel %vm432, 0, %v463
        %465 = vst [vmem:[#allocation2 + $0x78] sm:$0x1] %v464
        %v466 = vld [vmem:[#allocation2 + $0x84] sm:$0x1]
        %v467 = vsel %vm432, 0, %v466
        %468 = vst [vmem:[#allocation2 + $0x84] sm:$0x1] %v467
        %v469 = vld [vmem:[#allocation2 + $0x90] sm:$0x1]
        %v470 = vsel %vm432, 0, %v469
        %471 = vst [vmem:[#allocation2 + $0x90] sm:$0x1] %v470
        %v472 = vld [vmem:[#allocation2 + $0x9c] sm:$0x1]
        %v473 = vsel %vm432, 0, %v472
        %474 = vst [vmem:[#allocation2 + $0x9c] sm:$0x1] %v473
        %v475 = vld [vmem:[#allocation2 + $0xa8] sm:$0x1]
        %v476 = vsel %vm432, 0, %v475
        %477 = vst [vmem:[#allocation2 + $0xa8] sm:$0x1] %v476
        %v478 = vld [vmem:[#allocation2 + $0xb4] sm:$0x1]
        %v479 = vsel %vm432, 0, %v478
        %480 = vst [vmem:[#allocation2 + $0xb4] sm:$0x1] %v479
        %v481 = vld [vmem:[#allocation2 + $0xc0] sm:$0x1]
        %v482 = vsel %vm432, 0, %v481
        %483 = vst [vmem:[#allocation2 + $0xc0] sm:$0x1] %v482
        %v484 = vld [vmem:[#allocation2 + $0xcc] sm:$0x1]
        %v485 = vsel %vm432, 0, %v484
        %486 = vst [vmem:[#allocation2 + $0xcc] sm:$0x1] %v485
        %vm487 = vsmask.f32 7938
        %vm488 = vmand %vm430, %vm487
        %v489 = vld [vmem:[#allocation2 + $0x8] sm:$0x1]
        %v490 = vsel %vm488, 0, %v489
        %491 = vst [vmem:[#allocation2 + $0x8] sm:$0x1] %v490
        %v492 = vld [vmem:[#allocation2 + $0x14] sm:$0x1]
        %v493 = vsel %vm488, 0, %v492
        %494 = vst [vmem:[#allocation2 + $0x14] sm:$0x1] %v493
        %v495 = vld [vmem:[#allocation2 + $0x20] sm:$0x1]
        %v496 = vsel %vm488, 0, %v495
        %497 = vst [vmem:[#allocation2 + $0x20] sm:$0x1] %v496
        %v498 = vld [vmem:[#allocation2 + $0x2c] sm:$0x1]
        %v499 = vsel %vm488, 0, %v498
        %500 = vst [vmem:[#allocation2 + $0x2c] sm:$0x1] %v499
        %v501 = vld [vmem:[#allocation2 + $0x38] sm:$0x1]
        %v502 = vsel %vm488, 0, %v501
        %503 = vst [vmem:[#allocation2 + $0x38] sm:$0x1] %v502
        %v504 = vld [vmem:[#allocation2 + $0x44] sm:$0x1]
        %v505 = vsel %vm488, 0, %v504
        %506 = vst [vmem:[#allocation2 + $0x44] sm:$0x1] %v505
        %v507 = vld [vmem:[#allocation2 + $0x50] sm:$0x1]
        %v508 = vsel %vm488, 0, %v507
        %509 = vst [vmem:[#allocation2 + $0x50] sm:$0x1] %v508
        %v510 = vld [vmem:[#allocation2 + $0x5c] sm:$0x1]
        %v511 = vsel %vm488, 0, %v510
        %512 = vst [vmem:[#allocation2 + $0x5c] sm:$0x1] %v511
        %v513 = vld [vmem:[#allocation2 + $0x68] sm:$0x1]
        %v514 = vsel %vm488, 0, %v513
        %515 = vst [vmem:[#allocation2 + $0x68] sm:$0x1] %v514
        %v516 = vld [vmem:[#allocation2 + $0x74] sm:$0x1]
        %v517 = vsel %vm488, 0, %v516
        %518 = vst [vmem:[#allocation2 + $0x74] sm:$0x1] %v517
        %v519 = vld [vmem:[#allocation2 + $0x80] sm:$0x1]
        %v520 = vsel %vm488, 0, %v519
        %521 = vst [vmem:[#allocation2 + $0x80] sm:$0x1] %v520
        %v522 = vld [vmem:[#allocation2 + $0x8c] sm:$0x1]
        %v523 = vsel %vm488, 0, %v522
        %524 = vst [vmem:[#allocation2 + $0x8c] sm:$0x1] %v523
        %v525 = vld [vmem:[#allocation2 + $0x98] sm:$0x1]
        %v526 = vsel %vm488, 0, %v525
        %527 = vst [vmem:[#allocation2 + $0x98] sm:$0x1] %v526
        %v528 = vld [vmem:[#allocation2 + $0xa4] sm:$0x1]
        %v529 = vsel %vm488, 0, %v528
        %530 = vst [vmem:[#allocation2 + $0xa4] sm:$0x1] %v529
        %v531 = vld [vmem:[#allocation2 + $0xb0] sm:$0x1]
        %v532 = vsel %vm488, 0, %v531
        %533 = vst [vmem:[#allocation2 + $0xb0] sm:$0x1] %v532
        %v534 = vld [vmem:[#allocation2 + $0xbc] sm:$0x1]
        %v535 = vsel %vm488, 0, %v534
        %536 = vst [vmem:[#allocation2 + $0xbc] sm:$0x1] %v535
        %v537 = vld [vmem:[#allocation2 + $0xc8] sm:$0x1]
        %v538 = vsel %vm488, 0, %v537
        %539 = vst [vmem:[#allocation2 + $0xc8] sm:$0x1] %v538
        %v540 = vld [vmem:[#allocation2 + $0xd4] sm:$0x1]
        %v541 = vsel %vm488, 0, %v540
        %542 = vst [vmem:[#allocation2 + $0xd4] sm:$0x1] %v541
        %543 = vst.msk [vmem:[#allocation3] sm:$0xf] %vm421, 0
        %544 = vst.msk [vmem:[#allocation3 + $0x4] sm:$0xf] %vm421, 0
        %545 = vst.msk [vmem:[#allocation3 + $0x8] sm:$0x1] %vm424, 0
        %s546 = scalar_lea.vmem [#allocation3], 204
        %547 = vst.msk [vmem:[%s546] sm:$0xf] %vm421, 0
        %548 = vst.msk [vmem:[%s546 + $0x4] sm:$0xf] %vm421, 0
        %549 = vst.msk [vmem:[%s546 + $0x8] sm:$0x1] %vm424, 0
        %v550 = vld [vmem:[#allocation3] sm:$0x1]
        %v551 = vsel %vm432, 0, %v550
        %552 = vst [vmem:[#allocation3] sm:$0x1] %v551
        %v553 = vld [vmem:[#allocation3 + $0xc] sm:$0x1]
        %v554 = vsel %vm432, 0, %v553
        %555 = vst [vmem:[#allocation3 + $0xc] sm:$0x1] %v554
        %v556 = vld [vmem:[#allocation3 + $0x18] sm:$0x1]
        %v557 = vsel %vm432, 0, %v556
        %558 = vst [vmem:[#allocation3 + $0x18] sm:$0x1] %v557
        %v559 = vld [vmem:[#allocation3 + $0x24] sm:$0x1]
        %v560 = vsel %vm432, 0, %v559
        %561 = vst [vmem:[#allocation3 + $0x24] sm:$0x1] %v560
        %v562 = vld [vmem:[#allocation3 + $0x30] sm:$0x1]
        %v563 = vsel %vm432, 0, %v562
        %564 = vst [vmem:[#allocation3 + $0x30] sm:$0x1] %v563
        %v565 = vld [vmem:[#allocation3 + $0x3c] sm:$0x1]
        %v566 = vsel %vm432, 0, %v565
        %567 = vst [vmem:[#allocation3 + $0x3c] sm:$0x1] %v566
        %v568 = vld [vmem:[#allocation3 + $0x48] sm:$0x1]
        %v569 = vsel %vm432, 0, %v568
        %570 = vst [vmem:[#allocation3 + $0x48] sm:$0x1] %v569
        %v571 = vld [vmem:[#allocation3 + $0x54] sm:$0x1]
        %v572 = vsel %vm432, 0, %v571
        %573 = vst [vmem:[#allocation3 + $0x54] sm:$0x1] %v572
        %v574 = vld [vmem:[#allocation3 + $0x60] sm:$0x1]
        %v575 = vsel %vm432, 0, %v574
        %576 = vst [vmem:[#allocation3 + $0x60] sm:$0x1] %v575
        %v577 = vld [vmem:[#allocation3 + $0x6c] sm:$0x1]
        %v578 = vsel %vm432, 0, %v577
        %579 = vst [vmem:[#allocation3 + $0x6c] sm:$0x1] %v578
        %v580 = vld [vmem:[#allocation3 + $0x78] sm:$0x1]
        %v581 = vsel %vm432, 0, %v580
        %582 = vst [vmem:[#allocation3 + $0x78] sm:$0x1] %v581
        %v583 = vld [vmem:[#allocation3 + $0x84] sm:$0x1]
        %v584 = vsel %vm432, 0, %v583
        %585 = vst [vmem:[#allocation3 + $0x84] sm:$0x1] %v584
        %v586 = vld [vmem:[#allocation3 + $0x90] sm:$0x1]
        %v587 = vsel %vm432, 0, %v586
        %588 = vst [vmem:[#allocation3 + $0x90] sm:$0x1] %v587
        %v589 = vld [vmem:[#allocation3 + $0x9c] sm:$0x1]
        %v590 = vsel %vm432, 0, %v589
        %591 = vst [vmem:[#allocation3 + $0x9c] sm:$0x1] %v590
        %v592 = vld [vmem:[#allocation3 + $0xa8] sm:$0x1]
        %v593 = vsel %vm432, 0, %v592
        %594 = vst [vmem:[#allocation3 + $0xa8] sm:$0x1] %v593
        %v595 = vld [vmem:[#allocation3 + $0xb4] sm:$0x1]
        %v596 = vsel %vm432, 0, %v595
        %597 = vst [vmem:[#allocation3 + $0xb4] sm:$0x1] %v596
        %v598 = vld [vmem:[#allocation3 + $0xc0] sm:$0x1]
        %v599 = vsel %vm432, 0, %v598
        %600 = vst [vmem:[#allocation3 + $0xc0] sm:$0x1] %v599
        %v601 = vld [vmem:[#allocation3 + $0xcc] sm:$0x1]
        %v602 = vsel %vm432, 0, %v601
        %603 = vst [vmem:[#allocation3 + $0xcc] sm:$0x1] %v602
        %v604 = vld [vmem:[#allocation3 + $0x8] sm:$0x1]
        %v605 = vsel %vm488, 0, %v604
        %606 = vst [vmem:[#allocation3 + $0x8] sm:$0x1] %v605
        %v607 = vld [vmem:[#allocation3 + $0x14] sm:$0x1]
        %v608 = vsel %vm488, 0, %v607
        %609 = vst [vmem:[#allocation3 + $0x14] sm:$0x1] %v608
        %v610 = vld [vmem:[#allocation3 + $0x20] sm:$0x1]
        %v611 = vsel %vm488, 0, %v610
        %612 = vst [vmem:[#allocation3 + $0x20] sm:$0x1] %v611
        %v613 = vld [vmem:[#allocation3 + $0x2c] sm:$0x1]
        %v614 = vsel %vm488, 0, %v613
        %615 = vst [vmem:[#allocation3 + $0x2c] sm:$0x1] %v614
        %v616 = vld [vmem:[#allocation3 + $0x38] sm:$0x1]
        %v617 = vsel %vm488, 0, %v616
        %618 = vst [vmem:[#allocation3 + $0x38] sm:$0x1] %v617
        %v619 = vld [vmem:[#allocation3 + $0x44] sm:$0x1]
        %v620 = vsel %vm488, 0, %v619
        %621 = vst [vmem:[#allocation3 + $0x44] sm:$0x1] %v620
        %v622 = vld [vmem:[#allocation3 + $0x50] sm:$0x1]
        %v623 = vsel %vm488, 0, %v622
        %624 = vst [vmem:[#allocation3 + $0x50] sm:$0x1] %v623
        %v625 = vld [vmem:[#allocation3 + $0x5c] sm:$0x1]
        %v626 = vsel %vm488, 0, %v625
        %627 = vst [vmem:[#allocation3 + $0x5c] sm:$0x1] %v626
        %v628 = vld [vmem:[#allocation3 + $0x68] sm:$0x1]
        %v629 = vsel %vm488, 0, %v628
        %630 = vst [vmem:[#allocation3 + $0x68] sm:$0x1] %v629
        %v631 = vld [vmem:[#allocation3 + $0x74] sm:$0x1]
        %v632 = vsel %vm488, 0, %v631
        %633 = vst [vmem:[#allocation3 + $0x74] sm:$0x1] %v632
        %v634 = vld [vmem:[#allocation3 + $0x80] sm:$0x1]
        %v635 = vsel %vm488, 0, %v634
        %636 = vst [vmem:[#allocation3 + $0x80] sm:$0x1] %v635
        %v637 = vld [vmem:[#allocation3 + $0x8c] sm:$0x1]
        %v638 = vsel %vm488, 0, %v637
        %639 = vst [vmem:[#allocation3 + $0x8c] sm:$0x1] %v638
        %v640 = vld [vmem:[#allocation3 + $0x98] sm:$0x1]
        %v641 = vsel %vm488, 0, %v640
        %642 = vst [vmem:[#allocation3 + $0x98] sm:$0x1] %v641
        %v643 = vld [vmem:[#allocation3 + $0xa4] sm:$0x1]
        %v644 = vsel %vm488, 0, %v643
        %645 = vst [vmem:[#allocation3 + $0xa4] sm:$0x1] %v644
        %v646 = vld [vmem:[#allocation3 + $0xb0] sm:$0x1]
        %v647 = vsel %vm488, 0, %v646
        %648 = vst [vmem:[#allocation3 + $0xb0] sm:$0x1] %v647
        %v649 = vld [vmem:[#allocation3 + $0xbc] sm:$0x1]
        %v650 = vsel %vm488, 0, %v649
        %651 = vst [vmem:[#allocation3 + $0xbc] sm:$0x1] %v650
        %v652 = vld [vmem:[#allocation3 + $0xc8] sm:$0x1]
        %v653 = vsel %vm488, 0, %v652
        %654 = vst [vmem:[#allocation3 + $0xc8] sm:$0x1] %v653
        %v655 = vld [vmem:[#allocation3 + $0xd4] sm:$0x1]
        %v656 = vsel %vm488, 0, %v655
        %657 = vst [vmem:[#allocation3 + $0xd4] sm:$0x1] %v656
        %v658 = vld [vmem:[%s369] sm:$0xff]
        %v659 = vld [vmem:[%s369 + $0x8] sm:$0xff]
        %v660 = vld [vmem:[%s369 + $0x10] sm:$0xff]
        %v661 = vld [vmem:[%s369 + $0x18] sm:$0xff]
        %v662 = vld [vmem:[%s369 + $0x20] sm:$0xff]
        %v663 = vld [vmem:[%s369 + $0x28] sm:$0xff]
        %v664 = vld [vmem:[%s369 + $0x30] sm:$0xff]
        %v665 = vld [vmem:[%s369 + $0x38] sm:$0xff]
        %v666 = vld [vmem:[%s369 + $0x40] sm:$0xff]
        %v667 = vld [vmem:[%s369 + $0x48] sm:$0xff]
        %v668 = vld [vmem:[%s369 + $0x50] sm:$0xff]
        %v669 = vld [vmem:[%s369 + $0x58] sm:$0xff]
        %v670 = vld [vmem:[%s369 + $0x60] sm:$0xff]
        %v671 = vld [vmem:[%s369 + $0x68] sm:$0xff]
        %v672 = vld [vmem:[%s369 + $0x70] sm:$0xff]
        %v673 = vld [vmem:[%s369 + $0x78] sm:$0xff]
        %v674 = vld [vmem:[%s369 + $0x80] sm:$0xff]
        %v675 = vld [vmem:[%s369 + $0x88] sm:$0xff]
        %v676 = vld [vmem:[%s369 + $0x90] sm:$0xff]
        %v677 = vld [vmem:[%s369 + $0x98] sm:$0xff]
        %v678 = vld [vmem:[%s369 + $0xa0] sm:$0xff]
        %v679 = vld [vmem:[%s369 + $0xa8] sm:$0xff]
        %v680 = vld [vmem:[%s369 + $0xb0] sm:$0xff]
        %v681 = vld [vmem:[%s369 + $0xb8] sm:$0xff]
        %v682 = vld [vmem:[%s369 + $0xc0] sm:$0xff]
        %v683 = vld [vmem:[%s369 + $0xc8] sm:$0xff]
        %v684 = vld [vmem:[%s369 + $0xd0] sm:$0xff]
        %v685 = vld [vmem:[%s369 + $0xd8] sm:$0xff]
        %v686 = vld [vmem:[%s369 + $0xe0] sm:$0xff]
        %v687 = vld [vmem:[%s369 + $0xe8] sm:$0xff]
        %v688 = vld [vmem:[%s369 + $0xf0] sm:$0xff]
        %v689 = vld [vmem:[%s369 + $0xf8] sm:$0xff]
        %v690 = vpack.c.bf16 %v659, %v658
        %v691 = vpack.c.bf16 %v661, %v660
        %v692 = vpack.c.bf16 %v663, %v662
        %v693 = vpack.c.bf16 %v665, %v664
        %v694 = vpack.c.bf16 %v667, %v666
        %v695 = vpack.c.bf16 %v669, %v668
        %v696 = vpack.c.bf16 %v671, %v670
        %v697 = vpack.c.bf16 %v673, %v672
        %v698 = vpack.c.bf16 %v675, %v674
        %v699 = vpack.c.bf16 %v677, %v676
        %v700 = vpack.c.bf16 %v679, %v678
        %v701 = vpack.c.bf16 %v681, %v680
        %v702 = vpack.c.bf16 %v683, %v682
        %v703 = vpack.c.bf16 %v685, %v684
        %v704 = vpack.c.bf16 %v687, %v686
        %v705 = vpack.c.bf16 %v689, %v688
        %v722 = vunpack.c.l.b16 %v690
        %v723 = vunpack.c.h.b16 %v690
        %v724 = vunpack.c.l.b16 %v691
        %v725 = vunpack.c.h.b16 %v691
        %v726 = vunpack.c.l.b16 %v692
        %v727 = vunpack.c.h.b16 %v692
        %v728 = vunpack.c.l.b16 %v693
        %v729 = vunpack.c.h.b16 %v693
        %v730 = vunpack.c.l.b16 %v694
        %v731 = vunpack.c.h.b16 %v694
        %v732 = vunpack.c.l.b16 %v695
        %v733 = vunpack.c.h.b16 %v695
        %v734 = vunpack.c.l.b16 %v696
        %v735 = vunpack.c.h.b16 %v696
        %v736 = vunpack.c.l.b16 %v697
        %v737 = vunpack.c.h.b16 %v697
        %v738 = vunpack.c.l.b16 %v698
        %v739 = vunpack.c.h.b16 %v698
        %v740 = vunpack.c.l.b16 %v699
        %v741 = vunpack.c.h.b16 %v699
        %v742 = vunpack.c.l.b16 %v700
        %v743 = vunpack.c.h.b16 %v700
        %v744 = vunpack.c.l.b16 %v701
        %v745 = vunpack.c.h.b16 %v701
        %v746 = vunpack.c.l.b16 %v702
        %v747 = vunpack.c.h.b16 %v702
        %v748 = vunpack.c.l.b16 %v703
        %v749 = vunpack.c.h.b16 %v703
        %v750 = vunpack.c.l.b16 %v704
        %v751 = vunpack.c.h.b16 %v704
        %v752 = vunpack.c.l.b16 %v705
        %v753 = vunpack.c.h.b16 %v705
        %v754 = vpack.c.b16 %v722, %v722
        %v755 = vpack.c.b16 %v723, %v723
        %v756 = vpack.c.b16 %v724, %v724
        %v757 = vpack.c.b16 %v725, %v725
        %v758 = vpack.c.b16 %v726, %v726
        %v759 = vpack.c.b16 %v727, %v727
        %v760 = vpack.c.b16 %v728, %v728
        %v761 = vpack.c.b16 %v729, %v729
        %v762 = vpack.c.b16 %v730, %v730
        %v763 = vpack.c.b16 %v731, %v731
        %v764 = vpack.c.b16 %v732, %v732
        %v765 = vpack.c.b16 %v733, %v733
        %v766 = vpack.c.b16 %v734, %v734
        %v767 = vpack.c.b16 %v735, %v735
        %v768 = vpack.c.b16 %v736, %v736
        %v769 = vpack.c.b16 %v737, %v737
        %v770 = vpack.c.b16 %v738, %v738
        %v771 = vpack.c.b16 %v739, %v739
        %v772 = vpack.c.b16 %v740, %v740
        %v773 = vpack.c.b16 %v741, %v741
        %v774 = vpack.c.b16 %v742, %v742
        %v775 = vpack.c.b16 %v743, %v743
        %v776 = vpack.c.b16 %v744, %v744
        %v777 = vpack.c.b16 %v745, %v745
        %v778 = vpack.c.b16 %v746, %v746
        %v779 = vpack.c.b16 %v747, %v747
        %v780 = vpack.c.b16 %v748, %v748
        %v781 = vpack.c.b16 %v749, %v749
        %v782 = vpack.c.b16 %v750, %v750
        %v783 = vpack.c.b16 %v751, %v751
        %v784 = vpack.c.b16 %v752, %v752
        %v785 = vpack.c.b16 %v753, %v753
        %vm786 = vsmask.f32 4368
        %vm787 = vmor %vm431, %vm786
        %v789 = vshrl.u32 %v754, 16
        %v791 = vrot.slane %v789, 7
        %v792 = vshll.u32 %v754, 16
        %v794 = vor.u32 %v791, %v792
        %v795 = vrot.slane %v791, 4
        %v797 = vshrl.u32 %v755, 16
        %v799 = vrot.slane %v797, 7
        %v800 = vshll.u32 %v755, 16
        %v802 = vor.u32 %v799, %v800
        %v803 = vsel %vm787, %v795, %v802
        %v804 = vrot.slane %v799, 4
        %v806 = vshrl.u32 %v756, 16
        %v808 = vrot.slane %v806, 7
        %v809 = vshll.u32 %v756, 16
        %v811 = vor.u32 %v808, %v809
        %v812 = vrot.slane %v808, 4
        %v814 = vshrl.u32 %v757, 16
        %v816 = vrot.slane %v814, 7
        %v817 = vshll.u32 %v757, 16
        %v819 = vor.u32 %v816, %v817
        %v820 = vsel %vm787, %v812, %v819
        %v821 = vrot.slane %v816, 4
        %v823 = vshrl.u32 %v758, 16
        %v825 = vrot.slane %v823, 7
        %v826 = vshll.u32 %v758, 16
        %v828 = vor.u32 %v825, %v826
        %v829 = vrot.slane %v825, 4
        %v831 = vshrl.u32 %v759, 16
        %v833 = vrot.slane %v831, 7
        %v834 = vshll.u32 %v759, 16
        %v836 = vor.u32 %v833, %v834
        %v837 = vsel %vm787, %v829, %v836
        %v838 = vrot.slane %v833, 4
        %v840 = vshrl.u32 %v760, 16
        %v842 = vrot.slane %v840, 7
        %v843 = vshll.u32 %v760, 16
        %v845 = vor.u32 %v842, %v843
        %v846 = vrot.slane %v842, 4
        %v848 = vshrl.u32 %v761, 16
        %v850 = vrot.slane %v848, 7
        %v851 = vshll.u32 %v761, 16
        %v853 = vor.u32 %v850, %v851
        %v854 = vsel %vm787, %v846, %v853
        %v855 = vrot.slane %v850, 4
        %v857 = vshrl.u32 %v762, 16
        %v859 = vrot.slane %v857, 7
        %v860 = vshll.u32 %v762, 16
        %v862 = vor.u32 %v859, %v860
        %v863 = vrot.slane %v859, 4
        %v865 = vshrl.u32 %v763, 16
        %v867 = vrot.slane %v865, 7
        %v868 = vshll.u32 %v763, 16
        %v870 = vor.u32 %v867, %v868
        %v871 = vsel %vm787, %v863, %v870
        %v872 = vrot.slane %v867, 4
        %v874 = vshrl.u32 %v764, 16
        %v876 = vrot.slane %v874, 7
        %v877 = vshll.u32 %v764, 16
        %v879 = vor.u32 %v876, %v877
        %v880 = vrot.slane %v876, 4
        %v882 = vshrl.u32 %v765, 16
        %v884 = vrot.slane %v882, 7
        %v885 = vshll.u32 %v765, 16
        %v887 = vor.u32 %v884, %v885
        %v888 = vsel %vm787, %v880, %v887
        %v889 = vrot.slane %v884, 4
        %v891 = vshrl.u32 %v766, 16
        %v893 = vrot.slane %v891, 7
        %v894 = vshll.u32 %v766, 16
        %v896 = vor.u32 %v893, %v894
        %v897 = vrot.slane %v893, 4
        %v899 = vshrl.u32 %v767, 16
        %v901 = vrot.slane %v899, 7
        %v902 = vshll.u32 %v767, 16
        %v904 = vor.u32 %v901, %v902
        %v905 = vsel %vm787, %v897, %v904
        %v906 = vrot.slane %v901, 4
        %v908 = vshrl.u32 %v768, 16
        %v910 = vrot.slane %v908, 7
        %v911 = vshll.u32 %v768, 16
        %v913 = vor.u32 %v910, %v911
        %v914 = vrot.slane %v910, 4
        %v916 = vshrl.u32 %v769, 16
        %v918 = vrot.slane %v916, 7
        %v919 = vshll.u32 %v769, 16
        %v921 = vor.u32 %v918, %v919
        %v922 = vsel %vm787, %v914, %v921
        %v923 = vrot.slane %v918, 4
        %v925 = vshrl.u32 %v770, 16
        %v927 = vrot.slane %v925, 7
        %v928 = vshll.u32 %v770, 16
        %v930 = vor.u32 %v927, %v928
        %v931 = vrot.slane %v927, 4
        %v933 = vshrl.u32 %v771, 16
        %v935 = vrot.slane %v933, 7
        %v936 = vshll.u32 %v771, 16
        %v938 = vor.u32 %v935, %v936
        %v939 = vsel %vm787, %v931, %v938
        %v940 = vrot.slane %v935, 4
        %v942 = vshrl.u32 %v772, 16
        %v944 = vrot.slane %v942, 7
        %v945 = vshll.u32 %v772, 16
        %v947 = vor.u32 %v944, %v945
        %v948 = vrot.slane %v944, 4
        %v950 = vshrl.u32 %v773, 16
        %v952 = vrot.slane %v950, 7
        %v953 = vshll.u32 %v773, 16
        %v955 = vor.u32 %v952, %v953
        %v956 = vsel %vm787, %v948, %v955
        %v957 = vrot.slane %v952, 4
        %v959 = vshrl.u32 %v774, 16
        %v961 = vrot.slane %v959, 7
        %v962 = vshll.u32 %v774, 16
        %v964 = vor.u32 %v961, %v962
        %v965 = vrot.slane %v961, 4
        %v967 = vshrl.u32 %v775, 16
        %v969 = vrot.slane %v967, 7
        %v970 = vshll.u32 %v775, 16
        %v972 = vor.u32 %v969, %v970
        %v973 = vsel %vm787, %v965, %v972
        %v974 = vrot.slane %v969, 4
        %v976 = vshrl.u32 %v776, 16
        %v978 = vrot.slane %v976, 7
        %v979 = vshll.u32 %v776, 16
        %v981 = vor.u32 %v978, %v979
        %v982 = vrot.slane %v978, 4
        %v984 = vshrl.u32 %v777, 16
        %v986 = vrot.slane %v984, 7
        %v987 = vshll.u32 %v777, 16
        %v989 = vor.u32 %v986, %v987
        %v990 = vsel %vm787, %v982, %v989
        %v991 = vrot.slane %v986, 4
        %v993 = vshrl.u32 %v778, 16
        %v995 = vrot.slane %v993, 7
        %v996 = vshll.u32 %v778, 16
        %v998 = vor.u32 %v995, %v996
        %v999 = vrot.slane %v995, 4
        %v1001 = vshrl.u32 %v779, 16
        %v1003 = vrot.slane %v1001, 7
        %v1004 = vshll.u32 %v779, 16
        %v1006 = vor.u32 %v1003, %v1004
        %v1007 = vsel %vm787, %v999, %v1006
        %v1008 = vrot.slane %v1003, 4
        %v1010 = vshrl.u32 %v780, 16
        %v1012 = vrot.slane %v1010, 7
        %v1013 = vshll.u32 %v780, 16
        %v1015 = vor.u32 %v1012, %v1013
        %v1016 = vrot.slane %v1012, 4
        %v1018 = vshrl.u32 %v781, 16
        %v1020 = vrot.slane %v1018, 7
        %v1021 = vshll.u32 %v781, 16
        %v1023 = vor.u32 %v1020, %v1021
        %v1024 = vsel %vm787, %v1016, %v1023
        %v1025 = vrot.slane %v1020, 4
        %v1027 = vshrl.u32 %v782, 16
        %v1029 = vrot.slane %v1027, 7
        %v1030 = vshll.u32 %v782, 16
        %v1032 = vor.u32 %v1029, %v1030
        %v1033 = vrot.slane %v1029, 4
        %v1035 = vshrl.u32 %v783, 16
        %v1037 = vrot.slane %v1035, 7
        %v1038 = vshll.u32 %v783, 16
        %v1040 = vor.u32 %v1037, %v1038
        %v1041 = vsel %vm787, %v1033, %v1040
        %v1042 = vrot.slane %v1037, 4
        %v1044 = vshrl.u32 %v784, 16
        %v1046 = vrot.slane %v1044, 7
        %v1047 = vshll.u32 %v784, 16
        %v1049 = vor.u32 %v1046, %v1047
        %v1050 = vrot.slane %v1046, 4
        %v1052 = vshrl.u32 %v785, 16
        %v1054 = vrot.slane %v1052, 7
        %v1055 = vshll.u32 %v785, 16
        %v1057 = vor.u32 %v1054, %v1055
        %v1058 = vsel %vm787, %v1050, %v1057
        %v1059 = vrot.slane %v1054, 4
        %s1108 = scalar_lea.vmem [#allocation2], 12
        %vm1109 = vcmask 125952
        %vm1110 = vmand %vm1109, %vm487
        %v1111 = vld [vmem:[%s1108] sm:$0xf]
        %v1112 = vsel %vm1110, %v794, %v1111
        %1113 = vst [vmem:[%s1108] sm:$0xf] %v1112
        %vm1114 = vcmask 125952
        %1115 = vst.msk [vmem:[%s1108 + $0x4] sm:$0xf] %vm1114, %v803
        %vm1116 = vcmask 122880
        %vm1117 = vmand %vm1116, %vm431
        %v1118 = vld [vmem:[%s1108 + $0x8] sm:$0x1]
        %v1119 = vsel %vm1117, %v804, %v1118
        %1120 = vst [vmem:[%s1108 + $0x8] sm:$0x1] %v1119
        %v1121 = vld [vmem:[%s1108 + $0xc] sm:$0xf]
        %v1122 = vsel %vm1110, %v811, %v1121
        %1123 = vst [vmem:[%s1108 + $0xc] sm:$0xf] %v1122
        %1124 = vst.msk [vmem:[%s1108 + $0x10] sm:$0xf] %vm1114, %v820
        %v1125 = vld [vmem:[%s1108 + $0x14] sm:$0x1]
        %v1126 = vsel %vm1117, %v821, %v1125
        %1127 = vst [vmem:[%s1108 + $0x14] sm:$0x1] %v1126
        %v1128 = vld [vmem:[%s1108 + $0x18] sm:$0xf]
        %v1129 = vsel %vm1110, %v828, %v1128
        %1130 = vst [vmem:[%s1108 + $0x18] sm:$0xf] %v1129
        %1131 = vst.msk [vmem:[%s1108 + $0x1c] sm:$0xf] %vm1114, %v837
        %v1132 = vld [vmem:[%s1108 + $0x20] sm:$0x1]
        %v1133 = vsel %vm1117, %v838, %v1132
        %1134 = vst [vmem:[%s1108 + $0x20] sm:$0x1] %v1133
        %v1135 = vld [vmem:[%s1108 + $0x24] sm:$0xf]
        %v1136 = vsel %vm1110, %v845, %v1135
        %1137 = vst [vmem:[%s1108 + $0x24] sm:$0xf] %v1136
        %1138 = vst.msk [vmem:[%s1108 + $0x28] sm:$0xf] %vm1114, %v854
        %v1139 = vld [vmem:[%s1108 + $0x2c] sm:$0x1]
        %v1140 = vsel %vm1117, %v855, %v1139
        %1141 = vst [vmem:[%s1108 + $0x2c] sm:$0x1] %v1140
        %v1142 = vld [vmem:[%s1108 + $0x30] sm:$0xf]
        %v1143 = vsel %vm1110, %v862, %v1142
        %1144 = vst [vmem:[%s1108 + $0x30] sm:$0xf] %v1143
        %1145 = vst.msk [vmem:[%s1108 + $0x34] sm:$0xf] %vm1114, %v871
        %v1146 = vld [vmem:[%s1108 + $0x38] sm:$0x1]
        %v1147 = vsel %vm1117, %v872, %v1146
        %1148 = vst [vmem:[%s1108 + $0x38] sm:$0x1] %v1147
        %v1149 = vld [vmem:[%s1108 + $0x3c] sm:$0xf]
        %v1150 = vsel %vm1110, %v879, %v1149
        %1151 = vst [vmem:[%s1108 + $0x3c] sm:$0xf] %v1150
        %1152 = vst.msk [vmem:[%s1108 + $0x40] sm:$0xf] %vm1114, %v888
        %v1153 = vld [vmem:[%s1108 + $0x44] sm:$0x1]
        %v1154 = vsel %vm1117, %v889, %v1153
        %1155 = vst [vmem:[%s1108 + $0x44] sm:$0x1] %v1154
        %v1156 = vld [vmem:[%s1108 + $0x48] sm:$0xf]
        %v1157 = vsel %vm1110, %v896, %v1156
        %1158 = vst [vmem:[%s1108 + $0x48] sm:$0xf] %v1157
        %1159 = vst.msk [vmem:[%s1108 + $0x4c] sm:$0xf] %vm1114, %v905
        %v1160 = vld [vmem:[%s1108 + $0x50] sm:$0x1]
        %v1161 = vsel %vm1117, %v906, %v1160
        %1162 = vst [vmem:[%s1108 + $0x50] sm:$0x1] %v1161
        %v1163 = vld [vmem:[%s1108 + $0x54] sm:$0xf]
        %v1164 = vsel %vm1110, %v913, %v1163
        %1165 = vst [vmem:[%s1108 + $0x54] sm:$0xf] %v1164
        %1166 = vst.msk [vmem:[%s1108 + $0x58] sm:$0xf] %vm1114, %v922
        %v1167 = vld [vmem:[%s1108 + $0x5c] sm:$0x1]
        %v1168 = vsel %vm1117, %v923, %v1167
        %1169 = vst [vmem:[%s1108 + $0x5c] sm:$0x1] %v1168
        %v1170 = vld [vmem:[%s1108 + $0x60] sm:$0xf]
        %v1171 = vsel %vm1110, %v930, %v1170
        %1172 = vst [vmem:[%s1108 + $0x60] sm:$0xf] %v1171
        %1173 = vst.msk [vmem:[%s1108 + $0x64] sm:$0xf] %vm1114, %v939
        %v1174 = vld [vmem:[%s1108 + $0x68] sm:$0x1]
        %v1175 = vsel %vm1117, %v940, %v1174
        %1176 = vst [vmem:[%s1108 + $0x68] sm:$0x1] %v1175
        %v1177 = vld [vmem:[%s1108 + $0x6c] sm:$0xf]
        %v1178 = vsel %vm1110, %v947, %v1177
        %1179 = vst [vmem:[%s1108 + $0x6c] sm:$0xf] %v1178
        %1180 = vst.msk [vmem:[%s1108 + $0x70] sm:$0xf] %vm1114, %v956
        %v1181 = vld [vmem:[%s1108 + $0x74] sm:$0x1]
        %v1182 = vsel %vm1117, %v957, %v1181
        %1183 = vst [vmem:[%s1108 + $0x74] sm:$0x1] %v1182
        %v1184 = vld [vmem:[%s1108 + $0x78] sm:$0xf]
        %v1185 = vsel %vm1110, %v964, %v1184
        %1186 = vst [vmem:[%s1108 + $0x78] sm:$0xf] %v1185
        %1187 = vst.msk [vmem:[%s1108 + $0x7c] sm:$0xf] %vm1114, %v973
        %v1188 = vld [vmem:[%s1108 + $0x80] sm:$0x1]
        %v1189 = vsel %vm1117, %v974, %v1188
        %1190 = vst [vmem:[%s1108 + $0x80] sm:$0x1] %v1189
        %v1191 = vld [vmem:[%s1108 + $0x84] sm:$0xf]
        %v1192 = vsel %vm1110, %v981, %v1191
        %1193 = vst [vmem:[%s1108 + $0x84] sm:$0xf] %v1192
        %1194 = vst.msk [vmem:[%s1108 + $0x88] sm:$0xf] %vm1114, %v990
        %v1195 = vld [vmem:[%s1108 + $0x8c] sm:$0x1]
        %v1196 = vsel %vm1117, %v991, %v1195
        %1197 = vst [vmem:[%s1108 + $0x8c] sm:$0x1] %v1196
        %v1198 = vld [vmem:[%s1108 + $0x90] sm:$0xf]
        %v1199 = vsel %vm1110, %v998, %v1198
        %1200 = vst [vmem:[%s1108 + $0x90] sm:$0xf] %v1199
        %1201 = vst.msk [vmem:[%s1108 + $0x94] sm:$0xf] %vm1114, %v1007
        %v1202 = vld [vmem:[%s1108 + $0x98] sm:$0x1]
        %v1203 = vsel %vm1117, %v1008, %v1202
        %1204 = vst [vmem:[%s1108 + $0x98] sm:$0x1] %v1203
        %v1205 = vld [vmem:[%s1108 + $0x9c] sm:$0xf]
        %v1206 = vsel %vm1110, %v1015, %v1205
        %1207 = vst [vmem:[%s1108 + $0x9c] sm:$0xf] %v1206
        %1208 = vst.msk [vmem:[%s1108 + $0xa0] sm:$0xf] %vm1114, %v1024
        %v1209 = vld [vmem:[%s1108 + $0xa4] sm:$0x1]
        %v1210 = vsel %vm1117, %v1025, %v1209
        %1211 = vst [vmem:[%s1108 + $0xa4] sm:$0x1] %v1210
        %v1212 = vld [vmem:[%s1108 + $0xa8] sm:$0xf]
        %v1213 = vsel %vm1110, %v1032, %v1212
        %1214 = vst [vmem:[%s1108 + $0xa8] sm:$0xf] %v1213
        %1215 = vst.msk [vmem:[%s1108 + $0xac] sm:$0xf] %vm1114, %v1041
        %v1216 = vld [vmem:[%s1108 + $0xb0] sm:$0x1]
        %v1217 = vsel %vm1117, %v1042, %v1216
        %1218 = vst [vmem:[%s1108 + $0xb0] sm:$0x1] %v1217
        %v1219 = vld [vmem:[%s1108 + $0xb4] sm:$0xf]
        %v1220 = vsel %vm1110, %v1049, %v1219
        %1221 = vst [vmem:[%s1108 + $0xb4] sm:$0xf] %v1220
        %1222 = vst.msk [vmem:[%s1108 + $0xb8] sm:$0xf] %vm1114, %v1058
        %v1223 = vld [vmem:[%s1108 + $0xbc] sm:$0x1]
        %v1224 = vsel %vm1117, %v1059, %v1223
        %1225 = vst [vmem:[%s1108 + $0xbc] sm:$0x1] %v1224
        %v1226 = vld [vmem:[%s378] sm:$0xff]
        %v1227 = vld [vmem:[%s378 + $0x8] sm:$0xff]
        %v1228 = vld [vmem:[%s378 + $0x10] sm:$0xff]
        %v1229 = vld [vmem:[%s378 + $0x18] sm:$0xff]
        %v1230 = vld [vmem:[%s378 + $0x20] sm:$0xff]
        %v1231 = vld [vmem:[%s378 + $0x28] sm:$0xff]
        %v1232 = vld [vmem:[%s378 + $0x30] sm:$0xff]
        %v1233 = vld [vmem:[%s378 + $0x38] sm:$0xff]
        %v1234 = vld [vmem:[%s378 + $0x40] sm:$0xff]
        %v1235 = vld [vmem:[%s378 + $0x48] sm:$0xff]
        %v1236 = vld [vmem:[%s378 + $0x50] sm:$0xff]
        %v1237 = vld [vmem:[%s378 + $0x58] sm:$0xff]
        %v1238 = vld [vmem:[%s378 + $0x60] sm:$0xff]
        %v1239 = vld [vmem:[%s378 + $0x68] sm:$0xff]
        %v1240 = vld [vmem:[%s378 + $0x70] sm:$0xff]
        %v1241 = vld [vmem:[%s378 + $0x78] sm:$0xff]
        %v1242 = vld [vmem:[%s378 + $0x80] sm:$0xff]
        %v1243 = vld [vmem:[%s378 + $0x88] sm:$0xff]
        %v1244 = vld [vmem:[%s378 + $0x90] sm:$0xff]
        %v1245 = vld [vmem:[%s378 + $0x98] sm:$0xff]
        %v1246 = vld [vmem:[%s378 + $0xa0] sm:$0xff]
        %v1247 = vld [vmem:[%s378 + $0xa8] sm:$0xff]
        %v1248 = vld [vmem:[%s378 + $0xb0] sm:$0xff]
        %v1249 = vld [vmem:[%s378 + $0xb8] sm:$0xff]
        %v1250 = vld [vmem:[%s378 + $0xc0] sm:$0xff]
        %v1251 = vld [vmem:[%s378 + $0xc8] sm:$0xff]
        %v1252 = vld [vmem:[%s378 + $0xd0] sm:$0xff]
        %v1253 = vld [vmem:[%s378 + $0xd8] sm:$0xff]
        %v1254 = vld [vmem:[%s378 + $0xe0] sm:$0xff]
        %v1255 = vld [vmem:[%s378 + $0xe8] sm:$0xff]
        %v1256 = vld [vmem:[%s378 + $0xf0] sm:$0xff]
        %v1257 = vld [vmem:[%s378 + $0xf8] sm:$0xff]
        %v1258 = vpack.c.bf16 %v1227, %v1226
        %v1259 = vpack.c.bf16 %v1229, %v1228
        %v1260 = vpack.c.bf16 %v1231, %v1230
        %v1261 = vpack.c.bf16 %v1233, %v1232
        %v1262 = vpack.c.bf16 %v1235, %v1234
        %v1263 = vpack.c.bf16 %v1237, %v1236
        %v1264 = vpack.c.bf16 %v1239, %v1238
        %v1265 = vpack.c.bf16 %v1241, %v1240
        %v1266 = vpack.c.bf16 %v1243, %v1242
        %v1267 = vpack.c.bf16 %v1245, %v1244
        %v1268 = vpack.c.bf16 %v1247, %v1246
        %v1269 = vpack.c.bf16 %v1249, %v1248
        %v1270 = vpack.c.bf16 %v1251, %v1250
        %v1271 = vpack.c.bf16 %v1253, %v1252
        %v1272 = vpack.c.bf16 %v1255, %v1254
        %v1273 = vpack.c.bf16 %v1257, %v1256
        %v1290 = vunpack.c.l.b16 %v1258
        %v1291 = vunpack.c.h.b16 %v1258
        %v1292 = vunpack.c.l.b16 %v1259
        %v1293 = vunpack.c.h.b16 %v1259
        %v1294 = vunpack.c.l.b16 %v1260
        %v1295 = vunpack.c.h.b16 %v1260
        %v1296 = vunpack.c.l.b16 %v1261
        %v1297 = vunpack.c.h.b16 %v1261
        %v1298 = vunpack.c.l.b16 %v1262
        %v1299 = vunpack.c.h.b16 %v1262
        %v1300 = vunpack.c.l.b16 %v1263
        %v1301 = vunpack.c.h.b16 %v1263
        %v1302 = vunpack.c.l.b16 %v1264
        %v1303 = vunpack.c.h.b16 %v1264
        %v1304 = vunpack.c.l.b16 %v1265
        %v1305 = vunpack.c.h.b16 %v1265
        %v1306 = vunpack.c.l.b16 %v1266
        %v1307 = vunpack.c.h.b16 %v1266
        %v1308 = vunpack.c.l.b16 %v1267
        %v1309 = vunpack.c.h.b16 %v1267
        %v1310 = vunpack.c.l.b16 %v1268
        %v1311 = vunpack.c.h.b16 %v1268
        %v1312 = vunpack.c.l.b16 %v1269
        %v1313 = vunpack.c.h.b16 %v1269
        %v1314 = vunpack.c.l.b16 %v1270
        %v1315 = vunpack.c.h.b16 %v1270
        %v1316 = vunpack.c.l.b16 %v1271
        %v1317 = vunpack.c.h.b16 %v1271
        %v1318 = vunpack.c.l.b16 %v1272
        %v1319 = vunpack.c.h.b16 %v1272
        %v1320 = vunpack.c.l.b16 %v1273
        %v1321 = vunpack.c.h.b16 %v1273
        %v1322 = vpack.c.b16 %v1290, %v1290
        %v1323 = vpack.c.b16 %v1291, %v1291
        %v1324 = vpack.c.b16 %v1292, %v1292
        %v1325 = vpack.c.b16 %v1293, %v1293
        %v1326 = vpack.c.b16 %v1294, %v1294
        %v1327 = vpack.c.b16 %v1295, %v1295
        %v1328 = vpack.c.b16 %v1296, %v1296
        %v1329 = vpack.c.b16 %v1297, %v1297
        %v1330 = vpack.c.b16 %v1298, %v1298
        %v1331 = vpack.c.b16 %v1299, %v1299
        %v1332 = vpack.c.b16 %v1300, %v1300
        %v1333 = vpack.c.b16 %v1301, %v1301
        %v1334 = vpack.c.b16 %v1302, %v1302
        %v1335 = vpack.c.b16 %v1303, %v1303
        %v1336 = vpack.c.b16 %v1304, %v1304
        %v1337 = vpack.c.b16 %v1305, %v1305
        %v1338 = vpack.c.b16 %v1306, %v1306
        %v1339 = vpack.c.b16 %v1307, %v1307
        %v1340 = vpack.c.b16 %v1308, %v1308
        %v1341 = vpack.c.b16 %v1309, %v1309
        %v1342 = vpack.c.b16 %v1310, %v1310
        %v1343 = vpack.c.b16 %v1311, %v1311
        %v1344 = vpack.c.b16 %v1312, %v1312
        %v1345 = vpack.c.b16 %v1313, %v1313
        %v1346 = vpack.c.b16 %v1314, %v1314
        %v1347 = vpack.c.b16 %v1315, %v1315
        %v1348 = vpack.c.b16 %v1316, %v1316
        %v1349 = vpack.c.b16 %v1317, %v1317
        %v1350 = vpack.c.b16 %v1318, %v1318
        %v1351 = vpack.c.b16 %v1319, %v1319
        %v1352 = vpack.c.b16 %v1320, %v1320
        %v1353 = vpack.c.b16 %v1321, %v1321
        %v1355 = vshrl.u32 %v1322, 16
        %v1357 = vrot.slane %v1355, 7
        %v1358 = vshll.u32 %v1322, 16
        %v1360 = vor.u32 %v1357, %v1358
        %v1361 = vrot.slane %v1357, 4
        %v1363 = vshrl.u32 %v1323, 16
        %v1365 = vrot.slane %v1363, 7
        %v1366 = vshll.u32 %v1323, 16
        %v1368 = vor.u32 %v1365, %v1366
        %v1369 = vsel %vm787, %v1361, %v1368
        %v1370 = vrot.slane %v1365, 4
        %v1372 = vshrl.u32 %v1324, 16
        %v1374 = vrot.slane %v1372, 7
        %v1375 = vshll.u32 %v1324, 16
        %v1377 = vor.u32 %v1374, %v1375
        %v1378 = vrot.slane %v1374, 4
        %v1380 = vshrl.u32 %v1325, 16
        %v1382 = vrot.slane %v1380, 7
        %v1383 = vshll.u32 %v1325, 16
        %v1385 = vor.u32 %v1382, %v1383
        %v1386 = vsel %vm787, %v1378, %v1385
        %v1387 = vrot.slane %v1382, 4
        %v1389 = vshrl.u32 %v1326, 16
        %v1391 = vrot.slane %v1389, 7
        %v1392 = vshll.u32 %v1326, 16
        %v1394 = vor.u32 %v1391, %v1392
        %v1395 = vrot.slane %v1391, 4
        %v1397 = vshrl.u32 %v1327, 16
        %v1399 = vrot.slane %v1397, 7
        %v1400 = vshll.u32 %v1327, 16
        %v1402 = vor.u32 %v1399, %v1400
        %v1403 = vsel %vm787, %v1395, %v1402
        %v1404 = vrot.slane %v1399, 4
        %v1406 = vshrl.u32 %v1328, 16
        %v1408 = vrot.slane %v1406, 7
        %v1409 = vshll.u32 %v1328, 16
        %v1411 = vor.u32 %v1408, %v1409
        %v1412 = vrot.slane %v1408, 4
        %v1414 = vshrl.u32 %v1329, 16
        %v1416 = vrot.slane %v1414, 7
        %v1417 = vshll.u32 %v1329, 16
        %v1419 = vor.u32 %v1416, %v1417
        %v1420 = vsel %vm787, %v1412, %v1419
        %v1421 = vrot.slane %v1416, 4
        %v1423 = vshrl.u32 %v1330, 16
        %v1425 = vrot.slane %v1423, 7
        %v1426 = vshll.u32 %v1330, 16
        %v1428 = vor.u32 %v1425, %v1426
        %v1429 = vrot.slane %v1425, 4
        %v1431 = vshrl.u32 %v1331, 16
        %v1433 = vrot.slane %v1431, 7
        %v1434 = vshll.u32 %v1331, 16
        %v1436 = vor.u32 %v1433, %v1434
        %v1437 = vsel %vm787, %v1429, %v1436
        %v1438 = vrot.slane %v1433, 4
        %v1440 = vshrl.u32 %v1332, 16
        %v1442 = vrot.slane %v1440, 7
        %v1443 = vshll.u32 %v1332, 16
        %v1445 = vor.u32 %v1442, %v1443
        %v1446 = vrot.slane %v1442, 4
        %v1448 = vshrl.u32 %v1333, 16
        %v1450 = vrot.slane %v1448, 7
        %v1451 = vshll.u32 %v1333, 16
        %v1453 = vor.u32 %v1450, %v1451
        %v1454 = vsel %vm787, %v1446, %v1453
        %v1455 = vrot.slane %v1450, 4
        %v1457 = vshrl.u32 %v1334, 16
        %v1459 = vrot.slane %v1457, 7
        %v1460 = vshll.u32 %v1334, 16
        %v1462 = vor.u32 %v1459, %v1460
        %v1463 = vrot.slane %v1459, 4
        %v1465 = vshrl.u32 %v1335, 16
        %v1467 = vrot.slane %v1465, 7
        %v1468 = vshll.u32 %v1335, 16
        %v1470 = vor.u32 %v1467, %v1468
        %v1471 = vsel %vm787, %v1463, %v1470
        %v1472 = vrot.slane %v1467, 4
        %v1474 = vshrl.u32 %v1336, 16
        %v1476 = vrot.slane %v1474, 7
        %v1477 = vshll.u32 %v1336, 16
        %v1479 = vor.u32 %v1476, %v1477
        %v1480 = vrot.slane %v1476, 4
        %v1482 = vshrl.u32 %v1337, 16
        %v1484 = vrot.slane %v1482, 7
        %v1485 = vshll.u32 %v1337, 16
        %v1487 = vor.u32 %v1484, %v1485
        %v1488 = vsel %vm787, %v1480, %v1487
        %v1489 = vrot.slane %v1484, 4
        %v1491 = vshrl.u32 %v1338, 16
        %v1493 = vrot.slane %v1491, 7
        %v1494 = vshll.u32 %v1338, 16
        %v1496 = vor.u32 %v1493, %v1494
        %v1497 = vrot.slane %v1493, 4
        %v1499 = vshrl.u32 %v1339, 16
        %v1501 = vrot.slane %v1499, 7
        %v1502 = vshll.u32 %v1339, 16
        %v1504 = vor.u32 %v1501, %v1502
        %v1505 = vsel %vm787, %v1497, %v1504
        %v1506 = vrot.slane %v1501, 4
        %v1508 = vshrl.u32 %v1340, 16
        %v1510 = vrot.slane %v1508, 7
        %v1511 = vshll.u32 %v1340, 16
        %v1513 = vor.u32 %v1510, %v1511
        %v1514 = vrot.slane %v1510, 4
        %v1516 = vshrl.u32 %v1341, 16
        %v1518 = vrot.slane %v1516, 7
        %v1519 = vshll.u32 %v1341, 16
        %v1521 = vor.u32 %v1518, %v1519
        %v1522 = vsel %vm787, %v1514, %v1521
        %v1523 = vrot.slane %v1518, 4
        %v1525 = vshrl.u32 %v1342, 16
        %v1527 = vrot.slane %v1525, 7
        %v1528 = vshll.u32 %v1342, 16
        %v1530 = vor.u32 %v1527, %v1528
        %v1531 = vrot.slane %v1527, 4
        %v1533 = vshrl.u32 %v1343, 16
        %v1535 = vrot.slane %v1533, 7
        %v1536 = vshll.u32 %v1343, 16
        %v1538 = vor.u32 %v1535, %v1536
        %v1539 = vsel %vm787, %v1531, %v1538
        %v1540 = vrot.slane %v1535, 4
        %v1542 = vshrl.u32 %v1344, 16
        %v1544 = vrot.slane %v1542, 7
        %v1545 = vshll.u32 %v1344, 16
        %v1547 = vor.u32 %v1544, %v1545
        %v1548 = vrot.slane %v1544, 4
        %v1550 = vshrl.u32 %v1345, 16
        %v1552 = vrot.slane %v1550, 7
        %v1553 = vshll.u32 %v1345, 16
        %v1555 = vor.u32 %v1552, %v1553
        %v1556 = vsel %vm787, %v1548, %v1555
        %v1557 = vrot.slane %v1552, 4
        %v1559 = vshrl.u32 %v1346, 16
        %v1561 = vrot.slane %v1559, 7
        %v1562 = vshll.u32 %v1346, 16
        %v1564 = vor.u32 %v1561, %v1562
        %v1565 = vrot.slane %v1561, 4
        %v1567 = vshrl.u32 %v1347, 16
        %v1569 = vrot.slane %v1567, 7
        %v1570 = vshll.u32 %v1347, 16
        %v1572 = vor.u32 %v1569, %v1570
        %v1573 = vsel %vm787, %v1565, %v1572
        %v1574 = vrot.slane %v1569, 4
        %v1576 = vshrl.u32 %v1348, 16
        %v1578 = vrot.slane %v1576, 7
        %v1579 = vshll.u32 %v1348, 16
        %v1581 = vor.u32 %v1578, %v1579
        %v1582 = vrot.slane %v1578, 4
        %v1584 = vshrl.u32 %v1349, 16
        %v1586 = vrot.slane %v1584, 7
        %v1587 = vshll.u32 %v1349, 16
        %v1589 = vor.u32 %v1586, %v1587
        %v1590 = vsel %vm787, %v1582, %v1589
        %v1591 = vrot.slane %v1586, 4
        %v1593 = vshrl.u32 %v1350, 16
        %v1595 = vrot.slane %v1593, 7
        %v1596 = vshll.u32 %v1350, 16
        %v1598 = vor.u32 %v1595, %v1596
        %v1599 = vrot.slane %v1595, 4
        %v1601 = vshrl.u32 %v1351, 16
        %v1603 = vrot.slane %v1601, 7
        %v1604 = vshll.u32 %v1351, 16
        %v1606 = vor.u32 %v1603, %v1604
        %v1607 = vsel %vm787, %v1599, %v1606
        %v1608 = vrot.slane %v1603, 4
        %v1610 = vshrl.u32 %v1352, 16
        %v1612 = vrot.slane %v1610, 7
        %v1613 = vshll.u32 %v1352, 16
        %v1615 = vor.u32 %v1612, %v1613
        %v1616 = vrot.slane %v1612, 4
        %v1618 = vshrl.u32 %v1353, 16
        %v1620 = vrot.slane %v1618, 7
        %v1621 = vshll.u32 %v1353, 16
        %v1623 = vor.u32 %v1620, %v1621
        %v1624 = vsel %vm787, %v1616, %v1623
        %v1625 = vrot.slane %v1620, 4
        %1626 = vrot.lane.b32.xlu0 %v1360, 16
        %v1627 = vpop.permute.xlu0 %1626
        %1628 = vrot.lane.b32.xlu0 %v1369, 16
        %v1629 = vpop.permute.xlu0 %1628
        %1630 = vrot.lane.b32.xlu0 %v1370, 16
        %v1631 = vpop.permute.xlu0 %1630
        %1632 = vrot.lane.b32.xlu0 %v1377, 16
        %v1633 = vpop.permute.xlu0 %1632
        %1634 = vrot.lane.b32.xlu0 %v1386, 16
        %v1635 = vpop.permute.xlu0 %1634
        %1636 = vrot.lane.b32.xlu0 %v1387, 16
        %v1637 = vpop.permute.xlu0 %1636
        %1638 = vrot.lane.b32.xlu0 %v1394, 16
        %v1639 = vpop.permute.xlu0 %1638
        %1640 = vrot.lane.b32.xlu0 %v1403, 16
        %v1641 = vpop.permute.xlu0 %1640
        %1642 = vrot.lane.b32.xlu0 %v1404, 16
        %v1643 = vpop.permute.xlu0 %1642
        %1644 = vrot.lane.b32.xlu0 %v1411, 16
        %v1645 = vpop.permute.xlu0 %1644
        %1646 = vrot.lane.b32.xlu0 %v1420, 16
        %v1647 = vpop.permute.xlu0 %1646
        %1648 = vrot.lane.b32.xlu0 %v1421, 16
        %v1649 = vpop.permute.xlu0 %1648
        %1650 = vrot.lane.b32.xlu0 %v1428, 16
        %v1651 = vpop.permute.xlu0 %1650
        %1652 = vrot.lane.b32.xlu0 %v1437, 16
        %v1653 = vpop.permute.xlu0 %1652
        %1654 = vrot.lane.b32.xlu0 %v1438, 16
        %v1655 = vpop.permute.xlu0 %1654
        %1656 = vrot.lane.b32.xlu0 %v1445, 16
        %v1657 = vpop.permute.xlu0 %1656
        %1658 = vrot.lane.b32.xlu0 %v1454, 16
        %v1659 = vpop.permute.xlu0 %1658
        %1660 = vrot.lane.b32.xlu0 %v1455, 16
        %v1661 = vpop.permute.xlu0 %1660
        %1662 = vrot.lane.b32.xlu0 %v1462, 16
        %v1663 = vpop.permute.xlu0 %1662
        %1664 = vrot.lane.b32.xlu0 %v1471, 16
        %v1665 = vpop.permute.xlu0 %1664
        %1666 = vrot.lane.b32.xlu0 %v1472, 16
        %v1667 = vpop.permute.xlu0 %1666
        %1668 = vrot.lane.b32.xlu0 %v1479, 16
        %v1669 = vpop.permute.xlu0 %1668
        %1670 = vrot.lane.b32.xlu0 %v1488, 16
        %v1671 = vpop.permute.xlu0 %1670
        %1672 = vrot.lane.b32.xlu0 %v1489, 16
        %v1673 = vpop.permute.xlu0 %1672
        %1674 = vrot.lane.b32.xlu0 %v1496, 16
        %v1675 = vpop.permute.xlu0 %1674
        %1676 = vrot.lane.b32.xlu0 %v1505, 16
        %v1677 = vpop.permute.xlu0 %1676
        %1678 = vrot.lane.b32.xlu0 %v1506, 16
        %v1679 = vpop.permute.xlu0 %1678
        %1680 = vrot.lane.b32.xlu0 %v1513, 16
        %v1681 = vpop.permute.xlu0 %1680
        %1682 = vrot.lane.b32.xlu0 %v1522, 16
        %v1683 = vpop.permute.xlu0 %1682
        %1684 = vrot.lane.b32.xlu0 %v1523, 16
        %v1685 = vpop.permute.xlu0 %1684
        %1686 = vrot.lane.b32.xlu0 %v1530, 16
        %v1687 = vpop.permute.xlu0 %1686
        %1688 = vrot.lane.b32.xlu0 %v1539, 16
        %v1689 = vpop.permute.xlu0 %1688
        %1690 = vrot.lane.b32.xlu0 %v1540, 16
        %v1691 = vpop.permute.xlu0 %1690
        %1692 = vrot.lane.b32.xlu0 %v1547, 16
        %v1693 = vpop.permute.xlu0 %1692
        %1694 = vrot.lane.b32.xlu0 %v1556, 16
        %v1695 = vpop.permute.xlu0 %1694
        %1696 = vrot.lane.b32.xlu0 %v1557, 16
        %v1697 = vpop.permute.xlu0 %1696
        %1698 = vrot.lane.b32.xlu0 %v1564, 16
        %v1699 = vpop.permute.xlu0 %1698
        %1700 = vrot.lane.b32.xlu0 %v1573, 16
        %v1701 = vpop.permute.xlu0 %1700
        %1702 = vrot.lane.b32.xlu0 %v1574, 16
        %v1703 = vpop.permute.xlu0 %1702
        %1704 = vrot.lane.b32.xlu0 %v1581, 16
        %v1705 = vpop.permute.xlu0 %1704
        %1706 = vrot.lane.b32.xlu0 %v1590, 16
        %v1707 = vpop.permute.xlu0 %1706
        %1708 = vrot.lane.b32.xlu0 %v1591, 16
        %v1709 = vpop.permute.xlu0 %1708
        %1710 = vrot.lane.b32.xlu0 %v1598, 16
        %v1711 = vpop.permute.xlu0 %1710
        %1712 = vrot.lane.b32.xlu0 %v1607, 16
        %v1713 = vpop.permute.xlu0 %1712
        %1714 = vrot.lane.b32.xlu0 %v1608, 16
        %v1715 = vpop.permute.xlu0 %1714
        %1716 = vrot.lane.b32.xlu0 %v1615, 16
        %v1717 = vpop.permute.xlu0 %1716
        %1718 = vrot.lane.b32.xlu0 %v1624, 16
        %v1719 = vpop.permute.xlu0 %1718
        %1720 = vrot.lane.b32.xlu0 %v1625, 16
        %v1721 = vpop.permute.xlu0 %1720
        %vm1770 = vcmask 257152
        %vm1771 = vmand %vm1770, %vm487
        %v1772 = vld [vmem:[%s1108] sm:$0xf]
        %v1773 = vsel %vm1771, %v1627, %v1772
        %1774 = vst [vmem:[%s1108] sm:$0xf] %v1773
        %vm1775 = vcmask 257152
        %1776 = vst.msk [vmem:[%s1108 + $0x4] sm:$0xf] %vm1775, %v1629
        %vm1777 = vcmask 254080
        %vm1778 = vmand %vm1777, %vm431
        %v1779 = vld [vmem:[%s1108 + $0x8] sm:$0x1]
        %v1780 = vsel %vm1778, %v1631, %v1779
        %1781 = vst [vmem:[%s1108 + $0x8] sm:$0x1] %v1780
        %v1782 = vld [vmem:[%s1108 + $0xc] sm:$0xf]
        %v1783 = vsel %vm1771, %v1633, %v1782
        %1784 = vst [vmem:[%s1108 + $0xc] sm:$0xf] %v1783
        %1785 = vst.msk [vmem:[%s1108 + $0x10] sm:$0xf] %vm1775, %v1635
        %v1786 = vld [vmem:[%s1108 + $0x14] sm:$0x1]
        %v1787 = vsel %vm1778, %v1637, %v1786
        %1788 = vst [vmem:[%s1108 + $0x14] sm:$0x1] %v1787
        %v1789 = vld [vmem:[%s1108 + $0x18] sm:$0xf]
        %v1790 = vsel %vm1771, %v1639, %v1789
        %1791 = vst [vmem:[%s1108 + $0x18] sm:$0xf] %v1790
        %1792 = vst.msk [vmem:[%s1108 + $0x1c] sm:$0xf] %vm1775, %v1641
        %v1793 = vld [vmem:[%s1108 + $0x20] sm:$0x1]
        %v1794 = vsel %vm1778, %v1643, %v1793
        %1795 = vst [vmem:[%s1108 + $0x20] sm:$0x1] %v1794
        %v1796 = vld [vmem:[%s1108 + $0x24] sm:$0xf]
        %v1797 = vsel %vm1771, %v1645, %v1796
        %1798 = vst [vmem:[%s1108 + $0x24] sm:$0xf] %v1797
        %1799 = vst.msk [vmem:[%s1108 + $0x28] sm:$0xf] %vm1775, %v1647
        %v1800 = vld [vmem:[%s1108 + $0x2c] sm:$0x1]
        %v1801 = vsel %vm1778, %v1649, %v1800
        %1802 = vst [vmem:[%s1108 + $0x2c] sm:$0x1] %v1801
        %v1803 = vld [vmem:[%s1108 + $0x30] sm:$0xf]
        %v1804 = vsel %vm1771, %v1651, %v1803
        %1805 = vst [vmem:[%s1108 + $0x30] sm:$0xf] %v1804
        %1806 = vst.msk [vmem:[%s1108 + $0x34] sm:$0xf] %vm1775, %v1653
        %v1807 = vld [vmem:[%s1108 + $0x38] sm:$0x1]
        %v1808 = vsel %vm1778, %v1655, %v1807
        %1809 = vst [vmem:[%s1108 + $0x38] sm:$0x1] %v1808
        %v1810 = vld [vmem:[%s1108 + $0x3c] sm:$0xf]
        %v1811 = vsel %vm1771, %v1657, %v1810
        %1812 = vst [vmem:[%s1108 + $0x3c] sm:$0xf] %v1811
        %1813 = vst.msk [vmem:[%s1108 + $0x40] sm:$0xf] %vm1775, %v1659
        %v1814 = vld [vmem:[%s1108 + $0x44] sm:$0x1]
        %v1815 = vsel %vm1778, %v1661, %v1814
        %1816 = vst [vmem:[%s1108 + $0x44] sm:$0x1] %v1815
        %v1817 = vld [vmem:[%s1108 + $0x48] sm:$0xf]
        %v1818 = vsel %vm1771, %v1663, %v1817
        %1819 = vst [vmem:[%s1108 + $0x48] sm:$0xf] %v1818
        %1820 = vst.msk [vmem:[%s1108 + $0x4c] sm:$0xf] %vm1775, %v1665
        %v1821 = vld [vmem:[%s1108 + $0x50] sm:$0x1]
        %v1822 = vsel %vm1778, %v1667, %v1821
        %1823 = vst [vmem:[%s1108 + $0x50] sm:$0x1] %v1822
        %v1824 = vld [vmem:[%s1108 + $0x54] sm:$0xf]
        %v1825 = vsel %vm1771, %v1669, %v1824
        %1826 = vst [vmem:[%s1108 + $0x54] sm:$0xf] %v1825
        %1827 = vst.msk [vmem:[%s1108 + $0x58] sm:$0xf] %vm1775, %v1671
        %v1828 = vld [vmem:[%s1108 + $0x5c] sm:$0x1]
        %v1829 = vsel %vm1778, %v1673, %v1828
        %1830 = vst [vmem:[%s1108 + $0x5c] sm:$0x1] %v1829
        %v1831 = vld [vmem:[%s1108 + $0x60] sm:$0xf]
        %v1832 = vsel %vm1771, %v1675, %v1831
        %1833 = vst [vmem:[%s1108 + $0x60] sm:$0xf] %v1832
        %1834 = vst.msk [vmem:[%s1108 + $0x64] sm:$0xf] %vm1775, %v1677
        %v1835 = vld [vmem:[%s1108 + $0x68] sm:$0x1]
        %v1836 = vsel %vm1778, %v1679, %v1835
        %1837 = vst [vmem:[%s1108 + $0x68] sm:$0x1] %v1836
        %v1838 = vld [vmem:[%s1108 + $0x6c] sm:$0xf]
        %v1839 = vsel %vm1771, %v1681, %v1838
        %1840 = vst [vmem:[%s1108 + $0x6c] sm:$0xf] %v1839
        %1841 = vst.msk [vmem:[%s1108 + $0x70] sm:$0xf] %vm1775, %v1683
        %v1842 = vld [vmem:[%s1108 + $0x74] sm:$0x1]
        %v1843 = vsel %vm1778, %v1685, %v1842
        %1844 = vst [vmem:[%s1108 + $0x74] sm:$0x1] %v1843
        %v1845 = vld [vmem:[%s1108 + $0x78] sm:$0xf]
        %v1846 = vsel %vm1771, %v1687, %v1845
        %1847 = vst [vmem:[%s1108 + $0x78] sm:$0xf] %v1846
        %1848 = vst.msk [vmem:[%s1108 + $0x7c] sm:$0xf] %vm1775, %v1689
        %v1849 = vld [vmem:[%s1108 + $0x80] sm:$0x1]
        %v1850 = vsel %vm1778, %v1691, %v1849
        %1851 = vst [vmem:[%s1108 + $0x80] sm:$0x1] %v1850
        %v1852 = vld [vmem:[%s1108 + $0x84] sm:$0xf]
        %v1853 = vsel %vm1771, %v1693, %v1852
        %1854 = vst [vmem:[%s1108 + $0x84] sm:$0xf] %v1853
        %1855 = vst.msk [vmem:[%s1108 + $0x88] sm:$0xf] %vm1775, %v1695
        %v1856 = vld [vmem:[%s1108 + $0x8c] sm:$0x1]
        %v1857 = vsel %vm1778, %v1697, %v1856
        %1858 = vst [vmem:[%s1108 + $0x8c] sm:$0x1] %v1857
        %v1859 = vld [vmem:[%s1108 + $0x90] sm:$0xf]
        %v1860 = vsel %vm1771, %v1699, %v1859
        %1861 = vst [vmem:[%s1108 + $0x90] sm:$0xf] %v1860
        %1862 = vst.msk [vmem:[%s1108 + $0x94] sm:$0xf] %vm1775, %v1701
        %v1863 = vld [vmem:[%s1108 + $0x98] sm:$0x1]
        %v1864 = vsel %vm1778, %v1703, %v1863
        %1865 = vst [vmem:[%s1108 + $0x98] sm:$0x1] %v1864
        %v1866 = vld [vmem:[%s1108 + $0x9c] sm:$0xf]
        %v1867 = vsel %vm1771, %v1705, %v1866
        %1868 = vst [vmem:[%s1108 + $0x9c] sm:$0xf] %v1867
        %1869 = vst.msk [vmem:[%s1108 + $0xa0] sm:$0xf] %vm1775, %v1707
        %v1870 = vld [vmem:[%s1108 + $0xa4] sm:$0x1]
        %v1871 = vsel %vm1778, %v1709, %v1870
        %1872 = vst [vmem:[%s1108 + $0xa4] sm:$0x1] %v1871
        %v1873 = vld [vmem:[%s1108 + $0xa8] sm:$0xf]
        %v1874 = vsel %vm1771, %v1711, %v1873
        %1875 = vst [vmem:[%s1108 + $0xa8] sm:$0xf] %v1874
        %1876 = vst.msk [vmem:[%s1108 + $0xac] sm:$0xf] %vm1775, %v1713
        %v1877 = vld [vmem:[%s1108 + $0xb0] sm:$0x1]
        %v1878 = vsel %vm1778, %v1715, %v1877
        %1879 = vst [vmem:[%s1108 + $0xb0] sm:$0x1] %v1878
        %v1880 = vld [vmem:[%s1108 + $0xb4] sm:$0xf]
        %v1881 = vsel %vm1771, %v1717, %v1880
        %1882 = vst [vmem:[%s1108 + $0xb4] sm:$0xf] %v1881
        %1883 = vst.msk [vmem:[%s1108 + $0xb8] sm:$0xf] %vm1775, %v1719
        %v1884 = vld [vmem:[%s1108 + $0xbc] sm:$0x1]
        %v1885 = vsel %vm1778, %v1721, %v1884
        %1886 = vst [vmem:[%s1108 + $0xbc] sm:$0x1] %v1885
        %v1887 = vld [vmem:[#allocation2] sm:$0xf]
        %v1888 = vld [vmem:[#allocation2 + $0x4] sm:$0xf]
        %v1889 = vld [vmem:[#allocation2 + $0xc] sm:$0xf]
        %v1890 = vld [vmem:[#allocation2 + $0x10] sm:$0xf]
        %v1891 = vld [vmem:[#allocation2 + $0x18] sm:$0xf]
        %v1892 = vld [vmem:[#allocation2 + $0x1c] sm:$0xf]
        %v1893 = vld [vmem:[#allocation2 + $0x24] sm:$0xf]
        %v1894 = vld [vmem:[#allocation2 + $0x28] sm:$0xf]
        %v1895 = vld [vmem:[#allocation2 + $0x30] sm:$0xf]
        %v1896 = vld [vmem:[#allocation2 + $0x34] sm:$0xf]
        %v1897 = vld [vmem:[#allocation2 + $0x3c] sm:$0xf]
        %v1898 = vld [vmem:[#allocation2 + $0x40] sm:$0xf]
        %v1899 = vld [vmem:[#allocation2 + $0x48] sm:$0xf]
        %v1900 = vld [vmem:[#allocation2 + $0x4c] sm:$0xf]
        %v1901 = vld [vmem:[#allocation2 + $0x54] sm:$0xf]
        %v1902 = vld [vmem:[#allocation2 + $0x58] sm:$0xf]
        %v1903 = vld [vmem:[#allocation2 + $0x60] sm:$0xf]
        %v1904 = vld [vmem:[#allocation2 + $0x64] sm:$0xf]
        %v1905 = vld [vmem:[#allocation2 + $0x6c] sm:$0xf]
        %v1906 = vld [vmem:[#allocation2 + $0x70] sm:$0xf]
        %v1907 = vld [vmem:[#allocation2 + $0x78] sm:$0xf]
        %v1908 = vld [vmem:[#allocation2 + $0x7c] sm:$0xf]
        %v1909 = vld [vmem:[#allocation2 + $0x84] sm:$0xf]
        %v1910 = vld [vmem:[#allocation2 + $0x88] sm:$0xf]
        %v1911 = vld [vmem:[#allocation2 + $0x90] sm:$0xf]
        %v1912 = vld [vmem:[#allocation2 + $0x94] sm:$0xf]
        %v1913 = vld [vmem:[#allocation2 + $0x9c] sm:$0xf]
        %v1914 = vld [vmem:[#allocation2 + $0xa0] sm:$0xf]
        %v1915 = vld [vmem:[#allocation2 + $0xa8] sm:$0xf]
        %v1916 = vld [vmem:[#allocation2 + $0xac] sm:$0xf]
        %v1917 = vld [vmem:[#allocation2 + $0xb4] sm:$0xf]
        %v1918 = vld [vmem:[#allocation2 + $0xb8] sm:$0xf]
        %v1919 = vld [vmem:[%s2] sm:$0xf]
        %v1920 = vld [vmem:[%s2 + $0x4] sm:$0xf]
        %v1921 = vld [vmem:[%s2 + $0x8] sm:$0xf]
        %v1922 = vld [vmem:[%s2 + $0xc] sm:$0xf]
        %v1923 = vld [vmem:[#allocation2 + $0x8] sm:$0x1]
        %v1924 = vld [vmem:[#allocation2 + $0x14] sm:$0x1]
        %v1925 = vld [vmem:[#allocation2 + $0x20] sm:$0x1]
        %v1926 = vld [vmem:[#allocation2 + $0x2c] sm:$0x1]
        %v1927 = vld [vmem:[#allocation2 + $0x38] sm:$0x1]
        %v1928 = vld [vmem:[#allocation2 + $0x44] sm:$0x1]
        %v1929 = vld [vmem:[#allocation2 + $0x50] sm:$0x1]
        %v1930 = vld [vmem:[#allocation2 + $0x5c] sm:$0x1]
        %v1931 = vld [vmem:[#allocation2 + $0x68] sm:$0x1]
        %v1932 = vld [vmem:[#allocation2 + $0x74] sm:$0x1]
        %v1933 = vld [vmem:[#allocation2 + $0x80] sm:$0x1]
        %v1934 = vld [vmem:[#allocation2 + $0x8c] sm:$0x1]
        %v1935 = vld [vmem:[#allocation2 + $0x98] sm:$0x1]
        %v1936 = vld [vmem:[#allocation2 + $0xa4] sm:$0x1]
        %v1937 = vld [vmem:[#allocation2 + $0xb0] sm:$0x1]
        %v1938 = vld [vmem:[#allocation2 + $0xbc] sm:$0x1]
        %vm1939 = vsmask.f32 3328
        %vm1940 = vsmask.f32 7440
        %vm1941 = vmor %vm1939, %vm1940
        %v1943 = vshrl.u32 %v1887, 16
        %v1945 = vrot.slane %v1943, 4
        %v1946 = vshll.u32 %v1887, 16
        %v1948 = vrot.slane %v1946, 5
        %v1949 = vor.u32 %v1945, %v1948
        %v1950 = vrot.slane %v1949, 4
        %v1952 = vshll.u32 %v1888, 16
        %v1954 = vrot.slane %v1952, 5
        %v1955 = vsel %vm1941, %v1950, %v1954
        %v1956 = vshrl.u32 %v1888, 16
        %v1958 = vrot.slane %v1956, 4
        %v1959 = vor.u32 %v1958, %v1954
        %v1960 = vrot.slane %v1959, 4
        %v1962 = vshll.u32 %v1923, 16
        %v1964 = vrot.slane %v1962, 5
        %v1965 = vsel %vm1941, %v1960, %v1964
        %v1967 = vshrl.u32 %v1889, 16
        %v1969 = vrot.slane %v1967, 4
        %v1970 = vshll.u32 %v1889, 16
        %v1972 = vrot.slane %v1970, 5
        %v1973 = vor.u32 %v1969, %v1972
        %v1974 = vrot.slane %v1973, 4
        %v1976 = vshll.u32 %v1890, 16
        %v1978 = vrot.slane %v1976, 5
        %v1979 = vsel %vm1941, %v1974, %v1978
        %v1980 = vshrl.u32 %v1890, 16
        %v1982 = vrot.slane %v1980, 4
        %v1983 = vor.u32 %v1982, %v1978
        %v1984 = vrot.slane %v1983, 4
        %v1986 = vshll.u32 %v1924, 16
        %v1988 = vrot.slane %v1986, 5
        %v1989 = vsel %vm1941, %v1984, %v1988
        %v1991 = vshrl.u32 %v1891, 16
        %v1993 = vrot.slane %v1991, 4
        %v1994 = vshll.u32 %v1891, 16
        %v1996 = vrot.slane %v1994, 5
        %v1997 = vor.u32 %v1993, %v1996
        %v1998 = vrot.slane %v1997, 4
        %v2000 = vshll.u32 %v1892, 16
        %v2002 = vrot.slane %v2000, 5
        %v2003 = vsel %vm1941, %v1998, %v2002
        %v2004 = vshrl.u32 %v1892, 16
        %v2006 = vrot.slane %v2004, 4
        %v2007 = vor.u32 %v2006, %v2002
        %v2008 = vrot.slane %v2007, 4
        %v2010 = vshll.u32 %v1925, 16
        %v2012 = vrot.slane %v2010, 5
        %v2013 = vsel %vm1941, %v2008, %v2012
        %v2015 = vshrl.u32 %v1893, 16
        %v2017 = vrot.slane %v2015, 4
        %v2018 = vshll.u32 %v1893, 16
        %v2020 = vrot.slane %v2018, 5
        %v2021 = vor.u32 %v2017, %v2020
        %v2022 = vrot.slane %v2021, 4
        %v2024 = vshll.u32 %v1894, 16
        %v2026 = vrot.slane %v2024, 5
        %v2027 = vsel %vm1941, %v2022, %v2026
        %v2028 = vshrl.u32 %v1894, 16
        %v2030 = vrot.slane %v2028, 4
        %v2031 = vor.u32 %v2030, %v2026
        %v2032 = vrot.slane %v2031, 4
        %v2034 = vshll.u32 %v1926, 16
        %v2036 = vrot.slane %v2034, 5
        %v2037 = vsel %vm1941, %v2032, %v2036
        %v2039 = vshrl.u32 %v1895, 16
        %v2041 = vrot.slane %v2039, 4
        %v2042 = vshll.u32 %v1895, 16
        %v2044 = vrot.slane %v2042, 5
        %v2045 = vor.u32 %v2041, %v2044
        %v2046 = vrot.slane %v2045, 4
        %v2048 = vshll.u32 %v1896, 16
        %v2050 = vrot.slane %v2048, 5
        %v2051 = vsel %vm1941, %v2046, %v2050
        %v2052 = vshrl.u32 %v1896, 16
        %v2054 = vrot.slane %v2052, 4
        %v2055 = vor.u32 %v2054, %v2050
        %v2056 = vrot.slane %v2055, 4
        %v2058 = vshll.u32 %v1927, 16
        %v2060 = vrot.slane %v2058, 5
        %v2061 = vsel %vm1941, %v2056, %v2060
        %v2063 = vshrl.u32 %v1897, 16
        %v2065 = vrot.slane %v2063, 4
        %v2066 = vshll.u32 %v1897, 16
        %v2068 = vrot.slane %v2066, 5
        %v2069 = vor.u32 %v2065, %v2068
        %v2070 = vrot.slane %v2069, 4
        %v2072 = vshll.u32 %v1898, 16
        %v2074 = vrot.slane %v2072, 5
        %v2075 = vsel %vm1941, %v2070, %v2074
        %v2076 = vshrl.u32 %v1898, 16
        %v2078 = vrot.slane %v2076, 4
        %v2079 = vor.u32 %v2078, %v2074
        %v2080 = vrot.slane %v2079, 4
        %v2082 = vshll.u32 %v1928, 16
        %v2084 = vrot.slane %v2082, 5
        %v2085 = vsel %vm1941, %v2080, %v2084
        %v2087 = vshrl.u32 %v1899, 16
        %v2089 = vrot.slane %v2087, 4
        %v2090 = vshll.u32 %v1899, 16
        %v2092 = vrot.slane %v2090, 5
        %v2093 = vor.u32 %v2089, %v2092
        %v2094 = vrot.slane %v2093, 4
        %v2096 = vshll.u32 %v1900, 16
        %v2098 = vrot.slane %v2096, 5
        %v2099 = vsel %vm1941, %v2094, %v2098
        %v2100 = vshrl.u32 %v1900, 16
        %v2102 = vrot.slane %v2100, 4
        %v2103 = vor.u32 %v2102, %v2098
        %v2104 = vrot.slane %v2103, 4
        %v2106 = vshll.u32 %v1929, 16
        %v2108 = vrot.slane %v2106, 5
        %v2109 = vsel %vm1941, %v2104, %v2108
        %v2111 = vshrl.u32 %v1901, 16
        %v2113 = vrot.slane %v2111, 4
        %v2114 = vshll.u32 %v1901, 16
        %v2116 = vrot.slane %v2114, 5
        %v2117 = vor.u32 %v2113, %v2116
        %v2118 = vrot.slane %v2117, 4
        %v2120 = vshll.u32 %v1902, 16
        %v2122 = vrot.slane %v2120, 5
        %v2123 = vsel %vm1941, %v2118, %v2122
        %v2124 = vshrl.u32 %v1902, 16
        %v2126 = vrot.slane %v2124, 4
        %v2127 = vor.u32 %v2126, %v2122
        %v2128 = vrot.slane %v2127, 4
        %v2130 = vshll.u32 %v1930, 16
        %v2132 = vrot.slane %v2130, 5
        %v2133 = vsel %vm1941, %v2128, %v2132
        %v2135 = vshrl.u32 %v1903, 16
        %v2137 = vrot.slane %v2135, 4
        %v2138 = vshll.u32 %v1903, 16
        %v2140 = vrot.slane %v2138, 5
        %v2141 = vor.u32 %v2137, %v2140
        %v2142 = vrot.slane %v2141, 4
        %v2144 = vshll.u32 %v1904, 16
        %v2146 = vrot.slane %v2144, 5
        %v2147 = vsel %vm1941, %v2142, %v2146
        %v2148 = vshrl.u32 %v1904, 16
        %v2150 = vrot.slane %v2148, 4
        %v2151 = vor.u32 %v2150, %v2146
        %v2152 = vrot.slane %v2151, 4
        %v2154 = vshll.u32 %v1931, 16
        %v2156 = vrot.slane %v2154, 5
        %v2157 = vsel %vm1941, %v2152, %v2156
        %v2159 = vshrl.u32 %v1905, 16
        %v2161 = vrot.slane %v2159, 4
        %v2162 = vshll.u32 %v1905, 16
        %v2164 = vrot.slane %v2162, 5
        %v2165 = vor.u32 %v2161, %v2164
        %v2166 = vrot.slane %v2165, 4
        %v2168 = vshll.u32 %v1906, 16
        %v2170 = vrot.slane %v2168, 5
        %v2171 = vsel %vm1941, %v2166, %v2170
        %v2172 = vshrl.u32 %v1906, 16
        %v2174 = vrot.slane %v2172, 4
        %v2175 = vor.u32 %v2174, %v2170
        %v2176 = vrot.slane %v2175, 4
        %v2178 = vshll.u32 %v1932, 16
        %v2180 = vrot.slane %v2178, 5
        %v2181 = vsel %vm1941, %v2176, %v2180
        %v2183 = vshrl.u32 %v1907, 16
        %v2185 = vrot.slane %v2183, 4
        %v2186 = vshll.u32 %v1907, 16
        %v2188 = vrot.slane %v2186, 5
        %v2189 = vor.u32 %v2185, %v2188
        %v2190 = vrot.slane %v2189, 4
        %v2192 = vshll.u32 %v1908, 16
        %v2194 = vrot.slane %v2192, 5
        %v2195 = vsel %vm1941, %v2190, %v2194
        %v2196 = vshrl.u32 %v1908, 16
        %v2198 = vrot.slane %v2196, 4
        %v2199 = vor.u32 %v2198, %v2194
        %v2200 = vrot.slane %v2199, 4
        %v2202 = vshll.u32 %v1933, 16
        %v2204 = vrot.slane %v2202, 5
        %v2205 = vsel %vm1941, %v2200, %v2204
        %v2207 = vshrl.u32 %v1909, 16
        %v2209 = vrot.slane %v2207, 4
        %v2210 = vshll.u32 %v1909, 16
        %v2212 = vrot.slane %v2210, 5
        %v2213 = vor.u32 %v2209, %v2212
        %v2214 = vrot.slane %v2213, 4
        %v2216 = vshll.u32 %v1910, 16
        %v2218 = vrot.slane %v2216, 5
        %v2219 = vsel %vm1941, %v2214, %v2218
        %v2220 = vshrl.u32 %v1910, 16
        %v2222 = vrot.slane %v2220, 4
        %v2223 = vor.u32 %v2222, %v2218
        %v2224 = vrot.slane %v2223, 4
        %v2226 = vshll.u32 %v1934, 16
        %v2228 = vrot.slane %v2226, 5
        %v2229 = vsel %vm1941, %v2224, %v2228
        %v2231 = vshrl.u32 %v1911, 16
        %v2233 = vrot.slane %v2231, 4
        %v2234 = vshll.u32 %v1911, 16
        %v2236 = vrot.slane %v2234, 5
        %v2237 = vor.u32 %v2233, %v2236
        %v2238 = vrot.slane %v2237, 4
        %v2240 = vshll.u32 %v1912, 16
        %v2242 = vrot.slane %v2240, 5
        %v2243 = vsel %vm1941, %v2238, %v2242
        %v2244 = vshrl.u32 %v1912, 16
        %v2246 = vrot.slane %v2244, 4
        %v2247 = vor.u32 %v2246, %v2242
        %v2248 = vrot.slane %v2247, 4
        %v2250 = vshll.u32 %v1935, 16
        %v2252 = vrot.slane %v2250, 5
        %v2253 = vsel %vm1941, %v2248, %v2252
        %v2255 = vshrl.u32 %v1913, 16
        %v2257 = vrot.slane %v2255, 4
        %v2258 = vshll.u32 %v1913, 16
        %v2260 = vrot.slane %v2258, 5
        %v2261 = vor.u32 %v2257, %v2260
        %v2262 = vrot.slane %v2261, 4
        %v2264 = vshll.u32 %v1914, 16
        %v2266 = vrot.slane %v2264, 5
        %v2267 = vsel %vm1941, %v2262, %v2266
        %v2268 = vshrl.u32 %v1914, 16
        %v2270 = vrot.slane %v2268, 4
        %v2271 = vor.u32 %v2270, %v2266
        %v2272 = vrot.slane %v2271, 4
        %v2274 = vshll.u32 %v1936, 16
        %v2276 = vrot.slane %v2274, 5
        %v2277 = vsel %vm1941, %v2272, %v2276
        %v2279 = vshrl.u32 %v1915, 16
        %v2281 = vrot.slane %v2279, 4
        %v2282 = vshll.u32 %v1915, 16
        %v2284 = vrot.slane %v2282, 5
        %v2285 = vor.u32 %v2281, %v2284
        %v2286 = vrot.slane %v2285, 4
        %v2288 = vshll.u32 %v1916, 16
        %v2290 = vrot.slane %v2288, 5
        %v2291 = vsel %vm1941, %v2286, %v2290
        %v2292 = vshrl.u32 %v1916, 16
        %v2294 = vrot.slane %v2292, 4
        %v2295 = vor.u32 %v2294, %v2290
        %v2296 = vrot.slane %v2295, 4
        %v2298 = vshll.u32 %v1937, 16
        %v2300 = vrot.slane %v2298, 5
        %v2301 = vsel %vm1941, %v2296, %v2300
        %v2303 = vshrl.u32 %v1917, 16
        %v2305 = vrot.slane %v2303, 4
        %v2306 = vshll.u32 %v1917, 16
        %v2308 = vrot.slane %v2306, 5
        %v2309 = vor.u32 %v2305, %v2308
        %v2310 = vrot.slane %v2309, 4
        %v2312 = vshll.u32 %v1918, 16
        %v2314 = vrot.slane %v2312, 5
        %v2315 = vsel %vm1941, %v2310, %v2314
        %v2316 = vshrl.u32 %v1918, 16
        %v2318 = vrot.slane %v2316, 4
        %v2319 = vor.u32 %v2318, %v2314
        %v2320 = vrot.slane %v2319, 4
        %v2322 = vshll.u32 %v1938, 16
        %v2324 = vrot.slane %v2322, 5
        %v2325 = vsel %vm1941, %v2320, %v2324
        %v2326 = vld [vmem:[%s2 + $0x10] sm:$0xf]
        %v2327 = vld [vmem:[%s2 + $0x14] sm:$0xf]
        %v2328 = vld [vmem:[%s2 + $0x18] sm:$0xf]
        %v2329 = vld [vmem:[%s2 + $0x1c] sm:$0xf]
        %v2330 = vunpack.c.l.b16 %v1955
        %v2331 = vunpack.c.l.b16 %v1965
        %v2332 = vunpack.c.l.b16 %v1979
        %v2333 = vunpack.c.l.b16 %v1989
        %v2334 = vunpack.c.l.b16 %v2003
        %v2335 = vunpack.c.l.b16 %v2013
        %v2336 = vunpack.c.l.b16 %v2027
        %v2337 = vunpack.c.l.b16 %v2037
        %v2338 = vunpack.c.l.b16 %v2051
        %v2339 = vunpack.c.l.b16 %v2061
        %v2340 = vunpack.c.l.b16 %v2075
        %v2341 = vunpack.c.l.b16 %v2085
        %v2342 = vunpack.c.l.b16 %v2099
        %v2343 = vunpack.c.l.b16 %v2109
        %v2344 = vunpack.c.l.b16 %v2123
        %v2345 = vunpack.c.l.b16 %v2133
        %v2346 = vunpack.c.l.b16 %v2147
        %v2347 = vunpack.c.l.b16 %v2157
        %v2348 = vunpack.c.l.b16 %v2171
        %v2349 = vunpack.c.l.b16 %v2181
        %v2350 = vunpack.c.l.b16 %v2195
        %v2351 = vunpack.c.l.b16 %v2205
        %v2352 = vunpack.c.l.b16 %v2219
        %v2353 = vunpack.c.l.b16 %v2229
        %v2354 = vunpack.c.l.b16 %v2243
        %v2355 = vunpack.c.l.b16 %v2253
        %v2356 = vunpack.c.l.b16 %v2267
        %v2357 = vunpack.c.l.b16 %v2277
        %v2358 = vunpack.c.l.b16 %v2291
        %v2359 = vunpack.c.l.b16 %v2301
        %v2360 = vunpack.c.l.b16 %v2315
        %v2361 = vunpack.c.l.b16 %v2325
        %v2362 = vpack.c.b16 %v2331, %v2330
        %v2363 = vpack.c.b16 %v2333, %v2332
        %v2364 = vpack.c.b16 %v2335, %v2334
        %v2365 = vpack.c.b16 %v2337, %v2336
        %v2366 = vpack.c.b16 %v2339, %v2338
        %v2367 = vpack.c.b16 %v2341, %v2340
        %v2368 = vpack.c.b16 %v2343, %v2342
        %v2369 = vpack.c.b16 %v2345, %v2344
        %v2370 = vpack.c.b16 %v2347, %v2346
        %v2371 = vpack.c.b16 %v2349, %v2348
        %v2372 = vpack.c.b16 %v2351, %v2350
        %v2373 = vpack.c.b16 %v2353, %v2352
        %v2374 = vpack.c.b16 %v2355, %v2354
        %v2375 = vpack.c.b16 %v2357, %v2356
        %v2376 = vpack.c.b16 %v2359, %v2358
        %v2377 = vpack.c.b16 %v2361, %v2360
        %v2382 = vunpack.c.l.b16 %v2326
        %v2383 = vunpack.c.l.b16 %v2327
        %v2384 = vunpack.c.l.b16 %v2328
        %v2385 = vunpack.c.l.b16 %v2329
        %v2386 = vpack.c.b16 %v2383, %v2382
        %v2387 = vpack.c.b16 %v2385, %v2384
        %vm2390 = vcmask 261120
        %v2392 = vsel %vm2390, %v2362, 0
        %v2395 = vsel %vm2390, %v2363, 0
        %v2398 = vsel %vm2390, %v2364, 0
        %v2401 = vsel %vm2390, %v2365, 0
        %v2404 = vsel %vm2390, %v2366, 0
        %v2407 = vsel %vm2390, %v2367, 0
        %v2410 = vsel %vm2390, %v2368, 0
        %v2413 = vsel %vm2390, %v2369, 0
        %v2416 = vsel %vm2390, %v2370, 0
        %v2419 = vsel %vm2390, %v2371, 0
        %v2422 = vsel %vm2390, %v2372, 0
        %v2425 = vsel %vm2390, %v2373, 0
        %v2428 = vsel %vm2390, %v2374, 0
        %v2431 = vsel %vm2390, %v2375, 0
        %v2434 = vsel %vm2390, %v2376, 0
        %v2437 = vsel %vm2390, %v2377, 0
        %2439 = vmatprep.subr.bf16.mxu0 0
        %2440 = vmatpush1.bf16.msra.mxu0 0
        %2441 = vmatprep.subr.bf16.mxu0 0
        %2442 = vmatpush1.bf16.msra.mxu0 0
        %2443 = vmatprep.subr.bf16.mxu0 0
        %2444 = vmatpush1.bf16.msra.mxu0 0
        %2445 = vmatprep.subr.bf16.mxu0 0
        %2446 = vmatpush1.bf16.msra.mxu0 0
        %2447 = vmatprep.subr.bf16.mxu0 0
        %2448 = vmatpush1.bf16.msra.mxu0 0
        %2449 = vmatprep.subr.bf16.mxu0 0
        %2450 = vmatpush1.bf16.msra.mxu0 0
        %2451 = vmatprep.subr.bf16.mxu0 0
        %2452 = vmatpush1.bf16.msra.mxu0 %v2387
        %2453 = vmatprep.subr.bf16.mxu0 0
        %2454 = vmatpush1.bf16.msra.mxu0 %v2386
        %2455 = vmatprep.subr.bf16.mxu0 0
        %2456 = vmatpush2.bf16.msra.mxu0 0
        %2457 = vmatprep.subr.bf16.mxu0 0
        %2458 = vmatpush2.bf16.msra.mxu0 0
        %2459 = vmatprep.subr.bf16.mxu0 0
        %2460 = vmatpush2.bf16.msra.mxu0 0
        %2461 = vmatprep.subr.bf16.mxu0 0
        %2462 = vmatpush2.bf16.msra.mxu0 0
        %2463 = vmatprep.subr.bf16.mxu0 0
        %2464 = vmatpush2.bf16.msra.mxu0 0
        %2465 = vmatprep.subr.bf16.mxu0 0
        %2466 = vmatpush2.bf16.msra.mxu0 0
        %2467 = vmatprep.subr.bf16.mxu0 0
        %2468 = vmatpush2.bf16.msra.mxu0 0
        %2469 = vmatprep.subr.bf16.mxu0 0
        %2470 = vmatpush2.bf16.msra.mxu0 0
        %2471 = vmatprep.mubr.bf16.mxu0 0
        %2472 = vmatmul.mubr.bf16.gmra.mxu0 %v2392
        %v2473 = vpop.f32.mrf.mxu0
        %v2474 = vadd.f32 0.0, %v2473
        %v2475 = vpop.f32.mrf.mxu0
        %v2476 = vpop.f32.mrf.mxu0
        %v2477 = vadd.f32 0.0, %v2476
        %v2478 = vpop.f32.mrf.mxu0
        %2479 = vmatprep.mubr.bf16.mxu0 0
        %2480 = vmatmul.mubr.bf16.gmra.mxu0 %v2395
        %v2481 = vpop.f32.mrf.mxu0
        %v2482 = vadd.f32 0.0, %v2481
        %v2483 = vpop.f32.mrf.mxu0
        %v2484 = vpop.f32.mrf.mxu0
        %v2485 = vadd.f32 0.0, %v2484
        %v2486 = vpop.f32.mrf.mxu0
        %2487 = vmatprep.mubr.bf16.mxu0 0
        %2488 = vmatmul.mubr.bf16.gmra.mxu0 %v2398
        %v2489 = vpop.f32.mrf.mxu0
        %v2490 = vadd.f32 0.0, %v2489
        %v2491 = vpop.f32.mrf.mxu0
        %v2492 = vpop.f32.mrf.mxu0
        %v2493 = vadd.f32 0.0, %v2492
        %v2494 = vpop.f32.mrf.mxu0
        %2495 = vmatprep.mubr.bf16.mxu0 0
        %2496 = vmatmul.mubr.bf16.gmra.mxu0 %v2401
        %v2497 = vpop.f32.mrf.mxu0
        %v2498 = vadd.f32 0.0, %v2497
        %v2499 = vpop.f32.mrf.mxu0
        %v2500 = vpop.f32.mrf.mxu0
        %v2501 = vadd.f32 0.0, %v2500
        %v2502 = vpop.f32.mrf.mxu0
        %2503 = vmatprep.mubr.bf16.mxu0 0
        %2504 = vmatmul.mubr.bf16.gmra.mxu0 %v2404
        %v2505 = vpop.f32.mrf.mxu0
        %v2506 = vadd.f32 0.0, %v2505
        %v2507 = vpop.f32.mrf.mxu0
        %v2508 = vpop.f32.mrf.mxu0
        %v2509 = vadd.f32 0.0, %v2508
        %v2510 = vpop.f32.mrf.mxu0
        %2511 = vmatprep.mubr.bf16.mxu0 0
        %2512 = vmatmul.mubr.bf16.gmra.mxu0 %v2407
        %v2513 = vpop.f32.mrf.mxu0
        %v2514 = vadd.f32 0.0, %v2513
        %v2515 = vpop.f32.mrf.mxu0
        %v2516 = vpop.f32.mrf.mxu0
        %v2517 = vadd.f32 0.0, %v2516
        %v2518 = vpop.f32.mrf.mxu0
        %2519 = vmatprep.mubr.bf16.mxu0 0
        %2520 = vmatmul.mubr.bf16.gmra.mxu0 %v2410
        %v2521 = vpop.f32.mrf.mxu0
        %v2522 = vadd.f32 0.0, %v2521
        %v2523 = vpop.f32.mrf.mxu0
        %v2524 = vpop.f32.mrf.mxu0
        %v2525 = vadd.f32 0.0, %v2524
        %v2526 = vpop.f32.mrf.mxu0
        %2527 = vmatprep.mubr.bf16.mxu0 0
        %2528 = vmatmul.mubr.bf16.gmra.mxu0 %v2413
        %v2529 = vpop.f32.mrf.mxu0
        %v2530 = vadd.f32 0.0, %v2529
        %v2531 = vpop.f32.mrf.mxu0
        %v2532 = vpop.f32.mrf.mxu0
        %v2533 = vadd.f32 0.0, %v2532
        %v2534 = vpop.f32.mrf.mxu0
        %2535 = vmatprep.mubr.bf16.mxu0 0
        %2536 = vmatmul.mubr.bf16.gmra.mxu0 %v2416
        %v2537 = vpop.f32.mrf.mxu0
        %v2538 = vadd.f32 0.0, %v2537
        %v2539 = vpop.f32.mrf.mxu0
        %v2540 = vpop.f32.mrf.mxu0
        %v2541 = vadd.f32 0.0, %v2540
        %v2542 = vpop.f32.mrf.mxu0
        %2543 = vmatprep.mubr.bf16.mxu0 0
        %2544 = vmatmul.mubr.bf16.gmra.mxu0 %v2419
        %v2545 = vpop.f32.mrf.mxu0
        %v2546 = vadd.f32 0.0, %v2545
        %v2547 = vpop.f32.mrf.mxu0
        %v2548 = vpop.f32.mrf.mxu0
        %v2549 = vadd.f32 0.0, %v2548
        %v2550 = vpop.f32.mrf.mxu0
        %2551 = vmatprep.mubr.bf16.mxu0 0
        %2552 = vmatmul.mubr.bf16.gmra.mxu0 %v2422
        %v2553 = vpop.f32.mrf.mxu0
        %v2554 = vadd.f32 0.0, %v2553
        %v2555 = vpop.f32.mrf.mxu0
        %v2556 = vpop.f32.mrf.mxu0
        %v2557 = vadd.f32 0.0, %v2556
        %v2558 = vpop.f32.mrf.mxu0
        %2559 = vmatprep.mubr.bf16.mxu0 0
        %2560 = vmatmul.mubr.bf16.gmra.mxu0 %v2425
        %v2561 = vpop.f32.mrf.mxu0
        %v2562 = vadd.f32 0.0, %v2561
        %v2563 = vpop.f32.mrf.mxu0
        %v2564 = vpop.f32.mrf.mxu0
        %v2565 = vadd.f32 0.0, %v2564
        %v2566 = vpop.f32.mrf.mxu0
        %2567 = vmatprep.mubr.bf16.mxu0 0
        %2568 = vmatmul.mubr.bf16.gmra.mxu0 %v2428
        %v2569 = vpop.f32.mrf.mxu0
        %v2570 = vadd.f32 0.0, %v2569
        %v2571 = vpop.f32.mrf.mxu0
        %v2572 = vpop.f32.mrf.mxu0
        %v2573 = vadd.f32 0.0, %v2572
        %v2574 = vpop.f32.mrf.mxu0
        %2575 = vmatprep.mubr.bf16.mxu0 0
        %2576 = vmatmul.mubr.bf16.gmra.mxu0 %v2431
        %v2577 = vpop.f32.mrf.mxu0
        %v2578 = vadd.f32 0.0, %v2577
        %v2579 = vpop.f32.mrf.mxu0
        %v2580 = vpop.f32.mrf.mxu0
        %v2581 = vadd.f32 0.0, %v2580
        %v2582 = vpop.f32.mrf.mxu0
        %2583 = vmatprep.mubr.bf16.mxu0 0
        %2584 = vmatmul.mubr.bf16.gmra.mxu0 %v2434
        %v2585 = vpop.f32.mrf.mxu0
        %v2586 = vadd.f32 0.0, %v2585
        %v2587 = vpop.f32.mrf.mxu0
        %v2588 = vpop.f32.mrf.mxu0
        %v2589 = vadd.f32 0.0, %v2588
        %v2590 = vpop.f32.mrf.mxu0
        %2591 = vmatprep.mubr.bf16.mxu0 0
        %2592 = vmatmul.mubr.bf16.gmra.mxu0 %v2437
        %v2593 = vpop.f32.mrf.mxu0
        %v2594 = vadd.f32 0.0, %v2593
        %v2595 = vpop.f32.mrf.mxu0
        %v2596 = vpop.f32.mrf.mxu0
        %v2597 = vadd.f32 0.0, %v2596
        %v2598 = vpop.f32.mrf.mxu0
        %2599 = vdwg.mxu0
        %v2632 = vunpack.c.l.b16 %v1887
        %v2633 = vunpack.c.l.b16 %v1888
        %v2634 = vunpack.c.l.b16 %v1889
        %v2635 = vunpack.c.l.b16 %v1890
        %v2636 = vunpack.c.l.b16 %v1891
        %v2637 = vunpack.c.l.b16 %v1892
        %v2638 = vunpack.c.l.b16 %v1893
        %v2639 = vunpack.c.l.b16 %v1894
        %v2640 = vunpack.c.l.b16 %v1895
        %v2641 = vunpack.c.l.b16 %v1896
        %v2642 = vunpack.c.l.b16 %v1897
        %v2643 = vunpack.c.l.b16 %v1898
        %v2644 = vunpack.c.l.b16 %v1899
        %v2645 = vunpack.c.l.b16 %v1900
        %v2646 = vunpack.c.l.b16 %v1901
        %v2647 = vunpack.c.l.b16 %v1902
        %v2648 = vunpack.c.l.b16 %v1903
        %v2649 = vunpack.c.l.b16 %v1904
        %v2650 = vunpack.c.l.b16 %v1905
        %v2651 = vunpack.c.l.b16 %v1906
        %v2652 = vunpack.c.l.b16 %v1907
        %v2653 = vunpack.c.l.b16 %v1908
        %v2654 = vunpack.c.l.b16 %v1909
        %v2655 = vunpack.c.l.b16 %v1910
        %v2656 = vunpack.c.l.b16 %v1911
        %v2657 = vunpack.c.l.b16 %v1912
        %v2658 = vunpack.c.l.b16 %v1913
        %v2659 = vunpack.c.l.b16 %v1914
        %v2660 = vunpack.c.l.b16 %v1915
        %v2661 = vunpack.c.l.b16 %v1916
        %v2662 = vunpack.c.l.b16 %v1917
        %v2663 = vunpack.c.l.b16 %v1918
        %v2664 = vpack.c.b16 %v2633, %v2632
        %v2665 = vpack.c.b16 %v2635, %v2634
        %v2666 = vpack.c.b16 %v2637, %v2636
        %v2667 = vpack.c.b16 %v2639, %v2638
        %v2668 = vpack.c.b16 %v2641, %v2640
        %v2669 = vpack.c.b16 %v2643, %v2642
        %v2670 = vpack.c.b16 %v2645, %v2644
        %v2671 = vpack.c.b16 %v2647, %v2646
        %v2672 = vpack.c.b16 %v2649, %v2648
        %v2673 = vpack.c.b16 %v2651, %v2650
        %v2674 = vpack.c.b16 %v2653, %v2652
        %v2675 = vpack.c.b16 %v2655, %v2654
        %v2676 = vpack.c.b16 %v2657, %v2656
        %v2677 = vpack.c.b16 %v2659, %v2658
        %v2678 = vpack.c.b16 %v2661, %v2660
        %v2679 = vpack.c.b16 %v2663, %v2662
        %v2684 = vunpack.c.l.b16 %v1919
        %v2685 = vunpack.c.l.b16 %v1920
        %v2686 = vunpack.c.l.b16 %v1921
        %v2687 = vunpack.c.l.b16 %v1922
        %v2688 = vpack.c.b16 %v2685, %v2684
        %v2689 = vpack.c.b16 %v2687, %v2686
        %v2693 = vsel %vm2390, %v2664, 0
        %v2696 = vsel %vm2390, %v2665, 0
        %v2699 = vsel %vm2390, %v2666, 0
        %v2702 = vsel %vm2390, %v2667, 0
        %v2705 = vsel %vm2390, %v2668, 0
        %v2708 = vsel %vm2390, %v2669, 0
        %v2711 = vsel %vm2390, %v2670, 0
        %v2714 = vsel %vm2390, %v2671, 0
        %v2717 = vsel %vm2390, %v2672, 0
        %v2720 = vsel %vm2390, %v2673, 0
        %v2723 = vsel %vm2390, %v2674, 0
        %v2726 = vsel %vm2390, %v2675, 0
        %v2729 = vsel %vm2390, %v2676, 0
        %v2732 = vsel %vm2390, %v2677, 0
        %v2735 = vsel %vm2390, %v2678, 0
        %v2738 = vsel %vm2390, %v2679, 0
        %2740 = vmatprep.subr.bf16.mxu0 0
        %2741 = vmatpush1.bf16.msra.mxu0 0
        %2742 = vmatprep.subr.bf16.mxu0 0
        %2743 = vmatpush1.bf16.msra.mxu0 0
        %2744 = vmatprep.subr.bf16.mxu0 0
        %2745 = vmatpush1.bf16.msra.mxu0 0
        %2746 = vmatprep.subr.bf16.mxu0 0
        %2747 = vmatpush1.bf16.msra.mxu0 0
        %2748 = vmatprep.subr.bf16.mxu0 0
        %2749 = vmatpush1.bf16.msra.mxu0 0
        %2750 = vmatprep.subr.bf16.mxu0 0
        %2751 = vmatpush1.bf16.msra.mxu0 0
        %2752 = vmatprep.subr.bf16.mxu0 0
        %2753 = vmatpush1.bf16.msra.mxu0 %v2689
        %2754 = vmatprep.subr.bf16.mxu0 0
        %2755 = vmatpush1.bf16.msra.mxu0 %v2688
        %2756 = vmatprep.subr.bf16.mxu0 0
        %2757 = vmatpush2.bf16.msra.mxu0 0
        %2758 = vmatprep.subr.bf16.mxu0 0
        %2759 = vmatpush2.bf16.msra.mxu0 0
        %2760 = vmatprep.subr.bf16.mxu0 0
        %2761 = vmatpush2.bf16.msra.mxu0 0
        %2762 = vmatprep.subr.bf16.mxu0 0
        %2763 = vmatpush2.bf16.msra.mxu0 0
        %2764 = vmatprep.subr.bf16.mxu0 0
        %2765 = vmatpush2.bf16.msra.mxu0 0
        %2766 = vmatprep.subr.bf16.mxu0 0
        %2767 = vmatpush2.bf16.msra.mxu0 0
        %2768 = vmatprep.subr.bf16.mxu0 0
        %2769 = vmatpush2.bf16.msra.mxu0 0
        %2770 = vmatprep.subr.bf16.mxu0 0
        %2771 = vmatpush2.bf16.msra.mxu0 0
        %2772 = vmatprep.mubr.bf16.mxu0 0
        %2773 = vmatmul.mubr.bf16.gmra.mxu0 %v2693
        %v2774 = vpop.f32.mrf.mxu0
        %v2775 = vadd.f32 %v2474, %v2774
        %v2776 = vpop.f32.mrf.mxu0
        %v2777 = vpop.f32.mrf.mxu0
        %v2778 = vadd.f32 %v2477, %v2777
        %v2779 = vpop.f32.mrf.mxu0
        %2780 = vmatprep.mubr.bf16.mxu0 0
        %2781 = vmatmul.mubr.bf16.gmra.mxu0 %v2696
        %v2782 = vpop.f32.mrf.mxu0
        %v2783 = vadd.f32 %v2482, %v2782
        %v2784 = vpop.f32.mrf.mxu0
        %v2785 = vpop.f32.mrf.mxu0
        %v2786 = vadd.f32 %v2485, %v2785
        %v2787 = vpop.f32.mrf.mxu0
        %2788 = vmatprep.mubr.bf16.mxu0 0
        %2789 = vmatmul.mubr.bf16.gmra.mxu0 %v2699
        %v2790 = vpop.f32.mrf.mxu0
        %v2791 = vadd.f32 %v2490, %v2790
        %v2792 = vpop.f32.mrf.mxu0
        %v2793 = vpop.f32.mrf.mxu0
        %v2794 = vadd.f32 %v2493, %v2793
        %v2795 = vpop.f32.mrf.mxu0
        %2796 = vmatprep.mubr.bf16.mxu0 0
        %2797 = vmatmul.mubr.bf16.gmra.mxu0 %v2702
        %v2798 = vpop.f32.mrf.mxu0
        %v2799 = vadd.f32 %v2498, %v2798
        %v2800 = vpop.f32.mrf.mxu0
        %v2801 = vpop.f32.mrf.mxu0
        %v2802 = vadd.f32 %v2501, %v2801
        %v2803 = vpop.f32.mrf.mxu0
        %2804 = vmatprep.mubr.bf16.mxu0 0
        %2805 = vmatmul.mubr.bf16.gmra.mxu0 %v2705
        %v2806 = vpop.f32.mrf.mxu0
        %v2807 = vadd.f32 %v2506, %v2806
        %v2808 = vpop.f32.mrf.mxu0
        %v2809 = vpop.f32.mrf.mxu0
        %v2810 = vadd.f32 %v2509, %v2809
        %v2811 = vpop.f32.mrf.mxu0
        %2812 = vmatprep.mubr.bf16.mxu0 0
        %2813 = vmatmul.mubr.bf16.gmra.mxu0 %v2708
        %v2814 = vpop.f32.mrf.mxu0
        %v2815 = vadd.f32 %v2514, %v2814
        %v2816 = vpop.f32.mrf.mxu0
        %v2817 = vpop.f32.mrf.mxu0
        %v2818 = vadd.f32 %v2517, %v2817
        %v2819 = vpop.f32.mrf.mxu0
        %2820 = vmatprep.mubr.bf16.mxu0 0
        %2821 = vmatmul.mubr.bf16.gmra.mxu0 %v2711
        %v2822 = vpop.f32.mrf.mxu0
        %v2823 = vadd.f32 %v2522, %v2822
        %v2824 = vpop.f32.mrf.mxu0
        %v2825 = vpop.f32.mrf.mxu0
        %v2826 = vadd.f32 %v2525, %v2825
        %v2827 = vpop.f32.mrf.mxu0
        %2828 = vmatprep.mubr.bf16.mxu0 0
        %2829 = vmatmul.mubr.bf16.gmra.mxu0 %v2714
        %v2830 = vpop.f32.mrf.mxu0
        %v2831 = vadd.f32 %v2530, %v2830
        %v2832 = vpop.f32.mrf.mxu0
        %v2833 = vpop.f32.mrf.mxu0
        %v2834 = vadd.f32 %v2533, %v2833
        %v2835 = vpop.f32.mrf.mxu0
        %2836 = vmatprep.mubr.bf16.mxu0 0
        %2837 = vmatmul.mubr.bf16.gmra.mxu0 %v2717
        %v2838 = vpop.f32.mrf.mxu0
        %v2839 = vadd.f32 %v2538, %v2838
        %v2840 = vpop.f32.mrf.mxu0
        %v2841 = vpop.f32.mrf.mxu0
        %v2842 = vadd.f32 %v2541, %v2841
        %v2843 = vpop.f32.mrf.mxu0
        %2844 = vmatprep.mubr.bf16.mxu0 0
        %2845 = vmatmul.mubr.bf16.gmra.mxu0 %v2720
        %v2846 = vpop.f32.mrf.mxu0
        %v2847 = vadd.f32 %v2546, %v2846
        %v2848 = vpop.f32.mrf.mxu0
        %v2849 = vpop.f32.mrf.mxu0
        %v2850 = vadd.f32 %v2549, %v2849
        %v2851 = vpop.f32.mrf.mxu0
        %2852 = vmatprep.mubr.bf16.mxu0 0
        %2853 = vmatmul.mubr.bf16.gmra.mxu0 %v2723
        %v2854 = vpop.f32.mrf.mxu0
        %v2855 = vadd.f32 %v2554, %v2854
        %v2856 = vpop.f32.mrf.mxu0
        %v2857 = vpop.f32.mrf.mxu0
        %v2858 = vadd.f32 %v2557, %v2857
        %v2859 = vpop.f32.mrf.mxu0
        %2860 = vmatprep.mubr.bf16.mxu0 0
        %2861 = vmatmul.mubr.bf16.gmra.mxu0 %v2726
        %v2862 = vpop.f32.mrf.mxu0
        %v2863 = vadd.f32 %v2562, %v2862
        %v2864 = vpop.f32.mrf.mxu0
        %v2865 = vpop.f32.mrf.mxu0
        %v2866 = vadd.f32 %v2565, %v2865
        %v2867 = vpop.f32.mrf.mxu0
        %2868 = vmatprep.mubr.bf16.mxu0 0
        %2869 = vmatmul.mubr.bf16.gmra.mxu0 %v2729
        %v2870 = vpop.f32.mrf.mxu0
        %v2871 = vadd.f32 %v2570, %v2870
        %v2872 = vpop.f32.mrf.mxu0
        %v2873 = vpop.f32.mrf.mxu0
        %v2874 = vadd.f32 %v2573, %v2873
        %v2875 = vpop.f32.mrf.mxu0
        %2876 = vmatprep.mubr.bf16.mxu0 0
        %2877 = vmatmul.mubr.bf16.gmra.mxu0 %v2732
        %v2878 = vpop.f32.mrf.mxu0
        %v2879 = vadd.f32 %v2578, %v2878
        %v2880 = vpop.f32.mrf.mxu0
        %v2881 = vpop.f32.mrf.mxu0
        %v2882 = vadd.f32 %v2581, %v2881
        %v2883 = vpop.f32.mrf.mxu0
        %2884 = vmatprep.mubr.bf16.mxu0 0
        %2885 = vmatmul.mubr.bf16.gmra.mxu0 %v2735
        %v2886 = vpop.f32.mrf.mxu0
        %v2887 = vadd.f32 %v2586, %v2886
        %v2888 = vpop.f32.mrf.mxu0
        %v2889 = vpop.f32.mrf.mxu0
        %v2890 = vadd.f32 %v2589, %v2889
        %v2891 = vpop.f32.mrf.mxu0
        %2892 = vmatprep.mubr.bf16.mxu0 0
        %2893 = vmatmul.mubr.bf16.gmra.mxu0 %v2738
        %v2894 = vpop.f32.mrf.mxu0
        %v2895 = vadd.f32 %v2594, %v2894
        %v2896 = vpop.f32.mrf.mxu0
        %v2897 = vpop.f32.mrf.mxu0
        %v2898 = vadd.f32 %v2597, %v2897
        %v2899 = vpop.f32.mrf.mxu0
        %2900 = vdwg.mxu0
        %v2901 = vld [vmem:[#allocation2] sm:$0xe]
        %v2902 = vld [vmem:[#allocation2 + $0xc] sm:$0xe]
        %v2903 = vld [vmem:[#allocation2 + $0x18] sm:$0xe]
        %v2904 = vld [vmem:[#allocation2 + $0x24] sm:$0xe]
        %v2905 = vld [vmem:[#allocation2 + $0x30] sm:$0xe]
        %v2906 = vld [vmem:[#allocation2 + $0x3c] sm:$0xe]
        %v2907 = vld [vmem:[#allocation2 + $0x48] sm:$0xe]
        %v2908 = vld [vmem:[#allocation2 + $0x54] sm:$0xe]
        %v2909 = vld [vmem:[#allocation2 + $0x60] sm:$0xe]
        %v2910 = vld [vmem:[#allocation2 + $0x6c] sm:$0xe]
        %v2911 = vld [vmem:[#allocation2 + $0x78] sm:$0xe]
        %v2912 = vld [vmem:[#allocation2 + $0x84] sm:$0xe]
        %v2913 = vld [vmem:[#allocation2 + $0x90] sm:$0xe]
        %v2914 = vld [vmem:[#allocation2 + $0x9c] sm:$0xe]
        %v2915 = vld [vmem:[#allocation2 + $0xa8] sm:$0xe]
        %v2916 = vld [vmem:[#allocation2 + $0xb4] sm:$0xe]
        %vm2949 = vcmask 1042432
        %vm2950 = vcmask 1046532
        %vm2951 = vmor %vm2949, %vm2950
        %v2952 = vrot.slane %v2901, 5
        %v2953 = vrot.slane %v2952, 4
        %v2954 = vrot.slane %v1888, 5
        %v2955 = vsel %vm2951, %v2953, %v2954
        %v2956 = vrot.slane %v2954, 4
        %v2957 = vrot.slane %v1923, 5
        %v2958 = vsel %vm2951, %v2956, %v2957
        %v2959 = vrot.slane %v2902, 5
        %v2960 = vrot.slane %v2959, 4
        %v2961 = vrot.slane %v1890, 5
        %v2962 = vsel %vm2951, %v2960, %v2961
        %v2963 = vrot.slane %v2961, 4
        %v2964 = vrot.slane %v1924, 5
        %v2965 = vsel %vm2951, %v2963, %v2964
        %v2966 = vrot.slane %v2903, 5
        %v2967 = vrot.slane %v2966, 4
        %v2968 = vrot.slane %v1892, 5
        %v2969 = vsel %vm2951, %v2967, %v2968
        %v2970 = vrot.slane %v2968, 4
        %v2971 = vrot.slane %v1925, 5
        %v2972 = vsel %vm2951, %v2970, %v2971
        %v2973 = vrot.slane %v2904, 5
        %v2974 = vrot.slane %v2973, 4
        %v2975 = vrot.slane %v1894, 5
        %v2976 = vsel %vm2951, %v2974, %v2975
        %v2977 = vrot.slane %v2975, 4
        %v2978 = vrot.slane %v1926, 5
        %v2979 = vsel %vm2951, %v2977, %v2978
        %v2980 = vrot.slane %v2905, 5
        %v2981 = vrot.slane %v2980, 4
        %v2982 = vrot.slane %v1896, 5
        %v2983 = vsel %vm2951, %v2981, %v2982
        %v2984 = vrot.slane %v2982, 4
        %v2985 = vrot.slane %v1927, 5
        %v2986 = vsel %vm2951, %v2984, %v2985
        %v2987 = vrot.slane %v2906, 5
        %v2988 = vrot.slane %v2987, 4
        %v2989 = vrot.slane %v1898, 5
        %v2990 = vsel %vm2951, %v2988, %v2989
        %v2991 = vrot.slane %v2989, 4
        %v2992 = vrot.slane %v1928, 5
        %v2993 = vsel %vm2951, %v2991, %v2992
        %v2994 = vrot.slane %v2907, 5
        %v2995 = vrot.slane %v2994, 4
        %v2996 = vrot.slane %v1900, 5
        %v2997 = vsel %vm2951, %v2995, %v2996
        %v2998 = vrot.slane %v2996, 4
        %v2999 = vrot.slane %v1929, 5
        %v3000 = vsel %vm2951, %v2998, %v2999
        %v3001 = vrot.slane %v2908, 5
        %v3002 = vrot.slane %v3001, 4
        %v3003 = vrot.slane %v1902, 5
        %v3004 = vsel %vm2951, %v3002, %v3003
        %v3005 = vrot.slane %v3003, 4
        %v3006 = vrot.slane %v1930, 5
        %v3007 = vsel %vm2951, %v3005, %v3006
        %v3008 = vrot.slane %v2909, 5
        %v3009 = vrot.slane %v3008, 4
        %v3010 = vrot.slane %v1904, 5
        %v3011 = vsel %vm2951, %v3009, %v3010
        %v3012 = vrot.slane %v3010, 4
        %v3013 = vrot.slane %v1931, 5
        %v3014 = vsel %vm2951, %v3012, %v3013
        %v3015 = vrot.slane %v2910, 5
        %v3016 = vrot.slane %v3015, 4
        %v3017 = vrot.slane %v1906, 5
        %v3018 = vsel %vm2951, %v3016, %v3017
        %v3019 = vrot.slane %v3017, 4
        %v3020 = vrot.slane %v1932, 5
        %v3021 = vsel %vm2951, %v3019, %v3020
        %v3022 = vrot.slane %v2911, 5
        %v3023 = vrot.slane %v3022, 4
        %v3024 = vrot.slane %v1908, 5
        %v3025 = vsel %vm2951, %v3023, %v3024
        %v3026 = vrot.slane %v3024, 4
        %v3027 = vrot.slane %v1933, 5
        %v3028 = vsel %vm2951, %v3026, %v3027
        %v3029 = vrot.slane %v2912, 5
        %v3030 = vrot.slane %v3029, 4
        %v3031 = vrot.slane %v1910, 5
        %v3032 = vsel %vm2951, %v3030, %v3031
        %v3033 = vrot.slane %v3031, 4
        %v3034 = vrot.slane %v1934, 5
        %v3035 = vsel %vm2951, %v3033, %v3034
        %v3036 = vrot.slane %v2913, 5
        %v3037 = vrot.slane %v3036, 4
        %v3038 = vrot.slane %v1912, 5
        %v3039 = vsel %vm2951, %v3037, %v3038
        %v3040 = vrot.slane %v3038, 4
        %v3041 = vrot.slane %v1935, 5
        %v3042 = vsel %vm2951, %v3040, %v3041
        %v3043 = vrot.slane %v2914, 5
        %v3044 = vrot.slane %v3043, 4
        %v3045 = vrot.slane %v1914, 5
        %v3046 = vsel %vm2951, %v3044, %v3045
        %v3047 = vrot.slane %v3045, 4
        %v3048 = vrot.slane %v1936, 5
        %v3049 = vsel %vm2951, %v3047, %v3048
        %v3050 = vrot.slane %v2915, 5
        %v3051 = vrot.slane %v3050, 4
        %v3052 = vrot.slane %v1916, 5
        %v3053 = vsel %vm2951, %v3051, %v3052
        %v3054 = vrot.slane %v3052, 4
        %v3055 = vrot.slane %v1937, 5
        %v3056 = vsel %vm2951, %v3054, %v3055
        %v3057 = vrot.slane %v2916, 5
        %v3058 = vrot.slane %v3057, 4
        %v3059 = vrot.slane %v1918, 5
        %v3060 = vsel %vm2951, %v3058, %v3059
        %v3061 = vrot.slane %v3059, 4
        %v3062 = vrot.slane %v1938, 5
        %v3063 = vsel %vm2951, %v3061, %v3062
        %v3064 = vld [vmem:[%s2 + $0x20] sm:$0xf]
        %v3065 = vld [vmem:[%s2 + $0x24] sm:$0xf]
        %v3066 = vld [vmem:[%s2 + $0x28] sm:$0xf]
        %v3067 = vld [vmem:[%s2 + $0x2c] sm:$0xf]
        %v3068 = vunpack.c.l.b16 %v2955
        %v3069 = vunpack.c.l.b16 %v2958
        %v3070 = vunpack.c.l.b16 %v2962
        %v3071 = vunpack.c.l.b16 %v2965
        %v3072 = vunpack.c.l.b16 %v2969
        %v3073 = vunpack.c.l.b16 %v2972
        %v3074 = vunpack.c.l.b16 %v2976
        %v3075 = vunpack.c.l.b16 %v2979
        %v3076 = vunpack.c.l.b16 %v2983
        %v3077 = vunpack.c.l.b16 %v2986
        %v3078 = vunpack.c.l.b16 %v2990
        %v3079 = vunpack.c.l.b16 %v2993
        %v3080 = vunpack.c.l.b16 %v2997
        %v3081 = vunpack.c.l.b16 %v3000
        %v3082 = vunpack.c.l.b16 %v3004
        %v3083 = vunpack.c.l.b16 %v3007
        %v3084 = vunpack.c.l.b16 %v3011
        %v3085 = vunpack.c.l.b16 %v3014
        %v3086 = vunpack.c.l.b16 %v3018
        %v3087 = vunpack.c.l.b16 %v3021
        %v3088 = vunpack.c.l.b16 %v3025
        %v3089 = vunpack.c.l.b16 %v3028
        %v3090 = vunpack.c.l.b16 %v3032
        %v3091 = vunpack.c.l.b16 %v3035
        %v3092 = vunpack.c.l.b16 %v3039
        %v3093 = vunpack.c.l.b16 %v3042
        %v3094 = vunpack.c.l.b16 %v3046
        %v3095 = vunpack.c.l.b16 %v3049
        %v3096 = vunpack.c.l.b16 %v3053
        %v3097 = vunpack.c.l.b16 %v3056
        %v3098 = vunpack.c.l.b16 %v3060
        %v3099 = vunpack.c.l.b16 %v3063
        %v3100 = vpack.c.b16 %v3069, %v3068
        %v3101 = vpack.c.b16 %v3071, %v3070
        %v3102 = vpack.c.b16 %v3073, %v3072
        %v3103 = vpack.c.b16 %v3075, %v3074
        %v3104 = vpack.c.b16 %v3077, %v3076
        %v3105 = vpack.c.b16 %v3079, %v3078
        %v3106 = vpack.c.b16 %v3081, %v3080
        %v3107 = vpack.c.b16 %v3083, %v3082
        %v3108 = vpack.c.b16 %v3085, %v3084
        %v3109 = vpack.c.b16 %v3087, %v3086
        %v3110 = vpack.c.b16 %v3089, %v3088
        %v3111 = vpack.c.b16 %v3091, %v3090
        %v3112 = vpack.c.b16 %v3093, %v3092
        %v3113 = vpack.c.b16 %v3095, %v3094
        %v3114 = vpack.c.b16 %v3097, %v3096
        %v3115 = vpack.c.b16 %v3099, %v3098
        %v3120 = vunpack.c.l.b16 %v3064
        %v3121 = vunpack.c.l.b16 %v3065
        %v3122 = vunpack.c.l.b16 %v3066
        %v3123 = vunpack.c.l.b16 %v3067
        %v3124 = vpack.c.b16 %v3121, %v3120
        %v3125 = vpack.c.b16 %v3123, %v3122
        %v3129 = vsel %vm2390, %v3100, 0
        %v3132 = vsel %vm2390, %v3101, 0
        %v3135 = vsel %vm2390, %v3102, 0
        %v3138 = vsel %vm2390, %v3103, 0
        %v3141 = vsel %vm2390, %v3104, 0
        %v3144 = vsel %vm2390, %v3105, 0
        %v3147 = vsel %vm2390, %v3106, 0
        %v3150 = vsel %vm2390, %v3107, 0
        %v3153 = vsel %vm2390, %v3108, 0
        %v3156 = vsel %vm2390, %v3109, 0
        %v3159 = vsel %vm2390, %v3110, 0
        %v3162 = vsel %vm2390, %v3111, 0
        %v3165 = vsel %vm2390, %v3112, 0
        %v3168 = vsel %vm2390, %v3113, 0
        %v3171 = vsel %vm2390, %v3114, 0
        %v3174 = vsel %vm2390, %v3115, 0
        %3176 = vmatprep.subr.bf16.mxu0 0
        %3177 = vmatpush1.bf16.msra.mxu0 0
        %3178 = vmatprep.subr.bf16.mxu0 0
        %3179 = vmatpush1.bf16.msra.mxu0 0
        %3180 = vmatprep.subr.bf16.mxu0 0
        %3181 = vmatpush1.bf16.msra.mxu0 0
        %3182 = vmatprep.subr.bf16.mxu0 0
        %3183 = vmatpush1.bf16.msra.mxu0 0
        %3184 = vmatprep.subr.bf16.mxu0 0
        %3185 = vmatpush1.bf16.msra.mxu0 0
        %3186 = vmatprep.subr.bf16.mxu0 0
        %3187 = vmatpush1.bf16.msra.mxu0 0
        %3188 = vmatprep.subr.bf16.mxu0 0
        %3189 = vmatpush1.bf16.msra.mxu0 %v3125
        %3190 = vmatprep.subr.bf16.mxu0 0
        %3191 = vmatpush1.bf16.msra.mxu0 %v3124
        %3192 = vmatprep.subr.bf16.mxu0 0
        %3193 = vmatpush2.bf16.msra.mxu0 0
        %3194 = vmatprep.subr.bf16.mxu0 0
        %3195 = vmatpush2.bf16.msra.mxu0 0
        %3196 = vmatprep.subr.bf16.mxu0 0
        %3197 = vmatpush2.bf16.msra.mxu0 0
        %3198 = vmatprep.subr.bf16.mxu0 0
        %3199 = vmatpush2.bf16.msra.mxu0 0
        %3200 = vmatprep.subr.bf16.mxu0 0
        %3201 = vmatpush2.bf16.msra.mxu0 0
        %3202 = vmatprep.subr.bf16.mxu0 0
        %3203 = vmatpush2.bf16.msra.mxu0 0
        %3204 = vmatprep.subr.bf16.mxu0 0
        %3205 = vmatpush2.bf16.msra.mxu0 0
        %3206 = vmatprep.subr.bf16.mxu0 0
        %3207 = vmatpush2.bf16.msra.mxu0 0
        %3208 = vmatprep.mubr.bf16.mxu0 0
        %3209 = vmatmul.mubr.bf16.gmra.mxu0 %v3129
        %v3210 = vpop.f32.mrf.mxu0
        %v3211 = vadd.f32 0.0, %v3210
        %v3212 = vpop.f32.mrf.mxu0
        %v3213 = vpop.f32.mrf.mxu0
        %v3214 = vadd.f32 0.0, %v3213
        %v3215 = vpop.f32.mrf.mxu0
        %3216 = vmatprep.mubr.bf16.mxu0 0
        %3217 = vmatmul.mubr.bf16.gmra.mxu0 %v3132
        %v3218 = vpop.f32.mrf.mxu0
        %v3219 = vadd.f32 0.0, %v3218
        %v3220 = vpop.f32.mrf.mxu0
        %v3221 = vpop.f32.mrf.mxu0
        %v3222 = vadd.f32 0.0, %v3221
        %v3223 = vpop.f32.mrf.mxu0
        %3224 = vmatprep.mubr.bf16.mxu0 0
        %3225 = vmatmul.mubr.bf16.gmra.mxu0 %v3135
        %v3226 = vpop.f32.mrf.mxu0
        %v3227 = vadd.f32 0.0, %v3226
        %v3228 = vpop.f32.mrf.mxu0
        %v3229 = vpop.f32.mrf.mxu0
        %v3230 = vadd.f32 0.0, %v3229
        %v3231 = vpop.f32.mrf.mxu0
        %3232 = vmatprep.mubr.bf16.mxu0 0
        %3233 = vmatmul.mubr.bf16.gmra.mxu0 %v3138
        %v3234 = vpop.f32.mrf.mxu0
        %v3235 = vadd.f32 0.0, %v3234
        %v3236 = vpop.f32.mrf.mxu0
        %v3237 = vpop.f32.mrf.mxu0
        %v3238 = vadd.f32 0.0, %v3237
        %v3239 = vpop.f32.mrf.mxu0
        %3240 = vmatprep.mubr.bf16.mxu0 0
        %3241 = vmatmul.mubr.bf16.gmra.mxu0 %v3141
        %v3242 = vpop.f32.mrf.mxu0
        %v3243 = vadd.f32 0.0, %v3242
        %v3244 = vpop.f32.mrf.mxu0
        %v3245 = vpop.f32.mrf.mxu0
        %v3246 = vadd.f32 0.0, %v3245
        %v3247 = vpop.f32.mrf.mxu0
        %3248 = vmatprep.mubr.bf16.mxu0 0
        %3249 = vmatmul.mubr.bf16.gmra.mxu0 %v3144
        %v3250 = vpop.f32.mrf.mxu0
        %v3251 = vadd.f32 0.0, %v3250
        %v3252 = vpop.f32.mrf.mxu0
        %v3253 = vpop.f32.mrf.mxu0
        %v3254 = vadd.f32 0.0, %v3253
        %v3255 = vpop.f32.mrf.mxu0
        %3256 = vmatprep.mubr.bf16.mxu0 0
        %3257 = vmatmul.mubr.bf16.gmra.mxu0 %v3147
        %v3258 = vpop.f32.mrf.mxu0
        %v3259 = vadd.f32 0.0, %v3258
        %v3260 = vpop.f32.mrf.mxu0
        %v3261 = vpop.f32.mrf.mxu0
        %v3262 = vadd.f32 0.0, %v3261
        %v3263 = vpop.f32.mrf.mxu0
        %3264 = vmatprep.mubr.bf16.mxu0 0
        %3265 = vmatmul.mubr.bf16.gmra.mxu0 %v3150
        %v3266 = vpop.f32.mrf.mxu0
        %v3267 = vadd.f32 0.0, %v3266
        %v3268 = vpop.f32.mrf.mxu0
        %v3269 = vpop.f32.mrf.mxu0
        %v3270 = vadd.f32 0.0, %v3269
        %v3271 = vpop.f32.mrf.mxu0
        %3272 = vmatprep.mubr.bf16.mxu0 0
        %3273 = vmatmul.mubr.bf16.gmra.mxu0 %v3153
        %v3274 = vpop.f32.mrf.mxu0
        %v3275 = vadd.f32 0.0, %v3274
        %v3276 = vpop.f32.mrf.mxu0
        %v3277 = vpop.f32.mrf.mxu0
        %v3278 = vadd.f32 0.0, %v3277
        %v3279 = vpop.f32.mrf.mxu0
        %3280 = vmatprep.mubr.bf16.mxu0 0
        %3281 = vmatmul.mubr.bf16.gmra.mxu0 %v3156
        %v3282 = vpop.f32.mrf.mxu0
        %v3283 = vadd.f32 0.0, %v3282
        %v3284 = vpop.f32.mrf.mxu0
        %v3285 = vpop.f32.mrf.mxu0
        %v3286 = vadd.f32 0.0, %v3285
        %v3287 = vpop.f32.mrf.mxu0
        %3288 = vmatprep.mubr.bf16.mxu0 0
        %3289 = vmatmul.mubr.bf16.gmra.mxu0 %v3159
        %v3290 = vpop.f32.mrf.mxu0
        %v3291 = vadd.f32 0.0, %v3290
        %v3292 = vpop.f32.mrf.mxu0
        %v3293 = vpop.f32.mrf.mxu0
        %v3294 = vadd.f32 0.0, %v3293
        %v3295 = vpop.f32.mrf.mxu0
        %3296 = vmatprep.mubr.bf16.mxu0 0
        %3297 = vmatmul.mubr.bf16.gmra.mxu0 %v3162
        %v3298 = vpop.f32.mrf.mxu0
        %v3299 = vadd.f32 0.0, %v3298
        %v3300 = vpop.f32.mrf.mxu0
        %v3301 = vpop.f32.mrf.mxu0
        %v3302 = vadd.f32 0.0, %v3301
        %v3303 = vpop.f32.mrf.mxu0
        %3304 = vmatprep.mubr.bf16.mxu0 0
        %3305 = vmatmul.mubr.bf16.gmra.mxu0 %v3165
        %v3306 = vpop.f32.mrf.mxu0
        %v3307 = vadd.f32 0.0, %v3306
        %v3308 = vpop.f32.mrf.mxu0
        %v3309 = vpop.f32.mrf.mxu0
        %v3310 = vadd.f32 0.0, %v3309
        %v3311 = vpop.f32.mrf.mxu0
        %3312 = vmatprep.mubr.bf16.mxu0 0
        %3313 = vmatmul.mubr.bf16.gmra.mxu0 %v3168
        %v3314 = vpop.f32.mrf.mxu0
        %v3315 = vadd.f32 0.0, %v3314
        %v3316 = vpop.f32.mrf.mxu0
        %v3317 = vpop.f32.mrf.mxu0
        %v3318 = vadd.f32 0.0, %v3317
        %v3319 = vpop.f32.mrf.mxu0
        %3320 = vmatprep.mubr.bf16.mxu0 0
        %3321 = vmatmul.mubr.bf16.gmra.mxu0 %v3171
        %v3322 = vpop.f32.mrf.mxu0
        %v3323 = vadd.f32 0.0, %v3322
        %v3324 = vpop.f32.mrf.mxu0
        %v3325 = vpop.f32.mrf.mxu0
        %v3326 = vadd.f32 0.0, %v3325
        %v3327 = vpop.f32.mrf.mxu0
        %3328 = vmatprep.mubr.bf16.mxu0 0
        %3329 = vmatmul.mubr.bf16.gmra.mxu0 %v3174
        %v3330 = vpop.f32.mrf.mxu0
        %v3331 = vadd.f32 0.0, %v3330
        %v3332 = vpop.f32.mrf.mxu0
        %v3333 = vpop.f32.mrf.mxu0
        %v3334 = vadd.f32 0.0, %v3333
        %v3335 = vpop.f32.mrf.mxu0
        %3336 = vdwg.mxu0
        %v3337 = vadd.f32 %v2775, %v3211
        %v3338 = vadd.f32 %v2778, %v3214
        %v3339 = vadd.f32 %v2783, %v3219
        %v3340 = vadd.f32 %v2786, %v3222
        %v3341 = vadd.f32 %v2791, %v3227
        %v3342 = vadd.f32 %v2794, %v3230
        %v3343 = vadd.f32 %v2799, %v3235
        %v3344 = vadd.f32 %v2802, %v3238
        %v3345 = vadd.f32 %v2807, %v3243
        %v3346 = vadd.f32 %v2810, %v3246
        %v3347 = vadd.f32 %v2815, %v3251
        %v3348 = vadd.f32 %v2818, %v3254
        %v3349 = vadd.f32 %v2823, %v3259
        %v3350 = vadd.f32 %v2826, %v3262
        %v3351 = vadd.f32 %v2831, %v3267
        %v3352 = vadd.f32 %v2834, %v3270
        %v3353 = vadd.f32 %v2839, %v3275
        %v3354 = vadd.f32 %v2842, %v3278
        %v3355 = vadd.f32 %v2847, %v3283
        %v3356 = vadd.f32 %v2850, %v3286
        %v3357 = vadd.f32 %v2855, %v3291
        %v3358 = vadd.f32 %v2858, %v3294
        %v3359 = vadd.f32 %v2863, %v3299
        %v3360 = vadd.f32 %v2866, %v3302
        %v3361 = vadd.f32 %v2871, %v3307
        %v3362 = vadd.f32 %v2874, %v3310
        %v3363 = vadd.f32 %v2879, %v3315
        %v3364 = vadd.f32 %v2882, %v3318
        %v3365 = vadd.f32 %v2887, %v3323
        %v3366 = vadd.f32 %v2890, %v3326
        %v3367 = vadd.f32 %v2895, %v3331
        %v3368 = vadd.f32 %v2898, %v3334
        %v3369 = vld [vmem:[%s1108] sm:$0xf]
        %v3370 = vld [vmem:[%s1108 + $0x4] sm:$0xf]
        %v3371 = vld [vmem:[%s1108 + $0xc] sm:$0xf]
        %v3372 = vld [vmem:[%s1108 + $0x10] sm:$0xf]
        %v3373 = vld [vmem:[%s1108 + $0x18] sm:$0xf]
        %v3374 = vld [vmem:[%s1108 + $0x1c] sm:$0xf]
        %v3375 = vld [vmem:[%s1108 + $0x24] sm:$0xf]
        %v3376 = vld [vmem:[%s1108 + $0x28] sm:$0xf]
        %v3377 = vld [vmem:[%s1108 + $0x30] sm:$0xf]
        %v3378 = vld [vmem:[%s1108 + $0x34] sm:$0xf]
        %v3379 = vld [vmem:[%s1108 + $0x3c] sm:$0xf]
        %v3380 = vld [vmem:[%s1108 + $0x40] sm:$0xf]
        %v3381 = vld [vmem:[%s1108 + $0x48] sm:$0xf]
        %v3382 = vld [vmem:[%s1108 + $0x4c] sm:$0xf]
        %v3383 = vld [vmem:[%s1108 + $0x54] sm:$0xf]
        %v3384 = vld [vmem:[%s1108 + $0x58] sm:$0xf]
        %v3385 = vld [vmem:[%s1108 + $0x60] sm:$0xf]
        %v3386 = vld [vmem:[%s1108 + $0x64] sm:$0xf]
        %v3387 = vld [vmem:[%s1108 + $0x6c] sm:$0xf]
        %v3388 = vld [vmem:[%s1108 + $0x70] sm:$0xf]
        %v3389 = vld [vmem:[%s1108 + $0x78] sm:$0xf]
        %v3390 = vld [vmem:[%s1108 + $0x7c] sm:$0xf]
        %v3391 = vld [vmem:[%s1108 + $0x84] sm:$0xf]
        %v3392 = vld [vmem:[%s1108 + $0x88] sm:$0xf]
        %v3393 = vld [vmem:[%s1108 + $0x90] sm:$0xf]
        %v3394 = vld [vmem:[%s1108 + $0x94] sm:$0xf]
        %v3395 = vld [vmem:[%s1108 + $0x9c] sm:$0xf]
        %v3396 = vld [vmem:[%s1108 + $0xa0] sm:$0xf]
        %v3397 = vld [vmem:[%s1108 + $0xa8] sm:$0xf]
        %v3398 = vld [vmem:[%s1108 + $0xac] sm:$0xf]
        %v3399 = vld [vmem:[%s1108 + $0xb4] sm:$0xf]
        %v3400 = vld [vmem:[%s1108 + $0xb8] sm:$0xf]
        %v3401 = vld [vmem:[%s2 + $0x30] sm:$0xf]
        %v3402 = vld [vmem:[%s2 + $0x34] sm:$0xf]
        %v3403 = vld [vmem:[%s2 + $0x38] sm:$0xf]
        %v3404 = vld [vmem:[%s2 + $0x3c] sm:$0xf]
        %v3437 = vunpack.c.l.b16 %v3369
        %v3438 = vunpack.c.l.b16 %v3370
        %v3439 = vunpack.c.l.b16 %v3371
        %v3440 = vunpack.c.l.b16 %v3372
        %v3441 = vunpack.c.l.b16 %v3373
        %v3442 = vunpack.c.l.b16 %v3374
        %v3443 = vunpack.c.l.b16 %v3375
        %v3444 = vunpack.c.l.b16 %v3376
        %v3445 = vunpack.c.l.b16 %v3377
        %v3446 = vunpack.c.l.b16 %v3378
        %v3447 = vunpack.c.l.b16 %v3379
        %v3448 = vunpack.c.l.b16 %v3380
        %v3449 = vunpack.c.l.b16 %v3381
        %v3450 = vunpack.c.l.b16 %v3382
        %v3451 = vunpack.c.l.b16 %v3383
        %v3452 = vunpack.c.l.b16 %v3384
        %v3453 = vunpack.c.l.b16 %v3385
        %v3454 = vunpack.c.l.b16 %v3386
        %v3455 = vunpack.c.l.b16 %v3387
        %v3456 = vunpack.c.l.b16 %v3388
        %v3457 = vunpack.c.l.b16 %v3389
        %v3458 = vunpack.c.l.b16 %v3390
        %v3459 = vunpack.c.l.b16 %v3391
        %v3460 = vunpack.c.l.b16 %v3392
        %v3461 = vunpack.c.l.b16 %v3393
        %v3462 = vunpack.c.l.b16 %v3394
        %v3463 = vunpack.c.l.b16 %v3395
        %v3464 = vunpack.c.l.b16 %v3396
        %v3465 = vunpack.c.l.b16 %v3397
        %v3466 = vunpack.c.l.b16 %v3398
        %v3467 = vunpack.c.l.b16 %v3399
        %v3468 = vunpack.c.l.b16 %v3400
        %v3469 = vpack.c.b16 %v3438, %v3437
        %v3470 = vpack.c.b16 %v3440, %v3439
        %v3471 = vpack.c.b16 %v3442, %v3441
        %v3472 = vpack.c.b16 %v3444, %v3443
        %v3473 = vpack.c.b16 %v3446, %v3445
        %v3474 = vpack.c.b16 %v3448, %v3447
        %v3475 = vpack.c.b16 %v3450, %v3449
        %v3476 = vpack.c.b16 %v3452, %v3451
        %v3477 = vpack.c.b16 %v3454, %v3453
        %v3478 = vpack.c.b16 %v3456, %v3455
        %v3479 = vpack.c.b16 %v3458, %v3457
        %v3480 = vpack.c.b16 %v3460, %v3459
        %v3481 = vpack.c.b16 %v3462, %v3461
        %v3482 = vpack.c.b16 %v3464, %v3463
        %v3483 = vpack.c.b16 %v3466, %v3465
        %v3484 = vpack.c.b16 %v3468, %v3467
        %v3489 = vunpack.c.l.b16 %v3401
        %v3490 = vunpack.c.l.b16 %v3402
        %v3491 = vunpack.c.l.b16 %v3403
        %v3492 = vunpack.c.l.b16 %v3404
        %v3493 = vpack.c.b16 %v3490, %v3489
        %v3494 = vpack.c.b16 %v3492, %v3491
        %v3498 = vsel %vm2390, %v3469, 0
        %v3501 = vsel %vm2390, %v3470, 0
        %v3504 = vsel %vm2390, %v3471, 0
        %v3507 = vsel %vm2390, %v3472, 0
        %v3510 = vsel %vm2390, %v3473, 0
        %v3513 = vsel %vm2390, %v3474, 0
        %v3516 = vsel %vm2390, %v3475, 0
        %v3519 = vsel %vm2390, %v3476, 0
        %v3522 = vsel %vm2390, %v3477, 0
        %v3525 = vsel %vm2390, %v3478, 0
        %v3528 = vsel %vm2390, %v3479, 0
        %v3531 = vsel %vm2390, %v3480, 0
        %v3534 = vsel %vm2390, %v3481, 0
        %v3537 = vsel %vm2390, %v3482, 0
        %v3540 = vsel %vm2390, %v3483, 0
        %v3543 = vsel %vm2390, %v3484, 0
        %3545 = vmatprep.subr.bf16.mxu0 0
        %3546 = vmatpush1.bf16.msra.mxu0 0
        %3547 = vmatprep.subr.bf16.mxu0 0
        %3548 = vmatpush1.bf16.msra.mxu0 0
        %3549 = vmatprep.subr.bf16.mxu0 0
        %3550 = vmatpush1.bf16.msra.mxu0 0
        %3551 = vmatprep.subr.bf16.mxu0 0
        %3552 = vmatpush1.bf16.msra.mxu0 0
        %3553 = vmatprep.subr.bf16.mxu0 0
        %3554 = vmatpush1.bf16.msra.mxu0 0
        %3555 = vmatprep.subr.bf16.mxu0 0
        %3556 = vmatpush1.bf16.msra.mxu0 0
        %3557 = vmatprep.subr.bf16.mxu0 0
        %3558 = vmatpush1.bf16.msra.mxu0 %v3494
        %3559 = vmatprep.subr.bf16.mxu0 0
        %3560 = vmatpush1.bf16.msra.mxu0 %v3493
        %3561 = vmatprep.subr.bf16.mxu0 0
        %3562 = vmatpush2.bf16.msra.mxu0 0
        %3563 = vmatprep.subr.bf16.mxu0 0
        %3564 = vmatpush2.bf16.msra.mxu0 0
        %3565 = vmatprep.subr.bf16.mxu0 0
        %3566 = vmatpush2.bf16.msra.mxu0 0
        %3567 = vmatprep.subr.bf16.mxu0 0
        %3568 = vmatpush2.bf16.msra.mxu0 0
        %3569 = vmatprep.subr.bf16.mxu0 0
        %3570 = vmatpush2.bf16.msra.mxu0 0
        %3571 = vmatprep.subr.bf16.mxu0 0
        %3572 = vmatpush2.bf16.msra.mxu0 0
        %3573 = vmatprep.subr.bf16.mxu0 0
        %3574 = vmatpush2.bf16.msra.mxu0 0
        %3575 = vmatprep.subr.bf16.mxu0 0
        %3576 = vmatpush2.bf16.msra.mxu0 0
        %3577 = vmatprep.mubr.bf16.mxu0 0
        %3578 = vmatmul.mubr.bf16.gmra.mxu0 %v3498
        %v3579 = vpop.f32.mrf.mxu0
        %v3580 = vadd.f32 0.0, %v3579
        %v3581 = vpop.f32.mrf.mxu0
        %v3582 = vpop.f32.mrf.mxu0
        %v3583 = vadd.f32 0.0, %v3582
        %v3584 = vpop.f32.mrf.mxu0
        %3585 = vmatprep.mubr.bf16.mxu0 0
        %3586 = vmatmul.mubr.bf16.gmra.mxu0 %v3501
        %v3587 = vpop.f32.mrf.mxu0
        %v3588 = vadd.f32 0.0, %v3587
        %v3589 = vpop.f32.mrf.mxu0
        %v3590 = vpop.f32.mrf.mxu0
        %v3591 = vadd.f32 0.0, %v3590
        %v3592 = vpop.f32.mrf.mxu0
        %3593 = vmatprep.mubr.bf16.mxu0 0
        %3594 = vmatmul.mubr.bf16.gmra.mxu0 %v3504
        %v3595 = vpop.f32.mrf.mxu0
        %v3596 = vadd.f32 0.0, %v3595
        %v3597 = vpop.f32.mrf.mxu0
        %v3598 = vpop.f32.mrf.mxu0
        %v3599 = vadd.f32 0.0, %v3598
        %v3600 = vpop.f32.mrf.mxu0
        %3601 = vmatprep.mubr.bf16.mxu0 0
        %3602 = vmatmul.mubr.bf16.gmra.mxu0 %v3507
        %v3603 = vpop.f32.mrf.mxu0
        %v3604 = vadd.f32 0.0, %v3603
        %v3605 = vpop.f32.mrf.mxu0
        %v3606 = vpop.f32.mrf.mxu0
        %v3607 = vadd.f32 0.0, %v3606
        %v3608 = vpop.f32.mrf.mxu0
        %3609 = vmatprep.mubr.bf16.mxu0 0
        %3610 = vmatmul.mubr.bf16.gmra.mxu0 %v3510
        %v3611 = vpop.f32.mrf.mxu0
        %v3612 = vadd.f32 0.0, %v3611
        %v3613 = vpop.f32.mrf.mxu0
        %v3614 = vpop.f32.mrf.mxu0
        %v3615 = vadd.f32 0.0, %v3614
        %v3616 = vpop.f32.mrf.mxu0
        %3617 = vmatprep.mubr.bf16.mxu0 0
        %3618 = vmatmul.mubr.bf16.gmra.mxu0 %v3513
        %v3619 = vpop.f32.mrf.mxu0
        %v3620 = vadd.f32 0.0, %v3619
        %v3621 = vpop.f32.mrf.mxu0
        %v3622 = vpop.f32.mrf.mxu0
        %v3623 = vadd.f32 0.0, %v3622
        %v3624 = vpop.f32.mrf.mxu0
        %3625 = vmatprep.mubr.bf16.mxu0 0
        %3626 = vmatmul.mubr.bf16.gmra.mxu0 %v3516
        %v3627 = vpop.f32.mrf.mxu0
        %v3628 = vadd.f32 0.0, %v3627
        %v3629 = vpop.f32.mrf.mxu0
        %v3630 = vpop.f32.mrf.mxu0
        %v3631 = vadd.f32 0.0, %v3630
        %v3632 = vpop.f32.mrf.mxu0
        %3633 = vmatprep.mubr.bf16.mxu0 0
        %3634 = vmatmul.mubr.bf16.gmra.mxu0 %v3519
        %v3635 = vpop.f32.mrf.mxu0
        %v3636 = vadd.f32 0.0, %v3635
        %v3637 = vpop.f32.mrf.mxu0
        %v3638 = vpop.f32.mrf.mxu0
        %v3639 = vadd.f32 0.0, %v3638
        %v3640 = vpop.f32.mrf.mxu0
        %3641 = vmatprep.mubr.bf16.mxu0 0
        %3642 = vmatmul.mubr.bf16.gmra.mxu0 %v3522
        %v3643 = vpop.f32.mrf.mxu0
        %v3644 = vadd.f32 0.0, %v3643
        %v3645 = vpop.f32.mrf.mxu0
        %v3646 = vpop.f32.mrf.mxu0
        %v3647 = vadd.f32 0.0, %v3646
        %v3648 = vpop.f32.mrf.mxu0
        %3649 = vmatprep.mubr.bf16.mxu0 0
        %3650 = vmatmul.mubr.bf16.gmra.mxu0 %v3525
        %v3651 = vpop.f32.mrf.mxu0
        %v3652 = vadd.f32 0.0, %v3651
        %v3653 = vpop.f32.mrf.mxu0
        %v3654 = vpop.f32.mrf.mxu0
        %v3655 = vadd.f32 0.0, %v3654
        %v3656 = vpop.f32.mrf.mxu0
        %3657 = vmatprep.mubr.bf16.mxu0 0
        %3658 = vmatmul.mubr.bf16.gmra.mxu0 %v3528
        %v3659 = vpop.f32.mrf.mxu0
        %v3660 = vadd.f32 0.0, %v3659
        %v3661 = vpop.f32.mrf.mxu0
        %v3662 = vpop.f32.mrf.mxu0
        %v3663 = vadd.f32 0.0, %v3662
        %v3664 = vpop.f32.mrf.mxu0
        %3665 = vmatprep.mubr.bf16.mxu0 0
        %3666 = vmatmul.mubr.bf16.gmra.mxu0 %v3531
        %v3667 = vpop.f32.mrf.mxu0
        %v3668 = vadd.f32 0.0, %v3667
        %v3669 = vpop.f32.mrf.mxu0
        %v3670 = vpop.f32.mrf.mxu0
        %v3671 = vadd.f32 0.0, %v3670
        %v3672 = vpop.f32.mrf.mxu0
        %3673 = vmatprep.mubr.bf16.mxu0 0
        %3674 = vmatmul.mubr.bf16.gmra.mxu0 %v3534
        %v3675 = vpop.f32.mrf.mxu0
        %v3676 = vadd.f32 0.0, %v3675
        %v3677 = vpop.f32.mrf.mxu0
        %v3678 = vpop.f32.mrf.mxu0
        %v3679 = vadd.f32 0.0, %v3678
        %v3680 = vpop.f32.mrf.mxu0
        %3681 = vmatprep.mubr.bf16.mxu0 0
        %3682 = vmatmul.mubr.bf16.gmra.mxu0 %v3537
        %v3683 = vpop.f32.mrf.mxu0
        %v3684 = vadd.f32 0.0, %v3683
        %v3685 = vpop.f32.mrf.mxu0
        %v3686 = vpop.f32.mrf.mxu0
        %v3687 = vadd.f32 0.0, %v3686
        %v3688 = vpop.f32.mrf.mxu0
        %3689 = vmatprep.mubr.bf16.mxu0 0
        %3690 = vmatmul.mubr.bf16.gmra.mxu0 %v3540
        %v3691 = vpop.f32.mrf.mxu0
        %v3692 = vadd.f32 0.0, %v3691
        %v3693 = vpop.f32.mrf.mxu0
        %v3694 = vpop.f32.mrf.mxu0
        %v3695 = vadd.f32 0.0, %v3694
        %v3696 = vpop.f32.mrf.mxu0
        %3697 = vmatprep.mubr.bf16.mxu0 0
        %3698 = vmatmul.mubr.bf16.gmra.mxu0 %v3543
        %v3699 = vpop.f32.mrf.mxu0
        %v3700 = vadd.f32 0.0, %v3699
        %v3701 = vpop.f32.mrf.mxu0
        %v3702 = vpop.f32.mrf.mxu0
        %v3703 = vadd.f32 0.0, %v3702
        %v3704 = vpop.f32.mrf.mxu0
        %3705 = vdwg.mxu0
        %v3706 = vadd.f32 %v3337, %v3580
        %v3707 = vadd.f32 %v3338, %v3583
        %v3708 = vadd.f32 %v3339, %v3588
        %v3709 = vadd.f32 %v3340, %v3591
        %v3710 = vadd.f32 %v3341, %v3596
        %v3711 = vadd.f32 %v3342, %v3599
        %v3712 = vadd.f32 %v3343, %v3604
        %v3713 = vadd.f32 %v3344, %v3607
        %v3714 = vadd.f32 %v3345, %v3612
        %v3715 = vadd.f32 %v3346, %v3615
        %v3716 = vadd.f32 %v3347, %v3620
        %v3717 = vadd.f32 %v3348, %v3623
        %v3718 = vadd.f32 %v3349, %v3628
        %v3719 = vadd.f32 %v3350, %v3631
        %v3720 = vadd.f32 %v3351, %v3636
        %v3721 = vadd.f32 %v3352, %v3639
        %v3722 = vadd.f32 %v3353, %v3644
        %v3723 = vadd.f32 %v3354, %v3647
        %v3724 = vadd.f32 %v3355, %v3652
        %v3725 = vadd.f32 %v3356, %v3655
        %v3726 = vadd.f32 %v3357, %v3660
        %v3727 = vadd.f32 %v3358, %v3663
        %v3728 = vadd.f32 %v3359, %v3668
        %v3729 = vadd.f32 %v3360, %v3671
        %v3730 = vadd.f32 %v3361, %v3676
        %v3731 = vadd.f32 %v3362, %v3679
        %v3732 = vadd.f32 %v3363, %v3684
        %v3733 = vadd.f32 %v3364, %v3687
        %v3734 = vadd.f32 %v3365, %v3692
        %v3735 = vadd.f32 %v3366, %v3695
        %v3736 = vadd.f32 %v3367, %v3700
        %v3737 = vadd.f32 %v3368, %v3703
        %v3738 = vld [vmem:[%s1108] sm:$0xf]
        %v3739 = vld [vmem:[%s1108 + $0x4] sm:$0xf]
        %v3740 = vld [vmem:[%s1108 + $0x8] sm:$0x1]
        %v3741 = vld [vmem:[%s1108 + $0xc] sm:$0xf]
        %v3742 = vld [vmem:[%s1108 + $0x10] sm:$0xf]
        %v3743 = vld [vmem:[%s1108 + $0x14] sm:$0x1]
        %v3744 = vld [vmem:[%s1108 + $0x18] sm:$0xf]
        %v3745 = vld [vmem:[%s1108 + $0x1c] sm:$0xf]
        %v3746 = vld [vmem:[%s1108 + $0x20] sm:$0x1]
        %v3747 = vld [vmem:[%s1108 + $0x24] sm:$0xf]
        %v3748 = vld [vmem:[%s1108 + $0x28] sm:$0xf]
        %v3749 = vld [vmem:[%s1108 + $0x2c] sm:$0x1]
        %v3750 = vld [vmem:[%s1108 + $0x30] sm:$0xf]
        %v3751 = vld [vmem:[%s1108 + $0x34] sm:$0xf]
        %v3752 = vld [vmem:[%s1108 + $0x38] sm:$0x1]
        %v3753 = vld [vmem:[%s1108 + $0x3c] sm:$0xf]
        %v3754 = vld [vmem:[%s1108 + $0x40] sm:$0xf]
        %v3755 = vld [vmem:[%s1108 + $0x44] sm:$0x1]
        %v3756 = vld [vmem:[%s1108 + $0x48] sm:$0xf]
        %v3757 = vld [vmem:[%s1108 + $0x4c] sm:$0xf]
        %v3758 = vld [vmem:[%s1108 + $0x50] sm:$0x1]
        %v3759 = vld [vmem:[%s1108 + $0x54] sm:$0xf]
        %v3760 = vld [vmem:[%s1108 + $0x58] sm:$0xf]
        %v3761 = vld [vmem:[%s1108 + $0x5c] sm:$0x1]
        %v3762 = vld [vmem:[%s1108 + $0x60] sm:$0xf]
        %v3763 = vld [vmem:[%s1108 + $0x64] sm:$0xf]
        %v3764 = vld [vmem:[%s1108 + $0x68] sm:$0x1]
        %v3765 = vld [vmem:[%s1108 + $0x6c] sm:$0xf]
        %v3766 = vld [vmem:[%s1108 + $0x70] sm:$0xf]
        %v3767 = vld [vmem:[%s1108 + $0x74] sm:$0x1]
        %v3768 = vld [vmem:[%s1108 + $0x78] sm:$0xf]
        %v3769 = vld [vmem:[%s1108 + $0x7c] sm:$0xf]
        %v3770 = vld [vmem:[%s1108 + $0x80] sm:$0x1]
        %v3771 = vld [vmem:[%s1108 + $0x84] sm:$0xf]
        %v3772 = vld [vmem:[%s1108 + $0x88] sm:$0xf]
        %v3773 = vld [vmem:[%s1108 + $0x8c] sm:$0x1]
        %v3774 = vld [vmem:[%s1108 + $0x90] sm:$0xf]
        %v3775 = vld [vmem:[%s1108 + $0x94] sm:$0xf]
        %v3776 = vld [vmem:[%s1108 + $0x98] sm:$0x1]
        %v3777 = vld [vmem:[%s1108 + $0x9c] sm:$0xf]
        %v3778 = vld [vmem:[%s1108 + $0xa0] sm:$0xf]
        %v3779 = vld [vmem:[%s1108 + $0xa4] sm:$0x1]
        %v3780 = vld [vmem:[%s1108 + $0xa8] sm:$0xf]
        %v3781 = vld [vmem:[%s1108 + $0xac] sm:$0xf]
        %v3782 = vld [vmem:[%s1108 + $0xb0] sm:$0x1]
        %v3783 = vld [vmem:[%s1108 + $0xb4] sm:$0xf]
        %v3784 = vld [vmem:[%s1108 + $0xb8] sm:$0xf]
        %v3785 = vld [vmem:[%s1108 + $0xbc] sm:$0x1]
        %v3787 = vshrl.u32 %v3738, 16
        %v3789 = vrot.slane %v3787, 4
        %v3790 = vshll.u32 %v3738, 16
        %v3792 = vrot.slane %v3790, 5
        %v3793 = vor.u32 %v3789, %v3792
        %v3794 = vrot.slane %v3793, 4
        %v3796 = vshll.u32 %v3739, 16
        %v3798 = vrot.slane %v3796, 5
        %v3799 = vsel %vm1941, %v3794, %v3798
        %v3800 = vshrl.u32 %v3739, 16
        %v3802 = vrot.slane %v3800, 4
        %v3803 = vor.u32 %v3802, %v3798
        %v3804 = vrot.slane %v3803, 4
        %v3806 = vshll.u32 %v3740, 16
        %v3808 = vrot.slane %v3806, 5
        %v3809 = vsel %vm1941, %v3804, %v3808
        %v3811 = vshrl.u32 %v3741, 16
        %v3813 = vrot.slane %v3811, 4
        %v3814 = vshll.u32 %v3741, 16
        %v3816 = vrot.slane %v3814, 5
        %v3817 = vor.u32 %v3813, %v3816
        %v3818 = vrot.slane %v3817, 4
        %v3820 = vshll.u32 %v3742, 16
        %v3822 = vrot.slane %v3820, 5
        %v3823 = vsel %vm1941, %v3818, %v3822
        %v3824 = vshrl.u32 %v3742, 16
        %v3826 = vrot.slane %v3824, 4
        %v3827 = vor.u32 %v3826, %v3822
        %v3828 = vrot.slane %v3827, 4
        %v3830 = vshll.u32 %v3743, 16
        %v3832 = vrot.slane %v3830, 5
        %v3833 = vsel %vm1941, %v3828, %v3832
        %v3835 = vshrl.u32 %v3744, 16
        %v3837 = vrot.slane %v3835, 4
        %v3838 = vshll.u32 %v3744, 16
        %v3840 = vrot.slane %v3838, 5
        %v3841 = vor.u32 %v3837, %v3840
        %v3842 = vrot.slane %v3841, 4
        %v3844 = vshll.u32 %v3745, 16
        %v3846 = vrot.slane %v3844, 5
        %v3847 = vsel %vm1941, %v3842, %v3846
        %v3848 = vshrl.u32 %v3745, 16
        %v3850 = vrot.slane %v3848, 4
        %v3851 = vor.u32 %v3850, %v3846
        %v3852 = vrot.slane %v3851, 4
        %v3854 = vshll.u32 %v3746, 16
        %v3856 = vrot.slane %v3854, 5
        %v3857 = vsel %vm1941, %v3852, %v3856
        %v3859 = vshrl.u32 %v3747, 16
        %v3861 = vrot.slane %v3859, 4
        %v3862 = vshll.u32 %v3747, 16
        %v3864 = vrot.slane %v3862, 5
        %v3865 = vor.u32 %v3861, %v3864
        %v3866 = vrot.slane %v3865, 4
        %v3868 = vshll.u32 %v3748, 16
        %v3870 = vrot.slane %v3868, 5
        %v3871 = vsel %vm1941, %v3866, %v3870
        %v3872 = vshrl.u32 %v3748, 16
        %v3874 = vrot.slane %v3872, 4
        %v3875 = vor.u32 %v3874, %v3870
        %v3876 = vrot.slane %v3875, 4
        %v3878 = vshll.u32 %v3749, 16
        %v3880 = vrot.slane %v3878, 5
        %v3881 = vsel %vm1941, %v3876, %v3880
        %v3883 = vshrl.u32 %v3750, 16
        %v3885 = vrot.slane %v3883, 4
        %v3886 = vshll.u32 %v3750, 16
        %v3888 = vrot.slane %v3886, 5
        %v3889 = vor.u32 %v3885, %v3888
        %v3890 = vrot.slane %v3889, 4
        %v3892 = vshll.u32 %v3751, 16
        %v3894 = vrot.slane %v3892, 5
        %v3895 = vsel %vm1941, %v3890, %v3894
        %v3896 = vshrl.u32 %v3751, 16
        %v3898 = vrot.slane %v3896, 4
        %v3899 = vor.u32 %v3898, %v3894
        %v3900 = vrot.slane %v3899, 4
        %v3902 = vshll.u32 %v3752, 16
        %v3904 = vrot.slane %v3902, 5
        %v3905 = vsel %vm1941, %v3900, %v3904
        %v3907 = vshrl.u32 %v3753, 16
        %v3909 = vrot.slane %v3907, 4
        %v3910 = vshll.u32 %v3753, 16
        %v3912 = vrot.slane %v3910, 5
        %v3913 = vor.u32 %v3909, %v3912
        %v3914 = vrot.slane %v3913, 4
        %v3916 = vshll.u32 %v3754, 16
        %v3918 = vrot.slane %v3916, 5
        %v3919 = vsel %vm1941, %v3914, %v3918
        %v3920 = vshrl.u32 %v3754, 16
        %v3922 = vrot.slane %v3920, 4
        %v3923 = vor.u32 %v3922, %v3918
        %v3924 = vrot.slane %v3923, 4
        %v3926 = vshll.u32 %v3755, 16
        %v3928 = vrot.slane %v3926, 5
        %v3929 = vsel %vm1941, %v3924, %v3928
        %v3931 = vshrl.u32 %v3756, 16
        %v3933 = vrot.slane %v3931, 4
        %v3934 = vshll.u32 %v3756, 16
        %v3936 = vrot.slane %v3934, 5
        %v3937 = vor.u32 %v3933, %v3936
        %v3938 = vrot.slane %v3937, 4
        %v3940 = vshll.u32 %v3757, 16
        %v3942 = vrot.slane %v3940, 5
        %v3943 = vsel %vm1941, %v3938, %v3942
        %v3944 = vshrl.u32 %v3757, 16
        %v3946 = vrot.slane %v3944, 4
        %v3947 = vor.u32 %v3946, %v3942
        %v3948 = vrot.slane %v3947, 4
        %v3950 = vshll.u32 %v3758, 16
        %v3952 = vrot.slane %v3950, 5
        %v3953 = vsel %vm1941, %v3948, %v3952
        %v3955 = vshrl.u32 %v3759, 16
        %v3957 = vrot.slane %v3955, 4
        %v3958 = vshll.u32 %v3759, 16
        %v3960 = vrot.slane %v3958, 5
        %v3961 = vor.u32 %v3957, %v3960
        %v3962 = vrot.slane %v3961, 4
        %v3964 = vshll.u32 %v3760, 16
        %v3966 = vrot.slane %v3964, 5
        %v3967 = vsel %vm1941, %v3962, %v3966
        %v3968 = vshrl.u32 %v3760, 16
        %v3970 = vrot.slane %v3968, 4
        %v3971 = vor.u32 %v3970, %v3966
        %v3972 = vrot.slane %v3971, 4
        %v3974 = vshll.u32 %v3761, 16
        %v3976 = vrot.slane %v3974, 5
        %v3977 = vsel %vm1941, %v3972, %v3976
        %v3979 = vshrl.u32 %v3762, 16
        %v3981 = vrot.slane %v3979, 4
        %v3982 = vshll.u32 %v3762, 16
        %v3984 = vrot.slane %v3982, 5
        %v3985 = vor.u32 %v3981, %v3984
        %v3986 = vrot.slane %v3985, 4
        %v3988 = vshll.u32 %v3763, 16
        %v3990 = vrot.slane %v3988, 5
        %v3991 = vsel %vm1941, %v3986, %v3990
        %v3992 = vshrl.u32 %v3763, 16
        %v3994 = vrot.slane %v3992, 4
        %v3995 = vor.u32 %v3994, %v3990
        %v3996 = vrot.slane %v3995, 4
        %v3998 = vshll.u32 %v3764, 16
        %v4000 = vrot.slane %v3998, 5
        %v4001 = vsel %vm1941, %v3996, %v4000
        %v4003 = vshrl.u32 %v3765, 16
        %v4005 = vrot.slane %v4003, 4
        %v4006 = vshll.u32 %v3765, 16
        %v4008 = vrot.slane %v4006, 5
        %v4009 = vor.u32 %v4005, %v4008
        %v4010 = vrot.slane %v4009, 4
        %v4012 = vshll.u32 %v3766, 16
        %v4014 = vrot.slane %v4012, 5
        %v4015 = vsel %vm1941, %v4010, %v4014
        %v4016 = vshrl.u32 %v3766, 16
        %v4018 = vrot.slane %v4016, 4
        %v4019 = vor.u32 %v4018, %v4014
        %v4020 = vrot.slane %v4019, 4
        %v4022 = vshll.u32 %v3767, 16
        %v4024 = vrot.slane %v4022, 5
        %v4025 = vsel %vm1941, %v4020, %v4024
        %v4027 = vshrl.u32 %v3768, 16
        %v4029 = vrot.slane %v4027, 4
        %v4030 = vshll.u32 %v3768, 16
        %v4032 = vrot.slane %v4030, 5
        %v4033 = vor.u32 %v4029, %v4032
        %v4034 = vrot.slane %v4033, 4
        %v4036 = vshll.u32 %v3769, 16
        %v4038 = vrot.slane %v4036, 5
        %v4039 = vsel %vm1941, %v4034, %v4038
        %v4040 = vshrl.u32 %v3769, 16
        %v4042 = vrot.slane %v4040, 4
        %v4043 = vor.u32 %v4042, %v4038
        %v4044 = vrot.slane %v4043, 4
        %v4046 = vshll.u32 %v3770, 16
        %v4048 = vrot.slane %v4046, 5
        %v4049 = vsel %vm1941, %v4044, %v4048
        %v4051 = vshrl.u32 %v3771, 16
        %v4053 = vrot.slane %v4051, 4
        %v4054 = vshll.u32 %v3771, 16
        %v4056 = vrot.slane %v4054, 5
        %v4057 = vor.u32 %v4053, %v4056
        %v4058 = vrot.slane %v4057, 4
        %v4060 = vshll.u32 %v3772, 16
        %v4062 = vrot.slane %v4060, 5
        %v4063 = vsel %vm1941, %v4058, %v4062
        %v4064 = vshrl.u32 %v3772, 16
        %v4066 = vrot.slane %v4064, 4
        %v4067 = vor.u32 %v4066, %v4062
        %v4068 = vrot.slane %v4067, 4
        %v4070 = vshll.u32 %v3773, 16
        %v4072 = vrot.slane %v4070, 5
        %v4073 = vsel %vm1941, %v4068, %v4072
        %v4075 = vshrl.u32 %v3774, 16
        %v4077 = vrot.slane %v4075, 4
        %v4078 = vshll.u32 %v3774, 16
        %v4080 = vrot.slane %v4078, 5
        %v4081 = vor.u32 %v4077, %v4080
        %v4082 = vrot.slane %v4081, 4
        %v4084 = vshll.u32 %v3775, 16
        %v4086 = vrot.slane %v4084, 5
        %v4087 = vsel %vm1941, %v4082, %v4086
        %v4088 = vshrl.u32 %v3775, 16
        %v4090 = vrot.slane %v4088, 4
        %v4091 = vor.u32 %v4090, %v4086
        %v4092 = vrot.slane %v4091, 4
        %v4094 = vshll.u32 %v3776, 16
        %v4096 = vrot.slane %v4094, 5
        %v4097 = vsel %vm1941, %v4092, %v4096
        %v4099 = vshrl.u32 %v3777, 16
        %v4101 = vrot.slane %v4099, 4
        %v4102 = vshll.u32 %v3777, 16
        %v4104 = vrot.slane %v4102, 5
        %v4105 = vor.u32 %v4101, %v4104
        %v4106 = vrot.slane %v4105, 4
        %v4108 = vshll.u32 %v3778, 16
        %v4110 = vrot.slane %v4108, 5
        %v4111 = vsel %vm1941, %v4106, %v4110
        %v4112 = vshrl.u32 %v3778, 16
        %v4114 = vrot.slane %v4112, 4
        %v4115 = vor.u32 %v4114, %v4110
        %v4116 = vrot.slane %v4115, 4
        %v4118 = vshll.u32 %v3779, 16
        %v4120 = vrot.slane %v4118, 5
        %v4121 = vsel %vm1941, %v4116, %v4120
        %v4123 = vshrl.u32 %v3780, 16
        %v4125 = vrot.slane %v4123, 4
        %v4126 = vshll.u32 %v3780, 16
        %v4128 = vrot.slane %v4126, 5
        %v4129 = vor.u32 %v4125, %v4128
        %v4130 = vrot.slane %v4129, 4
        %v4132 = vshll.u32 %v3781, 16
        %v4134 = vrot.slane %v4132, 5
        %v4135 = vsel %vm1941, %v4130, %v4134
        %v4136 = vshrl.u32 %v3781, 16
        %v4138 = vrot.slane %v4136, 4
        %v4139 = vor.u32 %v4138, %v4134
        %v4140 = vrot.slane %v4139, 4
        %v4142 = vshll.u32 %v3782, 16
        %v4144 = vrot.slane %v4142, 5
        %v4145 = vsel %vm1941, %v4140, %v4144
        %v4147 = vshrl.u32 %v3783, 16
        %v4149 = vrot.slane %v4147, 4
        %v4150 = vshll.u32 %v3783, 16
        %v4152 = vrot.slane %v4150, 5
        %v4153 = vor.u32 %v4149, %v4152
        %v4154 = vrot.slane %v4153, 4
        %v4156 = vshll.u32 %v3784, 16
        %v4158 = vrot.slane %v4156, 5
        %v4159 = vsel %vm1941, %v4154, %v4158
        %v4160 = vshrl.u32 %v3784, 16
        %v4162 = vrot.slane %v4160, 4
        %v4163 = vor.u32 %v4162, %v4158
        %v4164 = vrot.slane %v4163, 4
        %v4166 = vshll.u32 %v3785, 16
        %v4168 = vrot.slane %v4166, 5
        %v4169 = vsel %vm1941, %v4164, %v4168
        %v4170 = vld [vmem:[%s2 + $0x40] sm:$0xf]
        %v4171 = vld [vmem:[%s2 + $0x44] sm:$0xf]
        %v4172 = vld [vmem:[%s2 + $0x48] sm:$0xf]
        %v4173 = vld [vmem:[%s2 + $0x4c] sm:$0xf]
        %v4174 = vunpack.c.l.b16 %v3799
        %v4175 = vunpack.c.l.b16 %v3809
        %v4176 = vunpack.c.l.b16 %v3823
        %v4177 = vunpack.c.l.b16 %v3833
        %v4178 = vunpack.c.l.b16 %v3847
        %v4179 = vunpack.c.l.b16 %v3857
        %v4180 = vunpack.c.l.b16 %v3871
        %v4181 = vunpack.c.l.b16 %v3881
        %v4182 = vunpack.c.l.b16 %v3895
        %v4183 = vunpack.c.l.b16 %v3905
        %v4184 = vunpack.c.l.b16 %v3919
        %v4185 = vunpack.c.l.b16 %v3929
        %v4186 = vunpack.c.l.b16 %v3943
        %v4187 = vunpack.c.l.b16 %v3953
        %v4188 = vunpack.c.l.b16 %v3967
        %v4189 = vunpack.c.l.b16 %v3977
        %v4190 = vunpack.c.l.b16 %v3991
        %v4191 = vunpack.c.l.b16 %v4001
        %v4192 = vunpack.c.l.b16 %v4015
        %v4193 = vunpack.c.l.b16 %v4025
        %v4194 = vunpack.c.l.b16 %v4039
        %v4195 = vunpack.c.l.b16 %v4049
        %v4196 = vunpack.c.l.b16 %v4063
        %v4197 = vunpack.c.l.b16 %v4073
        %v4198 = vunpack.c.l.b16 %v4087
        %v4199 = vunpack.c.l.b16 %v4097
        %v4200 = vunpack.c.l.b16 %v4111
        %v4201 = vunpack.c.l.b16 %v4121
        %v4202 = vunpack.c.l.b16 %v4135
        %v4203 = vunpack.c.l.b16 %v4145
        %v4204 = vunpack.c.l.b16 %v4159
        %v4205 = vunpack.c.l.b16 %v4169
        %v4206 = vpack.c.b16 %v4175, %v4174
        %v4207 = vpack.c.b16 %v4177, %v4176
        %v4208 = vpack.c.b16 %v4179, %v4178
        %v4209 = vpack.c.b16 %v4181, %v4180
        %v4210 = vpack.c.b16 %v4183, %v4182
        %v4211 = vpack.c.b16 %v4185, %v4184
        %v4212 = vpack.c.b16 %v4187, %v4186
        %v4213 = vpack.c.b16 %v4189, %v4188
        %v4214 = vpack.c.b16 %v4191, %v4190
        %v4215 = vpack.c.b16 %v4193, %v4192
        %v4216 = vpack.c.b16 %v4195, %v4194
        %v4217 = vpack.c.b16 %v4197, %v4196
        %v4218 = vpack.c.b16 %v4199, %v4198
        %v4219 = vpack.c.b16 %v4201, %v4200
        %v4220 = vpack.c.b16 %v4203, %v4202
        %v4221 = vpack.c.b16 %v4205, %v4204
        %v4226 = vunpack.c.l.b16 %v4170
        %v4227 = vunpack.c.l.b16 %v4171
        %v4228 = vunpack.c.l.b16 %v4172
        %v4229 = vunpack.c.l.b16 %v4173
        %v4230 = vpack.c.b16 %v4227, %v4226
        %v4231 = vpack.c.b16 %v4229, %v4228
        %v4235 = vsel %vm2390, %v4206, 0
        %v4238 = vsel %vm2390, %v4207, 0
        %v4241 = vsel %vm2390, %v4208, 0
        %v4244 = vsel %vm2390, %v4209, 0
        %v4247 = vsel %vm2390, %v4210, 0
        %v4250 = vsel %vm2390, %v4211, 0
        %v4253 = vsel %vm2390, %v4212, 0
        %v4256 = vsel %vm2390, %v4213, 0
        %v4259 = vsel %vm2390, %v4214, 0
        %v4262 = vsel %vm2390, %v4215, 0
        %v4265 = vsel %vm2390, %v4216, 0
        %v4268 = vsel %vm2390, %v4217, 0
        %v4271 = vsel %vm2390, %v4218, 0
        %v4274 = vsel %vm2390, %v4219, 0
        %v4277 = vsel %vm2390, %v4220, 0
        %v4280 = vsel %vm2390, %v4221, 0
        %4282 = vmatprep.subr.bf16.mxu0 0
        %4283 = vmatpush1.bf16.msra.mxu0 0
        %4284 = vmatprep.subr.bf16.mxu0 0
        %4285 = vmatpush1.bf16.msra.mxu0 0
        %4286 = vmatprep.subr.bf16.mxu0 0
        %4287 = vmatpush1.bf16.msra.mxu0 0
        %4288 = vmatprep.subr.bf16.mxu0 0
        %4289 = vmatpush1.bf16.msra.mxu0 0
        %4290 = vmatprep.subr.bf16.mxu0 0
        %4291 = vmatpush1.bf16.msra.mxu0 0
        %4292 = vmatprep.subr.bf16.mxu0 0
        %4293 = vmatpush1.bf16.msra.mxu0 0
        %4294 = vmatprep.subr.bf16.mxu0 0
        %4295 = vmatpush1.bf16.msra.mxu0 %v4231
        %4296 = vmatprep.subr.bf16.mxu0 0
        %4297 = vmatpush1.bf16.msra.mxu0 %v4230
        %4298 = vmatprep.subr.bf16.mxu0 0
        %4299 = vmatpush2.bf16.msra.mxu0 0
        %4300 = vmatprep.subr.bf16.mxu0 0
        %4301 = vmatpush2.bf16.msra.mxu0 0
        %4302 = vmatprep.subr.bf16.mxu0 0
        %4303 = vmatpush2.bf16.msra.mxu0 0
        %4304 = vmatprep.subr.bf16.mxu0 0
        %4305 = vmatpush2.bf16.msra.mxu0 0
        %4306 = vmatprep.subr.bf16.mxu0 0
        %4307 = vmatpush2.bf16.msra.mxu0 0
        %4308 = vmatprep.subr.bf16.mxu0 0
        %4309 = vmatpush2.bf16.msra.mxu0 0
        %4310 = vmatprep.subr.bf16.mxu0 0
        %4311 = vmatpush2.bf16.msra.mxu0 0
        %4312 = vmatprep.subr.bf16.mxu0 0
        %4313 = vmatpush2.bf16.msra.mxu0 0
        %4314 = vmatprep.mubr.bf16.mxu0 0
        %4315 = vmatmul.mubr.bf16.gmra.mxu0 %v4235
        %v4316 = vpop.f32.mrf.mxu0
        %v4317 = vadd.f32 0.0, %v4316
        %v4318 = vpop.f32.mrf.mxu0
        %v4319 = vpop.f32.mrf.mxu0
        %v4320 = vadd.f32 0.0, %v4319
        %v4321 = vpop.f32.mrf.mxu0
        %4322 = vmatprep.mubr.bf16.mxu0 0
        %4323 = vmatmul.mubr.bf16.gmra.mxu0 %v4238
        %v4324 = vpop.f32.mrf.mxu0
        %v4325 = vadd.f32 0.0, %v4324
        %v4326 = vpop.f32.mrf.mxu0
        %v4327 = vpop.f32.mrf.mxu0
        %v4328 = vadd.f32 0.0, %v4327
        %v4329 = vpop.f32.mrf.mxu0
        %4330 = vmatprep.mubr.bf16.mxu0 0
        %4331 = vmatmul.mubr.bf16.gmra.mxu0 %v4241
        %v4332 = vpop.f32.mrf.mxu0
        %v4333 = vadd.f32 0.0, %v4332
        %v4334 = vpop.f32.mrf.mxu0
        %v4335 = vpop.f32.mrf.mxu0
        %v4336 = vadd.f32 0.0, %v4335
        %v4337 = vpop.f32.mrf.mxu0
        %4338 = vmatprep.mubr.bf16.mxu0 0
        %4339 = vmatmul.mubr.bf16.gmra.mxu0 %v4244
        %v4340 = vpop.f32.mrf.mxu0
        %v4341 = vadd.f32 0.0, %v4340
        %v4342 = vpop.f32.mrf.mxu0
        %v4343 = vpop.f32.mrf.mxu0
        %v4344 = vadd.f32 0.0, %v4343
        %v4345 = vpop.f32.mrf.mxu0
        %4346 = vmatprep.mubr.bf16.mxu0 0
        %4347 = vmatmul.mubr.bf16.gmra.mxu0 %v4247
        %v4348 = vpop.f32.mrf.mxu0
        %v4349 = vadd.f32 0.0, %v4348
        %v4350 = vpop.f32.mrf.mxu0
        %v4351 = vpop.f32.mrf.mxu0
        %v4352 = vadd.f32 0.0, %v4351
        %v4353 = vpop.f32.mrf.mxu0
        %4354 = vmatprep.mubr.bf16.mxu0 0
        %4355 = vmatmul.mubr.bf16.gmra.mxu0 %v4250
        %v4356 = vpop.f32.mrf.mxu0
        %v4357 = vadd.f32 0.0, %v4356
        %v4358 = vpop.f32.mrf.mxu0
        %v4359 = vpop.f32.mrf.mxu0
        %v4360 = vadd.f32 0.0, %v4359
        %v4361 = vpop.f32.mrf.mxu0
        %4362 = vmatprep.mubr.bf16.mxu0 0
        %4363 = vmatmul.mubr.bf16.gmra.mxu0 %v4253
        %v4364 = vpop.f32.mrf.mxu0
        %v4365 = vadd.f32 0.0, %v4364
        %v4366 = vpop.f32.mrf.mxu0
        %v4367 = vpop.f32.mrf.mxu0
        %v4368 = vadd.f32 0.0, %v4367
        %v4369 = vpop.f32.mrf.mxu0
        %4370 = vmatprep.mubr.bf16.mxu0 0
        %4371 = vmatmul.mubr.bf16.gmra.mxu0 %v4256
        %v4372 = vpop.f32.mrf.mxu0
        %v4373 = vadd.f32 0.0, %v4372
        %v4374 = vpop.f32.mrf.mxu0
        %v4375 = vpop.f32.mrf.mxu0
        %v4376 = vadd.f32 0.0, %v4375
        %v4377 = vpop.f32.mrf.mxu0
        %4378 = vmatprep.mubr.bf16.mxu0 0
        %4379 = vmatmul.mubr.bf16.gmra.mxu0 %v4259
        %v4380 = vpop.f32.mrf.mxu0
        %v4381 = vadd.f32 0.0, %v4380
        %v4382 = vpop.f32.mrf.mxu0
        %v4383 = vpop.f32.mrf.mxu0
        %v4384 = vadd.f32 0.0, %v4383
        %v4385 = vpop.f32.mrf.mxu0
        %4386 = vmatprep.mubr.bf16.mxu0 0
        %4387 = vmatmul.mubr.bf16.gmra.mxu0 %v4262
        %v4388 = vpop.f32.mrf.mxu0
        %v4389 = vadd.f32 0.0, %v4388
        %v4390 = vpop.f32.mrf.mxu0
        %v4391 = vpop.f32.mrf.mxu0
        %v4392 = vadd.f32 0.0, %v4391
        %v4393 = vpop.f32.mrf.mxu0
        %4394 = vmatprep.mubr.bf16.mxu0 0
        %4395 = vmatmul.mubr.bf16.gmra.mxu0 %v4265
        %v4396 = vpop.f32.mrf.mxu0
        %v4397 = vadd.f32 0.0, %v4396
        %v4398 = vpop.f32.mrf.mxu0
        %v4399 = vpop.f32.mrf.mxu0
        %v4400 = vadd.f32 0.0, %v4399
        %v4401 = vpop.f32.mrf.mxu0
        %4402 = vmatprep.mubr.bf16.mxu0 0
        %4403 = vmatmul.mubr.bf16.gmra.mxu0 %v4268
        %v4404 = vpop.f32.mrf.mxu0
        %v4405 = vadd.f32 0.0, %v4404
        %v4406 = vpop.f32.mrf.mxu0
        %v4407 = vpop.f32.mrf.mxu0
        %v4408 = vadd.f32 0.0, %v4407
        %v4409 = vpop.f32.mrf.mxu0
        %4410 = vmatprep.mubr.bf16.mxu0 0
        %4411 = vmatmul.mubr.bf16.gmra.mxu0 %v4271
        %v4412 = vpop.f32.mrf.mxu0
        %v4413 = vadd.f32 0.0, %v4412
        %v4414 = vpop.f32.mrf.mxu0
        %v4415 = vpop.f32.mrf.mxu0
        %v4416 = vadd.f32 0.0, %v4415
        %v4417 = vpop.f32.mrf.mxu0
        %4418 = vmatprep.mubr.bf16.mxu0 0
        %4419 = vmatmul.mubr.bf16.gmra.mxu0 %v4274
        %v4420 = vpop.f32.mrf.mxu0
        %v4421 = vadd.f32 0.0, %v4420
        %v4422 = vpop.f32.mrf.mxu0
        %v4423 = vpop.f32.mrf.mxu0
        %v4424 = vadd.f32 0.0, %v4423
        %v4425 = vpop.f32.mrf.mxu0
        %4426 = vmatprep.mubr.bf16.mxu0 0
        %4427 = vmatmul.mubr.bf16.gmra.mxu0 %v4277
        %v4428 = vpop.f32.mrf.mxu0
        %v4429 = vadd.f32 0.0, %v4428
        %v4430 = vpop.f32.mrf.mxu0
        %v4431 = vpop.f32.mrf.mxu0
        %v4432 = vadd.f32 0.0, %v4431
        %v4433 = vpop.f32.mrf.mxu0
        %4434 = vmatprep.mubr.bf16.mxu0 0
        %4435 = vmatmul.mubr.bf16.gmra.mxu0 %v4280
        %v4436 = vpop.f32.mrf.mxu0
        %v4437 = vadd.f32 0.0, %v4436
        %v4438 = vpop.f32.mrf.mxu0
        %v4439 = vpop.f32.mrf.mxu0
        %v4440 = vadd.f32 0.0, %v4439
        %v4441 = vpop.f32.mrf.mxu0
        %4442 = vdwg.mxu0
        %v4443 = vadd.f32 %v3706, %v4317
        %v4444 = vadd.f32 %v3707, %v4320
        %v4445 = vadd.f32 %v3708, %v4325
        %v4446 = vadd.f32 %v3709, %v4328
        %v4447 = vadd.f32 %v3710, %v4333
        %v4448 = vadd.f32 %v3711, %v4336
        %v4449 = vadd.f32 %v3712, %v4341
        %v4450 = vadd.f32 %v3713, %v4344
        %v4451 = vadd.f32 %v3714, %v4349
        %v4452 = vadd.f32 %v3715, %v4352
        %v4453 = vadd.f32 %v3716, %v4357
        %v4454 = vadd.f32 %v3717, %v4360
        %v4455 = vadd.f32 %v3718, %v4365
        %v4456 = vadd.f32 %v3719, %v4368
        %v4457 = vadd.f32 %v3720, %v4373
        %v4458 = vadd.f32 %v3721, %v4376
        %v4459 = vadd.f32 %v3722, %v4381
        %v4460 = vadd.f32 %v3723, %v4384
        %v4461 = vadd.f32 %v3724, %v4389
        %v4462 = vadd.f32 %v3725, %v4392
        %v4463 = vadd.f32 %v3726, %v4397
        %v4464 = vadd.f32 %v3727, %v4400
        %v4465 = vadd.f32 %v3728, %v4405
        %v4466 = vadd.f32 %v3729, %v4408
        %v4467 = vadd.f32 %v3730, %v4413
        %v4468 = vadd.f32 %v3731, %v4416
        %v4469 = vadd.f32 %v3732, %v4421
        %v4470 = vadd.f32 %v3733, %v4424
        %v4471 = vadd.f32 %v3734, %v4429
        %v4472 = vadd.f32 %v3735, %v4432
        %v4473 = vadd.f32 %v3736, %v4437
        %v4474 = vadd.f32 %v3737, %v4440
        %v4475 = vld [vmem:[%s1108] sm:$0xe]
        %v4476 = vld [vmem:[%s1108 + $0xc] sm:$0xe]
        %v4477 = vld [vmem:[%s1108 + $0x18] sm:$0xe]
        %v4478 = vld [vmem:[%s1108 + $0x24] sm:$0xe]
        %v4479 = vld [vmem:[%s1108 + $0x30] sm:$0xe]
        %v4480 = vld [vmem:[%s1108 + $0x3c] sm:$0xe]
        %v4481 = vld [vmem:[%s1108 + $0x48] sm:$0xe]
        %v4482 = vld [vmem:[%s1108 + $0x54] sm:$0xe]
        %v4483 = vld [vmem:[%s1108 + $0x60] sm:$0xe]
        %v4484 = vld [vmem:[%s1108 + $0x6c] sm:$0xe]
        %v4485 = vld [vmem:[%s1108 + $0x78] sm:$0xe]
        %v4486 = vld [vmem:[%s1108 + $0x84] sm:$0xe]
        %v4487 = vld [vmem:[%s1108 + $0x90] sm:$0xe]
        %v4488 = vld [vmem:[%s1108 + $0x9c] sm:$0xe]
        %v4489 = vld [vmem:[%s1108 + $0xa8] sm:$0xe]
        %v4490 = vld [vmem:[%s1108 + $0xb4] sm:$0xe]
        %v4539 = vrot.slane %v4475, 5
        %v4540 = vrot.slane %v4539, 4
        %v4541 = vrot.slane %v3739, 5
        %v4542 = vsel %vm2951, %v4540, %v4541
        %v4543 = vrot.slane %v4541, 4
        %v4544 = vrot.slane %v3740, 5
        %v4545 = vsel %vm2951, %v4543, %v4544
        %v4546 = vrot.slane %v4476, 5
        %v4547 = vrot.slane %v4546, 4
        %v4548 = vrot.slane %v3742, 5
        %v4549 = vsel %vm2951, %v4547, %v4548
        %v4550 = vrot.slane %v4548, 4
        %v4551 = vrot.slane %v3743, 5
        %v4552 = vsel %vm2951, %v4550, %v4551
        %v4553 = vrot.slane %v4477, 5
        %v4554 = vrot.slane %v4553, 4
        %v4555 = vrot.slane %v3745, 5
        %v4556 = vsel %vm2951, %v4554, %v4555
        %v4557 = vrot.slane %v4555, 4
        %v4558 = vrot.slane %v3746, 5
        %v4559 = vsel %vm2951, %v4557, %v4558
        %v4560 = vrot.slane %v4478, 5
        %v4561 = vrot.slane %v4560, 4
        %v4562 = vrot.slane %v3748, 5
        %v4563 = vsel %vm2951, %v4561, %v4562
        %v4564 = vrot.slane %v4562, 4
        %v4565 = vrot.slane %v3749, 5
        %v4566 = vsel %vm2951, %v4564, %v4565
        %v4567 = vrot.slane %v4479, 5
        %v4568 = vrot.slane %v4567, 4
        %v4569 = vrot.slane %v3751, 5
        %v4570 = vsel %vm2951, %v4568, %v4569
        %v4571 = vrot.slane %v4569, 4
        %v4572 = vrot.slane %v3752, 5
        %v4573 = vsel %vm2951, %v4571, %v4572
        %v4574 = vrot.slane %v4480, 5
        %v4575 = vrot.slane %v4574, 4
        %v4576 = vrot.slane %v3754, 5
        %v4577 = vsel %vm2951, %v4575, %v4576
        %v4578 = vrot.slane %v4576, 4
        %v4579 = vrot.slane %v3755, 5
        %v4580 = vsel %vm2951, %v4578, %v4579
        %v4581 = vrot.slane %v4481, 5
        %v4582 = vrot.slane %v4581, 4
        %v4583 = vrot.slane %v3757, 5
        %v4584 = vsel %vm2951, %v4582, %v4583
        %v4585 = vrot.slane %v4583, 4
        %v4586 = vrot.slane %v3758, 5
        %v4587 = vsel %vm2951, %v4585, %v4586
        %v4588 = vrot.slane %v4482, 5
        %v4589 = vrot.slane %v4588, 4
        %v4590 = vrot.slane %v3760, 5
        %v4591 = vsel %vm2951, %v4589, %v4590
        %v4592 = vrot.slane %v4590, 4
        %v4593 = vrot.slane %v3761, 5
        %v4594 = vsel %vm2951, %v4592, %v4593
        %v4595 = vrot.slane %v4483, 5
        %v4596 = vrot.slane %v4595, 4
        %v4597 = vrot.slane %v3763, 5
        %v4598 = vsel %vm2951, %v4596, %v4597
        %v4599 = vrot.slane %v4597, 4
        %v4600 = vrot.slane %v3764, 5
        %v4601 = vsel %vm2951, %v4599, %v4600
        %v4602 = vrot.slane %v4484, 5
        %v4603 = vrot.slane %v4602, 4
        %v4604 = vrot.slane %v3766, 5
        %v4605 = vsel %vm2951, %v4603, %v4604
        %v4606 = vrot.slane %v4604, 4
        %v4607 = vrot.slane %v3767, 5
        %v4608 = vsel %vm2951, %v4606, %v4607
        %v4609 = vrot.slane %v4485, 5
        %v4610 = vrot.slane %v4609, 4
        %v4611 = vrot.slane %v3769, 5
        %v4612 = vsel %vm2951, %v4610, %v4611
        %v4613 = vrot.slane %v4611, 4
        %v4614 = vrot.slane %v3770, 5
        %v4615 = vsel %vm2951, %v4613, %v4614
        %v4616 = vrot.slane %v4486, 5
        %v4617 = vrot.slane %v4616, 4
        %v4618 = vrot.slane %v3772, 5
        %v4619 = vsel %vm2951, %v4617, %v4618
        %v4620 = vrot.slane %v4618, 4
        %v4621 = vrot.slane %v3773, 5
        %v4622 = vsel %vm2951, %v4620, %v4621
        %v4623 = vrot.slane %v4487, 5
        %v4624 = vrot.slane %v4623, 4
        %v4625 = vrot.slane %v3775, 5
        %v4626 = vsel %vm2951, %v4624, %v4625
        %v4627 = vrot.slane %v4625, 4
        %v4628 = vrot.slane %v3776, 5
        %v4629 = vsel %vm2951, %v4627, %v4628
        %v4630 = vrot.slane %v4488, 5
        %v4631 = vrot.slane %v4630, 4
        %v4632 = vrot.slane %v3778, 5
        %v4633 = vsel %vm2951, %v4631, %v4632
        %v4634 = vrot.slane %v4632, 4
        %v4635 = vrot.slane %v3779, 5
        %v4636 = vsel %vm2951, %v4634, %v4635
        %v4637 = vrot.slane %v4489, 5
        %v4638 = vrot.slane %v4637, 4
        %v4639 = vrot.slane %v3781, 5
        %v4640 = vsel %vm2951, %v4638, %v4639
        %v4641 = vrot.slane %v4639, 4
        %v4642 = vrot.slane %v3782, 5
        %v4643 = vsel %vm2951, %v4641, %v4642
        %v4644 = vrot.slane %v4490, 5
        %v4645 = vrot.slane %v4644, 4
        %v4646 = vrot.slane %v3784, 5
        %v4647 = vsel %vm2951, %v4645, %v4646
        %v4648 = vrot.slane %v4646, 4
        %v4649 = vrot.slane %v3785, 5
        %v4650 = vsel %vm2951, %v4648, %v4649
        %v4651 = vld [vmem:[%s2 + $0x50] sm:$0xf]
        %v4652 = vld [vmem:[%s2 + $0x54] sm:$0xf]
        %v4653 = vld [vmem:[%s2 + $0x58] sm:$0xf]
        %v4654 = vld [vmem:[%s2 + $0x5c] sm:$0xf]
        %v4655 = vunpack.c.l.b16 %v4542
        %v4656 = vunpack.c.l.b16 %v4545
        %v4657 = vunpack.c.l.b16 %v4549
        %v4658 = vunpack.c.l.b16 %v4552
        %v4659 = vunpack.c.l.b16 %v4556
        %v4660 = vunpack.c.l.b16 %v4559
        %v4661 = vunpack.c.l.b16 %v4563
        %v4662 = vunpack.c.l.b16 %v4566
        %v4663 = vunpack.c.l.b16 %v4570
        %v4664 = vunpack.c.l.b16 %v4573
        %v4665 = vunpack.c.l.b16 %v4577
        %v4666 = vunpack.c.l.b16 %v4580
        %v4667 = vunpack.c.l.b16 %v4584
        %v4668 = vunpack.c.l.b16 %v4587
        %v4669 = vunpack.c.l.b16 %v4591
        %v4670 = vunpack.c.l.b16 %v4594
        %v4671 = vunpack.c.l.b16 %v4598
        %v4672 = vunpack.c.l.b16 %v4601
        %v4673 = vunpack.c.l.b16 %v4605
        %v4674 = vunpack.c.l.b16 %v4608
        %v4675 = vunpack.c.l.b16 %v4612
        %v4676 = vunpack.c.l.b16 %v4615
        %v4677 = vunpack.c.l.b16 %v4619
        %v4678 = vunpack.c.l.b16 %v4622
        %v4679 = vunpack.c.l.b16 %v4626
        %v4680 = vunpack.c.l.b16 %v4629
        %v4681 = vunpack.c.l.b16 %v4633
        %v4682 = vunpack.c.l.b16 %v4636
        %v4683 = vunpack.c.l.b16 %v4640
        %v4684 = vunpack.c.l.b16 %v4643
        %v4685 = vunpack.c.l.b16 %v4647
        %v4686 = vunpack.c.l.b16 %v4650
        %v4687 = vpack.c.b16 %v4656, %v4655
        %v4688 = vpack.c.b16 %v4658, %v4657
        %v4689 = vpack.c.b16 %v4660, %v4659
        %v4690 = vpack.c.b16 %v4662, %v4661
        %v4691 = vpack.c.b16 %v4664, %v4663
        %v4692 = vpack.c.b16 %v4666, %v4665
        %v4693 = vpack.c.b16 %v4668, %v4667
        %v4694 = vpack.c.b16 %v4670, %v4669
        %v4695 = vpack.c.b16 %v4672, %v4671
        %v4696 = vpack.c.b16 %v4674, %v4673
        %v4697 = vpack.c.b16 %v4676, %v4675
        %v4698 = vpack.c.b16 %v4678, %v4677
        %v4699 = vpack.c.b16 %v4680, %v4679
        %v4700 = vpack.c.b16 %v4682, %v4681
        %v4701 = vpack.c.b16 %v4684, %v4683
        %v4702 = vpack.c.b16 %v4686, %v4685
        %v4707 = vunpack.c.l.b16 %v4651
        %v4708 = vunpack.c.l.b16 %v4652
        %v4709 = vunpack.c.l.b16 %v4653
        %v4710 = vunpack.c.l.b16 %v4654
        %v4711 = vpack.c.b16 %v4708, %v4707
        %v4712 = vpack.c.b16 %v4710, %v4709
        %v4716 = vsel %vm2390, %v4687, 0
        %v4719 = vsel %vm2390, %v4688, 0
        %v4722 = vsel %vm2390, %v4689, 0
        %v4725 = vsel %vm2390, %v4690, 0
        %v4728 = vsel %vm2390, %v4691, 0
        %v4731 = vsel %vm2390, %v4692, 0
        %v4734 = vsel %vm2390, %v4693, 0
        %v4737 = vsel %vm2390, %v4694, 0
        %v4740 = vsel %vm2390, %v4695, 0
        %v4743 = vsel %vm2390, %v4696, 0
        %v4746 = vsel %vm2390, %v4697, 0
        %v4749 = vsel %vm2390, %v4698, 0
        %v4752 = vsel %vm2390, %v4699, 0
        %v4755 = vsel %vm2390, %v4700, 0
        %v4758 = vsel %vm2390, %v4701, 0
        %v4761 = vsel %vm2390, %v4702, 0
        %4763 = vmatprep.subr.bf16.mxu0 0
        %4764 = vmatpush1.bf16.msra.mxu0 0
        %4765 = vmatprep.subr.bf16.mxu0 0
        %4766 = vmatpush1.bf16.msra.mxu0 0
        %4767 = vmatprep.subr.bf16.mxu0 0
        %4768 = vmatpush1.bf16.msra.mxu0 0
        %4769 = vmatprep.subr.bf16.mxu0 0
        %4770 = vmatpush1.bf16.msra.mxu0 0
        %4771 = vmatprep.subr.bf16.mxu0 0
        %4772 = vmatpush1.bf16.msra.mxu0 0
        %4773 = vmatprep.subr.bf16.mxu0 0
        %4774 = vmatpush1.bf16.msra.mxu0 0
        %4775 = vmatprep.subr.bf16.mxu0 0
        %4776 = vmatpush1.bf16.msra.mxu0 %v4712
        %4777 = vmatprep.subr.bf16.mxu0 0
        %4778 = vmatpush1.bf16.msra.mxu0 %v4711
        %4779 = vmatprep.subr.bf16.mxu0 0
        %4780 = vmatpush2.bf16.msra.mxu0 0
        %4781 = vmatprep.subr.bf16.mxu0 0
        %4782 = vmatpush2.bf16.msra.mxu0 0
        %4783 = vmatprep.subr.bf16.mxu0 0
        %4784 = vmatpush2.bf16.msra.mxu0 0
        %4785 = vmatprep.subr.bf16.mxu0 0
        %4786 = vmatpush2.bf16.msra.mxu0 0
        %4787 = vmatprep.subr.bf16.mxu0 0
        %4788 = vmatpush2.bf16.msra.mxu0 0
        %4789 = vmatprep.subr.bf16.mxu0 0
        %4790 = vmatpush2.bf16.msra.mxu0 0
        %4791 = vmatprep.subr.bf16.mxu0 0
        %4792 = vmatpush2.bf16.msra.mxu0 0
        %4793 = vmatprep.subr.bf16.mxu0 0
        %4794 = vmatpush2.bf16.msra.mxu0 0
        %4795 = vmatprep.mubr.bf16.mxu0 0
        %4796 = vmatmul.mubr.bf16.gmra.mxu0 %v4716
        %v4797 = vpop.f32.mrf.mxu0
        %v4798 = vadd.f32 0.0, %v4797
        %v4799 = vpop.f32.mrf.mxu0
        %v4800 = vpop.f32.mrf.mxu0
        %v4801 = vadd.f32 0.0, %v4800
        %v4802 = vpop.f32.mrf.mxu0
        %4803 = vmatprep.mubr.bf16.mxu0 0
        %4804 = vmatmul.mubr.bf16.gmra.mxu0 %v4719
        %v4805 = vpop.f32.mrf.mxu0
        %v4806 = vadd.f32 0.0, %v4805
        %v4807 = vpop.f32.mrf.mxu0
        %v4808 = vpop.f32.mrf.mxu0
        %v4809 = vadd.f32 0.0, %v4808
        %v4810 = vpop.f32.mrf.mxu0
        %4811 = vmatprep.mubr.bf16.mxu0 0
        %4812 = vmatmul.mubr.bf16.gmra.mxu0 %v4722
        %v4813 = vpop.f32.mrf.mxu0
        %v4814 = vadd.f32 0.0, %v4813
        %v4815 = vpop.f32.mrf.mxu0
        %v4816 = vpop.f32.mrf.mxu0
        %v4817 = vadd.f32 0.0, %v4816
        %v4818 = vpop.f32.mrf.mxu0
        %4819 = vmatprep.mubr.bf16.mxu0 0
        %4820 = vmatmul.mubr.bf16.gmra.mxu0 %v4725
        %v4821 = vpop.f32.mrf.mxu0
        %v4822 = vadd.f32 0.0, %v4821
        %v4823 = vpop.f32.mrf.mxu0
        %v4824 = vpop.f32.mrf.mxu0
        %v4825 = vadd.f32 0.0, %v4824
        %v4826 = vpop.f32.mrf.mxu0
        %4827 = vmatprep.mubr.bf16.mxu0 0
        %4828 = vmatmul.mubr.bf16.gmra.mxu0 %v4728
        %v4829 = vpop.f32.mrf.mxu0
        %v4830 = vadd.f32 0.0, %v4829
        %v4831 = vpop.f32.mrf.mxu0
        %v4832 = vpop.f32.mrf.mxu0
        %v4833 = vadd.f32 0.0, %v4832
        %v4834 = vpop.f32.mrf.mxu0
        %4835 = vmatprep.mubr.bf16.mxu0 0
        %4836 = vmatmul.mubr.bf16.gmra.mxu0 %v4731
        %v4837 = vpop.f32.mrf.mxu0
        %v4838 = vadd.f32 0.0, %v4837
        %v4839 = vpop.f32.mrf.mxu0
        %v4840 = vpop.f32.mrf.mxu0
        %v4841 = vadd.f32 0.0, %v4840
        %v4842 = vpop.f32.mrf.mxu0
        %4843 = vmatprep.mubr.bf16.mxu0 0
        %4844 = vmatmul.mubr.bf16.gmra.mxu0 %v4734
        %v4845 = vpop.f32.mrf.mxu0
        %v4846 = vadd.f32 0.0, %v4845
        %v4847 = vpop.f32.mrf.mxu0
        %v4848 = vpop.f32.mrf.mxu0
        %v4849 = vadd.f32 0.0, %v4848
        %v4850 = vpop.f32.mrf.mxu0
        %4851 = vmatprep.mubr.bf16.mxu0 0
        %4852 = vmatmul.mubr.bf16.gmra.mxu0 %v4737
        %v4853 = vpop.f32.mrf.mxu0
        %v4854 = vadd.f32 0.0, %v4853
        %v4855 = vpop.f32.mrf.mxu0
        %v4856 = vpop.f32.mrf.mxu0
        %v4857 = vadd.f32 0.0, %v4856
        %v4858 = vpop.f32.mrf.mxu0
        %4859 = vmatprep.mubr.bf16.mxu0 0
        %4860 = vmatmul.mubr.bf16.gmra.mxu0 %v4740
        %v4861 = vpop.f32.mrf.mxu0
        %v4862 = vadd.f32 0.0, %v4861
        %v4863 = vpop.f32.mrf.mxu0
        %v4864 = vpop.f32.mrf.mxu0
        %v4865 = vadd.f32 0.0, %v4864
        %v4866 = vpop.f32.mrf.mxu0
        %4867 = vmatprep.mubr.bf16.mxu0 0
        %4868 = vmatmul.mubr.bf16.gmra.mxu0 %v4743
        %v4869 = vpop.f32.mrf.mxu0
        %v4870 = vadd.f32 0.0, %v4869
        %v4871 = vpop.f32.mrf.mxu0
        %v4872 = vpop.f32.mrf.mxu0
        %v4873 = vadd.f32 0.0, %v4872
        %v4874 = vpop.f32.mrf.mxu0
        %4875 = vmatprep.mubr.bf16.mxu0 0
        %4876 = vmatmul.mubr.bf16.gmra.mxu0 %v4746
        %v4877 = vpop.f32.mrf.mxu0
        %v4878 = vadd.f32 0.0, %v4877
        %v4879 = vpop.f32.mrf.mxu0
        %v4880 = vpop.f32.mrf.mxu0
        %v4881 = vadd.f32 0.0, %v4880
        %v4882 = vpop.f32.mrf.mxu0
        %4883 = vmatprep.mubr.bf16.mxu0 0
        %4884 = vmatmul.mubr.bf16.gmra.mxu0 %v4749
        %v4885 = vpop.f32.mrf.mxu0
        %v4886 = vadd.f32 0.0, %v4885
        %v4887 = vpop.f32.mrf.mxu0
        %v4888 = vpop.f32.mrf.mxu0
        %v4889 = vadd.f32 0.0, %v4888
        %v4890 = vpop.f32.mrf.mxu0
        %4891 = vmatprep.mubr.bf16.mxu0 0
        %4892 = vmatmul.mubr.bf16.gmra.mxu0 %v4752
        %v4893 = vpop.f32.mrf.mxu0
        %v4894 = vadd.f32 0.0, %v4893
        %v4895 = vpop.f32.mrf.mxu0
        %v4896 = vpop.f32.mrf.mxu0
        %v4897 = vadd.f32 0.0, %v4896
        %v4898 = vpop.f32.mrf.mxu0
        %4899 = vmatprep.mubr.bf16.mxu0 0
        %4900 = vmatmul.mubr.bf16.gmra.mxu0 %v4755
        %v4901 = vpop.f32.mrf.mxu0
        %v4902 = vadd.f32 0.0, %v4901
        %v4903 = vpop.f32.mrf.mxu0
        %v4904 = vpop.f32.mrf.mxu0
        %v4905 = vadd.f32 0.0, %v4904
        %v4906 = vpop.f32.mrf.mxu0
        %4907 = vmatprep.mubr.bf16.mxu0 0
        %4908 = vmatmul.mubr.bf16.gmra.mxu0 %v4758
        %v4909 = vpop.f32.mrf.mxu0
        %v4910 = vadd.f32 0.0, %v4909
        %v4911 = vpop.f32.mrf.mxu0
        %v4912 = vpop.f32.mrf.mxu0
        %v4913 = vadd.f32 0.0, %v4912
        %v4914 = vpop.f32.mrf.mxu0
        %4915 = vmatprep.mubr.bf16.mxu0 0
        %4916 = vmatmul.mubr.bf16.gmra.mxu0 %v4761
        %v4917 = vpop.f32.mrf.mxu0
        %v4918 = vadd.f32 0.0, %v4917
        %v4919 = vpop.f32.mrf.mxu0
        %v4920 = vpop.f32.mrf.mxu0
        %v4921 = vadd.f32 0.0, %v4920
        %v4922 = vpop.f32.mrf.mxu0
        %4923 = vdwg.mxu0
        %v4924 = vadd.f32 %v4443, %v4798
        %v4925 = vadd.f32 %v4444, %v4801
        %v4926 = vadd.f32 %v4445, %v4806
        %v4927 = vadd.f32 %v4446, %v4809
        %v4928 = vadd.f32 %v4447, %v4814
        %v4929 = vadd.f32 %v4448, %v4817
        %v4930 = vadd.f32 %v4449, %v4822
        %v4931 = vadd.f32 %v4450, %v4825
        %v4932 = vadd.f32 %v4451, %v4830
        %v4933 = vadd.f32 %v4452, %v4833
        %v4934 = vadd.f32 %v4453, %v4838
        %v4935 = vadd.f32 %v4454, %v4841
        %v4936 = vadd.f32 %v4455, %v4846
        %v4937 = vadd.f32 %v4456, %v4849
        %v4938 = vadd.f32 %v4457, %v4854
        %v4939 = vadd.f32 %v4458, %v4857
        %v4940 = vadd.f32 %v4459, %v4862
        %v4941 = vadd.f32 %v4460, %v4865
        %v4942 = vadd.f32 %v4461, %v4870
        %v4943 = vadd.f32 %v4462, %v4873
        %v4944 = vadd.f32 %v4463, %v4878
        %v4945 = vadd.f32 %v4464, %v4881
        %v4946 = vadd.f32 %v4465, %v4886
        %v4947 = vadd.f32 %v4466, %v4889
        %v4948 = vadd.f32 %v4467, %v4894
        %v4949 = vadd.f32 %v4468, %v4897
        %v4950 = vadd.f32 %v4469, %v4902
        %v4951 = vadd.f32 %v4470, %v4905
        %v4952 = vadd.f32 %v4471, %v4910
        %v4953 = vadd.f32 %v4472, %v4913
        %v4954 = vadd.f32 %v4473, %v4918
        %v4955 = vadd.f32 %v4474, %v4921
        %s4956 = scalar_lea.vmem [#allocation2], 24
        %v4957 = vld [vmem:[%s4956] sm:$0xf]
        %v4958 = vld [vmem:[%s4956 + $0x4] sm:$0xf]
        %v4959 = vld [vmem:[%s4956 + $0xc] sm:$0xf]
        %v4960 = vld [vmem:[%s4956 + $0x10] sm:$0xf]
        %v4961 = vld [vmem:[%s4956 + $0x18] sm:$0xf]
        %v4962 = vld [vmem:[%s4956 + $0x1c] sm:$0xf]
        %v4963 = vld [vmem:[%s4956 + $0x24] sm:$0xf]
        %v4964 = vld [vmem:[%s4956 + $0x28] sm:$0xf]
        %v4965 = vld [vmem:[%s4956 + $0x30] sm:$0xf]
        %v4966 = vld [vmem:[%s4956 + $0x34] sm:$0xf]
        %v4967 = vld [vmem:[%s4956 + $0x3c] sm:$0xf]
        %v4968 = vld [vmem:[%s4956 + $0x40] sm:$0xf]
        %v4969 = vld [vmem:[%s4956 + $0x48] sm:$0xf]
        %v4970 = vld [vmem:[%s4956 + $0x4c] sm:$0xf]
        %v4971 = vld [vmem:[%s4956 + $0x54] sm:$0xf]
        %v4972 = vld [vmem:[%s4956 + $0x58] sm:$0xf]
        %v4973 = vld [vmem:[%s4956 + $0x60] sm:$0xf]
        %v4974 = vld [vmem:[%s4956 + $0x64] sm:$0xf]
        %v4975 = vld [vmem:[%s4956 + $0x6c] sm:$0xf]
        %v4976 = vld [vmem:[%s4956 + $0x70] sm:$0xf]
        %v4977 = vld [vmem:[%s4956 + $0x78] sm:$0xf]
        %v4978 = vld [vmem:[%s4956 + $0x7c] sm:$0xf]
        %v4979 = vld [vmem:[%s4956 + $0x84] sm:$0xf]
        %v4980 = vld [vmem:[%s4956 + $0x88] sm:$0xf]
        %v4981 = vld [vmem:[%s4956 + $0x90] sm:$0xf]
        %v4982 = vld [vmem:[%s4956 + $0x94] sm:$0xf]
        %v4983 = vld [vmem:[%s4956 + $0x9c] sm:$0xf]
        %v4984 = vld [vmem:[%s4956 + $0xa0] sm:$0xf]
        %v4985 = vld [vmem:[%s4956 + $0xa8] sm:$0xf]
        %v4986 = vld [vmem:[%s4956 + $0xac] sm:$0xf]
        %v4987 = vld [vmem:[%s4956 + $0xb4] sm:$0xf]
        %v4988 = vld [vmem:[%s4956 + $0xb8] sm:$0xf]
        %v4989 = vld [vmem:[%s2 + $0x60] sm:$0xf]
        %v4990 = vld [vmem:[%s2 + $0x64] sm:$0xf]
        %v4991 = vld [vmem:[%s2 + $0x68] sm:$0xf]
        %v4992 = vld [vmem:[%s2 + $0x6c] sm:$0xf]
        %v5025 = vunpack.c.l.b16 %v4957
        %v5026 = vunpack.c.l.b16 %v4958
        %v5027 = vunpack.c.l.b16 %v4959
        %v5028 = vunpack.c.l.b16 %v4960
        %v5029 = vunpack.c.l.b16 %v4961
        %v5030 = vunpack.c.l.b16 %v4962
        %v5031 = vunpack.c.l.b16 %v4963
        %v5032 = vunpack.c.l.b16 %v4964
        %v5033 = vunpack.c.l.b16 %v4965
        %v5034 = vunpack.c.l.b16 %v4966
        %v5035 = vunpack.c.l.b16 %v4967
        %v5036 = vunpack.c.l.b16 %v4968
        %v5037 = vunpack.c.l.b16 %v4969
        %v5038 = vunpack.c.l.b16 %v4970
        %v5039 = vunpack.c.l.b16 %v4971
        %v5040 = vunpack.c.l.b16 %v4972
        %v5041 = vunpack.c.l.b16 %v4973
        %v5042 = vunpack.c.l.b16 %v4974
        %v5043 = vunpack.c.l.b16 %v4975
        %v5044 = vunpack.c.l.b16 %v4976
        %v5045 = vunpack.c.l.b16 %v4977
        %v5046 = vunpack.c.l.b16 %v4978
        %v5047 = vunpack.c.l.b16 %v4979
        %v5048 = vunpack.c.l.b16 %v4980
        %v5049 = vunpack.c.l.b16 %v4981
        %v5050 = vunpack.c.l.b16 %v4982
        %v5051 = vunpack.c.l.b16 %v4983
        %v5052 = vunpack.c.l.b16 %v4984
        %v5053 = vunpack.c.l.b16 %v4985
        %v5054 = vunpack.c.l.b16 %v4986
        %v5055 = vunpack.c.l.b16 %v4987
        %v5056 = vunpack.c.l.b16 %v4988
        %v5057 = vpack.c.b16 %v5026, %v5025
        %v5058 = vpack.c.b16 %v5028, %v5027
        %v5059 = vpack.c.b16 %v5030, %v5029
        %v5060 = vpack.c.b16 %v5032, %v5031
        %v5061 = vpack.c.b16 %v5034, %v5033
        %v5062 = vpack.c.b16 %v5036, %v5035
        %v5063 = vpack.c.b16 %v5038, %v5037
        %v5064 = vpack.c.b16 %v5040, %v5039
        %v5065 = vpack.c.b16 %v5042, %v5041
        %v5066 = vpack.c.b16 %v5044, %v5043
        %v5067 = vpack.c.b16 %v5046, %v5045
        %v5068 = vpack.c.b16 %v5048, %v5047
        %v5069 = vpack.c.b16 %v5050, %v5049
        %v5070 = vpack.c.b16 %v5052, %v5051
        %v5071 = vpack.c.b16 %v5054, %v5053
        %v5072 = vpack.c.b16 %v5056, %v5055
        %v5077 = vunpack.c.l.b16 %v4989
        %v5078 = vunpack.c.l.b16 %v4990
        %v5079 = vunpack.c.l.b16 %v4991
        %v5080 = vunpack.c.l.b16 %v4992
        %v5081 = vpack.c.b16 %v5078, %v5077
        %v5082 = vpack.c.b16 %v5080, %v5079
        %v5086 = vsel %vm2390, %v5057, 0
        %v5089 = vsel %vm2390, %v5058, 0
        %v5092 = vsel %vm2390, %v5059, 0
        %v5095 = vsel %vm2390, %v5060, 0
        %v5098 = vsel %vm2390, %v5061, 0
        %v5101 = vsel %vm2390, %v5062, 0
        %v5104 = vsel %vm2390, %v5063, 0
        %v5107 = vsel %vm2390, %v5064, 0
        %v5110 = vsel %vm2390, %v5065, 0
        %v5113 = vsel %vm2390, %v5066, 0
        %v5116 = vsel %vm2390, %v5067, 0
        %v5119 = vsel %vm2390, %v5068, 0
        %v5122 = vsel %vm2390, %v5069, 0
        %v5125 = vsel %vm2390, %v5070, 0
        %v5128 = vsel %vm2390, %v5071, 0
        %v5131 = vsel %vm2390, %v5072, 0
        %5133 = vmatprep.subr.bf16.mxu0 0
        %5134 = vmatpush1.bf16.msra.mxu0 0
        %5135 = vmatprep.subr.bf16.mxu0 0
        %5136 = vmatpush1.bf16.msra.mxu0 0
        %5137 = vmatprep.subr.bf16.mxu0 0
        %5138 = vmatpush1.bf16.msra.mxu0 0
        %5139 = vmatprep.subr.bf16.mxu0 0
        %5140 = vmatpush1.bf16.msra.mxu0 0
        %5141 = vmatprep.subr.bf16.mxu0 0
        %5142 = vmatpush1.bf16.msra.mxu0 0
        %5143 = vmatprep.subr.bf16.mxu0 0
        %5144 = vmatpush1.bf16.msra.mxu0 0
        %5145 = vmatprep.subr.bf16.mxu0 0
        %5146 = vmatpush1.bf16.msra.mxu0 %v5082
        %5147 = vmatprep.subr.bf16.mxu0 0
        %5148 = vmatpush1.bf16.msra.mxu0 %v5081
        %5149 = vmatprep.subr.bf16.mxu0 0
        %5150 = vmatpush2.bf16.msra.mxu0 0
        %5151 = vmatprep.subr.bf16.mxu0 0
        %5152 = vmatpush2.bf16.msra.mxu0 0
        %5153 = vmatprep.subr.bf16.mxu0 0
        %5154 = vmatpush2.bf16.msra.mxu0 0
        %5155 = vmatprep.subr.bf16.mxu0 0
        %5156 = vmatpush2.bf16.msra.mxu0 0
        %5157 = vmatprep.subr.bf16.mxu0 0
        %5158 = vmatpush2.bf16.msra.mxu0 0
        %5159 = vmatprep.subr.bf16.mxu0 0
        %5160 = vmatpush2.bf16.msra.mxu0 0
        %5161 = vmatprep.subr.bf16.mxu0 0
        %5162 = vmatpush2.bf16.msra.mxu0 0
        %5163 = vmatprep.subr.bf16.mxu0 0
        %5164 = vmatpush2.bf16.msra.mxu0 0
        %5165 = vmatprep.mubr.bf16.mxu0 0
        %5166 = vmatmul.mubr.bf16.gmra.mxu0 %v5086
        %v5167 = vpop.f32.mrf.mxu0
        %v5168 = vadd.f32 0.0, %v5167
        %v5169 = vpop.f32.mrf.mxu0
        %v5170 = vpop.f32.mrf.mxu0
        %v5171 = vadd.f32 0.0, %v5170
        %v5172 = vpop.f32.mrf.mxu0
        %5173 = vmatprep.mubr.bf16.mxu0 0
        %5174 = vmatmul.mubr.bf16.gmra.mxu0 %v5089
        %v5175 = vpop.f32.mrf.mxu0
        %v5176 = vadd.f32 0.0, %v5175
        %v5177 = vpop.f32.mrf.mxu0
        %v5178 = vpop.f32.mrf.mxu0
        %v5179 = vadd.f32 0.0, %v5178
        %v5180 = vpop.f32.mrf.mxu0
        %5181 = vmatprep.mubr.bf16.mxu0 0
        %5182 = vmatmul.mubr.bf16.gmra.mxu0 %v5092
        %v5183 = vpop.f32.mrf.mxu0
        %v5184 = vadd.f32 0.0, %v5183
        %v5185 = vpop.f32.mrf.mxu0
        %v5186 = vpop.f32.mrf.mxu0
        %v5187 = vadd.f32 0.0, %v5186
        %v5188 = vpop.f32.mrf.mxu0
        %5189 = vmatprep.mubr.bf16.mxu0 0
        %5190 = vmatmul.mubr.bf16.gmra.mxu0 %v5095
        %v5191 = vpop.f32.mrf.mxu0
        %v5192 = vadd.f32 0.0, %v5191
        %v5193 = vpop.f32.mrf.mxu0
        %v5194 = vpop.f32.mrf.mxu0
        %v5195 = vadd.f32 0.0, %v5194
        %v5196 = vpop.f32.mrf.mxu0
        %5197 = vmatprep.mubr.bf16.mxu0 0
        %5198 = vmatmul.mubr.bf16.gmra.mxu0 %v5098
        %v5199 = vpop.f32.mrf.mxu0
        %v5200 = vadd.f32 0.0, %v5199
        %v5201 = vpop.f32.mrf.mxu0
        %v5202 = vpop.f32.mrf.mxu0
        %v5203 = vadd.f32 0.0, %v5202
        %v5204 = vpop.f32.mrf.mxu0
        %5205 = vmatprep.mubr.bf16.mxu0 0
        %5206 = vmatmul.mubr.bf16.gmra.mxu0 %v5101
        %v5207 = vpop.f32.mrf.mxu0
        %v5208 = vadd.f32 0.0, %v5207
        %v5209 = vpop.f32.mrf.mxu0
        %v5210 = vpop.f32.mrf.mxu0
        %v5211 = vadd.f32 0.0, %v5210
        %v5212 = vpop.f32.mrf.mxu0
        %5213 = vmatprep.mubr.bf16.mxu0 0
        %5214 = vmatmul.mubr.bf16.gmra.mxu0 %v5104
        %v5215 = vpop.f32.mrf.mxu0
        %v5216 = vadd.f32 0.0, %v5215
        %v5217 = vpop.f32.mrf.mxu0
        %v5218 = vpop.f32.mrf.mxu0
        %v5219 = vadd.f32 0.0, %v5218
        %v5220 = vpop.f32.mrf.mxu0
        %5221 = vmatprep.mubr.bf16.mxu0 0
        %5222 = vmatmul.mubr.bf16.gmra.mxu0 %v5107
        %v5223 = vpop.f32.mrf.mxu0
        %v5224 = vadd.f32 0.0, %v5223
        %v5225 = vpop.f32.mrf.mxu0
        %v5226 = vpop.f32.mrf.mxu0
        %v5227 = vadd.f32 0.0, %v5226
        %v5228 = vpop.f32.mrf.mxu0
        %5229 = vmatprep.mubr.bf16.mxu0 0
        %5230 = vmatmul.mubr.bf16.gmra.mxu0 %v5110
        %v5231 = vpop.f32.mrf.mxu0
        %v5232 = vadd.f32 0.0, %v5231
        %v5233 = vpop.f32.mrf.mxu0
        %v5234 = vpop.f32.mrf.mxu0
        %v5235 = vadd.f32 0.0, %v5234
        %v5236 = vpop.f32.mrf.mxu0
        %5237 = vmatprep.mubr.bf16.mxu0 0
        %5238 = vmatmul.mubr.bf16.gmra.mxu0 %v5113
        %v5239 = vpop.f32.mrf.mxu0
        %v5240 = vadd.f32 0.0, %v5239
        %v5241 = vpop.f32.mrf.mxu0
        %v5242 = vpop.f32.mrf.mxu0
        %v5243 = vadd.f32 0.0, %v5242
        %v5244 = vpop.f32.mrf.mxu0
        %5245 = vmatprep.mubr.bf16.mxu0 0
        %5246 = vmatmul.mubr.bf16.gmra.mxu0 %v5116
        %v5247 = vpop.f32.mrf.mxu0
        %v5248 = vadd.f32 0.0, %v5247
        %v5249 = vpop.f32.mrf.mxu0
        %v5250 = vpop.f32.mrf.mxu0
        %v5251 = vadd.f32 0.0, %v5250
        %v5252 = vpop.f32.mrf.mxu0
        %5253 = vmatprep.mubr.bf16.mxu0 0
        %5254 = vmatmul.mubr.bf16.gmra.mxu0 %v5119
        %v5255 = vpop.f32.mrf.mxu0
        %v5256 = vadd.f32 0.0, %v5255
        %v5257 = vpop.f32.mrf.mxu0
        %v5258 = vpop.f32.mrf.mxu0
        %v5259 = vadd.f32 0.0, %v5258
        %v5260 = vpop.f32.mrf.mxu0
        %5261 = vmatprep.mubr.bf16.mxu0 0
        %5262 = vmatmul.mubr.bf16.gmra.mxu0 %v5122
        %v5263 = vpop.f32.mrf.mxu0
        %v5264 = vadd.f32 0.0, %v5263
        %v5265 = vpop.f32.mrf.mxu0
        %v5266 = vpop.f32.mrf.mxu0
        %v5267 = vadd.f32 0.0, %v5266
        %v5268 = vpop.f32.mrf.mxu0
        %5269 = vmatprep.mubr.bf16.mxu0 0
        %5270 = vmatmul.mubr.bf16.gmra.mxu0 %v5125
        %v5271 = vpop.f32.mrf.mxu0
        %v5272 = vadd.f32 0.0, %v5271
        %v5273 = vpop.f32.mrf.mxu0
        %v5274 = vpop.f32.mrf.mxu0
        %v5275 = vadd.f32 0.0, %v5274
        %v5276 = vpop.f32.mrf.mxu0
        %5277 = vmatprep.mubr.bf16.mxu0 0
        %5278 = vmatmul.mubr.bf16.gmra.mxu0 %v5128
        %v5279 = vpop.f32.mrf.mxu0
        %v5280 = vadd.f32 0.0, %v5279
        %v5281 = vpop.f32.mrf.mxu0
        %v5282 = vpop.f32.mrf.mxu0
        %v5283 = vadd.f32 0.0, %v5282
        %v5284 = vpop.f32.mrf.mxu0
        %5285 = vmatprep.mubr.bf16.mxu0 0
        %5286 = vmatmul.mubr.bf16.gmra.mxu0 %v5131
        %v5287 = vpop.f32.mrf.mxu0
        %v5288 = vadd.f32 0.0, %v5287
        %v5289 = vpop.f32.mrf.mxu0
        %v5290 = vpop.f32.mrf.mxu0
        %v5291 = vadd.f32 0.0, %v5290
        %v5292 = vpop.f32.mrf.mxu0
        %5293 = vdwg.mxu0
        %v5294 = vadd.f32 %v4924, %v5168
        %v5295 = vadd.f32 %v4925, %v5171
        %v5296 = vadd.f32 %v4926, %v5176
        %v5297 = vadd.f32 %v4927, %v5179
        %v5298 = vadd.f32 %v4928, %v5184
        %v5299 = vadd.f32 %v4929, %v5187
        %v5300 = vadd.f32 %v4930, %v5192
        %v5301 = vadd.f32 %v4931, %v5195
        %v5302 = vadd.f32 %v4932, %v5200
        %v5303 = vadd.f32 %v4933, %v5203
        %v5304 = vadd.f32 %v4934, %v5208
        %v5305 = vadd.f32 %v4935, %v5211
        %v5306 = vadd.f32 %v4936, %v5216
        %v5307 = vadd.f32 %v4937, %v5219
        %v5308 = vadd.f32 %v4938, %v5224
        %v5309 = vadd.f32 %v4939, %v5227
        %v5310 = vadd.f32 %v4940, %v5232
        %v5311 = vadd.f32 %v4941, %v5235
        %v5312 = vadd.f32 %v4942, %v5240
        %v5313 = vadd.f32 %v4943, %v5243
        %v5314 = vadd.f32 %v4944, %v5248
        %v5315 = vadd.f32 %v4945, %v5251
        %v5316 = vadd.f32 %v4946, %v5256
        %v5317 = vadd.f32 %v4947, %v5259
        %v5318 = vadd.f32 %v4948, %v5264
        %v5319 = vadd.f32 %v4949, %v5267
        %v5320 = vadd.f32 %v4950, %v5272
        %v5321 = vadd.f32 %v4951, %v5275
        %v5322 = vadd.f32 %v4952, %v5280
        %v5323 = vadd.f32 %v4953, %v5283
        %v5324 = vadd.f32 %v4954, %v5288
        %v5325 = vadd.f32 %v4955, %v5291
        %v5326 = vld [vmem:[%s4956] sm:$0xf]
        %v5327 = vld [vmem:[%s4956 + $0x4] sm:$0xf]
        %v5328 = vld [vmem:[%s4956 + $0x8] sm:$0x1]
        %v5329 = vld [vmem:[%s4956 + $0xc] sm:$0xf]
        %v5330 = vld [vmem:[%s4956 + $0x10] sm:$0xf]
        %v5331 = vld [vmem:[%s4956 + $0x14] sm:$0x1]
        %v5332 = vld [vmem:[%s4956 + $0x18] sm:$0xf]
        %v5333 = vld [vmem:[%s4956 + $0x1c] sm:$0xf]
        %v5334 = vld [vmem:[%s4956 + $0x20] sm:$0x1]
        %v5335 = vld [vmem:[%s4956 + $0x24] sm:$0xf]
        %v5336 = vld [vmem:[%s4956 + $0x28] sm:$0xf]
        %v5337 = vld [vmem:[%s4956 + $0x2c] sm:$0x1]
        %v5338 = vld [vmem:[%s4956 + $0x30] sm:$0xf]
        %v5339 = vld [vmem:[%s4956 + $0x34] sm:$0xf]
        %v5340 = vld [vmem:[%s4956 + $0x38] sm:$0x1]
        %v5341 = vld [vmem:[%s4956 + $0x3c] sm:$0xf]
        %v5342 = vld [vmem:[%s4956 + $0x40] sm:$0xf]
        %v5343 = vld [vmem:[%s4956 + $0x44] sm:$0x1]
        %v5344 = vld [vmem:[%s4956 + $0x48] sm:$0xf]
        %v5345 = vld [vmem:[%s4956 + $0x4c] sm:$0xf]
        %v5346 = vld [vmem:[%s4956 + $0x50] sm:$0x1]
        %v5347 = vld [vmem:[%s4956 + $0x54] sm:$0xf]
        %v5348 = vld [vmem:[%s4956 + $0x58] sm:$0xf]
        %v5349 = vld [vmem:[%s4956 + $0x5c] sm:$0x1]
        %v5350 = vld [vmem:[%s4956 + $0x60] sm:$0xf]
        %v5351 = vld [vmem:[%s4956 + $0x64] sm:$0xf]
        %v5352 = vld [vmem:[%s4956 + $0x68] sm:$0x1]
        %v5353 = vld [vmem:[%s4956 + $0x6c] sm:$0xf]
        %v5354 = vld [vmem:[%s4956 + $0x70] sm:$0xf]
        %v5355 = vld [vmem:[%s4956 + $0x74] sm:$0x1]
        %v5356 = vld [vmem:[%s4956 + $0x78] sm:$0xf]
        %v5357 = vld [vmem:[%s4956 + $0x7c] sm:$0xf]
        %v5358 = vld [vmem:[%s4956 + $0x80] sm:$0x1]
        %v5359 = vld [vmem:[%s4956 + $0x84] sm:$0xf]
        %v5360 = vld [vmem:[%s4956 + $0x88] sm:$0xf]
        %v5361 = vld [vmem:[%s4956 + $0x8c] sm:$0x1]
        %v5362 = vld [vmem:[%s4956 + $0x90] sm:$0xf]
        %v5363 = vld [vmem:[%s4956 + $0x94] sm:$0xf]
        %v5364 = vld [vmem:[%s4956 + $0x98] sm:$0x1]
        %v5365 = vld [vmem:[%s4956 + $0x9c] sm:$0xf]
        %v5366 = vld [vmem:[%s4956 + $0xa0] sm:$0xf]
        %v5367 = vld [vmem:[%s4956 + $0xa4] sm:$0x1]
        %v5368 = vld [vmem:[%s4956 + $0xa8] sm:$0xf]
        %v5369 = vld [vmem:[%s4956 + $0xac] sm:$0xf]
        %v5370 = vld [vmem:[%s4956 + $0xb0] sm:$0x1]
        %v5371 = vld [vmem:[%s4956 + $0xb4] sm:$0xf]
        %v5372 = vld [vmem:[%s4956 + $0xb8] sm:$0xf]
        %v5373 = vld [vmem:[%s4956 + $0xbc] sm:$0x1]
        %v5375 = vshrl.u32 %v5326, 16
        %v5377 = vrot.slane %v5375, 4
        %v5378 = vshll.u32 %v5326, 16
        %v5380 = vrot.slane %v5378, 5
        %v5381 = vor.u32 %v5377, %v5380
        %v5382 = vrot.slane %v5381, 4
        %v5384 = vshll.u32 %v5327, 16
        %v5386 = vrot.slane %v5384, 5
        %v5387 = vsel %vm1941, %v5382, %v5386
        %v5388 = vshrl.u32 %v5327, 16
        %v5390 = vrot.slane %v5388, 4
        %v5391 = vor.u32 %v5390, %v5386
        %v5392 = vrot.slane %v5391, 4
        %v5394 = vshll.u32 %v5328, 16
        %v5396 = vrot.slane %v5394, 5
        %v5397 = vsel %vm1941, %v5392, %v5396
        %v5399 = vshrl.u32 %v5329, 16
        %v5401 = vrot.slane %v5399, 4
        %v5402 = vshll.u32 %v5329, 16
        %v5404 = vrot.slane %v5402, 5
        %v5405 = vor.u32 %v5401, %v5404
        %v5406 = vrot.slane %v5405, 4
        %v5408 = vshll.u32 %v5330, 16
        %v5410 = vrot.slane %v5408, 5
        %v5411 = vsel %vm1941, %v5406, %v5410
        %v5412 = vshrl.u32 %v5330, 16
        %v5414 = vrot.slane %v5412, 4
        %v5415 = vor.u32 %v5414, %v5410
        %v5416 = vrot.slane %v5415, 4
        %v5418 = vshll.u32 %v5331, 16
        %v5420 = vrot.slane %v5418, 5
        %v5421 = vsel %vm1941, %v5416, %v5420
        %v5423 = vshrl.u32 %v5332, 16
        %v5425 = vrot.slane %v5423, 4
        %v5426 = vshll.u32 %v5332, 16
        %v5428 = vrot.slane %v5426, 5
        %v5429 = vor.u32 %v5425, %v5428
        %v5430 = vrot.slane %v5429, 4
        %v5432 = vshll.u32 %v5333, 16
        %v5434 = vrot.slane %v5432, 5
        %v5435 = vsel %vm1941, %v5430, %v5434
        %v5436 = vshrl.u32 %v5333, 16
        %v5438 = vrot.slane %v5436, 4
        %v5439 = vor.u32 %v5438, %v5434
        %v5440 = vrot.slane %v5439, 4
        %v5442 = vshll.u32 %v5334, 16
        %v5444 = vrot.slane %v5442, 5
        %v5445 = vsel %vm1941, %v5440, %v5444
        %v5447 = vshrl.u32 %v5335, 16
        %v5449 = vrot.slane %v5447, 4
        %v5450 = vshll.u32 %v5335, 16
        %v5452 = vrot.slane %v5450, 5
        %v5453 = vor.u32 %v5449, %v5452
        %v5454 = vrot.slane %v5453, 4
        %v5456 = vshll.u32 %v5336, 16
        %v5458 = vrot.slane %v5456, 5
        %v5459 = vsel %vm1941, %v5454, %v5458
        %v5460 = vshrl.u32 %v5336, 16
        %v5462 = vrot.slane %v5460, 4
        %v5463 = vor.u32 %v5462, %v5458
        %v5464 = vrot.slane %v5463, 4
        %v5466 = vshll.u32 %v5337, 16
        %v5468 = vrot.slane %v5466, 5
        %v5469 = vsel %vm1941, %v5464, %v5468
        %v5471 = vshrl.u32 %v5338, 16
        %v5473 = vrot.slane %v5471, 4
        %v5474 = vshll.u32 %v5338, 16
        %v5476 = vrot.slane %v5474, 5
        %v5477 = vor.u32 %v5473, %v5476
        %v5478 = vrot.slane %v5477, 4
        %v5480 = vshll.u32 %v5339, 16
        %v5482 = vrot.slane %v5480, 5
        %v5483 = vsel %vm1941, %v5478, %v5482
        %v5484 = vshrl.u32 %v5339, 16
        %v5486 = vrot.slane %v5484, 4
        %v5487 = vor.u32 %v5486, %v5482
        %v5488 = vrot.slane %v5487, 4
        %v5490 = vshll.u32 %v5340, 16
        %v5492 = vrot.slane %v5490, 5
        %v5493 = vsel %vm1941, %v5488, %v5492
        %v5495 = vshrl.u32 %v5341, 16
        %v5497 = vrot.slane %v5495, 4
        %v5498 = vshll.u32 %v5341, 16
        %v5500 = vrot.slane %v5498, 5
        %v5501 = vor.u32 %v5497, %v5500
        %v5502 = vrot.slane %v5501, 4
        %v5504 = vshll.u32 %v5342, 16
        %v5506 = vrot.slane %v5504, 5
        %v5507 = vsel %vm1941, %v5502, %v5506
        %v5508 = vshrl.u32 %v5342, 16
        %v5510 = vrot.slane %v5508, 4
        %v5511 = vor.u32 %v5510, %v5506
        %v5512 = vrot.slane %v5511, 4
        %v5514 = vshll.u32 %v5343, 16
        %v5516 = vrot.slane %v5514, 5
        %v5517 = vsel %vm1941, %v5512, %v5516
        %v5519 = vshrl.u32 %v5344, 16
        %v5521 = vrot.slane %v5519, 4
        %v5522 = vshll.u32 %v5344, 16
        %v5524 = vrot.slane %v5522, 5
        %v5525 = vor.u32 %v5521, %v5524
        %v5526 = vrot.slane %v5525, 4
        %v5528 = vshll.u32 %v5345, 16
        %v5530 = vrot.slane %v5528, 5
        %v5531 = vsel %vm1941, %v5526, %v5530
        %v5532 = vshrl.u32 %v5345, 16
        %v5534 = vrot.slane %v5532, 4
        %v5535 = vor.u32 %v5534, %v5530
        %v5536 = vrot.slane %v5535, 4
        %v5538 = vshll.u32 %v5346, 16
        %v5540 = vrot.slane %v5538, 5
        %v5541 = vsel %vm1941, %v5536, %v5540
        %v5543 = vshrl.u32 %v5347, 16
        %v5545 = vrot.slane %v5543, 4
        %v5546 = vshll.u32 %v5347, 16
        %v5548 = vrot.slane %v5546, 5
        %v5549 = vor.u32 %v5545, %v5548
        %v5550 = vrot.slane %v5549, 4
        %v5552 = vshll.u32 %v5348, 16
        %v5554 = vrot.slane %v5552, 5
        %v5555 = vsel %vm1941, %v5550, %v5554
        %v5556 = vshrl.u32 %v5348, 16
        %v5558 = vrot.slane %v5556, 4
        %v5559 = vor.u32 %v5558, %v5554
        %v5560 = vrot.slane %v5559, 4
        %v5562 = vshll.u32 %v5349, 16
        %v5564 = vrot.slane %v5562, 5
        %v5565 = vsel %vm1941, %v5560, %v5564
        %v5567 = vshrl.u32 %v5350, 16
        %v5569 = vrot.slane %v5567, 4
        %v5570 = vshll.u32 %v5350, 16
        %v5572 = vrot.slane %v5570, 5
        %v5573 = vor.u32 %v5569, %v5572
        %v5574 = vrot.slane %v5573, 4
        %v5576 = vshll.u32 %v5351, 16
        %v5578 = vrot.slane %v5576, 5
        %v5579 = vsel %vm1941, %v5574, %v5578
        %v5580 = vshrl.u32 %v5351, 16
        %v5582 = vrot.slane %v5580, 4
        %v5583 = vor.u32 %v5582, %v5578
        %v5584 = vrot.slane %v5583, 4
        %v5586 = vshll.u32 %v5352, 16
        %v5588 = vrot.slane %v5586, 5
        %v5589 = vsel %vm1941, %v5584, %v5588
        %v5591 = vshrl.u32 %v5353, 16
        %v5593 = vrot.slane %v5591, 4
        %v5594 = vshll.u32 %v5353, 16
        %v5596 = vrot.slane %v5594, 5
        %v5597 = vor.u32 %v5593, %v5596
        %v5598 = vrot.slane %v5597, 4
        %v5600 = vshll.u32 %v5354, 16
        %v5602 = vrot.slane %v5600, 5
        %v5603 = vsel %vm1941, %v5598, %v5602
        %v5604 = vshrl.u32 %v5354, 16
        %v5606 = vrot.slane %v5604, 4
        %v5607 = vor.u32 %v5606, %v5602
        %v5608 = vrot.slane %v5607, 4
        %v5610 = vshll.u32 %v5355, 16
        %v5612 = vrot.slane %v5610, 5
        %v5613 = vsel %vm1941, %v5608, %v5612
        %v5615 = vshrl.u32 %v5356, 16
        %v5617 = vrot.slane %v5615, 4
        %v5618 = vshll.u32 %v5356, 16
        %v5620 = vrot.slane %v5618, 5
        %v5621 = vor.u32 %v5617, %v5620
        %v5622 = vrot.slane %v5621, 4
        %v5624 = vshll.u32 %v5357, 16
        %v5626 = vrot.slane %v5624, 5
        %v5627 = vsel %vm1941, %v5622, %v5626
        %v5628 = vshrl.u32 %v5357, 16
        %v5630 = vrot.slane %v5628, 4
        %v5631 = vor.u32 %v5630, %v5626
        %v5632 = vrot.slane %v5631, 4
        %v5634 = vshll.u32 %v5358, 16
        %v5636 = vrot.slane %v5634, 5
        %v5637 = vsel %vm1941, %v5632, %v5636
        %v5639 = vshrl.u32 %v5359, 16
        %v5641 = vrot.slane %v5639, 4
        %v5642 = vshll.u32 %v5359, 16
        %v5644 = vrot.slane %v5642, 5
        %v5645 = vor.u32 %v5641, %v5644
        %v5646 = vrot.slane %v5645, 4
        %v5648 = vshll.u32 %v5360, 16
        %v5650 = vrot.slane %v5648, 5
        %v5651 = vsel %vm1941, %v5646, %v5650
        %v5652 = vshrl.u32 %v5360, 16
        %v5654 = vrot.slane %v5652, 4
        %v5655 = vor.u32 %v5654, %v5650
        %v5656 = vrot.slane %v5655, 4
        %v5658 = vshll.u32 %v5361, 16
        %v5660 = vrot.slane %v5658, 5
        %v5661 = vsel %vm1941, %v5656, %v5660
        %v5663 = vshrl.u32 %v5362, 16
        %v5665 = vrot.slane %v5663, 4
        %v5666 = vshll.u32 %v5362, 16
        %v5668 = vrot.slane %v5666, 5
        %v5669 = vor.u32 %v5665, %v5668
        %v5670 = vrot.slane %v5669, 4
        %v5672 = vshll.u32 %v5363, 16
        %v5674 = vrot.slane %v5672, 5
        %v5675 = vsel %vm1941, %v5670, %v5674
        %v5676 = vshrl.u32 %v5363, 16
        %v5678 = vrot.slane %v5676, 4
        %v5679 = vor.u32 %v5678, %v5674
        %v5680 = vrot.slane %v5679, 4
        %v5682 = vshll.u32 %v5364, 16
        %v5684 = vrot.slane %v5682, 5
        %v5685 = vsel %vm1941, %v5680, %v5684
        %v5687 = vshrl.u32 %v5365, 16
        %v5689 = vrot.slane %v5687, 4
        %v5690 = vshll.u32 %v5365, 16
        %v5692 = vrot.slane %v5690, 5
        %v5693 = vor.u32 %v5689, %v5692
        %v5694 = vrot.slane %v5693, 4
        %v5696 = vshll.u32 %v5366, 16
        %v5698 = vrot.slane %v5696, 5
        %v5699 = vsel %vm1941, %v5694, %v5698
        %v5700 = vshrl.u32 %v5366, 16
        %v5702 = vrot.slane %v5700, 4
        %v5703 = vor.u32 %v5702, %v5698
        %v5704 = vrot.slane %v5703, 4
        %v5706 = vshll.u32 %v5367, 16
        %v5708 = vrot.slane %v5706, 5
        %v5709 = vsel %vm1941, %v5704, %v5708
        %v5711 = vshrl.u32 %v5368, 16
        %v5713 = vrot.slane %v5711, 4
        %v5714 = vshll.u32 %v5368, 16
        %v5716 = vrot.slane %v5714, 5
        %v5717 = vor.u32 %v5713, %v5716
        %v5718 = vrot.slane %v5717, 4
        %v5720 = vshll.u32 %v5369, 16
        %v5722 = vrot.slane %v5720, 5
        %v5723 = vsel %vm1941, %v5718, %v5722
        %v5724 = vshrl.u32 %v5369, 16
        %v5726 = vrot.slane %v5724, 4
        %v5727 = vor.u32 %v5726, %v5722
        %v5728 = vrot.slane %v5727, 4
        %v5730 = vshll.u32 %v5370, 16
        %v5732 = vrot.slane %v5730, 5
        %v5733 = vsel %vm1941, %v5728, %v5732
        %v5735 = vshrl.u32 %v5371, 16
        %v5737 = vrot.slane %v5735, 4
        %v5738 = vshll.u32 %v5371, 16
        %v5740 = vrot.slane %v5738, 5
        %v5741 = vor.u32 %v5737, %v5740
        %v5742 = vrot.slane %v5741, 4
        %v5744 = vshll.u32 %v5372, 16
        %v5746 = vrot.slane %v5744, 5
        %v5747 = vsel %vm1941, %v5742, %v5746
        %v5748 = vshrl.u32 %v5372, 16
        %v5750 = vrot.slane %v5748, 4
        %v5751 = vor.u32 %v5750, %v5746
        %v5752 = vrot.slane %v5751, 4
        %v5754 = vshll.u32 %v5373, 16
        %v5756 = vrot.slane %v5754, 5
        %v5757 = vsel %vm1941, %v5752, %v5756
        %v5758 = vld [vmem:[%s2 + $0x70] sm:$0xf]
        %v5759 = vld [vmem:[%s2 + $0x74] sm:$0xf]
        %v5760 = vld [vmem:[%s2 + $0x78] sm:$0xf]
        %v5761 = vld [vmem:[%s2 + $0x7c] sm:$0xf]
        %v5762 = vunpack.c.l.b16 %v5387
        %v5763 = vunpack.c.l.b16 %v5397
        %v5764 = vunpack.c.l.b16 %v5411
        %v5765 = vunpack.c.l.b16 %v5421
        %v5766 = vunpack.c.l.b16 %v5435
        %v5767 = vunpack.c.l.b16 %v5445
        %v5768 = vunpack.c.l.b16 %v5459
        %v5769 = vunpack.c.l.b16 %v5469
        %v5770 = vunpack.c.l.b16 %v5483
        %v5771 = vunpack.c.l.b16 %v5493
        %v5772 = vunpack.c.l.b16 %v5507
        %v5773 = vunpack.c.l.b16 %v5517
        %v5774 = vunpack.c.l.b16 %v5531
        %v5775 = vunpack.c.l.b16 %v5541
        %v5776 = vunpack.c.l.b16 %v5555
        %v5777 = vunpack.c.l.b16 %v5565
        %v5778 = vunpack.c.l.b16 %v5579
        %v5779 = vunpack.c.l.b16 %v5589
        %v5780 = vunpack.c.l.b16 %v5603
        %v5781 = vunpack.c.l.b16 %v5613
        %v5782 = vunpack.c.l.b16 %v5627
        %v5783 = vunpack.c.l.b16 %v5637
        %v5784 = vunpack.c.l.b16 %v5651
        %v5785 = vunpack.c.l.b16 %v5661
        %v5786 = vunpack.c.l.b16 %v5675
        %v5787 = vunpack.c.l.b16 %v5685
        %v5788 = vunpack.c.l.b16 %v5699
        %v5789 = vunpack.c.l.b16 %v5709
        %v5790 = vunpack.c.l.b16 %v5723
        %v5791 = vunpack.c.l.b16 %v5733
        %v5792 = vunpack.c.l.b16 %v5747
        %v5793 = vunpack.c.l.b16 %v5757
        %v5794 = vpack.c.b16 %v5763, %v5762
        %v5795 = vpack.c.b16 %v5765, %v5764
        %v5796 = vpack.c.b16 %v5767, %v5766
        %v5797 = vpack.c.b16 %v5769, %v5768
        %v5798 = vpack.c.b16 %v5771, %v5770
        %v5799 = vpack.c.b16 %v5773, %v5772
        %v5800 = vpack.c.b16 %v5775, %v5774
        %v5801 = vpack.c.b16 %v5777, %v5776
        %v5802 = vpack.c.b16 %v5779, %v5778
        %v5803 = vpack.c.b16 %v5781, %v5780
        %v5804 = vpack.c.b16 %v5783, %v5782
        %v5805 = vpack.c.b16 %v5785, %v5784
        %v5806 = vpack.c.b16 %v5787, %v5786
        %v5807 = vpack.c.b16 %v5789, %v5788
        %v5808 = vpack.c.b16 %v5791, %v5790
        %v5809 = vpack.c.b16 %v5793, %v5792
        %v5814 = vunpack.c.l.b16 %v5758
        %v5815 = vunpack.c.l.b16 %v5759
        %v5816 = vunpack.c.l.b16 %v5760
        %v5817 = vunpack.c.l.b16 %v5761
        %v5818 = vpack.c.b16 %v5815, %v5814
        %v5819 = vpack.c.b16 %v5817, %v5816
        %v5823 = vsel %vm2390, %v5794, 0
        %v5826 = vsel %vm2390, %v5795, 0
        %v5829 = vsel %vm2390, %v5796, 0
        %v5832 = vsel %vm2390, %v5797, 0
        %v5835 = vsel %vm2390, %v5798, 0
        %v5838 = vsel %vm2390, %v5799, 0
        %v5841 = vsel %vm2390, %v5800, 0
        %v5844 = vsel %vm2390, %v5801, 0
        %v5847 = vsel %vm2390, %v5802, 0
        %v5850 = vsel %vm2390, %v5803, 0
        %v5853 = vsel %vm2390, %v5804, 0
        %v5856 = vsel %vm2390, %v5805, 0
        %v5859 = vsel %vm2390, %v5806, 0
        %v5862 = vsel %vm2390, %v5807, 0
        %v5865 = vsel %vm2390, %v5808, 0
        %v5868 = vsel %vm2390, %v5809, 0
        %5870 = vmatprep.subr.bf16.mxu0 0
        %5871 = vmatpush1.bf16.msra.mxu0 0
        %5872 = vmatprep.subr.bf16.mxu0 0
        %5873 = vmatpush1.bf16.msra.mxu0 0
        %5874 = vmatprep.subr.bf16.mxu0 0
        %5875 = vmatpush1.bf16.msra.mxu0 0
        %5876 = vmatprep.subr.bf16.mxu0 0
        %5877 = vmatpush1.bf16.msra.mxu0 0
        %5878 = vmatprep.subr.bf16.mxu0 0
        %5879 = vmatpush1.bf16.msra.mxu0 0
        %5880 = vmatprep.subr.bf16.mxu0 0
        %5881 = vmatpush1.bf16.msra.mxu0 0
        %5882 = vmatprep.subr.bf16.mxu0 0
        %5883 = vmatpush1.bf16.msra.mxu0 %v5819
        %5884 = vmatprep.subr.bf16.mxu0 0
        %5885 = vmatpush1.bf16.msra.mxu0 %v5818
        %5886 = vmatprep.subr.bf16.mxu0 0
        %5887 = vmatpush2.bf16.msra.mxu0 0
        %5888 = vmatprep.subr.bf16.mxu0 0
        %5889 = vmatpush2.bf16.msra.mxu0 0
        %5890 = vmatprep.subr.bf16.mxu0 0
        %5891 = vmatpush2.bf16.msra.mxu0 0
        %5892 = vmatprep.subr.bf16.mxu0 0
        %5893 = vmatpush2.bf16.msra.mxu0 0
        %5894 = vmatprep.subr.bf16.mxu0 0
        %5895 = vmatpush2.bf16.msra.mxu0 0
        %5896 = vmatprep.subr.bf16.mxu0 0
        %5897 = vmatpush2.bf16.msra.mxu0 0
        %5898 = vmatprep.subr.bf16.mxu0 0
        %5899 = vmatpush2.bf16.msra.mxu0 0
        %5900 = vmatprep.subr.bf16.mxu0 0
        %5901 = vmatpush2.bf16.msra.mxu0 0
        %5902 = vmatprep.mubr.bf16.mxu0 0
        %5903 = vmatmul.mubr.bf16.gmra.mxu0 %v5823
        %v5904 = vpop.f32.mrf.mxu0
        %v5905 = vadd.f32 0.0, %v5904
        %v5906 = vpop.f32.mrf.mxu0
        %v5907 = vpop.f32.mrf.mxu0
        %v5908 = vadd.f32 0.0, %v5907
        %v5909 = vpop.f32.mrf.mxu0
        %5910 = vmatprep.mubr.bf16.mxu0 0
        %5911 = vmatmul.mubr.bf16.gmra.mxu0 %v5826
        %v5912 = vpop.f32.mrf.mxu0
        %v5913 = vadd.f32 0.0, %v5912
        %v5914 = vpop.f32.mrf.mxu0
        %v5915 = vpop.f32.mrf.mxu0
        %v5916 = vadd.f32 0.0, %v5915
        %v5917 = vpop.f32.mrf.mxu0
        %5918 = vmatprep.mubr.bf16.mxu0 0
        %5919 = vmatmul.mubr.bf16.gmra.mxu0 %v5829
        %v5920 = vpop.f32.mrf.mxu0
        %v5921 = vadd.f32 0.0, %v5920
        %v5922 = vpop.f32.mrf.mxu0
        %v5923 = vpop.f32.mrf.mxu0
        %v5924 = vadd.f32 0.0, %v5923
        %v5925 = vpop.f32.mrf.mxu0
        %5926 = vmatprep.mubr.bf16.mxu0 0
        %5927 = vmatmul.mubr.bf16.gmra.mxu0 %v5832
        %v5928 = vpop.f32.mrf.mxu0
        %v5929 = vadd.f32 0.0, %v5928
        %v5930 = vpop.f32.mrf.mxu0
        %v5931 = vpop.f32.mrf.mxu0
        %v5932 = vadd.f32 0.0, %v5931
        %v5933 = vpop.f32.mrf.mxu0
        %5934 = vmatprep.mubr.bf16.mxu0 0
        %5935 = vmatmul.mubr.bf16.gmra.mxu0 %v5835
        %v5936 = vpop.f32.mrf.mxu0
        %v5937 = vadd.f32 0.0, %v5936
        %v5938 = vpop.f32.mrf.mxu0
        %v5939 = vpop.f32.mrf.mxu0
        %v5940 = vadd.f32 0.0, %v5939
        %v5941 = vpop.f32.mrf.mxu0
        %5942 = vmatprep.mubr.bf16.mxu0 0
        %5943 = vmatmul.mubr.bf16.gmra.mxu0 %v5838
        %v5944 = vpop.f32.mrf.mxu0
        %v5945 = vadd.f32 0.0, %v5944
        %v5946 = vpop.f32.mrf.mxu0
        %v5947 = vpop.f32.mrf.mxu0
        %v5948 = vadd.f32 0.0, %v5947
        %v5949 = vpop.f32.mrf.mxu0
        %5950 = vmatprep.mubr.bf16.mxu0 0
        %5951 = vmatmul.mubr.bf16.gmra.mxu0 %v5841
        %v5952 = vpop.f32.mrf.mxu0
        %v5953 = vadd.f32 0.0, %v5952
        %v5954 = vpop.f32.mrf.mxu0
        %v5955 = vpop.f32.mrf.mxu0
        %v5956 = vadd.f32 0.0, %v5955
        %v5957 = vpop.f32.mrf.mxu0
        %5958 = vmatprep.mubr.bf16.mxu0 0
        %5959 = vmatmul.mubr.bf16.gmra.mxu0 %v5844
        %v5960 = vpop.f32.mrf.mxu0
        %v5961 = vadd.f32 0.0, %v5960
        %v5962 = vpop.f32.mrf.mxu0
        %v5963 = vpop.f32.mrf.mxu0
        %v5964 = vadd.f32 0.0, %v5963
        %v5965 = vpop.f32.mrf.mxu0
        %5966 = vmatprep.mubr.bf16.mxu0 0
        %5967 = vmatmul.mubr.bf16.gmra.mxu0 %v5847
        %v5968 = vpop.f32.mrf.mxu0
        %v5969 = vadd.f32 0.0, %v5968
        %v5970 = vpop.f32.mrf.mxu0
        %v5971 = vpop.f32.mrf.mxu0
        %v5972 = vadd.f32 0.0, %v5971
        %v5973 = vpop.f32.mrf.mxu0
        %5974 = vmatprep.mubr.bf16.mxu0 0
        %5975 = vmatmul.mubr.bf16.gmra.mxu0 %v5850
        %v5976 = vpop.f32.mrf.mxu0
        %v5977 = vadd.f32 0.0, %v5976
        %v5978 = vpop.f32.mrf.mxu0
        %v5979 = vpop.f32.mrf.mxu0
        %v5980 = vadd.f32 0.0, %v5979
        %v5981 = vpop.f32.mrf.mxu0
        %5982 = vmatprep.mubr.bf16.mxu0 0
        %5983 = vmatmul.mubr.bf16.gmra.mxu0 %v5853
        %v5984 = vpop.f32.mrf.mxu0
        %v5985 = vadd.f32 0.0, %v5984
        %v5986 = vpop.f32.mrf.mxu0
        %v5987 = vpop.f32.mrf.mxu0
        %v5988 = vadd.f32 0.0, %v5987
        %v5989 = vpop.f32.mrf.mxu0
        %5990 = vmatprep.mubr.bf16.mxu0 0
        %5991 = vmatmul.mubr.bf16.gmra.mxu0 %v5856
        %v5992 = vpop.f32.mrf.mxu0
        %v5993 = vadd.f32 0.0, %v5992
        %v5994 = vpop.f32.mrf.mxu0
        %v5995 = vpop.f32.mrf.mxu0
        %v5996 = vadd.f32 0.0, %v5995
        %v5997 = vpop.f32.mrf.mxu0
        %5998 = vmatprep.mubr.bf16.mxu0 0
        %5999 = vmatmul.mubr.bf16.gmra.mxu0 %v5859
        %v6000 = vpop.f32.mrf.mxu0
        %v6001 = vadd.f32 0.0, %v6000
        %v6002 = vpop.f32.mrf.mxu0
        %v6003 = vpop.f32.mrf.mxu0
        %v6004 = vadd.f32 0.0, %v6003
        %v6005 = vpop.f32.mrf.mxu0
        %6006 = vmatprep.mubr.bf16.mxu0 0
        %6007 = vmatmul.mubr.bf16.gmra.mxu0 %v5862
        %v6008 = vpop.f32.mrf.mxu0
        %v6009 = vadd.f32 0.0, %v6008
        %v6010 = vpop.f32.mrf.mxu0
        %v6011 = vpop.f32.mrf.mxu0
        %v6012 = vadd.f32 0.0, %v6011
        %v6013 = vpop.f32.mrf.mxu0
        %6014 = vmatprep.mubr.bf16.mxu0 0
        %6015 = vmatmul.mubr.bf16.gmra.mxu0 %v5865
        %v6016 = vpop.f32.mrf.mxu0
        %v6017 = vadd.f32 0.0, %v6016
        %v6018 = vpop.f32.mrf.mxu0
        %v6019 = vpop.f32.mrf.mxu0
        %v6020 = vadd.f32 0.0, %v6019
        %v6021 = vpop.f32.mrf.mxu0
        %6022 = vmatprep.mubr.bf16.mxu0 0
        %6023 = vmatmul.mubr.bf16.gmra.mxu0 %v5868
        %v6024 = vpop.f32.mrf.mxu0
        %v6025 = vadd.f32 0.0, %v6024
        %v6026 = vpop.f32.mrf.mxu0
        %v6027 = vpop.f32.mrf.mxu0
        %v6028 = vadd.f32 0.0, %v6027
        %v6029 = vpop.f32.mrf.mxu0
        %6030 = vdwg.mxu0
        %v6031 = vadd.f32 %v5294, %v5905
        %v6032 = vadd.f32 %v5295, %v5908
        %v6033 = vadd.f32 %v5296, %v5913
        %v6034 = vadd.f32 %v5297, %v5916
        %v6035 = vadd.f32 %v5298, %v5921
        %v6036 = vadd.f32 %v5299, %v5924
        %v6037 = vadd.f32 %v5300, %v5929
        %v6038 = vadd.f32 %v5301, %v5932
        %v6039 = vadd.f32 %v5302, %v5937
        %v6040 = vadd.f32 %v5303, %v5940
        %v6041 = vadd.f32 %v5304, %v5945
        %v6042 = vadd.f32 %v5305, %v5948
        %v6043 = vadd.f32 %v5306, %v5953
        %v6044 = vadd.f32 %v5307, %v5956
        %v6045 = vadd.f32 %v5308, %v5961
        %v6046 = vadd.f32 %v5309, %v5964
        %v6047 = vadd.f32 %v5310, %v5969
        %v6048 = vadd.f32 %v5311, %v5972
        %v6049 = vadd.f32 %v5312, %v5977
        %v6050 = vadd.f32 %v5313, %v5980
        %v6051 = vadd.f32 %v5314, %v5985
        %v6052 = vadd.f32 %v5315, %v5988
        %v6053 = vadd.f32 %v5316, %v5993
        %v6054 = vadd.f32 %v5317, %v5996
        %v6055 = vadd.f32 %v5318, %v6001
        %v6056 = vadd.f32 %v5319, %v6004
        %v6057 = vadd.f32 %v5320, %v6009
        %v6058 = vadd.f32 %v5321, %v6012
        %v6059 = vadd.f32 %v5322, %v6017
        %v6060 = vadd.f32 %v5323, %v6020
        %v6061 = vadd.f32 %v5324, %v6025
        %v6062 = vadd.f32 %v5325, %v6028
        %v6063 = vld [vmem:[%s4956] sm:$0xe]
        %v6064 = vld [vmem:[%s4956 + $0xc] sm:$0xe]
        %v6065 = vld [vmem:[%s4956 + $0x18] sm:$0xe]
        %v6066 = vld [vmem:[%s4956 + $0x24] sm:$0xe]
        %v6067 = vld [vmem:[%s4956 + $0x30] sm:$0xe]
        %v6068 = vld [vmem:[%s4956 + $0x3c] sm:$0xe]
        %v6069 = vld [vmem:[%s4956 + $0x48] sm:$0xe]
        %v6070 = vld [vmem:[%s4956 + $0x54] sm:$0xe]
        %v6071 = vld [vmem:[%s4956 + $0x60] sm:$0xe]
        %v6072 = vld [vmem:[%s4956 + $0x6c] sm:$0xe]
        %v6073 = vld [vmem:[%s4956 + $0x78] sm:$0xe]
        %v6074 = vld [vmem:[%s4956 + $0x84] sm:$0xe]
        %v6075 = vld [vmem:[%s4956 + $0x90] sm:$0xe]
        %v6076 = vld [vmem:[%s4956 + $0x9c] sm:$0xe]
        %v6077 = vld [vmem:[%s4956 + $0xa8] sm:$0xe]
        %v6078 = vld [vmem:[%s4956 + $0xb4] sm:$0xe]
        %v6127 = vrot.slane %v6063, 5
        %v6128 = vrot.slane %v6127, 4
        %v6129 = vrot.slane %v5327, 5
        %v6130 = vsel %vm2951, %v6128, %v6129
        %v6131 = vrot.slane %v6129, 4
        %v6132 = vrot.slane %v5328, 5
        %v6133 = vsel %vm2951, %v6131, %v6132
        %v6134 = vrot.slane %v6064, 5
        %v6135 = vrot.slane %v6134, 4
        %v6136 = vrot.slane %v5330, 5
        %v6137 = vsel %vm2951, %v6135, %v6136
        %v6138 = vrot.slane %v6136, 4
        %v6139 = vrot.slane %v5331, 5
        %v6140 = vsel %vm2951, %v6138, %v6139
        %v6141 = vrot.slane %v6065, 5
        %v6142 = vrot.slane %v6141, 4
        %v6143 = vrot.slane %v5333, 5
        %v6144 = vsel %vm2951, %v6142, %v6143
        %v6145 = vrot.slane %v6143, 4
        %v6146 = vrot.slane %v5334, 5
        %v6147 = vsel %vm2951, %v6145, %v6146
        %v6148 = vrot.slane %v6066, 5
        %v6149 = vrot.slane %v6148, 4
        %v6150 = vrot.slane %v5336, 5
        %v6151 = vsel %vm2951, %v6149, %v6150
        %v6152 = vrot.slane %v6150, 4
        %v6153 = vrot.slane %v5337, 5
        %v6154 = vsel %vm2951, %v6152, %v6153
        %v6155 = vrot.slane %v6067, 5
        %v6156 = vrot.slane %v6155, 4
        %v6157 = vrot.slane %v5339, 5
        %v6158 = vsel %vm2951, %v6156, %v6157
        %v6159 = vrot.slane %v6157, 4
        %v6160 = vrot.slane %v5340, 5
        %v6161 = vsel %vm2951, %v6159, %v6160
        %v6162 = vrot.slane %v6068, 5
        %v6163 = vrot.slane %v6162, 4
        %v6164 = vrot.slane %v5342, 5
        %v6165 = vsel %vm2951, %v6163, %v6164
        %v6166 = vrot.slane %v6164, 4
        %v6167 = vrot.slane %v5343, 5
        %v6168 = vsel %vm2951, %v6166, %v6167
        %v6169 = vrot.slane %v6069, 5
        %v6170 = vrot.slane %v6169, 4
        %v6171 = vrot.slane %v5345, 5
        %v6172 = vsel %vm2951, %v6170, %v6171
        %v6173 = vrot.slane %v6171, 4
        %v6174 = vrot.slane %v5346, 5
        %v6175 = vsel %vm2951, %v6173, %v6174
        %v6176 = vrot.slane %v6070, 5
        %v6177 = vrot.slane %v6176, 4
        %v6178 = vrot.slane %v5348, 5
        %v6179 = vsel %vm2951, %v6177, %v6178
        %v6180 = vrot.slane %v6178, 4
        %v6181 = vrot.slane %v5349, 5
        %v6182 = vsel %vm2951, %v6180, %v6181
        %v6183 = vrot.slane %v6071, 5
        %v6184 = vrot.slane %v6183, 4
        %v6185 = vrot.slane %v5351, 5
        %v6186 = vsel %vm2951, %v6184, %v6185
        %v6187 = vrot.slane %v6185, 4
        %v6188 = vrot.slane %v5352, 5
        %v6189 = vsel %vm2951, %v6187, %v6188
        %v6190 = vrot.slane %v6072, 5
        %v6191 = vrot.slane %v6190, 4
        %v6192 = vrot.slane %v5354, 5
        %v6193 = vsel %vm2951, %v6191, %v6192
        %v6194 = vrot.slane %v6192, 4
        %v6195 = vrot.slane %v5355, 5
        %v6196 = vsel %vm2951, %v6194, %v6195
        %v6197 = vrot.slane %v6073, 5
        %v6198 = vrot.slane %v6197, 4
        %v6199 = vrot.slane %v5357, 5
        %v6200 = vsel %vm2951, %v6198, %v6199
        %v6201 = vrot.slane %v6199, 4
        %v6202 = vrot.slane %v5358, 5
        %v6203 = vsel %vm2951, %v6201, %v6202
        %v6204 = vrot.slane %v6074, 5
        %v6205 = vrot.slane %v6204, 4
        %v6206 = vrot.slane %v5360, 5
        %v6207 = vsel %vm2951, %v6205, %v6206
        %v6208 = vrot.slane %v6206, 4
        %v6209 = vrot.slane %v5361, 5
        %v6210 = vsel %vm2951, %v6208, %v6209
        %v6211 = vrot.slane %v6075, 5
        %v6212 = vrot.slane %v6211, 4
        %v6213 = vrot.slane %v5363, 5
        %v6214 = vsel %vm2951, %v6212, %v6213
        %v6215 = vrot.slane %v6213, 4
        %v6216 = vrot.slane %v5364, 5
        %v6217 = vsel %vm2951, %v6215, %v6216
        %v6218 = vrot.slane %v6076, 5
        %v6219 = vrot.slane %v6218, 4
        %v6220 = vrot.slane %v5366, 5
        %v6221 = vsel %vm2951, %v6219, %v6220
        %v6222 = vrot.slane %v6220, 4
        %v6223 = vrot.slane %v5367, 5
        %v6224 = vsel %vm2951, %v6222, %v6223
        %v6225 = vrot.slane %v6077, 5
        %v6226 = vrot.slane %v6225, 4
        %v6227 = vrot.slane %v5369, 5
        %v6228 = vsel %vm2951, %v6226, %v6227
        %v6229 = vrot.slane %v6227, 4
        %v6230 = vrot.slane %v5370, 5
        %v6231 = vsel %vm2951, %v6229, %v6230
        %v6232 = vrot.slane %v6078, 5
        %v6233 = vrot.slane %v6232, 4
        %v6234 = vrot.slane %v5372, 5
        %v6235 = vsel %vm2951, %v6233, %v6234
        %v6236 = vrot.slane %v6234, 4
        %v6237 = vrot.slane %v5373, 5
        %v6238 = vsel %vm2951, %v6236, %v6237
        %v6239 = vld [vmem:[%s2 + $0x80] sm:$0xf]
        %v6240 = vld [vmem:[%s2 + $0x84] sm:$0xf]
        %v6241 = vld [vmem:[%s2 + $0x88] sm:$0xf]
        %v6242 = vld [vmem:[%s2 + $0x8c] sm:$0xf]
        %v6243 = vunpack.c.l.b16 %v6130
        %v6244 = vunpack.c.l.b16 %v6133
        %v6245 = vunpack.c.l.b16 %v6137
        %v6246 = vunpack.c.l.b16 %v6140
        %v6247 = vunpack.c.l.b16 %v6144
        %v6248 = vunpack.c.l.b16 %v6147
        %v6249 = vunpack.c.l.b16 %v6151
        %v6250 = vunpack.c.l.b16 %v6154
        %v6251 = vunpack.c.l.b16 %v6158
        %v6252 = vunpack.c.l.b16 %v6161
        %v6253 = vunpack.c.l.b16 %v6165
        %v6254 = vunpack.c.l.b16 %v6168
        %v6255 = vunpack.c.l.b16 %v6172
        %v6256 = vunpack.c.l.b16 %v6175
        %v6257 = vunpack.c.l.b16 %v6179
        %v6258 = vunpack.c.l.b16 %v6182
        %v6259 = vunpack.c.l.b16 %v6186
        %v6260 = vunpack.c.l.b16 %v6189
        %v6261 = vunpack.c.l.b16 %v6193
        %v6262 = vunpack.c.l.b16 %v6196
        %v6263 = vunpack.c.l.b16 %v6200
        %v6264 = vunpack.c.l.b16 %v6203
        %v6265 = vunpack.c.l.b16 %v6207
        %v6266 = vunpack.c.l.b16 %v6210
        %v6267 = vunpack.c.l.b16 %v6214
        %v6268 = vunpack.c.l.b16 %v6217
        %v6269 = vunpack.c.l.b16 %v6221
        %v6270 = vunpack.c.l.b16 %v6224
        %v6271 = vunpack.c.l.b16 %v6228
        %v6272 = vunpack.c.l.b16 %v6231
        %v6273 = vunpack.c.l.b16 %v6235
        %v6274 = vunpack.c.l.b16 %v6238
        %v6275 = vpack.c.b16 %v6244, %v6243
        %v6276 = vpack.c.b16 %v6246, %v6245
        %v6277 = vpack.c.b16 %v6248, %v6247
        %v6278 = vpack.c.b16 %v6250, %v6249
        %v6279 = vpack.c.b16 %v6252, %v6251
        %v6280 = vpack.c.b16 %v6254, %v6253
        %v6281 = vpack.c.b16 %v6256, %v6255
        %v6282 = vpack.c.b16 %v6258, %v6257
        %v6283 = vpack.c.b16 %v6260, %v6259
        %v6284 = vpack.c.b16 %v6262, %v6261
        %v6285 = vpack.c.b16 %v6264, %v6263
        %v6286 = vpack.c.b16 %v6266, %v6265
        %v6287 = vpack.c.b16 %v6268, %v6267
        %v6288 = vpack.c.b16 %v6270, %v6269
        %v6289 = vpack.c.b16 %v6272, %v6271
        %v6290 = vpack.c.b16 %v6274, %v6273
        %v6295 = vunpack.c.l.b16 %v6239
        %v6296 = vunpack.c.l.b16 %v6240
        %v6297 = vunpack.c.l.b16 %v6241
        %v6298 = vunpack.c.l.b16 %v6242
        %v6299 = vpack.c.b16 %v6296, %v6295
        %v6300 = vpack.c.b16 %v6298, %v6297
        %v6304 = vsel %vm2390, %v6275, 0
        %v6307 = vsel %vm2390, %v6276, 0
        %v6310 = vsel %vm2390, %v6277, 0
        %v6313 = vsel %vm2390, %v6278, 0
        %v6316 = vsel %vm2390, %v6279, 0
        %v6319 = vsel %vm2390, %v6280, 0
        %v6322 = vsel %vm2390, %v6281, 0
        %v6325 = vsel %vm2390, %v6282, 0
        %v6328 = vsel %vm2390, %v6283, 0
        %v6331 = vsel %vm2390, %v6284, 0
        %v6334 = vsel %vm2390, %v6285, 0
        %v6337 = vsel %vm2390, %v6286, 0
        %v6340 = vsel %vm2390, %v6287, 0
        %v6343 = vsel %vm2390, %v6288, 0
        %v6346 = vsel %vm2390, %v6289, 0
        %v6349 = vsel %vm2390, %v6290, 0
        %6351 = vmatprep.subr.bf16.mxu0 0
        %6352 = vmatpush1.bf16.msra.mxu0 0
        %6353 = vmatprep.subr.bf16.mxu0 0
        %6354 = vmatpush1.bf16.msra.mxu0 0
        %6355 = vmatprep.subr.bf16.mxu0 0
        %6356 = vmatpush1.bf16.msra.mxu0 0
        %6357 = vmatprep.subr.bf16.mxu0 0
        %6358 = vmatpush1.bf16.msra.mxu0 0
        %6359 = vmatprep.subr.bf16.mxu0 0
        %6360 = vmatpush1.bf16.msra.mxu0 0
        %6361 = vmatprep.subr.bf16.mxu0 0
        %6362 = vmatpush1.bf16.msra.mxu0 0
        %6363 = vmatprep.subr.bf16.mxu0 0
        %6364 = vmatpush1.bf16.msra.mxu0 %v6300
        %6365 = vmatprep.subr.bf16.mxu0 0
        %6366 = vmatpush1.bf16.msra.mxu0 %v6299
        %6367 = vmatprep.subr.bf16.mxu0 0
        %6368 = vmatpush2.bf16.msra.mxu0 0
        %6369 = vmatprep.subr.bf16.mxu0 0
        %6370 = vmatpush2.bf16.msra.mxu0 0
        %6371 = vmatprep.subr.bf16.mxu0 0
        %6372 = vmatpush2.bf16.msra.mxu0 0
        %6373 = vmatprep.subr.bf16.mxu0 0
        %6374 = vmatpush2.bf16.msra.mxu0 0
        %6375 = vmatprep.subr.bf16.mxu0 0
        %6376 = vmatpush2.bf16.msra.mxu0 0
        %6377 = vmatprep.subr.bf16.mxu0 0
        %6378 = vmatpush2.bf16.msra.mxu0 0
        %6379 = vmatprep.subr.bf16.mxu0 0
        %6380 = vmatpush2.bf16.msra.mxu0 0
        %6381 = vmatprep.subr.bf16.mxu0 0
        %6382 = vmatpush2.bf16.msra.mxu0 0
        %6383 = vmatprep.mubr.bf16.mxu0 0
        %6384 = vmatmul.mubr.bf16.gmra.mxu0 %v6304
        %v6385 = vpop.f32.mrf.mxu0
        %v6386 = vadd.f32 0.0, %v6385
        %v6387 = vpop.f32.mrf.mxu0
        %v6388 = vpop.f32.mrf.mxu0
        %v6389 = vadd.f32 0.0, %v6388
        %v6390 = vpop.f32.mrf.mxu0
        %6391 = vmatprep.mubr.bf16.mxu0 0
        %6392 = vmatmul.mubr.bf16.gmra.mxu0 %v6307
        %v6393 = vpop.f32.mrf.mxu0
        %v6394 = vadd.f32 0.0, %v6393
        %v6395 = vpop.f32.mrf.mxu0
        %v6396 = vpop.f32.mrf.mxu0
        %v6397 = vadd.f32 0.0, %v6396
        %v6398 = vpop.f32.mrf.mxu0
        %6399 = vmatprep.mubr.bf16.mxu0 0
        %6400 = vmatmul.mubr.bf16.gmra.mxu0 %v6310
        %v6401 = vpop.f32.mrf.mxu0
        %v6402 = vadd.f32 0.0, %v6401
        %v6403 = vpop.f32.mrf.mxu0
        %v6404 = vpop.f32.mrf.mxu0
        %v6405 = vadd.f32 0.0, %v6404
        %v6406 = vpop.f32.mrf.mxu0
        %6407 = vmatprep.mubr.bf16.mxu0 0
        %6408 = vmatmul.mubr.bf16.gmra.mxu0 %v6313
        %v6409 = vpop.f32.mrf.mxu0
        %v6410 = vadd.f32 0.0, %v6409
        %v6411 = vpop.f32.mrf.mxu0
        %v6412 = vpop.f32.mrf.mxu0
        %v6413 = vadd.f32 0.0, %v6412
        %v6414 = vpop.f32.mrf.mxu0
        %6415 = vmatprep.mubr.bf16.mxu0 0
        %6416 = vmatmul.mubr.bf16.gmra.mxu0 %v6316
        %v6417 = vpop.f32.mrf.mxu0
        %v6418 = vadd.f32 0.0, %v6417
        %v6419 = vpop.f32.mrf.mxu0
        %v6420 = vpop.f32.mrf.mxu0
        %v6421 = vadd.f32 0.0, %v6420
        %v6422 = vpop.f32.mrf.mxu0
        %6423 = vmatprep.mubr.bf16.mxu0 0
        %6424 = vmatmul.mubr.bf16.gmra.mxu0 %v6319
        %v6425 = vpop.f32.mrf.mxu0
        %v6426 = vadd.f32 0.0, %v6425
        %v6427 = vpop.f32.mrf.mxu0
        %v6428 = vpop.f32.mrf.mxu0
        %v6429 = vadd.f32 0.0, %v6428
        %v6430 = vpop.f32.mrf.mxu0
        %6431 = vmatprep.mubr.bf16.mxu0 0
        %6432 = vmatmul.mubr.bf16.gmra.mxu0 %v6322
        %v6433 = vpop.f32.mrf.mxu0
        %v6434 = vadd.f32 0.0, %v6433
        %v6435 = vpop.f32.mrf.mxu0
        %v6436 = vpop.f32.mrf.mxu0
        %v6437 = vadd.f32 0.0, %v6436
        %v6438 = vpop.f32.mrf.mxu0
        %6439 = vmatprep.mubr.bf16.mxu0 0
        %6440 = vmatmul.mubr.bf16.gmra.mxu0 %v6325
        %v6441 = vpop.f32.mrf.mxu0
        %v6442 = vadd.f32 0.0, %v6441
        %v6443 = vpop.f32.mrf.mxu0
        %v6444 = vpop.f32.mrf.mxu0
        %v6445 = vadd.f32 0.0, %v6444
        %v6446 = vpop.f32.mrf.mxu0
        %6447 = vmatprep.mubr.bf16.mxu0 0
        %6448 = vmatmul.mubr.bf16.gmra.mxu0 %v6328
        %v6449 = vpop.f32.mrf.mxu0
        %v6450 = vadd.f32 0.0, %v6449
        %v6451 = vpop.f32.mrf.mxu0
        %v6452 = vpop.f32.mrf.mxu0
        %v6453 = vadd.f32 0.0, %v6452
        %v6454 = vpop.f32.mrf.mxu0
        %6455 = vmatprep.mubr.bf16.mxu0 0
        %6456 = vmatmul.mubr.bf16.gmra.mxu0 %v6331
        %v6457 = vpop.f32.mrf.mxu0
        %v6458 = vadd.f32 0.0, %v6457
        %v6459 = vpop.f32.mrf.mxu0
        %v6460 = vpop.f32.mrf.mxu0
        %v6461 = vadd.f32 0.0, %v6460
        %v6462 = vpop.f32.mrf.mxu0
        %6463 = vmatprep.mubr.bf16.mxu0 0
        %6464 = vmatmul.mubr.bf16.gmra.mxu0 %v6334
        %v6465 = vpop.f32.mrf.mxu0
        %v6466 = vadd.f32 0.0, %v6465
        %v6467 = vpop.f32.mrf.mxu0
        %v6468 = vpop.f32.mrf.mxu0
        %v6469 = vadd.f32 0.0, %v6468
        %v6470 = vpop.f32.mrf.mxu0
        %6471 = vmatprep.mubr.bf16.mxu0 0
        %6472 = vmatmul.mubr.bf16.gmra.mxu0 %v6337
        %v6473 = vpop.f32.mrf.mxu0
        %v6474 = vadd.f32 0.0, %v6473
        %v6475 = vpop.f32.mrf.mxu0
        %v6476 = vpop.f32.mrf.mxu0
        %v6477 = vadd.f32 0.0, %v6476
        %v6478 = vpop.f32.mrf.mxu0
        %6479 = vmatprep.mubr.bf16.mxu0 0
        %6480 = vmatmul.mubr.bf16.gmra.mxu0 %v6340
        %v6481 = vpop.f32.mrf.mxu0
        %v6482 = vadd.f32 0.0, %v6481
        %v6483 = vpop.f32.mrf.mxu0
        %v6484 = vpop.f32.mrf.mxu0
        %v6485 = vadd.f32 0.0, %v6484
        %v6486 = vpop.f32.mrf.mxu0
        %6487 = vmatprep.mubr.bf16.mxu0 0
        %6488 = vmatmul.mubr.bf16.gmra.mxu0 %v6343
        %v6489 = vpop.f32.mrf.mxu0
        %v6490 = vadd.f32 0.0, %v6489
        %v6491 = vpop.f32.mrf.mxu0
        %v6492 = vpop.f32.mrf.mxu0
        %v6493 = vadd.f32 0.0, %v6492
        %v6494 = vpop.f32.mrf.mxu0
        %6495 = vmatprep.mubr.bf16.mxu0 0
        %6496 = vmatmul.mubr.bf16.gmra.mxu0 %v6346
        %v6497 = vpop.f32.mrf.mxu0
        %v6498 = vadd.f32 0.0, %v6497
        %v6499 = vpop.f32.mrf.mxu0
        %v6500 = vpop.f32.mrf.mxu0
        %v6501 = vadd.f32 0.0, %v6500
        %v6502 = vpop.f32.mrf.mxu0
        %6503 = vmatprep.mubr.bf16.mxu0 0
        %6504 = vmatmul.mubr.bf16.gmra.mxu0 %v6349
        %v6505 = vpop.f32.mrf.mxu0
        %v6506 = vadd.f32 0.0, %v6505
        %v6507 = vpop.f32.mrf.mxu0
        %v6508 = vpop.f32.mrf.mxu0
        %v6509 = vadd.f32 0.0, %v6508
        %v6510 = vpop.f32.mrf.mxu0
        %6511 = vdwg.mxu0
        %v6512 = vadd.f32 %v6031, %v6386
        %v6513 = vadd.f32 %v6032, %v6389
        %v6514 = vadd.f32 %v6033, %v6394
        %v6515 = vadd.f32 %v6034, %v6397
        %v6516 = vadd.f32 %v6035, %v6402
        %v6517 = vadd.f32 %v6036, %v6405
        %v6518 = vadd.f32 %v6037, %v6410
        %v6519 = vadd.f32 %v6038, %v6413
        %v6520 = vadd.f32 %v6039, %v6418
        %v6521 = vadd.f32 %v6040, %v6421
        %v6522 = vadd.f32 %v6041, %v6426
        %v6523 = vadd.f32 %v6042, %v6429
        %v6524 = vadd.f32 %v6043, %v6434
        %v6525 = vadd.f32 %v6044, %v6437
        %v6526 = vadd.f32 %v6045, %v6442
        %v6527 = vadd.f32 %v6046, %v6445
        %v6528 = vadd.f32 %v6047, %v6450
        %v6529 = vadd.f32 %v6048, %v6453
        %v6530 = vadd.f32 %v6049, %v6458
        %v6531 = vadd.f32 %v6050, %v6461
        %v6532 = vadd.f32 %v6051, %v6466
        %v6533 = vadd.f32 %v6052, %v6469
        %v6534 = vadd.f32 %v6053, %v6474
        %v6535 = vadd.f32 %v6054, %v6477
        %v6536 = vadd.f32 %v6055, %v6482
        %v6537 = vadd.f32 %v6056, %v6485
        %v6538 = vadd.f32 %v6057, %v6490
        %v6539 = vadd.f32 %v6058, %v6493
        %v6540 = vadd.f32 %v6059, %v6498
        %v6541 = vadd.f32 %v6060, %v6501
        %v6542 = vadd.f32 %v6061, %v6506
        %v6543 = vadd.f32 %v6062, %v6509
        %v6544 = vld [vmem:[%s3] sm:$0x1]
        %v6546 = vlaneseq
        %v6547 = vshrl.u32 %v6546, 7
        %v6548 = vsub.s32 0, %v6547
        %v6549 = vrot.slane %v6544, %v6548
        %v6551 = vadd.f32 %v6512, %v6549
        %v6552 = vadd.f32 %v6513, %v6549
        %v6553 = vadd.f32 %v6514, %v6549
        %v6554 = vadd.f32 %v6515, %v6549
        %v6555 = vadd.f32 %v6516, %v6549
        %v6556 = vadd.f32 %v6517, %v6549
        %v6557 = vadd.f32 %v6518, %v6549
        %v6558 = vadd.f32 %v6519, %v6549
        %v6559 = vadd.f32 %v6520, %v6549
        %v6560 = vadd.f32 %v6521, %v6549
        %v6561 = vadd.f32 %v6522, %v6549
        %v6562 = vadd.f32 %v6523, %v6549
        %v6563 = vadd.f32 %v6524, %v6549
        %v6564 = vadd.f32 %v6525, %v6549
        %v6565 = vadd.f32 %v6526, %v6549
        %v6566 = vadd.f32 %v6527, %v6549
        %v6567 = vadd.f32 %v6528, %v6549
        %v6568 = vadd.f32 %v6529, %v6549
        %v6569 = vadd.f32 %v6530, %v6549
        %v6570 = vadd.f32 %v6531, %v6549
        %v6571 = vadd.f32 %v6532, %v6549
        %v6572 = vadd.f32 %v6533, %v6549
        %v6573 = vadd.f32 %v6534, %v6549
        %v6574 = vadd.f32 %v6535, %v6549
        %v6575 = vadd.f32 %v6536, %v6549
        %v6576 = vadd.f32 %v6537, %v6549
        %v6577 = vadd.f32 %v6538, %v6549
        %v6578 = vadd.f32 %v6539, %v6549
        %v6579 = vadd.f32 %v6540, %v6549
        %v6580 = vadd.f32 %v6541, %v6549
        %v6581 = vadd.f32 %v6542, %v6549
        %v6582 = vadd.f32 %v6543, %v6549
        %vm6583 = vcmp.gt.f32.partialorder %v6551, 0.0
        %vm6584 = vcmp.gt.f32.partialorder %v6552, 0.0
        %vm6585 = vcmp.gt.f32.partialorder %v6553, 0.0
        %vm6586 = vcmp.gt.f32.partialorder %v6554, 0.0
        %vm6587 = vcmp.gt.f32.partialorder %v6555, 0.0
        %vm6588 = vcmp.gt.f32.partialorder %v6556, 0.0
        %vm6589 = vcmp.gt.f32.partialorder %v6557, 0.0
        %vm6590 = vcmp.gt.f32.partialorder %v6558, 0.0
        %vm6591 = vcmp.gt.f32.partialorder %v6559, 0.0
        %vm6592 = vcmp.gt.f32.partialorder %v6560, 0.0
        %vm6593 = vcmp.gt.f32.partialorder %v6561, 0.0
        %vm6594 = vcmp.gt.f32.partialorder %v6562, 0.0
        %vm6595 = vcmp.gt.f32.partialorder %v6563, 0.0
        %vm6596 = vcmp.gt.f32.partialorder %v6564, 0.0
        %vm6597 = vcmp.gt.f32.partialorder %v6565, 0.0
        %vm6598 = vcmp.gt.f32.partialorder %v6566, 0.0
        %vm6599 = vcmp.gt.f32.partialorder %v6567, 0.0
        %vm6600 = vcmp.gt.f32.partialorder %v6568, 0.0
        %vm6601 = vcmp.gt.f32.partialorder %v6569, 0.0
        %vm6602 = vcmp.gt.f32.partialorder %v6570, 0.0
        %vm6603 = vcmp.gt.f32.partialorder %v6571, 0.0
        %vm6604 = vcmp.gt.f32.partialorder %v6572, 0.0
        %vm6605 = vcmp.gt.f32.partialorder %v6573, 0.0
        %vm6606 = vcmp.gt.f32.partialorder %v6574, 0.0
        %vm6607 = vcmp.gt.f32.partialorder %v6575, 0.0
        %vm6608 = vcmp.gt.f32.partialorder %v6576, 0.0
        %vm6609 = vcmp.gt.f32.partialorder %v6577, 0.0
        %vm6610 = vcmp.gt.f32.partialorder %v6578, 0.0
        %vm6611 = vcmp.gt.f32.partialorder %v6579, 0.0
        %vm6612 = vcmp.gt.f32.partialorder %v6580, 0.0
        %vm6613 = vcmp.gt.f32.partialorder %v6581, 0.0
        %vm6614 = vcmp.gt.f32.partialorder %v6582, 0.0
        %v6615 = vmul.f32 %v6551, 0.2
        %v6616 = vmul.f32 %v6552, 0.2
        %v6617 = vmul.f32 %v6553, 0.2
        %v6618 = vmul.f32 %v6554, 0.2
        %v6619 = vmul.f32 %v6555, 0.2
        %v6620 = vmul.f32 %v6556, 0.2
        %v6621 = vmul.f32 %v6557, 0.2
        %v6622 = vmul.f32 %v6558, 0.2
        %v6623 = vmul.f32 %v6559, 0.2
        %v6624 = vmul.f32 %v6560, 0.2
        %v6625 = vmul.f32 %v6561, 0.2
        %v6626 = vmul.f32 %v6562, 0.2
        %v6627 = vmul.f32 %v6563, 0.2
        %v6628 = vmul.f32 %v6564, 0.2
        %v6629 = vmul.f32 %v6565, 0.2
        %v6630 = vmul.f32 %v6566, 0.2
        %v6631 = vmul.f32 %v6567, 0.2
        %v6632 = vmul.f32 %v6568, 0.2
        %v6633 = vmul.f32 %v6569, 0.2
        %v6634 = vmul.f32 %v6570, 0.2
        %v6635 = vmul.f32 %v6571, 0.2
        %v6636 = vmul.f32 %v6572, 0.2
        %v6637 = vmul.f32 %v6573, 0.2
        %v6638 = vmul.f32 %v6574, 0.2
        %v6639 = vmul.f32 %v6575, 0.2
        %v6640 = vmul.f32 %v6576, 0.2
        %v6641 = vmul.f32 %v6577, 0.2
        %v6642 = vmul.f32 %v6578, 0.2
        %v6643 = vmul.f32 %v6579, 0.2
        %v6644 = vmul.f32 %v6580, 0.2
        %v6645 = vmul.f32 %v6581, 0.2
        %v6646 = vmul.f32 %v6582, 0.2
        %v6647 = vsel %vm6583, %v6551, %v6615
        %v6648 = vsel %vm6584, %v6552, %v6616
        %v6649 = vsel %vm6585, %v6553, %v6617
        %v6650 = vsel %vm6586, %v6554, %v6618
        %v6651 = vsel %vm6587, %v6555, %v6619
        %v6652 = vsel %vm6588, %v6556, %v6620
        %v6653 = vsel %vm6589, %v6557, %v6621
        %v6654 = vsel %vm6590, %v6558, %v6622
        %v6655 = vsel %vm6591, %v6559, %v6623
        %v6656 = vsel %vm6592, %v6560, %v6624
        %v6657 = vsel %vm6593, %v6561, %v6625
        %v6658 = vsel %vm6594, %v6562, %v6626
        %v6659 = vsel %vm6595, %v6563, %v6627
        %v6660 = vsel %vm6596, %v6564, %v6628
        %v6661 = vsel %vm6597, %v6565, %v6629
        %v6662 = vsel %vm6598, %v6566, %v6630
        %v6663 = vsel %vm6599, %v6567, %v6631
        %v6664 = vsel %vm6600, %v6568, %v6632
        %v6665 = vsel %vm6601, %v6569, %v6633
        %v6666 = vsel %vm6602, %v6570, %v6634
        %v6667 = vsel %vm6603, %v6571, %v6635
        %v6668 = vsel %vm6604, %v6572, %v6636
        %v6669 = vsel %vm6605, %v6573, %v6637
        %v6670 = vsel %vm6606, %v6574, %v6638
        %v6671 = vsel %vm6607, %v6575, %v6639
        %v6672 = vsel %vm6608, %v6576, %v6640
        %v6673 = vsel %vm6609, %v6577, %v6641
        %v6674 = vsel %vm6610, %v6578, %v6642
        %v6675 = vsel %vm6611, %v6579, %v6643
        %v6676 = vsel %vm6612, %v6580, %v6644
        %v6677 = vsel %vm6613, %v6581, %v6645
        %v6678 = vsel %vm6614, %v6582, %v6646
        %v6679 = vpack.c.bf16 %v6648, %v6647
        %v6680 = vpack.c.bf16 %v6650, %v6649
        %v6681 = vpack.c.bf16 %v6652, %v6651
        %v6682 = vpack.c.bf16 %v6654, %v6653
        %v6683 = vpack.c.bf16 %v6656, %v6655
        %v6684 = vpack.c.bf16 %v6658, %v6657
        %v6685 = vpack.c.bf16 %v6660, %v6659
        %v6686 = vpack.c.bf16 %v6662, %v6661
        %v6687 = vpack.c.bf16 %v6664, %v6663
        %v6688 = vpack.c.bf16 %v6666, %v6665
        %v6689 = vpack.c.bf16 %v6668, %v6667
        %v6690 = vpack.c.bf16 %v6670, %v6669
        %v6691 = vpack.c.bf16 %v6672, %v6671
        %v6692 = vpack.c.bf16 %v6674, %v6673
        %v6693 = vpack.c.bf16 %v6676, %v6675
        %v6694 = vpack.c.bf16 %v6678, %v6677
        %v6711 = vunpack.c.l.b16 %v6679
        %v6712 = vunpack.c.h.b16 %v6679
        %v6713 = vunpack.c.l.b16 %v6680
        %v6714 = vunpack.c.h.b16 %v6680
        %v6715 = vunpack.c.l.b16 %v6681
        %v6716 = vunpack.c.h.b16 %v6681
        %v6717 = vunpack.c.l.b16 %v6682
        %v6718 = vunpack.c.h.b16 %v6682
        %v6719 = vunpack.c.l.b16 %v6683
        %v6720 = vunpack.c.h.b16 %v6683
        %v6721 = vunpack.c.l.b16 %v6684
        %v6722 = vunpack.c.h.b16 %v6684
        %v6723 = vunpack.c.l.b16 %v6685
        %v6724 = vunpack.c.h.b16 %v6685
        %v6725 = vunpack.c.l.b16 %v6686
        %v6726 = vunpack.c.h.b16 %v6686
        %v6727 = vunpack.c.l.b16 %v6687
        %v6728 = vunpack.c.h.b16 %v6687
        %v6729 = vunpack.c.l.b16 %v6688
        %v6730 = vunpack.c.h.b16 %v6688
        %v6731 = vunpack.c.l.b16 %v6689
        %v6732 = vunpack.c.h.b16 %v6689
        %v6733 = vunpack.c.l.b16 %v6690
        %v6734 = vunpack.c.h.b16 %v6690
        %v6735 = vunpack.c.l.b16 %v6691
        %v6736 = vunpack.c.h.b16 %v6691
        %v6737 = vunpack.c.l.b16 %v6692
        %v6738 = vunpack.c.h.b16 %v6692
        %v6739 = vunpack.c.l.b16 %v6693
        %v6740 = vunpack.c.h.b16 %v6693
        %v6741 = vunpack.c.l.b16 %v6694
        %v6742 = vunpack.c.h.b16 %v6694
        %v6743 = vpack.c.b16 %v6711, %v6711
        %v6744 = vpack.c.b16 %v6712, %v6712
        %v6745 = vpack.c.b16 %v6713, %v6713
        %v6746 = vpack.c.b16 %v6714, %v6714
        %v6747 = vpack.c.b16 %v6715, %v6715
        %v6748 = vpack.c.b16 %v6716, %v6716
        %v6749 = vpack.c.b16 %v6717, %v6717
        %v6750 = vpack.c.b16 %v6718, %v6718
        %v6751 = vpack.c.b16 %v6719, %v6719
        %v6752 = vpack.c.b16 %v6720, %v6720
        %v6753 = vpack.c.b16 %v6721, %v6721
        %v6754 = vpack.c.b16 %v6722, %v6722
        %v6755 = vpack.c.b16 %v6723, %v6723
        %v6756 = vpack.c.b16 %v6724, %v6724
        %v6757 = vpack.c.b16 %v6725, %v6725
        %v6758 = vpack.c.b16 %v6726, %v6726
        %v6759 = vpack.c.b16 %v6727, %v6727
        %v6760 = vpack.c.b16 %v6728, %v6728
        %v6761 = vpack.c.b16 %v6729, %v6729
        %v6762 = vpack.c.b16 %v6730, %v6730
        %v6763 = vpack.c.b16 %v6731, %v6731
        %v6764 = vpack.c.b16 %v6732, %v6732
        %v6765 = vpack.c.b16 %v6733, %v6733
        %v6766 = vpack.c.b16 %v6734, %v6734
        %v6767 = vpack.c.b16 %v6735, %v6735
        %v6768 = vpack.c.b16 %v6736, %v6736
        %v6769 = vpack.c.b16 %v6737, %v6737
        %v6770 = vpack.c.b16 %v6738, %v6738
        %v6771 = vpack.c.b16 %v6739, %v6739
        %v6772 = vpack.c.b16 %v6740, %v6740
        %v6773 = vpack.c.b16 %v6741, %v6741
        %v6774 = vpack.c.b16 %v6742, %v6742
        %v6776 = vshrl.u32 %v6743, 16
        %v6778 = vrot.slane %v6776, 7
        %v6779 = vshll.u32 %v6743, 16
        %v6781 = vor.u32 %v6778, %v6779
        %v6782 = vrot.slane %v6778, 4
        %v6784 = vshrl.u32 %v6744, 16
        %v6786 = vrot.slane %v6784, 7
        %v6787 = vshll.u32 %v6744, 16
        %v6789 = vor.u32 %v6786, %v6787
        %v6790 = vsel %vm787, %v6782, %v6789
        %v6791 = vrot.slane %v6786, 4
        %v6793 = vshrl.u32 %v6745, 16
        %v6795 = vrot.slane %v6793, 7
        %v6796 = vshll.u32 %v6745, 16
        %v6798 = vor.u32 %v6795, %v6796
        %v6799 = vrot.slane %v6795, 4
        %v6801 = vshrl.u32 %v6746, 16
        %v6803 = vrot.slane %v6801, 7
        %v6804 = vshll.u32 %v6746, 16
        %v6806 = vor.u32 %v6803, %v6804
        %v6807 = vsel %vm787, %v6799, %v6806
        %v6808 = vrot.slane %v6803, 4
        %v6810 = vshrl.u32 %v6747, 16
        %v6812 = vrot.slane %v6810, 7
        %v6813 = vshll.u32 %v6747, 16
        %v6815 = vor.u32 %v6812, %v6813
        %v6816 = vrot.slane %v6812, 4
        %v6818 = vshrl.u32 %v6748, 16
        %v6820 = vrot.slane %v6818, 7
        %v6821 = vshll.u32 %v6748, 16
        %v6823 = vor.u32 %v6820, %v6821
        %v6824 = vsel %vm787, %v6816, %v6823
        %v6825 = vrot.slane %v6820, 4
        %v6827 = vshrl.u32 %v6749, 16
        %v6829 = vrot.slane %v6827, 7
        %v6830 = vshll.u32 %v6749, 16
        %v6832 = vor.u32 %v6829, %v6830
        %v6833 = vrot.slane %v6829, 4
        %v6835 = vshrl.u32 %v6750, 16
        %v6837 = vrot.slane %v6835, 7
        %v6838 = vshll.u32 %v6750, 16
        %v6840 = vor.u32 %v6837, %v6838
        %v6841 = vsel %vm787, %v6833, %v6840
        %v6842 = vrot.slane %v6837, 4
        %v6844 = vshrl.u32 %v6751, 16
        %v6846 = vrot.slane %v6844, 7
        %v6847 = vshll.u32 %v6751, 16
        %v6849 = vor.u32 %v6846, %v6847
        %v6850 = vrot.slane %v6846, 4
        %v6852 = vshrl.u32 %v6752, 16
        %v6854 = vrot.slane %v6852, 7
        %v6855 = vshll.u32 %v6752, 16
        %v6857 = vor.u32 %v6854, %v6855
        %v6858 = vsel %vm787, %v6850, %v6857
        %v6859 = vrot.slane %v6854, 4
        %v6861 = vshrl.u32 %v6753, 16
        %v6863 = vrot.slane %v6861, 7
        %v6864 = vshll.u32 %v6753, 16
        %v6866 = vor.u32 %v6863, %v6864
        %v6867 = vrot.slane %v6863, 4
        %v6869 = vshrl.u32 %v6754, 16
        %v6871 = vrot.slane %v6869, 7
        %v6872 = vshll.u32 %v6754, 16
        %v6874 = vor.u32 %v6871, %v6872
        %v6875 = vsel %vm787, %v6867, %v6874
        %v6876 = vrot.slane %v6871, 4
        %v6878 = vshrl.u32 %v6755, 16
        %v6880 = vrot.slane %v6878, 7
        %v6881 = vshll.u32 %v6755, 16
        %v6883 = vor.u32 %v6880, %v6881
        %v6884 = vrot.slane %v6880, 4
        %v6886 = vshrl.u32 %v6756, 16
        %v6888 = vrot.slane %v6886, 7
        %v6889 = vshll.u32 %v6756, 16
        %v6891 = vor.u32 %v6888, %v6889
        %v6892 = vsel %vm787, %v6884, %v6891
        %v6893 = vrot.slane %v6888, 4
        %v6895 = vshrl.u32 %v6757, 16
        %v6897 = vrot.slane %v6895, 7
        %v6898 = vshll.u32 %v6757, 16
        %v6900 = vor.u32 %v6897, %v6898
        %v6901 = vrot.slane %v6897, 4
        %v6903 = vshrl.u32 %v6758, 16
        %v6905 = vrot.slane %v6903, 7
        %v6906 = vshll.u32 %v6758, 16
        %v6908 = vor.u32 %v6905, %v6906
        %v6909 = vsel %vm787, %v6901, %v6908
        %v6910 = vrot.slane %v6905, 4
        %v6912 = vshrl.u32 %v6759, 16
        %v6914 = vrot.slane %v6912, 7
        %v6915 = vshll.u32 %v6759, 16
        %v6917 = vor.u32 %v6914, %v6915
        %v6918 = vrot.slane %v6914, 4
        %v6920 = vshrl.u32 %v6760, 16
        %v6922 = vrot.slane %v6920, 7
        %v6923 = vshll.u32 %v6760, 16
        %v6925 = vor.u32 %v6922, %v6923
        %v6926 = vsel %vm787, %v6918, %v6925
        %v6927 = vrot.slane %v6922, 4
        %v6929 = vshrl.u32 %v6761, 16
        %v6931 = vrot.slane %v6929, 7
        %v6932 = vshll.u32 %v6761, 16
        %v6934 = vor.u32 %v6931, %v6932
        %v6935 = vrot.slane %v6931, 4
        %v6937 = vshrl.u32 %v6762, 16
        %v6939 = vrot.slane %v6937, 7
        %v6940 = vshll.u32 %v6762, 16
        %v6942 = vor.u32 %v6939, %v6940
        %v6943 = vsel %vm787, %v6935, %v6942
        %v6944 = vrot.slane %v6939, 4
        %v6946 = vshrl.u32 %v6763, 16
        %v6948 = vrot.slane %v6946, 7
        %v6949 = vshll.u32 %v6763, 16
        %v6951 = vor.u32 %v6948, %v6949
        %v6952 = vrot.slane %v6948, 4
        %v6954 = vshrl.u32 %v6764, 16
        %v6956 = vrot.slane %v6954, 7
        %v6957 = vshll.u32 %v6764, 16
        %v6959 = vor.u32 %v6956, %v6957
        %v6960 = vsel %vm787, %v6952, %v6959
        %v6961 = vrot.slane %v6956, 4
        %v6963 = vshrl.u32 %v6765, 16
        %v6965 = vrot.slane %v6963, 7
        %v6966 = vshll.u32 %v6765, 16
        %v6968 = vor.u32 %v6965, %v6966
        %v6969 = vrot.slane %v6965, 4
        %v6971 = vshrl.u32 %v6766, 16
        %v6973 = vrot.slane %v6971, 7
        %v6974 = vshll.u32 %v6766, 16
        %v6976 = vor.u32 %v6973, %v6974
        %v6977 = vsel %vm787, %v6969, %v6976
        %v6978 = vrot.slane %v6973, 4
        %v6980 = vshrl.u32 %v6767, 16
        %v6982 = vrot.slane %v6980, 7
        %v6983 = vshll.u32 %v6767, 16
        %v6985 = vor.u32 %v6982, %v6983
        %v6986 = vrot.slane %v6982, 4
        %v6988 = vshrl.u32 %v6768, 16
        %v6990 = vrot.slane %v6988, 7
        %v6991 = vshll.u32 %v6768, 16
        %v6993 = vor.u32 %v6990, %v6991
        %v6994 = vsel %vm787, %v6986, %v6993
        %v6995 = vrot.slane %v6990, 4
        %v6997 = vshrl.u32 %v6769, 16
        %v6999 = vrot.slane %v6997, 7
        %v7000 = vshll.u32 %v6769, 16
        %v7002 = vor.u32 %v6999, %v7000
        %v7003 = vrot.slane %v6999, 4
        %v7005 = vshrl.u32 %v6770, 16
        %v7007 = vrot.slane %v7005, 7
        %v7008 = vshll.u32 %v6770, 16
        %v7010 = vor.u32 %v7007, %v7008
        %v7011 = vsel %vm787, %v7003, %v7010
        %v7012 = vrot.slane %v7007, 4
        %v7014 = vshrl.u32 %v6771, 16
        %v7016 = vrot.slane %v7014, 7
        %v7017 = vshll.u32 %v6771, 16
        %v7019 = vor.u32 %v7016, %v7017
        %v7020 = vrot.slane %v7016, 4
        %v7022 = vshrl.u32 %v6772, 16
        %v7024 = vrot.slane %v7022, 7
        %v7025 = vshll.u32 %v6772, 16
        %v7027 = vor.u32 %v7024, %v7025
        %v7028 = vsel %vm787, %v7020, %v7027
        %v7029 = vrot.slane %v7024, 4
        %v7031 = vshrl.u32 %v6773, 16
        %v7033 = vrot.slane %v7031, 7
        %v7034 = vshll.u32 %v6773, 16
        %v7036 = vor.u32 %v7033, %v7034
        %v7037 = vrot.slane %v7033, 4
        %v7039 = vshrl.u32 %v6774, 16
        %v7041 = vrot.slane %v7039, 7
        %v7042 = vshll.u32 %v6774, 16
        %v7044 = vor.u32 %v7041, %v7042
        %v7045 = vsel %vm787, %v7037, %v7044
        %v7046 = vrot.slane %v7041, 4
        %s7095 = scalar_lea.vmem [#allocation3], 12
        %vm7096 = vcmask 257024
        %vm7097 = vmand %vm7096, %vm487
        %v7098 = vld [vmem:[%s7095] sm:$0xf]
        %v7099 = vsel %vm7097, %v6781, %v7098
        %7100 = vst [vmem:[%s7095] sm:$0xf] %v7099
        %7101 = vst.msk [vmem:[%s7095 + $0x4] sm:$0xf] %vm421, %v6790
        %v7102 = vld [vmem:[%s7095 + $0x8] sm:$0x1]
        %v7103 = vsel %vm432, %v6791, %v7102
        %7104 = vst [vmem:[%s7095 + $0x8] sm:$0x1] %v7103
        %v7105 = vld [vmem:[%s7095 + $0xc] sm:$0xf]
        %v7106 = vsel %vm7097, %v6798, %v7105
        %7107 = vst [vmem:[%s7095 + $0xc] sm:$0xf] %v7106
        %7108 = vst.msk [vmem:[%s7095 + $0x10] sm:$0xf] %vm421, %v6807
        %v7109 = vld [vmem:[%s7095 + $0x14] sm:$0x1]
        %v7110 = vsel %vm432, %v6808, %v7109
        %7111 = vst [vmem:[%s7095 + $0x14] sm:$0x1] %v7110
        %v7112 = vld [vmem:[%s7095 + $0x18] sm:$0xf]
        %v7113 = vsel %vm7097, %v6815, %v7112
        %7114 = vst [vmem:[%s7095 + $0x18] sm:$0xf] %v7113
        %7115 = vst.msk [vmem:[%s7095 + $0x1c] sm:$0xf] %vm421, %v6824
        %v7116 = vld [vmem:[%s7095 + $0x20] sm:$0x1]
        %v7117 = vsel %vm432, %v6825, %v7116
        %7118 = vst [vmem:[%s7095 + $0x20] sm:$0x1] %v7117
        %v7119 = vld [vmem:[%s7095 + $0x24] sm:$0xf]
        %v7120 = vsel %vm7097, %v6832, %v7119
        %7121 = vst [vmem:[%s7095 + $0x24] sm:$0xf] %v7120
        %7122 = vst.msk [vmem:[%s7095 + $0x28] sm:$0xf] %vm421, %v6841
        %v7123 = vld [vmem:[%s7095 + $0x2c] sm:$0x1]
        %v7124 = vsel %vm432, %v6842, %v7123
        %7125 = vst [vmem:[%s7095 + $0x2c] sm:$0x1] %v7124
        %v7126 = vld [vmem:[%s7095 + $0x30] sm:$0xf]
        %v7127 = vsel %vm7097, %v6849, %v7126
        %7128 = vst [vmem:[%s7095 + $0x30] sm:$0xf] %v7127
        %7129 = vst.msk [vmem:[%s7095 + $0x34] sm:$0xf] %vm421, %v6858
        %v7130 = vld [vmem:[%s7095 + $0x38] sm:$0x1]
        %v7131 = vsel %vm432, %v6859, %v7130
        %7132 = vst [vmem:[%s7095 + $0x38] sm:$0x1] %v7131
        %v7133 = vld [vmem:[%s7095 + $0x3c] sm:$0xf]
        %v7134 = vsel %vm7097, %v6866, %v7133
        %7135 = vst [vmem:[%s7095 + $0x3c] sm:$0xf] %v7134
        %7136 = vst.msk [vmem:[%s7095 + $0x40] sm:$0xf] %vm421, %v6875
        %v7137 = vld [vmem:[%s7095 + $0x44] sm:$0x1]
        %v7138 = vsel %vm432, %v6876, %v7137
        %7139 = vst [vmem:[%s7095 + $0x44] sm:$0x1] %v7138
        %v7140 = vld [vmem:[%s7095 + $0x48] sm:$0xf]
        %v7141 = vsel %vm7097, %v6883, %v7140
        %7142 = vst [vmem:[%s7095 + $0x48] sm:$0xf] %v7141
        %7143 = vst.msk [vmem:[%s7095 + $0x4c] sm:$0xf] %vm421, %v6892
        %v7144 = vld [vmem:[%s7095 + $0x50] sm:$0x1]
        %v7145 = vsel %vm432, %v6893, %v7144
        %7146 = vst [vmem:[%s7095 + $0x50] sm:$0x1] %v7145
        %v7147 = vld [vmem:[%s7095 + $0x54] sm:$0xf]
        %v7148 = vsel %vm7097, %v6900, %v7147
        %7149 = vst [vmem:[%s7095 + $0x54] sm:$0xf] %v7148
        %7150 = vst.msk [vmem:[%s7095 + $0x58] sm:$0xf] %vm421, %v6909
        %v7151 = vld [vmem:[%s7095 + $0x5c] sm:$0x1]
        %v7152 = vsel %vm432, %v6910, %v7151
        %7153 = vst [vmem:[%s7095 + $0x5c] sm:$0x1] %v7152
        %v7154 = vld [vmem:[%s7095 + $0x60] sm:$0xf]
        %v7155 = vsel %vm7097, %v6917, %v7154
        %7156 = vst [vmem:[%s7095 + $0x60] sm:$0xf] %v7155
        %7157 = vst.msk [vmem:[%s7095 + $0x64] sm:$0xf] %vm421, %v6926
        %v7158 = vld [vmem:[%s7095 + $0x68] sm:$0x1]
        %v7159 = vsel %vm432, %v6927, %v7158
        %7160 = vst [vmem:[%s7095 + $0x68] sm:$0x1] %v7159
        %v7161 = vld [vmem:[%s7095 + $0x6c] sm:$0xf]
        %v7162 = vsel %vm7097, %v6934, %v7161
        %7163 = vst [vmem:[%s7095 + $0x6c] sm:$0xf] %v7162
        %7164 = vst.msk [vmem:[%s7095 + $0x70] sm:$0xf] %vm421, %v6943
        %v7165 = vld [vmem:[%s7095 + $0x74] sm:$0x1]
        %v7166 = vsel %vm432, %v6944, %v7165
        %7167 = vst [vmem:[%s7095 + $0x74] sm:$0x1] %v7166
        %v7168 = vld [vmem:[%s7095 + $0x78] sm:$0xf]
        %v7169 = vsel %vm7097, %v6951, %v7168
        %7170 = vst [vmem:[%s7095 + $0x78] sm:$0xf] %v7169
        %7171 = vst.msk [vmem:[%s7095 + $0x7c] sm:$0xf] %vm421, %v6960
        %v7172 = vld [vmem:[%s7095 + $0x80] sm:$0x1]
        %v7173 = vsel %vm432, %v6961, %v7172
        %7174 = vst [vmem:[%s7095 + $0x80] sm:$0x1] %v7173
        %v7175 = vld [vmem:[%s7095 + $0x84] sm:$0xf]
        %v7176 = vsel %vm7097, %v6968, %v7175
        %7177 = vst [vmem:[%s7095 + $0x84] sm:$0xf] %v7176
        %7178 = vst.msk [vmem:[%s7095 + $0x88] sm:$0xf] %vm421, %v6977
        %v7179 = vld [vmem:[%s7095 + $0x8c] sm:$0x1]
        %v7180 = vsel %vm432, %v6978, %v7179
        %7181 = vst [vmem:[%s7095 + $0x8c] sm:$0x1] %v7180
        %v7182 = vld [vmem:[%s7095 + $0x90] sm:$0xf]
        %v7183 = vsel %vm7097, %v6985, %v7182
        %7184 = vst [vmem:[%s7095 + $0x90] sm:$0xf] %v7183
        %7185 = vst.msk [vmem:[%s7095 + $0x94] sm:$0xf] %vm421, %v6994
        %v7186 = vld [vmem:[%s7095 + $0x98] sm:$0x1]
        %v7187 = vsel %vm432, %v6995, %v7186
        %7188 = vst [vmem:[%s7095 + $0x98] sm:$0x1] %v7187
        %v7189 = vld [vmem:[%s7095 + $0x9c] sm:$0xf]
        %v7190 = vsel %vm7097, %v7002, %v7189
        %7191 = vst [vmem:[%s7095 + $0x9c] sm:$0xf] %v7190
        %7192 = vst.msk [vmem:[%s7095 + $0xa0] sm:$0xf] %vm421, %v7011
        %v7193 = vld [vmem:[%s7095 + $0xa4] sm:$0x1]
        %v7194 = vsel %vm432, %v7012, %v7193
        %7195 = vst [vmem:[%s7095 + $0xa4] sm:$0x1] %v7194
        %v7196 = vld [vmem:[%s7095 + $0xa8] sm:$0xf]
        %v7197 = vsel %vm7097, %v7019, %v7196
        %7198 = vst [vmem:[%s7095 + $0xa8] sm:$0xf] %v7197
        %7199 = vst.msk [vmem:[%s7095 + $0xac] sm:$0xf] %vm421, %v7028
        %v7200 = vld [vmem:[%s7095 + $0xb0] sm:$0x1]
        %v7201 = vsel %vm432, %v7029, %v7200
        %7202 = vst [vmem:[%s7095 + $0xb0] sm:$0x1] %v7201
        %v7203 = vld [vmem:[%s7095 + $0xb4] sm:$0xf]
        %v7204 = vsel %vm7097, %v7036, %v7203
        %7205 = vst [vmem:[%s7095 + $0xb4] sm:$0xf] %v7204
        %7206 = vst.msk [vmem:[%s7095 + $0xb8] sm:$0xf] %vm421, %v7045
        %v7207 = vld [vmem:[%s7095 + $0xbc] sm:$0x1]
        %v7208 = vsel %vm432, %v7046, %v7207
        %7209 = vst [vmem:[%s7095 + $0xbc] sm:$0x1] %v7208
        %v7210 = vld [vmem:[#allocation3] sm:$0xf]
        %v7211 = vld [vmem:[#allocation3 + $0x4] sm:$0xf]
        %v7212 = vld [vmem:[#allocation3 + $0xc] sm:$0xf]
        %v7213 = vld [vmem:[#allocation3 + $0x10] sm:$0xf]
        %v7214 = vld [vmem:[#allocation3 + $0x18] sm:$0xf]
        %v7215 = vld [vmem:[#allocation3 + $0x1c] sm:$0xf]
        %v7216 = vld [vmem:[#allocation3 + $0x24] sm:$0xf]
        %v7217 = vld [vmem:[#allocation3 + $0x28] sm:$0xf]
        %v7218 = vld [vmem:[#allocation3 + $0x30] sm:$0xf]
        %v7219 = vld [vmem:[#allocation3 + $0x34] sm:$0xf]
        %v7220 = vld [vmem:[#allocation3 + $0x3c] sm:$0xf]
        %v7221 = vld [vmem:[#allocation3 + $0x40] sm:$0xf]
        %v7222 = vld [vmem:[#allocation3 + $0x48] sm:$0xf]
        %v7223 = vld [vmem:[#allocation3 + $0x4c] sm:$0xf]
        %v7224 = vld [vmem:[#allocation3 + $0x54] sm:$0xf]
        %v7225 = vld [vmem:[#allocation3 + $0x58] sm:$0xf]
        %v7226 = vld [vmem:[#allocation3 + $0x60] sm:$0xf]
        %v7227 = vld [vmem:[#allocation3 + $0x64] sm:$0xf]
        %v7228 = vld [vmem:[#allocation3 + $0x6c] sm:$0xf]
        %v7229 = vld [vmem:[#allocation3 + $0x70] sm:$0xf]
        %v7230 = vld [vmem:[#allocation3 + $0x78] sm:$0xf]
        %v7231 = vld [vmem:[#allocation3 + $0x7c] sm:$0xf]
        %v7232 = vld [vmem:[#allocation3 + $0x84] sm:$0xf]
        %v7233 = vld [vmem:[#allocation3 + $0x88] sm:$0xf]
        %v7234 = vld [vmem:[#allocation3 + $0x90] sm:$0xf]
        %v7235 = vld [vmem:[#allocation3 + $0x94] sm:$0xf]
        %v7236 = vld [vmem:[#allocation3 + $0x9c] sm:$0xf]
        %v7237 = vld [vmem:[#allocation3 + $0xa0] sm:$0xf]
        %v7238 = vld [vmem:[#allocation3 + $0xa8] sm:$0xf]
        %v7239 = vld [vmem:[#allocation3 + $0xac] sm:$0xf]
        %v7240 = vld [vmem:[#allocation3 + $0xb4] sm:$0xf]
        %v7241 = vld [vmem:[#allocation3 + $0xb8] sm:$0xf]
        %v7242 = vld [vmem:[%s4] sm:$0xf]
        %v7243 = vld [vmem:[%s4 + $0x4] sm:$0xf]
        %v7244 = vld [vmem:[%s4 + $0x8] sm:$0xf]
        %v7245 = vld [vmem:[%s4 + $0xc] sm:$0xf]
        %v7246 = vld [vmem:[#allocation3 + $0x8] sm:$0x1]
        %v7247 = vld [vmem:[#allocation3 + $0x14] sm:$0x1]
        %v7248 = vld [vmem:[#allocation3 + $0x20] sm:$0x1]
        %v7249 = vld [vmem:[#allocation3 + $0x2c] sm:$0x1]
        %v7250 = vld [vmem:[#allocation3 + $0x38] sm:$0x1]
        %v7251 = vld [vmem:[#allocation3 + $0x44] sm:$0x1]
        %v7252 = vld [vmem:[#allocation3 + $0x50] sm:$0x1]
        %v7253 = vld [vmem:[#allocation3 + $0x5c] sm:$0x1]
        %v7254 = vld [vmem:[#allocation3 + $0x68] sm:$0x1]
        %v7255 = vld [vmem:[#allocation3 + $0x74] sm:$0x1]
        %v7256 = vld [vmem:[#allocation3 + $0x80] sm:$0x1]
        %v7257 = vld [vmem:[#allocation3 + $0x8c] sm:$0x1]
        %v7258 = vld [vmem:[#allocation3 + $0x98] sm:$0x1]
        %v7259 = vld [vmem:[#allocation3 + $0xa4] sm:$0x1]
        %v7260 = vld [vmem:[#allocation3 + $0xb0] sm:$0x1]
        %v7261 = vld [vmem:[#allocation3 + $0xbc] sm:$0x1]
        %v7263 = vshrl.u32 %v7210, 16
        %v7265 = vrot.slane %v7263, 4
        %v7266 = vshll.u32 %v7210, 16
        %v7268 = vrot.slane %v7266, 5
        %v7269 = vor.u32 %v7265, %v7268
        %v7270 = vrot.slane %v7269, 4
        %v7272 = vshll.u32 %v7211, 16
        %v7274 = vrot.slane %v7272, 5
        %v7275 = vsel %vm1941, %v7270, %v7274
        %v7276 = vshrl.u32 %v7211, 16
        %v7278 = vrot.slane %v7276, 4
        %v7279 = vor.u32 %v7278, %v7274
        %v7280 = vrot.slane %v7279, 4
        %v7282 = vshll.u32 %v7246, 16
        %v7284 = vrot.slane %v7282, 5
        %v7285 = vsel %vm1941, %v7280, %v7284
        %v7287 = vshrl.u32 %v7212, 16
        %v7289 = vrot.slane %v7287, 4
        %v7290 = vshll.u32 %v7212, 16
        %v7292 = vrot.slane %v7290, 5
        %v7293 = vor.u32 %v7289, %v7292
        %v7294 = vrot.slane %v7293, 4
        %v7296 = vshll.u32 %v7213, 16
        %v7298 = vrot.slane %v7296, 5
        %v7299 = vsel %vm1941, %v7294, %v7298
        %v7300 = vshrl.u32 %v7213, 16
        %v7302 = vrot.slane %v7300, 4
        %v7303 = vor.u32 %v7302, %v7298
        %v7304 = vrot.slane %v7303, 4
        %v7306 = vshll.u32 %v7247, 16
        %v7308 = vrot.slane %v7306, 5
        %v7309 = vsel %vm1941, %v7304, %v7308
        %v7311 = vshrl.u32 %v7214, 16
        %v7313 = vrot.slane %v7311, 4
        %v7314 = vshll.u32 %v7214, 16
        %v7316 = vrot.slane %v7314, 5
        %v7317 = vor.u32 %v7313, %v7316
        %v7318 = vrot.slane %v7317, 4
        %v7320 = vshll.u32 %v7215, 16
        %v7322 = vrot.slane %v7320, 5
        %v7323 = vsel %vm1941, %v7318, %v7322
        %v7324 = vshrl.u32 %v7215, 16
        %v7326 = vrot.slane %v7324, 4
        %v7327 = vor.u32 %v7326, %v7322
        %v7328 = vrot.slane %v7327, 4
        %v7330 = vshll.u32 %v7248, 16
        %v7332 = vrot.slane %v7330, 5
        %v7333 = vsel %vm1941, %v7328, %v7332
        %v7335 = vshrl.u32 %v7216, 16
        %v7337 = vrot.slane %v7335, 4
        %v7338 = vshll.u32 %v7216, 16
        %v7340 = vrot.slane %v7338, 5
        %v7341 = vor.u32 %v7337, %v7340
        %v7342 = vrot.slane %v7341, 4
        %v7344 = vshll.u32 %v7217, 16
        %v7346 = vrot.slane %v7344, 5
        %v7347 = vsel %vm1941, %v7342, %v7346
        %v7348 = vshrl.u32 %v7217, 16
        %v7350 = vrot.slane %v7348, 4
        %v7351 = vor.u32 %v7350, %v7346
        %v7352 = vrot.slane %v7351, 4
        %v7354 = vshll.u32 %v7249, 16
        %v7356 = vrot.slane %v7354, 5
        %v7357 = vsel %vm1941, %v7352, %v7356
        %v7359 = vshrl.u32 %v7218, 16
        %v7361 = vrot.slane %v7359, 4
        %v7362 = vshll.u32 %v7218, 16
        %v7364 = vrot.slane %v7362, 5
        %v7365 = vor.u32 %v7361, %v7364
        %v7366 = vrot.slane %v7365, 4
        %v7368 = vshll.u32 %v7219, 16
        %v7370 = vrot.slane %v7368, 5
        %v7371 = vsel %vm1941, %v7366, %v7370
        %v7372 = vshrl.u32 %v7219, 16
        %v7374 = vrot.slane %v7372, 4
        %v7375 = vor.u32 %v7374, %v7370
        %v7376 = vrot.slane %v7375, 4
        %v7378 = vshll.u32 %v7250, 16
        %v7380 = vrot.slane %v7378, 5
        %v7381 = vsel %vm1941, %v7376, %v7380
        %v7383 = vshrl.u32 %v7220, 16
        %v7385 = vrot.slane %v7383, 4
        %v7386 = vshll.u32 %v7220, 16
        %v7388 = vrot.slane %v7386, 5
        %v7389 = vor.u32 %v7385, %v7388
        %v7390 = vrot.slane %v7389, 4
        %v7392 = vshll.u32 %v7221, 16
        %v7394 = vrot.slane %v7392, 5
        %v7395 = vsel %vm1941, %v7390, %v7394
        %v7396 = vshrl.u32 %v7221, 16
        %v7398 = vrot.slane %v7396, 4
        %v7399 = vor.u32 %v7398, %v7394
        %v7400 = vrot.slane %v7399, 4
        %v7402 = vshll.u32 %v7251, 16
        %v7404 = vrot.slane %v7402, 5
        %v7405 = vsel %vm1941, %v7400, %v7404
        %v7407 = vshrl.u32 %v7222, 16
        %v7409 = vrot.slane %v7407, 4
        %v7410 = vshll.u32 %v7222, 16
        %v7412 = vrot.slane %v7410, 5
        %v7413 = vor.u32 %v7409, %v7412
        %v7414 = vrot.slane %v7413, 4
        %v7416 = vshll.u32 %v7223, 16
        %v7418 = vrot.slane %v7416, 5
        %v7419 = vsel %vm1941, %v7414, %v7418
        %v7420 = vshrl.u32 %v7223, 16
        %v7422 = vrot.slane %v7420, 4
        %v7423 = vor.u32 %v7422, %v7418
        %v7424 = vrot.slane %v7423, 4
        %v7426 = vshll.u32 %v7252, 16
        %v7428 = vrot.slane %v7426, 5
        %v7429 = vsel %vm1941, %v7424, %v7428
        %v7431 = vshrl.u32 %v7224, 16
        %v7433 = vrot.slane %v7431, 4
        %v7434 = vshll.u32 %v7224, 16
        %v7436 = vrot.slane %v7434, 5
        %v7437 = vor.u32 %v7433, %v7436
        %v7438 = vrot.slane %v7437, 4
        %v7440 = vshll.u32 %v7225, 16
        %v7442 = vrot.slane %v7440, 5
        %v7443 = vsel %vm1941, %v7438, %v7442
        %v7444 = vshrl.u32 %v7225, 16
        %v7446 = vrot.slane %v7444, 4
        %v7447 = vor.u32 %v7446, %v7442
        %v7448 = vrot.slane %v7447, 4
        %v7450 = vshll.u32 %v7253, 16
        %v7452 = vrot.slane %v7450, 5
        %v7453 = vsel %vm1941, %v7448, %v7452
        %v7455 = vshrl.u32 %v7226, 16
        %v7457 = vrot.slane %v7455, 4
        %v7458 = vshll.u32 %v7226, 16
        %v7460 = vrot.slane %v7458, 5
        %v7461 = vor.u32 %v7457, %v7460
        %v7462 = vrot.slane %v7461, 4
        %v7464 = vshll.u32 %v7227, 16
        %v7466 = vrot.slane %v7464, 5
        %v7467 = vsel %vm1941, %v7462, %v7466
        %v7468 = vshrl.u32 %v7227, 16
        %v7470 = vrot.slane %v7468, 4
        %v7471 = vor.u32 %v7470, %v7466
        %v7472 = vrot.slane %v7471, 4
        %v7474 = vshll.u32 %v7254, 16
        %v7476 = vrot.slane %v7474, 5
        %v7477 = vsel %vm1941, %v7472, %v7476
        %v7479 = vshrl.u32 %v7228, 16
        %v7481 = vrot.slane %v7479, 4
        %v7482 = vshll.u32 %v7228, 16
        %v7484 = vrot.slane %v7482, 5
        %v7485 = vor.u32 %v7481, %v7484
        %v7486 = vrot.slane %v7485, 4
        %v7488 = vshll.u32 %v7229, 16
        %v7490 = vrot.slane %v7488, 5
        %v7491 = vsel %vm1941, %v7486, %v7490
        %v7492 = vshrl.u32 %v7229, 16
        %v7494 = vrot.slane %v7492, 4
        %v7495 = vor.u32 %v7494, %v7490
        %v7496 = vrot.slane %v7495, 4
        %v7498 = vshll.u32 %v7255, 16
        %v7500 = vrot.slane %v7498, 5
        %v7501 = vsel %vm1941, %v7496, %v7500
        %v7503 = vshrl.u32 %v7230, 16
        %v7505 = vrot.slane %v7503, 4
        %v7506 = vshll.u32 %v7230, 16
        %v7508 = vrot.slane %v7506, 5
        %v7509 = vor.u32 %v7505, %v7508
        %v7510 = vrot.slane %v7509, 4
        %v7512 = vshll.u32 %v7231, 16
        %v7514 = vrot.slane %v7512, 5
        %v7515 = vsel %vm1941, %v7510, %v7514
        %v7516 = vshrl.u32 %v7231, 16
        %v7518 = vrot.slane %v7516, 4
        %v7519 = vor.u32 %v7518, %v7514
        %v7520 = vrot.slane %v7519, 4
        %v7522 = vshll.u32 %v7256, 16
        %v7524 = vrot.slane %v7522, 5
        %v7525 = vsel %vm1941, %v7520, %v7524
        %v7527 = vshrl.u32 %v7232, 16
        %v7529 = vrot.slane %v7527, 4
        %v7530 = vshll.u32 %v7232, 16
        %v7532 = vrot.slane %v7530, 5
        %v7533 = vor.u32 %v7529, %v7532
        %v7534 = vrot.slane %v7533, 4
        %v7536 = vshll.u32 %v7233, 16
        %v7538 = vrot.slane %v7536, 5
        %v7539 = vsel %vm1941, %v7534, %v7538
        %v7540 = vshrl.u32 %v7233, 16
        %v7542 = vrot.slane %v7540, 4
        %v7543 = vor.u32 %v7542, %v7538
        %v7544 = vrot.slane %v7543, 4
        %v7546 = vshll.u32 %v7257, 16
        %v7548 = vrot.slane %v7546, 5
        %v7549 = vsel %vm1941, %v7544, %v7548
        %v7551 = vshrl.u32 %v7234, 16
        %v7553 = vrot.slane %v7551, 4
        %v7554 = vshll.u32 %v7234, 16
        %v7556 = vrot.slane %v7554, 5
        %v7557 = vor.u32 %v7553, %v7556
        %v7558 = vrot.slane %v7557, 4
        %v7560 = vshll.u32 %v7235, 16
        %v7562 = vrot.slane %v7560, 5
        %v7563 = vsel %vm1941, %v7558, %v7562
        %v7564 = vshrl.u32 %v7235, 16
        %v7566 = vrot.slane %v7564, 4
        %v7567 = vor.u32 %v7566, %v7562
        %v7568 = vrot.slane %v7567, 4
        %v7570 = vshll.u32 %v7258, 16
        %v7572 = vrot.slane %v7570, 5
        %v7573 = vsel %vm1941, %v7568, %v7572
        %v7575 = vshrl.u32 %v7236, 16
        %v7577 = vrot.slane %v7575, 4
        %v7578 = vshll.u32 %v7236, 16
        %v7580 = vrot.slane %v7578, 5
        %v7581 = vor.u32 %v7577, %v7580
        %v7582 = vrot.slane %v7581, 4
        %v7584 = vshll.u32 %v7237, 16
        %v7586 = vrot.slane %v7584, 5
        %v7587 = vsel %vm1941, %v7582, %v7586
        %v7588 = vshrl.u32 %v7237, 16
        %v7590 = vrot.slane %v7588, 4
        %v7591 = vor.u32 %v7590, %v7586
        %v7592 = vrot.slane %v7591, 4
        %v7594 = vshll.u32 %v7259, 16
        %v7596 = vrot.slane %v7594, 5
        %v7597 = vsel %vm1941, %v7592, %v7596
        %v7599 = vshrl.u32 %v7238, 16
        %v7601 = vrot.slane %v7599, 4
        %v7602 = vshll.u32 %v7238, 16
        %v7604 = vrot.slane %v7602, 5
        %v7605 = vor.u32 %v7601, %v7604
        %v7606 = vrot.slane %v7605, 4
        %v7608 = vshll.u32 %v7239, 16
        %v7610 = vrot.slane %v7608, 5
        %v7611 = vsel %vm1941, %v7606, %v7610
        %v7612 = vshrl.u32 %v7239, 16
        %v7614 = vrot.slane %v7612, 4
        %v7615 = vor.u32 %v7614, %v7610
        %v7616 = vrot.slane %v7615, 4
        %v7618 = vshll.u32 %v7260, 16
        %v7620 = vrot.slane %v7618, 5
        %v7621 = vsel %vm1941, %v7616, %v7620
        %v7623 = vshrl.u32 %v7240, 16
        %v7625 = vrot.slane %v7623, 4
        %v7626 = vshll.u32 %v7240, 16
        %v7628 = vrot.slane %v7626, 5
        %v7629 = vor.u32 %v7625, %v7628
        %v7630 = vrot.slane %v7629, 4
        %v7632 = vshll.u32 %v7241, 16
        %v7634 = vrot.slane %v7632, 5
        %v7635 = vsel %vm1941, %v7630, %v7634
        %v7636 = vshrl.u32 %v7241, 16
        %v7638 = vrot.slane %v7636, 4
        %v7639 = vor.u32 %v7638, %v7634
        %v7640 = vrot.slane %v7639, 4
        %v7642 = vshll.u32 %v7261, 16
        %v7644 = vrot.slane %v7642, 5
        %v7645 = vsel %vm1941, %v7640, %v7644
        %v7646 = vld [vmem:[%s4 + $0x10] sm:$0xf]
        %v7647 = vld [vmem:[%s4 + $0x14] sm:$0xf]
        %v7648 = vld [vmem:[%s4 + $0x18] sm:$0xf]
        %v7649 = vld [vmem:[%s4 + $0x1c] sm:$0xf]
        %v7650 = vunpack.c.l.b16 %v7275
        %v7651 = vunpack.c.l.b16 %v7285
        %v7652 = vunpack.c.l.b16 %v7299
        %v7653 = vunpack.c.l.b16 %v7309
        %v7654 = vunpack.c.l.b16 %v7323
        %v7655 = vunpack.c.l.b16 %v7333
        %v7656 = vunpack.c.l.b16 %v7347
        %v7657 = vunpack.c.l.b16 %v7357
        %v7658 = vunpack.c.l.b16 %v7371
        %v7659 = vunpack.c.l.b16 %v7381
        %v7660 = vunpack.c.l.b16 %v7395
        %v7661 = vunpack.c.l.b16 %v7405
        %v7662 = vunpack.c.l.b16 %v7419
        %v7663 = vunpack.c.l.b16 %v7429
        %v7664 = vunpack.c.l.b16 %v7443
        %v7665 = vunpack.c.l.b16 %v7453
        %v7666 = vunpack.c.l.b16 %v7467
        %v7667 = vunpack.c.l.b16 %v7477
        %v7668 = vunpack.c.l.b16 %v7491
        %v7669 = vunpack.c.l.b16 %v7501
        %v7670 = vunpack.c.l.b16 %v7515
        %v7671 = vunpack.c.l.b16 %v7525
        %v7672 = vunpack.c.l.b16 %v7539
        %v7673 = vunpack.c.l.b16 %v7549
        %v7674 = vunpack.c.l.b16 %v7563
        %v7675 = vunpack.c.l.b16 %v7573
        %v7676 = vunpack.c.l.b16 %v7587
        %v7677 = vunpack.c.l.b16 %v7597
        %v7678 = vunpack.c.l.b16 %v7611
        %v7679 = vunpack.c.l.b16 %v7621
        %v7680 = vunpack.c.l.b16 %v7635
        %v7681 = vunpack.c.l.b16 %v7645
        %v7682 = vpack.c.b16 %v7651, %v7650
        %v7683 = vpack.c.b16 %v7653, %v7652
        %v7684 = vpack.c.b16 %v7655, %v7654
        %v7685 = vpack.c.b16 %v7657, %v7656
        %v7686 = vpack.c.b16 %v7659, %v7658
        %v7687 = vpack.c.b16 %v7661, %v7660
        %v7688 = vpack.c.b16 %v7663, %v7662
        %v7689 = vpack.c.b16 %v7665, %v7664
        %v7690 = vpack.c.b16 %v7667, %v7666
        %v7691 = vpack.c.b16 %v7669, %v7668
        %v7692 = vpack.c.b16 %v7671, %v7670
        %v7693 = vpack.c.b16 %v7673, %v7672
        %v7694 = vpack.c.b16 %v7675, %v7674
        %v7695 = vpack.c.b16 %v7677, %v7676
        %v7696 = vpack.c.b16 %v7679, %v7678
        %v7697 = vpack.c.b16 %v7681, %v7680
        %v7702 = vunpack.c.l.b16 %v7646
        %v7703 = vunpack.c.l.b16 %v7647
        %v7704 = vunpack.c.l.b16 %v7648
        %v7705 = vunpack.c.l.b16 %v7649
        %v7706 = vpack.c.b16 %v7703, %v7702
        %v7707 = vpack.c.b16 %v7705, %v7704
        %v7711 = vsel %vm2390, %v7682, 0
        %v7714 = vsel %vm2390, %v7683, 0
        %v7717 = vsel %vm2390, %v7684, 0
        %v7720 = vsel %vm2390, %v7685, 0
        %v7723 = vsel %vm2390, %v7686, 0
        %v7726 = vsel %vm2390, %v7687, 0
        %v7729 = vsel %vm2390, %v7688, 0
        %v7732 = vsel %vm2390, %v7689, 0
        %v7735 = vsel %vm2390, %v7690, 0
        %v7738 = vsel %vm2390, %v7691, 0
        %v7741 = vsel %vm2390, %v7692, 0
        %v7744 = vsel %vm2390, %v7693, 0
        %v7747 = vsel %vm2390, %v7694, 0
        %v7750 = vsel %vm2390, %v7695, 0
        %v7753 = vsel %vm2390, %v7696, 0
        %v7756 = vsel %vm2390, %v7697, 0
        %7758 = vmatprep.subr.bf16.mxu0 0
        %7759 = vmatpush1.bf16.msra.mxu0 0
        %7760 = vmatprep.subr.bf16.mxu0 0
        %7761 = vmatpush1.bf16.msra.mxu0 0
        %7762 = vmatprep.subr.bf16.mxu0 0
        %7763 = vmatpush1.bf16.msra.mxu0 0
        %7764 = vmatprep.subr.bf16.mxu0 0
        %7765 = vmatpush1.bf16.msra.mxu0 0
        %7766 = vmatprep.subr.bf16.mxu0 0
        %7767 = vmatpush1.bf16.msra.mxu0 0
        %7768 = vmatprep.subr.bf16.mxu0 0
        %7769 = vmatpush1.bf16.msra.mxu0 0
        %7770 = vmatprep.subr.bf16.mxu0 0
        %7771 = vmatpush1.bf16.msra.mxu0 %v7707
        %7772 = vmatprep.subr.bf16.mxu0 0
        %7773 = vmatpush1.bf16.msra.mxu0 %v7706
        %7774 = vmatprep.subr.bf16.mxu0 0
        %7775 = vmatpush2.bf16.msra.mxu0 0
        %7776 = vmatprep.subr.bf16.mxu0 0
        %7777 = vmatpush2.bf16.msra.mxu0 0
        %7778 = vmatprep.subr.bf16.mxu0 0
        %7779 = vmatpush2.bf16.msra.mxu0 0
        %7780 = vmatprep.subr.bf16.mxu0 0
        %7781 = vmatpush2.bf16.msra.mxu0 0
        %7782 = vmatprep.subr.bf16.mxu0 0
        %7783 = vmatpush2.bf16.msra.mxu0 0
        %7784 = vmatprep.subr.bf16.mxu0 0
        %7785 = vmatpush2.bf16.msra.mxu0 0
        %7786 = vmatprep.subr.bf16.mxu0 0
        %7787 = vmatpush2.bf16.msra.mxu0 0
        %7788 = vmatprep.subr.bf16.mxu0 0
        %7789 = vmatpush2.bf16.msra.mxu0 0
        %7790 = vmatprep.mubr.bf16.mxu0 0
        %7791 = vmatmul.mubr.bf16.gmra.mxu0 %v7711
        %v7792 = vpop.f32.mrf.mxu0
        %v7793 = vadd.f32 0.0, %v7792
        %v7794 = vpop.f32.mrf.mxu0
        %v7795 = vpop.f32.mrf.mxu0
        %v7796 = vadd.f32 0.0, %v7795
        %v7797 = vpop.f32.mrf.mxu0
        %7798 = vmatprep.mubr.bf16.mxu0 0
        %7799 = vmatmul.mubr.bf16.gmra.mxu0 %v7714
        %v7800 = vpop.f32.mrf.mxu0
        %v7801 = vadd.f32 0.0, %v7800
        %v7802 = vpop.f32.mrf.mxu0
        %v7803 = vpop.f32.mrf.mxu0
        %v7804 = vadd.f32 0.0, %v7803
        %v7805 = vpop.f32.mrf.mxu0
        %7806 = vmatprep.mubr.bf16.mxu0 0
        %7807 = vmatmul.mubr.bf16.gmra.mxu0 %v7717
        %v7808 = vpop.f32.mrf.mxu0
        %v7809 = vadd.f32 0.0, %v7808
        %v7810 = vpop.f32.mrf.mxu0
        %v7811 = vpop.f32.mrf.mxu0
        %v7812 = vadd.f32 0.0, %v7811
        %v7813 = vpop.f32.mrf.mxu0
        %7814 = vmatprep.mubr.bf16.mxu0 0
        %7815 = vmatmul.mubr.bf16.gmra.mxu0 %v7720
        %v7816 = vpop.f32.mrf.mxu0
        %v7817 = vadd.f32 0.0, %v7816
        %v7818 = vpop.f32.mrf.mxu0
        %v7819 = vpop.f32.mrf.mxu0
        %v7820 = vadd.f32 0.0, %v7819
        %v7821 = vpop.f32.mrf.mxu0
        %7822 = vmatprep.mubr.bf16.mxu0 0
        %7823 = vmatmul.mubr.bf16.gmra.mxu0 %v7723
        %v7824 = vpop.f32.mrf.mxu0
        %v7825 = vadd.f32 0.0, %v7824
        %v7826 = vpop.f32.mrf.mxu0
        %v7827 = vpop.f32.mrf.mxu0
        %v7828 = vadd.f32 0.0, %v7827
        %v7829 = vpop.f32.mrf.mxu0
        %7830 = vmatprep.mubr.bf16.mxu0 0
        %7831 = vmatmul.mubr.bf16.gmra.mxu0 %v7726
        %v7832 = vpop.f32.mrf.mxu0
        %v7833 = vadd.f32 0.0, %v7832
        %v7834 = vpop.f32.mrf.mxu0
        %v7835 = vpop.f32.mrf.mxu0
        %v7836 = vadd.f32 0.0, %v7835
        %v7837 = vpop.f32.mrf.mxu0
        %7838 = vmatprep.mubr.bf16.mxu0 0
        %7839 = vmatmul.mubr.bf16.gmra.mxu0 %v7729
        %v7840 = vpop.f32.mrf.mxu0
        %v7841 = vadd.f32 0.0, %v7840
        %v7842 = vpop.f32.mrf.mxu0
        %v7843 = vpop.f32.mrf.mxu0
        %v7844 = vadd.f32 0.0, %v7843
        %v7845 = vpop.f32.mrf.mxu0
        %7846 = vmatprep.mubr.bf16.mxu0 0
        %7847 = vmatmul.mubr.bf16.gmra.mxu0 %v7732
        %v7848 = vpop.f32.mrf.mxu0
        %v7849 = vadd.f32 0.0, %v7848
        %v7850 = vpop.f32.mrf.mxu0
        %v7851 = vpop.f32.mrf.mxu0
        %v7852 = vadd.f32 0.0, %v7851
        %v7853 = vpop.f32.mrf.mxu0
        %7854 = vmatprep.mubr.bf16.mxu0 0
        %7855 = vmatmul.mubr.bf16.gmra.mxu0 %v7735
        %v7856 = vpop.f32.mrf.mxu0
        %v7857 = vadd.f32 0.0, %v7856
        %v7858 = vpop.f32.mrf.mxu0
        %v7859 = vpop.f32.mrf.mxu0
        %v7860 = vadd.f32 0.0, %v7859
        %v7861 = vpop.f32.mrf.mxu0
        %7862 = vmatprep.mubr.bf16.mxu0 0
        %7863 = vmatmul.mubr.bf16.gmra.mxu0 %v7738
        %v7864 = vpop.f32.mrf.mxu0
        %v7865 = vadd.f32 0.0, %v7864
        %v7866 = vpop.f32.mrf.mxu0
        %v7867 = vpop.f32.mrf.mxu0
        %v7868 = vadd.f32 0.0, %v7867
        %v7869 = vpop.f32.mrf.mxu0
        %7870 = vmatprep.mubr.bf16.mxu0 0
        %7871 = vmatmul.mubr.bf16.gmra.mxu0 %v7741
        %v7872 = vpop.f32.mrf.mxu0
        %v7873 = vadd.f32 0.0, %v7872
        %v7874 = vpop.f32.mrf.mxu0
        %v7875 = vpop.f32.mrf.mxu0
        %v7876 = vadd.f32 0.0, %v7875
        %v7877 = vpop.f32.mrf.mxu0
        %7878 = vmatprep.mubr.bf16.mxu0 0
        %7879 = vmatmul.mubr.bf16.gmra.mxu0 %v7744
        %v7880 = vpop.f32.mrf.mxu0
        %v7881 = vadd.f32 0.0, %v7880
        %v7882 = vpop.f32.mrf.mxu0
        %v7883 = vpop.f32.mrf.mxu0
        %v7884 = vadd.f32 0.0, %v7883
        %v7885 = vpop.f32.mrf.mxu0
        %7886 = vmatprep.mubr.bf16.mxu0 0
        %7887 = vmatmul.mubr.bf16.gmra.mxu0 %v7747
        %v7888 = vpop.f32.mrf.mxu0
        %v7889 = vadd.f32 0.0, %v7888
        %v7890 = vpop.f32.mrf.mxu0
        %v7891 = vpop.f32.mrf.mxu0
        %v7892 = vadd.f32 0.0, %v7891
        %v7893 = vpop.f32.mrf.mxu0
        %7894 = vmatprep.mubr.bf16.mxu0 0
        %7895 = vmatmul.mubr.bf16.gmra.mxu0 %v7750
        %v7896 = vpop.f32.mrf.mxu0
        %v7897 = vadd.f32 0.0, %v7896
        %v7898 = vpop.f32.mrf.mxu0
        %v7899 = vpop.f32.mrf.mxu0
        %v7900 = vadd.f32 0.0, %v7899
        %v7901 = vpop.f32.mrf.mxu0
        %7902 = vmatprep.mubr.bf16.mxu0 0
        %7903 = vmatmul.mubr.bf16.gmra.mxu0 %v7753
        %v7904 = vpop.f32.mrf.mxu0
        %v7905 = vadd.f32 0.0, %v7904
        %v7906 = vpop.f32.mrf.mxu0
        %v7907 = vpop.f32.mrf.mxu0
        %v7908 = vadd.f32 0.0, %v7907
        %v7909 = vpop.f32.mrf.mxu0
        %7910 = vmatprep.mubr.bf16.mxu0 0
        %7911 = vmatmul.mubr.bf16.gmra.mxu0 %v7756
        %v7912 = vpop.f32.mrf.mxu0
        %v7913 = vadd.f32 0.0, %v7912
        %v7914 = vpop.f32.mrf.mxu0
        %v7915 = vpop.f32.mrf.mxu0
        %v7916 = vadd.f32 0.0, %v7915
        %v7917 = vpop.f32.mrf.mxu0
        %7918 = vdwg.mxu0
        %v7951 = vunpack.c.l.b16 %v7210
        %v7952 = vunpack.c.l.b16 %v7211
        %v7953 = vunpack.c.l.b16 %v7212
        %v7954 = vunpack.c.l.b16 %v7213
        %v7955 = vunpack.c.l.b16 %v7214
        %v7956 = vunpack.c.l.b16 %v7215
        %v7957 = vunpack.c.l.b16 %v7216
        %v7958 = vunpack.c.l.b16 %v7217
        %v7959 = vunpack.c.l.b16 %v7218
        %v7960 = vunpack.c.l.b16 %v7219
        %v7961 = vunpack.c.l.b16 %v7220
        %v7962 = vunpack.c.l.b16 %v7221
        %v7963 = vunpack.c.l.b16 %v7222
        %v7964 = vunpack.c.l.b16 %v7223
        %v7965 = vunpack.c.l.b16 %v7224
        %v7966 = vunpack.c.l.b16 %v7225
        %v7967 = vunpack.c.l.b16 %v7226
        %v7968 = vunpack.c.l.b16 %v7227
        %v7969 = vunpack.c.l.b16 %v7228
        %v7970 = vunpack.c.l.b16 %v7229
        %v7971 = vunpack.c.l.b16 %v7230
        %v7972 = vunpack.c.l.b16 %v7231
        %v7973 = vunpack.c.l.b16 %v7232
        %v7974 = vunpack.c.l.b16 %v7233
        %v7975 = vunpack.c.l.b16 %v7234
        %v7976 = vunpack.c.l.b16 %v7235
        %v7977 = vunpack.c.l.b16 %v7236
        %v7978 = vunpack.c.l.b16 %v7237
        %v7979 = vunpack.c.l.b16 %v7238
        %v7980 = vunpack.c.l.b16 %v7239
        %v7981 = vunpack.c.l.b16 %v7240
        %v7982 = vunpack.c.l.b16 %v7241
        %v7983 = vpack.c.b16 %v7952, %v7951
        %v7984 = vpack.c.b16 %v7954, %v7953
        %v7985 = vpack.c.b16 %v7956, %v7955
        %v7986 = vpack.c.b16 %v7958, %v7957
        %v7987 = vpack.c.b16 %v7960, %v7959
        %v7988 = vpack.c.b16 %v7962, %v7961
        %v7989 = vpack.c.b16 %v7964, %v7963
        %v7990 = vpack.c.b16 %v7966, %v7965
        %v7991 = vpack.c.b16 %v7968, %v7967
        %v7992 = vpack.c.b16 %v7970, %v7969
        %v7993 = vpack.c.b16 %v7972, %v7971
        %v7994 = vpack.c.b16 %v7974, %v7973
        %v7995 = vpack.c.b16 %v7976, %v7975
        %v7996 = vpack.c.b16 %v7978, %v7977
        %v7997 = vpack.c.b16 %v7980, %v7979
        %v7998 = vpack.c.b16 %v7982, %v7981
        %v8003 = vunpack.c.l.b16 %v7242
        %v8004 = vunpack.c.l.b16 %v7243
        %v8005 = vunpack.c.l.b16 %v7244
        %v8006 = vunpack.c.l.b16 %v7245
        %v8007 = vpack.c.b16 %v8004, %v8003
        %v8008 = vpack.c.b16 %v8006, %v8005
        %v8012 = vsel %vm2390, %v7983, 0
        %v8015 = vsel %vm2390, %v7984, 0
        %v8018 = vsel %vm2390, %v7985, 0
        %v8021 = vsel %vm2390, %v7986, 0
        %v8024 = vsel %vm2390, %v7987, 0
        %v8027 = vsel %vm2390, %v7988, 0
        %v8030 = vsel %vm2390, %v7989, 0
        %v8033 = vsel %vm2390, %v7990, 0
        %v8036 = vsel %vm2390, %v7991, 0
        %v8039 = vsel %vm2390, %v7992, 0
        %v8042 = vsel %vm2390, %v7993, 0
        %v8045 = vsel %vm2390, %v7994, 0
        %v8048 = vsel %vm2390, %v7995, 0
        %v8051 = vsel %vm2390, %v7996, 0
        %v8054 = vsel %vm2390, %v7997, 0
        %v8057 = vsel %vm2390, %v7998, 0
        %8059 = vmatprep.subr.bf16.mxu0 0
        %8060 = vmatpush1.bf16.msra.mxu0 0
        %8061 = vmatprep.subr.bf16.mxu0 0
        %8062 = vmatpush1.bf16.msra.mxu0 0
        %8063 = vmatprep.subr.bf16.mxu0 0
        %8064 = vmatpush1.bf16.msra.mxu0 0
        %8065 = vmatprep.subr.bf16.mxu0 0
        %8066 = vmatpush1.bf16.msra.mxu0 0
        %8067 = vmatprep.subr.bf16.mxu0 0
        %8068 = vmatpush1.bf16.msra.mxu0 0
        %8069 = vmatprep.subr.bf16.mxu0 0
        %8070 = vmatpush1.bf16.msra.mxu0 0
        %8071 = vmatprep.subr.bf16.mxu0 0
        %8072 = vmatpush1.bf16.msra.mxu0 %v8008
        %8073 = vmatprep.subr.bf16.mxu0 0
        %8074 = vmatpush1.bf16.msra.mxu0 %v8007
        %8075 = vmatprep.subr.bf16.mxu0 0
        %8076 = vmatpush2.bf16.msra.mxu0 0
        %8077 = vmatprep.subr.bf16.mxu0 0
        %8078 = vmatpush2.bf16.msra.mxu0 0
        %8079 = vmatprep.subr.bf16.mxu0 0
        %8080 = vmatpush2.bf16.msra.mxu0 0
        %8081 = vmatprep.subr.bf16.mxu0 0
        %8082 = vmatpush2.bf16.msra.mxu0 0
        %8083 = vmatprep.subr.bf16.mxu0 0
        %8084 = vmatpush2.bf16.msra.mxu0 0
        %8085 = vmatprep.subr.bf16.mxu0 0
        %8086 = vmatpush2.bf16.msra.mxu0 0
        %8087 = vmatprep.subr.bf16.mxu0 0
        %8088 = vmatpush2.bf16.msra.mxu0 0
        %8089 = vmatprep.subr.bf16.mxu0 0
        %8090 = vmatpush2.bf16.msra.mxu0 0
        %8091 = vmatprep.mubr.bf16.mxu0 0
        %8092 = vmatmul.mubr.bf16.gmra.mxu0 %v8012
        %v8093 = vpop.f32.mrf.mxu0
        %v8094 = vadd.f32 %v7793, %v8093
        %v8095 = vpop.f32.mrf.mxu0
        %v8096 = vpop.f32.mrf.mxu0
        %v8097 = vadd.f32 %v7796, %v8096
        %v8098 = vpop.f32.mrf.mxu0
        %8099 = vmatprep.mubr.bf16.mxu0 0
        %8100 = vmatmul.mubr.bf16.gmra.mxu0 %v8015
        %v8101 = vpop.f32.mrf.mxu0
        %v8102 = vadd.f32 %v7801, %v8101
        %v8103 = vpop.f32.mrf.mxu0
        %v8104 = vpop.f32.mrf.mxu0
        %v8105 = vadd.f32 %v7804, %v8104
        %v8106 = vpop.f32.mrf.mxu0
        %8107 = vmatprep.mubr.bf16.mxu0 0
        %8108 = vmatmul.mubr.bf16.gmra.mxu0 %v8018
        %v8109 = vpop.f32.mrf.mxu0
        %v8110 = vadd.f32 %v7809, %v8109
        %v8111 = vpop.f32.mrf.mxu0
        %v8112 = vpop.f32.mrf.mxu0
        %v8113 = vadd.f32 %v7812, %v8112
        %v8114 = vpop.f32.mrf.mxu0
        %8115 = vmatprep.mubr.bf16.mxu0 0
        %8116 = vmatmul.mubr.bf16.gmra.mxu0 %v8021
        %v8117 = vpop.f32.mrf.mxu0
        %v8118 = vadd.f32 %v7817, %v8117
        %v8119 = vpop.f32.mrf.mxu0
        %v8120 = vpop.f32.mrf.mxu0
        %v8121 = vadd.f32 %v7820, %v8120
        %v8122 = vpop.f32.mrf.mxu0
        %8123 = vmatprep.mubr.bf16.mxu0 0
        %8124 = vmatmul.mubr.bf16.gmra.mxu0 %v8024
        %v8125 = vpop.f32.mrf.mxu0
        %v8126 = vadd.f32 %v7825, %v8125
        %v8127 = vpop.f32.mrf.mxu0
        %v8128 = vpop.f32.mrf.mxu0
        %v8129 = vadd.f32 %v7828, %v8128
        %v8130 = vpop.f32.mrf.mxu0
        %8131 = vmatprep.mubr.bf16.mxu0 0
        %8132 = vmatmul.mubr.bf16.gmra.mxu0 %v8027
        %v8133 = vpop.f32.mrf.mxu0
        %v8134 = vadd.f32 %v7833, %v8133
        %v8135 = vpop.f32.mrf.mxu0
        %v8136 = vpop.f32.mrf.mxu0
        %v8137 = vadd.f32 %v7836, %v8136
        %v8138 = vpop.f32.mrf.mxu0
        %8139 = vmatprep.mubr.bf16.mxu0 0
        %8140 = vmatmul.mubr.bf16.gmra.mxu0 %v8030
        %v8141 = vpop.f32.mrf.mxu0
        %v8142 = vadd.f32 %v7841, %v8141
        %v8143 = vpop.f32.mrf.mxu0
        %v8144 = vpop.f32.mrf.mxu0
        %v8145 = vadd.f32 %v7844, %v8144
        %v8146 = vpop.f32.mrf.mxu0
        %8147 = vmatprep.mubr.bf16.mxu0 0
        %8148 = vmatmul.mubr.bf16.gmra.mxu0 %v8033
        %v8149 = vpop.f32.mrf.mxu0
        %v8150 = vadd.f32 %v7849, %v8149
        %v8151 = vpop.f32.mrf.mxu0
        %v8152 = vpop.f32.mrf.mxu0
        %v8153 = vadd.f32 %v7852, %v8152
        %v8154 = vpop.f32.mrf.mxu0
        %8155 = vmatprep.mubr.bf16.mxu0 0
        %8156 = vmatmul.mubr.bf16.gmra.mxu0 %v8036
        %v8157 = vpop.f32.mrf.mxu0
        %v8158 = vadd.f32 %v7857, %v8157
        %v8159 = vpop.f32.mrf.mxu0
        %v8160 = vpop.f32.mrf.mxu0
        %v8161 = vadd.f32 %v7860, %v8160
        %v8162 = vpop.f32.mrf.mxu0
        %8163 = vmatprep.mubr.bf16.mxu0 0
        %8164 = vmatmul.mubr.bf16.gmra.mxu0 %v8039
        %v8165 = vpop.f32.mrf.mxu0
        %v8166 = vadd.f32 %v7865, %v8165
        %v8167 = vpop.f32.mrf.mxu0
        %v8168 = vpop.f32.mrf.mxu0
        %v8169 = vadd.f32 %v7868, %v8168
        %v8170 = vpop.f32.mrf.mxu0
        %8171 = vmatprep.mubr.bf16.mxu0 0
        %8172 = vmatmul.mubr.bf16.gmra.mxu0 %v8042
        %v8173 = vpop.f32.mrf.mxu0
        %v8174 = vadd.f32 %v7873, %v8173
        %v8175 = vpop.f32.mrf.mxu0
        %v8176 = vpop.f32.mrf.mxu0
        %v8177 = vadd.f32 %v7876, %v8176
        %v8178 = vpop.f32.mrf.mxu0
        %8179 = vmatprep.mubr.bf16.mxu0 0
        %8180 = vmatmul.mubr.bf16.gmra.mxu0 %v8045
        %v8181 = vpop.f32.mrf.mxu0
        %v8182 = vadd.f32 %v7881, %v8181
        %v8183 = vpop.f32.mrf.mxu0
        %v8184 = vpop.f32.mrf.mxu0
        %v8185 = vadd.f32 %v7884, %v8184
        %v8186 = vpop.f32.mrf.mxu0
        %8187 = vmatprep.mubr.bf16.mxu0 0
        %8188 = vmatmul.mubr.bf16.gmra.mxu0 %v8048
        %v8189 = vpop.f32.mrf.mxu0
        %v8190 = vadd.f32 %v7889, %v8189
        %v8191 = vpop.f32.mrf.mxu0
        %v8192 = vpop.f32.mrf.mxu0
        %v8193 = vadd.f32 %v7892, %v8192
        %v8194 = vpop.f32.mrf.mxu0
        %8195 = vmatprep.mubr.bf16.mxu0 0
        %8196 = vmatmul.mubr.bf16.gmra.mxu0 %v8051
        %v8197 = vpop.f32.mrf.mxu0
        %v8198 = vadd.f32 %v7897, %v8197
        %v8199 = vpop.f32.mrf.mxu0
        %v8200 = vpop.f32.mrf.mxu0
        %v8201 = vadd.f32 %v7900, %v8200
        %v8202 = vpop.f32.mrf.mxu0
        %8203 = vmatprep.mubr.bf16.mxu0 0
        %8204 = vmatmul.mubr.bf16.gmra.mxu0 %v8054
        %v8205 = vpop.f32.mrf.mxu0
        %v8206 = vadd.f32 %v7905, %v8205
        %v8207 = vpop.f32.mrf.mxu0
        %v8208 = vpop.f32.mrf.mxu0
        %v8209 = vadd.f32 %v7908, %v8208
        %v8210 = vpop.f32.mrf.mxu0
        %8211 = vmatprep.mubr.bf16.mxu0 0
        %8212 = vmatmul.mubr.bf16.gmra.mxu0 %v8057
        %v8213 = vpop.f32.mrf.mxu0
        %v8214 = vadd.f32 %v7913, %v8213
        %v8215 = vpop.f32.mrf.mxu0
        %v8216 = vpop.f32.mrf.mxu0
        %v8217 = vadd.f32 %v7916, %v8216
        %v8218 = vpop.f32.mrf.mxu0
        %8219 = vdwg.mxu0
        %v8220 = vld [vmem:[#allocation3] sm:$0xe]
        %v8221 = vld [vmem:[#allocation3 + $0xc] sm:$0xe]
        %v8222 = vld [vmem:[#allocation3 + $0x18] sm:$0xe]
        %v8223 = vld [vmem:[#allocation3 + $0x24] sm:$0xe]
        %v8224 = vld [vmem:[#allocation3 + $0x30] sm:$0xe]
        %v8225 = vld [vmem:[#allocation3 + $0x3c] sm:$0xe]
        %v8226 = vld [vmem:[#allocation3 + $0x48] sm:$0xe]
        %v8227 = vld [vmem:[#allocation3 + $0x54] sm:$0xe]
        %v8228 = vld [vmem:[#allocation3 + $0x60] sm:$0xe]
        %v8229 = vld [vmem:[#allocation3 + $0x6c] sm:$0xe]
        %v8230 = vld [vmem:[#allocation3 + $0x78] sm:$0xe]
        %v8231 = vld [vmem:[#allocation3 + $0x84] sm:$0xe]
        %v8232 = vld [vmem:[#allocation3 + $0x90] sm:$0xe]
        %v8233 = vld [vmem:[#allocation3 + $0x9c] sm:$0xe]
        %v8234 = vld [vmem:[#allocation3 + $0xa8] sm:$0xe]
        %v8235 = vld [vmem:[#allocation3 + $0xb4] sm:$0xe]
        %v8268 = vrot.slane %v8220, 5
        %v8269 = vrot.slane %v8268, 4
        %v8270 = vrot.slane %v7211, 5
        %v8271 = vsel %vm2951, %v8269, %v8270
        %v8272 = vrot.slane %v8270, 4
        %v8273 = vrot.slane %v7246, 5
        %v8274 = vsel %vm2951, %v8272, %v8273
        %v8275 = vrot.slane %v8221, 5
        %v8276 = vrot.slane %v8275, 4
        %v8277 = vrot.slane %v7213, 5
        %v8278 = vsel %vm2951, %v8276, %v8277
        %v8279 = vrot.slane %v8277, 4
        %v8280 = vrot.slane %v7247, 5
        %v8281 = vsel %vm2951, %v8279, %v8280
        %v8282 = vrot.slane %v8222, 5
        %v8283 = vrot.slane %v8282, 4
        %v8284 = vrot.slane %v7215, 5
        %v8285 = vsel %vm2951, %v8283, %v8284
        %v8286 = vrot.slane %v8284, 4
        %v8287 = vrot.slane %v7248, 5
        %v8288 = vsel %vm2951, %v8286, %v8287
        %v8289 = vrot.slane %v8223, 5
        %v8290 = vrot.slane %v8289, 4
        %v8291 = vrot.slane %v7217, 5
        %v8292 = vsel %vm2951, %v8290, %v8291
        %v8293 = vrot.slane %v8291, 4
        %v8294 = vrot.slane %v7249, 5
        %v8295 = vsel %vm2951, %v8293, %v8294
        %v8296 = vrot.slane %v8224, 5
        %v8297 = vrot.slane %v8296, 4
        %v8298 = vrot.slane %v7219, 5
        %v8299 = vsel %vm2951, %v8297, %v8298
        %v8300 = vrot.slane %v8298, 4
        %v8301 = vrot.slane %v7250, 5
        %v8302 = vsel %vm2951, %v8300, %v8301
        %v8303 = vrot.slane %v8225, 5
        %v8304 = vrot.slane %v8303, 4
        %v8305 = vrot.slane %v7221, 5
        %v8306 = vsel %vm2951, %v8304, %v8305
        %v8307 = vrot.slane %v8305, 4
        %v8308 = vrot.slane %v7251, 5
        %v8309 = vsel %vm2951, %v8307, %v8308
        %v8310 = vrot.slane %v8226, 5
        %v8311 = vrot.slane %v8310, 4
        %v8312 = vrot.slane %v7223, 5
        %v8313 = vsel %vm2951, %v8311, %v8312
        %v8314 = vrot.slane %v8312, 4
        %v8315 = vrot.slane %v7252, 5
        %v8316 = vsel %vm2951, %v8314, %v8315
        %v8317 = vrot.slane %v8227, 5
        %v8318 = vrot.slane %v8317, 4
        %v8319 = vrot.slane %v7225, 5
        %v8320 = vsel %vm2951, %v8318, %v8319
        %v8321 = vrot.slane %v8319, 4
        %v8322 = vrot.slane %v7253, 5
        %v8323 = vsel %vm2951, %v8321, %v8322
        %v8324 = vrot.slane %v8228, 5
        %v8325 = vrot.slane %v8324, 4
        %v8326 = vrot.slane %v7227, 5
        %v8327 = vsel %vm2951, %v8325, %v8326
        %v8328 = vrot.slane %v8326, 4
        %v8329 = vrot.slane %v7254, 5
        %v8330 = vsel %vm2951, %v8328, %v8329
        %v8331 = vrot.slane %v8229, 5
        %v8332 = vrot.slane %v8331, 4
        %v8333 = vrot.slane %v7229, 5
        %v8334 = vsel %vm2951, %v8332, %v8333
        %v8335 = vrot.slane %v8333, 4
        %v8336 = vrot.slane %v7255, 5
        %v8337 = vsel %vm2951, %v8335, %v8336
        %v8338 = vrot.slane %v8230, 5
        %v8339 = vrot.slane %v8338, 4
        %v8340 = vrot.slane %v7231, 5
        %v8341 = vsel %vm2951, %v8339, %v8340
        %v8342 = vrot.slane %v8340, 4
        %v8343 = vrot.slane %v7256, 5
        %v8344 = vsel %vm2951, %v8342, %v8343
        %v8345 = vrot.slane %v8231, 5
        %v8346 = vrot.slane %v8345, 4
        %v8347 = vrot.slane %v7233, 5
        %v8348 = vsel %vm2951, %v8346, %v8347
        %v8349 = vrot.slane %v8347, 4
        %v8350 = vrot.slane %v7257, 5
        %v8351 = vsel %vm2951, %v8349, %v8350
        %v8352 = vrot.slane %v8232, 5
        %v8353 = vrot.slane %v8352, 4
        %v8354 = vrot.slane %v7235, 5
        %v8355 = vsel %vm2951, %v8353, %v8354
        %v8356 = vrot.slane %v8354, 4
        %v8357 = vrot.slane %v7258, 5
        %v8358 = vsel %vm2951, %v8356, %v8357
        %v8359 = vrot.slane %v8233, 5
        %v8360 = vrot.slane %v8359, 4
        %v8361 = vrot.slane %v7237, 5
        %v8362 = vsel %vm2951, %v8360, %v8361
        %v8363 = vrot.slane %v8361, 4
        %v8364 = vrot.slane %v7259, 5
        %v8365 = vsel %vm2951, %v8363, %v8364
        %v8366 = vrot.slane %v8234, 5
        %v8367 = vrot.slane %v8366, 4
        %v8368 = vrot.slane %v7239, 5
        %v8369 = vsel %vm2951, %v8367, %v8368
        %v8370 = vrot.slane %v8368, 4
        %v8371 = vrot.slane %v7260, 5
        %v8372 = vsel %vm2951, %v8370, %v8371
        %v8373 = vrot.slane %v8235, 5
        %v8374 = vrot.slane %v8373, 4
        %v8375 = vrot.slane %v7241, 5
        %v8376 = vsel %vm2951, %v8374, %v8375
        %v8377 = vrot.slane %v8375, 4
        %v8378 = vrot.slane %v7261, 5
        %v8379 = vsel %vm2951, %v8377, %v8378
        %v8380 = vld [vmem:[%s4 + $0x20] sm:$0xf]
        %v8381 = vld [vmem:[%s4 + $0x24] sm:$0xf]
        %v8382 = vld [vmem:[%s4 + $0x28] sm:$0xf]
        %v8383 = vld [vmem:[%s4 + $0x2c] sm:$0xf]
        %v8384 = vunpack.c.l.b16 %v8271
        %v8385 = vunpack.c.l.b16 %v8274
        %v8386 = vunpack.c.l.b16 %v8278
        %v8387 = vunpack.c.l.b16 %v8281
        %v8388 = vunpack.c.l.b16 %v8285
        %v8389 = vunpack.c.l.b16 %v8288
        %v8390 = vunpack.c.l.b16 %v8292
        %v8391 = vunpack.c.l.b16 %v8295
        %v8392 = vunpack.c.l.b16 %v8299
        %v8393 = vunpack.c.l.b16 %v8302
        %v8394 = vunpack.c.l.b16 %v8306
        %v8395 = vunpack.c.l.b16 %v8309
        %v8396 = vunpack.c.l.b16 %v8313
        %v8397 = vunpack.c.l.b16 %v8316
        %v8398 = vunpack.c.l.b16 %v8320
        %v8399 = vunpack.c.l.b16 %v8323
        %v8400 = vunpack.c.l.b16 %v8327
        %v8401 = vunpack.c.l.b16 %v8330
        %v8402 = vunpack.c.l.b16 %v8334
        %v8403 = vunpack.c.l.b16 %v8337
        %v8404 = vunpack.c.l.b16 %v8341
        %v8405 = vunpack.c.l.b16 %v8344
        %v8406 = vunpack.c.l.b16 %v8348
        %v8407 = vunpack.c.l.b16 %v8351
        %v8408 = vunpack.c.l.b16 %v8355
        %v8409 = vunpack.c.l.b16 %v8358
        %v8410 = vunpack.c.l.b16 %v8362
        %v8411 = vunpack.c.l.b16 %v8365
        %v8412 = vunpack.c.l.b16 %v8369
        %v8413 = vunpack.c.l.b16 %v8372
        %v8414 = vunpack.c.l.b16 %v8376
        %v8415 = vunpack.c.l.b16 %v8379
        %v8416 = vpack.c.b16 %v8385, %v8384
        %v8417 = vpack.c.b16 %v8387, %v8386
        %v8418 = vpack.c.b16 %v8389, %v8388
        %v8419 = vpack.c.b16 %v8391, %v8390
        %v8420 = vpack.c.b16 %v8393, %v8392
        %v8421 = vpack.c.b16 %v8395, %v8394
        %v8422 = vpack.c.b16 %v8397, %v8396
        %v8423 = vpack.c.b16 %v8399, %v8398
        %v8424 = vpack.c.b16 %v8401, %v8400
        %v8425 = vpack.c.b16 %v8403, %v8402
        %v8426 = vpack.c.b16 %v8405, %v8404
        %v8427 = vpack.c.b16 %v8407, %v8406
        %v8428 = vpack.c.b16 %v8409, %v8408
        %v8429 = vpack.c.b16 %v8411, %v8410
        %v8430 = vpack.c.b16 %v8413, %v8412
        %v8431 = vpack.c.b16 %v8415, %v8414
        %v8436 = vunpack.c.l.b16 %v8380
        %v8437 = vunpack.c.l.b16 %v8381
        %v8438 = vunpack.c.l.b16 %v8382
        %v8439 = vunpack.c.l.b16 %v8383
        %v8440 = vpack.c.b16 %v8437, %v8436
        %v8441 = vpack.c.b16 %v8439, %v8438
        %v8445 = vsel %vm2390, %v8416, 0
        %v8448 = vsel %vm2390, %v8417, 0
        %v8451 = vsel %vm2390, %v8418, 0
        %v8454 = vsel %vm2390, %v8419, 0
        %v8457 = vsel %vm2390, %v8420, 0
        %v8460 = vsel %vm2390, %v8421, 0
        %v8463 = vsel %vm2390, %v8422, 0
        %v8466 = vsel %vm2390, %v8423, 0
        %v8469 = vsel %vm2390, %v8424, 0
        %v8472 = vsel %vm2390, %v8425, 0
        %v8475 = vsel %vm2390, %v8426, 0
        %v8478 = vsel %vm2390, %v8427, 0
        %v8481 = vsel %vm2390, %v8428, 0
        %v8484 = vsel %vm2390, %v8429, 0
        %v8487 = vsel %vm2390, %v8430, 0
        %v8490 = vsel %vm2390, %v8431, 0
        %8492 = vmatprep.subr.bf16.mxu0 0
        %8493 = vmatpush1.bf16.msra.mxu0 0
        %8494 = vmatprep.subr.bf16.mxu0 0
        %8495 = vmatpush1.bf16.msra.mxu0 0
        %8496 = vmatprep.subr.bf16.mxu0 0
        %8497 = vmatpush1.bf16.msra.mxu0 0
        %8498 = vmatprep.subr.bf16.mxu0 0
        %8499 = vmatpush1.bf16.msra.mxu0 0
        %8500 = vmatprep.subr.bf16.mxu0 0
        %8501 = vmatpush1.bf16.msra.mxu0 0
        %8502 = vmatprep.subr.bf16.mxu0 0
        %8503 = vmatpush1.bf16.msra.mxu0 0
        %8504 = vmatprep.subr.bf16.mxu0 0
        %8505 = vmatpush1.bf16.msra.mxu0 %v8441
        %8506 = vmatprep.subr.bf16.mxu0 0
        %8507 = vmatpush1.bf16.msra.mxu0 %v8440
        %8508 = vmatprep.subr.bf16.mxu0 0
        %8509 = vmatpush2.bf16.msra.mxu0 0
        %8510 = vmatprep.subr.bf16.mxu0 0
        %8511 = vmatpush2.bf16.msra.mxu0 0
        %8512 = vmatprep.subr.bf16.mxu0 0
        %8513 = vmatpush2.bf16.msra.mxu0 0
        %8514 = vmatprep.subr.bf16.mxu0 0
        %8515 = vmatpush2.bf16.msra.mxu0 0
        %8516 = vmatprep.subr.bf16.mxu0 0
        %8517 = vmatpush2.bf16.msra.mxu0 0
        %8518 = vmatprep.subr.bf16.mxu0 0
        %8519 = vmatpush2.bf16.msra.mxu0 0
        %8520 = vmatprep.subr.bf16.mxu0 0
        %8521 = vmatpush2.bf16.msra.mxu0 0
        %8522 = vmatprep.subr.bf16.mxu0 0
        %8523 = vmatpush2.bf16.msra.mxu0 0
        %8524 = vmatprep.mubr.bf16.mxu0 0
        %8525 = vmatmul.mubr.bf16.gmra.mxu0 %v8445
        %v8526 = vpop.f32.mrf.mxu0
        %v8527 = vadd.f32 0.0, %v8526
        %v8528 = vpop.f32.mrf.mxu0
        %v8529 = vpop.f32.mrf.mxu0
        %v8530 = vadd.f32 0.0, %v8529
        %v8531 = vpop.f32.mrf.mxu0
        %8532 = vmatprep.mubr.bf16.mxu0 0
        %8533 = vmatmul.mubr.bf16.gmra.mxu0 %v8448
        %v8534 = vpop.f32.mrf.mxu0
        %v8535 = vadd.f32 0.0, %v8534
        %v8536 = vpop.f32.mrf.mxu0
        %v8537 = vpop.f32.mrf.mxu0
        %v8538 = vadd.f32 0.0, %v8537
        %v8539 = vpop.f32.mrf.mxu0
        %8540 = vmatprep.mubr.bf16.mxu0 0
        %8541 = vmatmul.mubr.bf16.gmra.mxu0 %v8451
        %v8542 = vpop.f32.mrf.mxu0
        %v8543 = vadd.f32 0.0, %v8542
        %v8544 = vpop.f32.mrf.mxu0
        %v8545 = vpop.f32.mrf.mxu0
        %v8546 = vadd.f32 0.0, %v8545
        %v8547 = vpop.f32.mrf.mxu0
        %8548 = vmatprep.mubr.bf16.mxu0 0
        %8549 = vmatmul.mubr.bf16.gmra.mxu0 %v8454
        %v8550 = vpop.f32.mrf.mxu0
        %v8551 = vadd.f32 0.0, %v8550
        %v8552 = vpop.f32.mrf.mxu0
        %v8553 = vpop.f32.mrf.mxu0
        %v8554 = vadd.f32 0.0, %v8553
        %v8555 = vpop.f32.mrf.mxu0
        %8556 = vmatprep.mubr.bf16.mxu0 0
        %8557 = vmatmul.mubr.bf16.gmra.mxu0 %v8457
        %v8558 = vpop.f32.mrf.mxu0
        %v8559 = vadd.f32 0.0, %v8558
        %v8560 = vpop.f32.mrf.mxu0
        %v8561 = vpop.f32.mrf.mxu0
        %v8562 = vadd.f32 0.0, %v8561
        %v8563 = vpop.f32.mrf.mxu0
        %8564 = vmatprep.mubr.bf16.mxu0 0
        %8565 = vmatmul.mubr.bf16.gmra.mxu0 %v8460
        %v8566 = vpop.f32.mrf.mxu0
        %v8567 = vadd.f32 0.0, %v8566
        %v8568 = vpop.f32.mrf.mxu0
        %v8569 = vpop.f32.mrf.mxu0
        %v8570 = vadd.f32 0.0, %v8569
        %v8571 = vpop.f32.mrf.mxu0
        %8572 = vmatprep.mubr.bf16.mxu0 0
        %8573 = vmatmul.mubr.bf16.gmra.mxu0 %v8463
        %v8574 = vpop.f32.mrf.mxu0
        %v8575 = vadd.f32 0.0, %v8574
        %v8576 = vpop.f32.mrf.mxu0
        %v8577 = vpop.f32.mrf.mxu0
        %v8578 = vadd.f32 0.0, %v8577
        %v8579 = vpop.f32.mrf.mxu0
        %8580 = vmatprep.mubr.bf16.mxu0 0
        %8581 = vmatmul.mubr.bf16.gmra.mxu0 %v8466
        %v8582 = vpop.f32.mrf.mxu0
        %v8583 = vadd.f32 0.0, %v8582
        %v8584 = vpop.f32.mrf.mxu0
        %v8585 = vpop.f32.mrf.mxu0
        %v8586 = vadd.f32 0.0, %v8585
        %v8587 = vpop.f32.mrf.mxu0
        %8588 = vmatprep.mubr.bf16.mxu0 0
        %8589 = vmatmul.mubr.bf16.gmra.mxu0 %v8469
        %v8590 = vpop.f32.mrf.mxu0
        %v8591 = vadd.f32 0.0, %v8590
        %v8592 = vpop.f32.mrf.mxu0
        %v8593 = vpop.f32.mrf.mxu0
        %v8594 = vadd.f32 0.0, %v8593
        %v8595 = vpop.f32.mrf.mxu0
        %8596 = vmatprep.mubr.bf16.mxu0 0
        %8597 = vmatmul.mubr.bf16.gmra.mxu0 %v8472
        %v8598 = vpop.f32.mrf.mxu0
        %v8599 = vadd.f32 0.0, %v8598
        %v8600 = vpop.f32.mrf.mxu0
        %v8601 = vpop.f32.mrf.mxu0
        %v8602 = vadd.f32 0.0, %v8601
        %v8603 = vpop.f32.mrf.mxu0
        %8604 = vmatprep.mubr.bf16.mxu0 0
        %8605 = vmatmul.mubr.bf16.gmra.mxu0 %v8475
        %v8606 = vpop.f32.mrf.mxu0
        %v8607 = vadd.f32 0.0, %v8606
        %v8608 = vpop.f32.mrf.mxu0
        %v8609 = vpop.f32.mrf.mxu0
        %v8610 = vadd.f32 0.0, %v8609
        %v8611 = vpop.f32.mrf.mxu0
        %8612 = vmatprep.mubr.bf16.mxu0 0
        %8613 = vmatmul.mubr.bf16.gmra.mxu0 %v8478
        %v8614 = vpop.f32.mrf.mxu0
        %v8615 = vadd.f32 0.0, %v8614
        %v8616 = vpop.f32.mrf.mxu0
        %v8617 = vpop.f32.mrf.mxu0
        %v8618 = vadd.f32 0.0, %v8617
        %v8619 = vpop.f32.mrf.mxu0
        %8620 = vmatprep.mubr.bf16.mxu0 0
        %8621 = vmatmul.mubr.bf16.gmra.mxu0 %v8481
        %v8622 = vpop.f32.mrf.mxu0
        %v8623 = vadd.f32 0.0, %v8622
        %v8624 = vpop.f32.mrf.mxu0
        %v8625 = vpop.f32.mrf.mxu0
        %v8626 = vadd.f32 0.0, %v8625
        %v8627 = vpop.f32.mrf.mxu0
        %8628 = vmatprep.mubr.bf16.mxu0 0
        %8629 = vmatmul.mubr.bf16.gmra.mxu0 %v8484
        %v8630 = vpop.f32.mrf.mxu0
        %v8631 = vadd.f32 0.0, %v8630
        %v8632 = vpop.f32.mrf.mxu0
        %v8633 = vpop.f32.mrf.mxu0
        %v8634 = vadd.f32 0.0, %v8633
        %v8635 = vpop.f32.mrf.mxu0
        %8636 = vmatprep.mubr.bf16.mxu0 0
        %8637 = vmatmul.mubr.bf16.gmra.mxu0 %v8487
        %v8638 = vpop.f32.mrf.mxu0
        %v8639 = vadd.f32 0.0, %v8638
        %v8640 = vpop.f32.mrf.mxu0
        %v8641 = vpop.f32.mrf.mxu0
        %v8642 = vadd.f32 0.0, %v8641
        %v8643 = vpop.f32.mrf.mxu0
        %8644 = vmatprep.mubr.bf16.mxu0 0
        %8645 = vmatmul.mubr.bf16.gmra.mxu0 %v8490
        %v8646 = vpop.f32.mrf.mxu0
        %v8647 = vadd.f32 0.0, %v8646
        %v8648 = vpop.f32.mrf.mxu0
        %v8649 = vpop.f32.mrf.mxu0
        %v8650 = vadd.f32 0.0, %v8649
        %v8651 = vpop.f32.mrf.mxu0
        %8652 = vdwg.mxu0
        %v8653 = vadd.f32 %v8094, %v8527
        %v8654 = vadd.f32 %v8097, %v8530
        %v8655 = vadd.f32 %v8102, %v8535
        %v8656 = vadd.f32 %v8105, %v8538
        %v8657 = vadd.f32 %v8110, %v8543
        %v8658 = vadd.f32 %v8113, %v8546
        %v8659 = vadd.f32 %v8118, %v8551
        %v8660 = vadd.f32 %v8121, %v8554
        %v8661 = vadd.f32 %v8126, %v8559
        %v8662 = vadd.f32 %v8129, %v8562
        %v8663 = vadd.f32 %v8134, %v8567
        %v8664 = vadd.f32 %v8137, %v8570
        %v8665 = vadd.f32 %v8142, %v8575
        %v8666 = vadd.f32 %v8145, %v8578
        %v8667 = vadd.f32 %v8150, %v8583
        %v8668 = vadd.f32 %v8153, %v8586
        %v8669 = vadd.f32 %v8158, %v8591
        %v8670 = vadd.f32 %v8161, %v8594
        %v8671 = vadd.f32 %v8166, %v8599
        %v8672 = vadd.f32 %v8169, %v8602
        %v8673 = vadd.f32 %v8174, %v8607
        %v8674 = vadd.f32 %v8177, %v8610
        %v8675 = vadd.f32 %v8182, %v8615
        %v8676 = vadd.f32 %v8185, %v8618
        %v8677 = vadd.f32 %v8190, %v8623
        %v8678 = vadd.f32 %v8193, %v8626
        %v8679 = vadd.f32 %v8198, %v8631
        %v8680 = vadd.f32 %v8201, %v8634
        %v8681 = vadd.f32 %v8206, %v8639
        %v8682 = vadd.f32 %v8209, %v8642
        %v8683 = vadd.f32 %v8214, %v8647
        %v8684 = vadd.f32 %v8217, %v8650
        %v8685 = vld [vmem:[%s7095] sm:$0xf]
        %v8686 = vld [vmem:[%s7095 + $0x4] sm:$0xf]
        %v8687 = vld [vmem:[%s7095 + $0xc] sm:$0xf]
        %v8688 = vld [vmem:[%s7095 + $0x10] sm:$0xf]
        %v8689 = vld [vmem:[%s7095 + $0x18] sm:$0xf]
        %v8690 = vld [vmem:[%s7095 + $0x1c] sm:$0xf]
        %v8691 = vld [vmem:[%s7095 + $0x24] sm:$0xf]
        %v8692 = vld [vmem:[%s7095 + $0x28] sm:$0xf]
        %v8693 = vld [vmem:[%s7095 + $0x30] sm:$0xf]
        %v8694 = vld [vmem:[%s7095 + $0x34] sm:$0xf]
        %v8695 = vld [vmem:[%s7095 + $0x3c] sm:$0xf]
        %v8696 = vld [vmem:[%s7095 + $0x40] sm:$0xf]
        %v8697 = vld [vmem:[%s7095 + $0x48] sm:$0xf]
        %v8698 = vld [vmem:[%s7095 + $0x4c] sm:$0xf]
        %v8699 = vld [vmem:[%s7095 + $0x54] sm:$0xf]
        %v8700 = vld [vmem:[%s7095 + $0x58] sm:$0xf]
        %v8701 = vld [vmem:[%s7095 + $0x60] sm:$0xf]
        %v8702 = vld [vmem:[%s7095 + $0x64] sm:$0xf]
        %v8703 = vld [vmem:[%s7095 + $0x6c] sm:$0xf]
        %v8704 = vld [vmem:[%s7095 + $0x70] sm:$0xf]
        %v8705 = vld [vmem:[%s7095 + $0x78] sm:$0xf]
        %v8706 = vld [vmem:[%s7095 + $0x7c] sm:$0xf]
        %v8707 = vld [vmem:[%s7095 + $0x84] sm:$0xf]
        %v8708 = vld [vmem:[%s7095 + $0x88] sm:$0xf]
        %v8709 = vld [vmem:[%s7095 + $0x90] sm:$0xf]
        %v8710 = vld [vmem:[%s7095 + $0x94] sm:$0xf]
        %v8711 = vld [vmem:[%s7095 + $0x9c] sm:$0xf]
        %v8712 = vld [vmem:[%s7095 + $0xa0] sm:$0xf]
        %v8713 = vld [vmem:[%s7095 + $0xa8] sm:$0xf]
        %v8714 = vld [vmem:[%s7095 + $0xac] sm:$0xf]
        %v8715 = vld [vmem:[%s7095 + $0xb4] sm:$0xf]
        %v8716 = vld [vmem:[%s7095 + $0xb8] sm:$0xf]
        %v8717 = vld [vmem:[%s4 + $0x30] sm:$0xf]
        %v8718 = vld [vmem:[%s4 + $0x34] sm:$0xf]
        %v8719 = vld [vmem:[%s4 + $0x38] sm:$0xf]
        %v8720 = vld [vmem:[%s4 + $0x3c] sm:$0xf]
        %v8753 = vunpack.c.l.b16 %v8685
        %v8754 = vunpack.c.l.b16 %v8686
        %v8755 = vunpack.c.l.b16 %v8687
        %v8756 = vunpack.c.l.b16 %v8688
        %v8757 = vunpack.c.l.b16 %v8689
        %v8758 = vunpack.c.l.b16 %v8690
        %v8759 = vunpack.c.l.b16 %v8691
        %v8760 = vunpack.c.l.b16 %v8692
        %v8761 = vunpack.c.l.b16 %v8693
        %v8762 = vunpack.c.l.b16 %v8694
        %v8763 = vunpack.c.l.b16 %v8695
        %v8764 = vunpack.c.l.b16 %v8696
        %v8765 = vunpack.c.l.b16 %v8697
        %v8766 = vunpack.c.l.b16 %v8698
        %v8767 = vunpack.c.l.b16 %v8699
        %v8768 = vunpack.c.l.b16 %v8700
        %v8769 = vunpack.c.l.b16 %v8701
        %v8770 = vunpack.c.l.b16 %v8702
        %v8771 = vunpack.c.l.b16 %v8703
        %v8772 = vunpack.c.l.b16 %v8704
        %v8773 = vunpack.c.l.b16 %v8705
        %v8774 = vunpack.c.l.b16 %v8706
        %v8775 = vunpack.c.l.b16 %v8707
        %v8776 = vunpack.c.l.b16 %v8708
        %v8777 = vunpack.c.l.b16 %v8709
        %v8778 = vunpack.c.l.b16 %v8710
        %v8779 = vunpack.c.l.b16 %v8711
        %v8780 = vunpack.c.l.b16 %v8712
        %v8781 = vunpack.c.l.b16 %v8713
        %v8782 = vunpack.c.l.b16 %v8714
        %v8783 = vunpack.c.l.b16 %v8715
        %v8784 = vunpack.c.l.b16 %v8716
        %v8785 = vpack.c.b16 %v8754, %v8753
        %v8786 = vpack.c.b16 %v8756, %v8755
        %v8787 = vpack.c.b16 %v8758, %v8757
        %v8788 = vpack.c.b16 %v8760, %v8759
        %v8789 = vpack.c.b16 %v8762, %v8761
        %v8790 = vpack.c.b16 %v8764, %v8763
        %v8791 = vpack.c.b16 %v8766, %v8765
        %v8792 = vpack.c.b16 %v8768, %v8767
        %v8793 = vpack.c.b16 %v8770, %v8769
        %v8794 = vpack.c.b16 %v8772, %v8771
        %v8795 = vpack.c.b16 %v8774, %v8773
        %v8796 = vpack.c.b16 %v8776, %v8775
        %v8797 = vpack.c.b16 %v8778, %v8777
        %v8798 = vpack.c.b16 %v8780, %v8779
        %v8799 = vpack.c.b16 %v8782, %v8781
        %v8800 = vpack.c.b16 %v8784, %v8783
        %v8805 = vunpack.c.l.b16 %v8717
        %v8806 = vunpack.c.l.b16 %v8718
        %v8807 = vunpack.c.l.b16 %v8719
        %v8808 = vunpack.c.l.b16 %v8720
        %v8809 = vpack.c.b16 %v8806, %v8805
        %v8810 = vpack.c.b16 %v8808, %v8807
        %v8814 = vsel %vm2390, %v8785, 0
        %v8817 = vsel %vm2390, %v8786, 0
        %v8820 = vsel %vm2390, %v8787, 0
        %v8823 = vsel %vm2390, %v8788, 0
        %v8826 = vsel %vm2390, %v8789, 0
        %v8829 = vsel %vm2390, %v8790, 0
        %v8832 = vsel %vm2390, %v8791, 0
        %v8835 = vsel %vm2390, %v8792, 0
        %v8838 = vsel %vm2390, %v8793, 0
        %v8841 = vsel %vm2390, %v8794, 0
        %v8844 = vsel %vm2390, %v8795, 0
        %v8847 = vsel %vm2390, %v8796, 0
        %v8850 = vsel %vm2390, %v8797, 0
        %v8853 = vsel %vm2390, %v8798, 0
        %v8856 = vsel %vm2390, %v8799, 0
        %v8859 = vsel %vm2390, %v8800, 0
        %8861 = vmatprep.subr.bf16.mxu0 0
        %8862 = vmatpush1.bf16.msra.mxu0 0
        %8863 = vmatprep.subr.bf16.mxu0 0
        %8864 = vmatpush1.bf16.msra.mxu0 0
        %8865 = vmatprep.subr.bf16.mxu0 0
        %8866 = vmatpush1.bf16.msra.mxu0 0
        %8867 = vmatprep.subr.bf16.mxu0 0
        %8868 = vmatpush1.bf16.msra.mxu0 0
        %8869 = vmatprep.subr.bf16.mxu0 0
        %8870 = vmatpush1.bf16.msra.mxu0 0
        %8871 = vmatprep.subr.bf16.mxu0 0
        %8872 = vmatpush1.bf16.msra.mxu0 0
        %8873 = vmatprep.subr.bf16.mxu0 0
        %8874 = vmatpush1.bf16.msra.mxu0 %v8810
        %8875 = vmatprep.subr.bf16.mxu0 0
        %8876 = vmatpush1.bf16.msra.mxu0 %v8809
        %8877 = vmatprep.subr.bf16.mxu0 0
        %8878 = vmatpush2.bf16.msra.mxu0 0
        %8879 = vmatprep.subr.bf16.mxu0 0
        %8880 = vmatpush2.bf16.msra.mxu0 0
        %8881 = vmatprep.subr.bf16.mxu0 0
        %8882 = vmatpush2.bf16.msra.mxu0 0
        %8883 = vmatprep.subr.bf16.mxu0 0
        %8884 = vmatpush2.bf16.msra.mxu0 0
        %8885 = vmatprep.subr.bf16.mxu0 0
        %8886 = vmatpush2.bf16.msra.mxu0 0
        %8887 = vmatprep.subr.bf16.mxu0 0
        %8888 = vmatpush2.bf16.msra.mxu0 0
        %8889 = vmatprep.subr.bf16.mxu0 0
        %8890 = vmatpush2.bf16.msra.mxu0 0
        %8891 = vmatprep.subr.bf16.mxu0 0
        %8892 = vmatpush2.bf16.msra.mxu0 0
        %8893 = vmatprep.mubr.bf16.mxu0 0
        %8894 = vmatmul.mubr.bf16.gmra.mxu0 %v8814
        %v8895 = vpop.f32.mrf.mxu0
        %v8896 = vadd.f32 0.0, %v8895
        %v8897 = vpop.f32.mrf.mxu0
        %v8898 = vpop.f32.mrf.mxu0
        %v8899 = vadd.f32 0.0, %v8898
        %v8900 = vpop.f32.mrf.mxu0
        %8901 = vmatprep.mubr.bf16.mxu0 0
        %8902 = vmatmul.mubr.bf16.gmra.mxu0 %v8817
        %v8903 = vpop.f32.mrf.mxu0
        %v8904 = vadd.f32 0.0, %v8903
        %v8905 = vpop.f32.mrf.mxu0
        %v8906 = vpop.f32.mrf.mxu0
        %v8907 = vadd.f32 0.0, %v8906
        %v8908 = vpop.f32.mrf.mxu0
        %8909 = vmatprep.mubr.bf16.mxu0 0
        %8910 = vmatmul.mubr.bf16.gmra.mxu0 %v8820
        %v8911 = vpop.f32.mrf.mxu0
        %v8912 = vadd.f32 0.0, %v8911
        %v8913 = vpop.f32.mrf.mxu0
        %v8914 = vpop.f32.mrf.mxu0
        %v8915 = vadd.f32 0.0, %v8914
        %v8916 = vpop.f32.mrf.mxu0
        %8917 = vmatprep.mubr.bf16.mxu0 0
        %8918 = vmatmul.mubr.bf16.gmra.mxu0 %v8823
        %v8919 = vpop.f32.mrf.mxu0
        %v8920 = vadd.f32 0.0, %v8919
        %v8921 = vpop.f32.mrf.mxu0
        %v8922 = vpop.f32.mrf.mxu0
        %v8923 = vadd.f32 0.0, %v8922
        %v8924 = vpop.f32.mrf.mxu0
        %8925 = vmatprep.mubr.bf16.mxu0 0
        %8926 = vmatmul.mubr.bf16.gmra.mxu0 %v8826
        %v8927 = vpop.f32.mrf.mxu0
        %v8928 = vadd.f32 0.0, %v8927
        %v8929 = vpop.f32.mrf.mxu0
        %v8930 = vpop.f32.mrf.mxu0
        %v8931 = vadd.f32 0.0, %v8930
        %v8932 = vpop.f32.mrf.mxu0
        %8933 = vmatprep.mubr.bf16.mxu0 0
        %8934 = vmatmul.mubr.bf16.gmra.mxu0 %v8829
        %v8935 = vpop.f32.mrf.mxu0
        %v8936 = vadd.f32 0.0, %v8935
        %v8937 = vpop.f32.mrf.mxu0
        %v8938 = vpop.f32.mrf.mxu0
        %v8939 = vadd.f32 0.0, %v8938
        %v8940 = vpop.f32.mrf.mxu0
        %8941 = vmatprep.mubr.bf16.mxu0 0
        %8942 = vmatmul.mubr.bf16.gmra.mxu0 %v8832
        %v8943 = vpop.f32.mrf.mxu0
        %v8944 = vadd.f32 0.0, %v8943
        %v8945 = vpop.f32.mrf.mxu0
        %v8946 = vpop.f32.mrf.mxu0
        %v8947 = vadd.f32 0.0, %v8946
        %v8948 = vpop.f32.mrf.mxu0
        %8949 = vmatprep.mubr.bf16.mxu0 0
        %8950 = vmatmul.mubr.bf16.gmra.mxu0 %v8835
        %v8951 = vpop.f32.mrf.mxu0
        %v8952 = vadd.f32 0.0, %v8951
        %v8953 = vpop.f32.mrf.mxu0
        %v8954 = vpop.f32.mrf.mxu0
        %v8955 = vadd.f32 0.0, %v8954
        %v8956 = vpop.f32.mrf.mxu0
        %8957 = vmatprep.mubr.bf16.mxu0 0
        %8958 = vmatmul.mubr.bf16.gmra.mxu0 %v8838
        %v8959 = vpop.f32.mrf.mxu0
        %v8960 = vadd.f32 0.0, %v8959
        %v8961 = vpop.f32.mrf.mxu0
        %v8962 = vpop.f32.mrf.mxu0
        %v8963 = vadd.f32 0.0, %v8962
        %v8964 = vpop.f32.mrf.mxu0
        %8965 = vmatprep.mubr.bf16.mxu0 0
        %8966 = vmatmul.mubr.bf16.gmra.mxu0 %v8841
        %v8967 = vpop.f32.mrf.mxu0
        %v8968 = vadd.f32 0.0, %v8967
        %v8969 = vpop.f32.mrf.mxu0
        %v8970 = vpop.f32.mrf.mxu0
        %v8971 = vadd.f32 0.0, %v8970
        %v8972 = vpop.f32.mrf.mxu0
        %8973 = vmatprep.mubr.bf16.mxu0 0
        %8974 = vmatmul.mubr.bf16.gmra.mxu0 %v8844
        %v8975 = vpop.f32.mrf.mxu0
        %v8976 = vadd.f32 0.0, %v8975
        %v8977 = vpop.f32.mrf.mxu0
        %v8978 = vpop.f32.mrf.mxu0
        %v8979 = vadd.f32 0.0, %v8978
        %v8980 = vpop.f32.mrf.mxu0
        %8981 = vmatprep.mubr.bf16.mxu0 0
        %8982 = vmatmul.mubr.bf16.gmra.mxu0 %v8847
        %v8983 = vpop.f32.mrf.mxu0
        %v8984 = vadd.f32 0.0, %v8983
        %v8985 = vpop.f32.mrf.mxu0
        %v8986 = vpop.f32.mrf.mxu0
        %v8987 = vadd.f32 0.0, %v8986
        %v8988 = vpop.f32.mrf.mxu0
        %8989 = vmatprep.mubr.bf16.mxu0 0
        %8990 = vmatmul.mubr.bf16.gmra.mxu0 %v8850
        %v8991 = vpop.f32.mrf.mxu0
        %v8992 = vadd.f32 0.0, %v8991
        %v8993 = vpop.f32.mrf.mxu0
        %v8994 = vpop.f32.mrf.mxu0
        %v8995 = vadd.f32 0.0, %v8994
        %v8996 = vpop.f32.mrf.mxu0
        %8997 = vmatprep.mubr.bf16.mxu0 0
        %8998 = vmatmul.mubr.bf16.gmra.mxu0 %v8853
        %v8999 = vpop.f32.mrf.mxu0
        %v9000 = vadd.f32 0.0, %v8999
        %v9001 = vpop.f32.mrf.mxu0
        %v9002 = vpop.f32.mrf.mxu0
        %v9003 = vadd.f32 0.0, %v9002
        %v9004 = vpop.f32.mrf.mxu0
        %9005 = vmatprep.mubr.bf16.mxu0 0
        %9006 = vmatmul.mubr.bf16.gmra.mxu0 %v8856
        %v9007 = vpop.f32.mrf.mxu0
        %v9008 = vadd.f32 0.0, %v9007
        %v9009 = vpop.f32.mrf.mxu0
        %v9010 = vpop.f32.mrf.mxu0
        %v9011 = vadd.f32 0.0, %v9010
        %v9012 = vpop.f32.mrf.mxu0
        %9013 = vmatprep.mubr.bf16.mxu0 0
        %9014 = vmatmul.mubr.bf16.gmra.mxu0 %v8859
        %v9015 = vpop.f32.mrf.mxu0
        %v9016 = vadd.f32 0.0, %v9015
        %v9017 = vpop.f32.mrf.mxu0
        %v9018 = vpop.f32.mrf.mxu0
        %v9019 = vadd.f32 0.0, %v9018
        %v9020 = vpop.f32.mrf.mxu0
        %9021 = vdwg.mxu0
        %v9022 = vadd.f32 %v8653, %v8896
        %v9023 = vadd.f32 %v8654, %v8899
        %v9024 = vadd.f32 %v8655, %v8904
        %v9025 = vadd.f32 %v8656, %v8907
        %v9026 = vadd.f32 %v8657, %v8912
        %v9027 = vadd.f32 %v8658, %v8915
        %v9028 = vadd.f32 %v8659, %v8920
        %v9029 = vadd.f32 %v8660, %v8923
        %v9030 = vadd.f32 %v8661, %v8928
        %v9031 = vadd.f32 %v8662, %v8931
        %v9032 = vadd.f32 %v8663, %v8936
        %v9033 = vadd.f32 %v8664, %v8939
        %v9034 = vadd.f32 %v8665, %v8944
        %v9035 = vadd.f32 %v8666, %v8947
        %v9036 = vadd.f32 %v8667, %v8952
        %v9037 = vadd.f32 %v8668, %v8955
        %v9038 = vadd.f32 %v8669, %v8960
        %v9039 = vadd.f32 %v8670, %v8963
        %v9040 = vadd.f32 %v8671, %v8968
        %v9041 = vadd.f32 %v8672, %v8971
        %v9042 = vadd.f32 %v8673, %v8976
        %v9043 = vadd.f32 %v8674, %v8979
        %v9044 = vadd.f32 %v8675, %v8984
        %v9045 = vadd.f32 %v8676, %v8987
        %v9046 = vadd.f32 %v8677, %v8992
        %v9047 = vadd.f32 %v8678, %v8995
        %v9048 = vadd.f32 %v8679, %v9000
        %v9049 = vadd.f32 %v8680, %v9003
        %v9050 = vadd.f32 %v8681, %v9008
        %v9051 = vadd.f32 %v8682, %v9011
        %v9052 = vadd.f32 %v8683, %v9016
        %v9053 = vadd.f32 %v8684, %v9019
        %v9054 = vld [vmem:[%s7095] sm:$0xf]
        %v9055 = vld [vmem:[%s7095 + $0x4] sm:$0xf]
        %v9056 = vld [vmem:[%s7095 + $0x8] sm:$0x1]
        %v9057 = vld [vmem:[%s7095 + $0xc] sm:$0xf]
        %v9058 = vld [vmem:[%s7095 + $0x10] sm:$0xf]
        %v9059 = vld [vmem:[%s7095 + $0x14] sm:$0x1]
        %v9060 = vld [vmem:[%s7095 + $0x18] sm:$0xf]
        %v9061 = vld [vmem:[%s7095 + $0x1c] sm:$0xf]
        %v9062 = vld [vmem:[%s7095 + $0x20] sm:$0x1]
        %v9063 = vld [vmem:[%s7095 + $0x24] sm:$0xf]
        %v9064 = vld [vmem:[%s7095 + $0x28] sm:$0xf]
        %v9065 = vld [vmem:[%s7095 + $0x2c] sm:$0x1]
        %v9066 = vld [vmem:[%s7095 + $0x30] sm:$0xf]
        %v9067 = vld [vmem:[%s7095 + $0x34] sm:$0xf]
        %v9068 = vld [vmem:[%s7095 + $0x38] sm:$0x1]
        %v9069 = vld [vmem:[%s7095 + $0x3c] sm:$0xf]
        %v9070 = vld [vmem:[%s7095 + $0x40] sm:$0xf]
        %v9071 = vld [vmem:[%s7095 + $0x44] sm:$0x1]
        %v9072 = vld [vmem:[%s7095 + $0x48] sm:$0xf]
        %v9073 = vld [vmem:[%s7095 + $0x4c] sm:$0xf]
        %v9074 = vld [vmem:[%s7095 + $0x50] sm:$0x1]
        %v9075 = vld [vmem:[%s7095 + $0x54] sm:$0xf]
        %v9076 = vld [vmem:[%s7095 + $0x58] sm:$0xf]
        %v9077 = vld [vmem:[%s7095 + $0x5c] sm:$0x1]
        %v9078 = vld [vmem:[%s7095 + $0x60] sm:$0xf]
        %v9079 = vld [vmem:[%s7095 + $0x64] sm:$0xf]
        %v9080 = vld [vmem:[%s7095 + $0x68] sm:$0x1]
        %v9081 = vld [vmem:[%s7095 + $0x6c] sm:$0xf]
        %v9082 = vld [vmem:[%s7095 + $0x70] sm:$0xf]
        %v9083 = vld [vmem:[%s7095 + $0x74] sm:$0x1]
        %v9084 = vld [vmem:[%s7095 + $0x78] sm:$0xf]
        %v9085 = vld [vmem:[%s7095 + $0x7c] sm:$0xf]
        %v9086 = vld [vmem:[%s7095 + $0x80] sm:$0x1]
        %v9087 = vld [vmem:[%s7095 + $0x84] sm:$0xf]
        %v9088 = vld [vmem:[%s7095 + $0x88] sm:$0xf]
        %v9089 = vld [vmem:[%s7095 + $0x8c] sm:$0x1]
        %v9090 = vld [vmem:[%s7095 + $0x90] sm:$0xf]
        %v9091 = vld [vmem:[%s7095 + $0x94] sm:$0xf]
        %v9092 = vld [vmem:[%s7095 + $0x98] sm:$0x1]
        %v9093 = vld [vmem:[%s7095 + $0x9c] sm:$0xf]
        %v9094 = vld [vmem:[%s7095 + $0xa0] sm:$0xf]
        %v9095 = vld [vmem:[%s7095 + $0xa4] sm:$0x1]
        %v9096 = vld [vmem:[%s7095 + $0xa8] sm:$0xf]
        %v9097 = vld [vmem:[%s7095 + $0xac] sm:$0xf]
        %v9098 = vld [vmem:[%s7095 + $0xb0] sm:$0x1]
        %v9099 = vld [vmem:[%s7095 + $0xb4] sm:$0xf]
        %v9100 = vld [vmem:[%s7095 + $0xb8] sm:$0xf]
        %v9101 = vld [vmem:[%s7095 + $0xbc] sm:$0x1]
        %v9103 = vshrl.u32 %v9054, 16
        %v9105 = vrot.slane %v9103, 4
        %v9106 = vshll.u32 %v9054, 16
        %v9108 = vrot.slane %v9106, 5
        %v9109 = vor.u32 %v9105, %v9108
        %v9110 = vrot.slane %v9109, 4
        %v9112 = vshll.u32 %v9055, 16
        %v9114 = vrot.slane %v9112, 5
        %v9115 = vsel %vm1941, %v9110, %v9114
        %v9116 = vshrl.u32 %v9055, 16
        %v9118 = vrot.slane %v9116, 4
        %v9119 = vor.u32 %v9118, %v9114
        %v9120 = vrot.slane %v9119, 4
        %v9122 = vshll.u32 %v9056, 16
        %v9124 = vrot.slane %v9122, 5
        %v9125 = vsel %vm1941, %v9120, %v9124
        %v9127 = vshrl.u32 %v9057, 16
        %v9129 = vrot.slane %v9127, 4
        %v9130 = vshll.u32 %v9057, 16
        %v9132 = vrot.slane %v9130, 5
        %v9133 = vor.u32 %v9129, %v9132
        %v9134 = vrot.slane %v9133, 4
        %v9136 = vshll.u32 %v9058, 16
        %v9138 = vrot.slane %v9136, 5
        %v9139 = vsel %vm1941, %v9134, %v9138
        %v9140 = vshrl.u32 %v9058, 16
        %v9142 = vrot.slane %v9140, 4
        %v9143 = vor.u32 %v9142, %v9138
        %v9144 = vrot.slane %v9143, 4
        %v9146 = vshll.u32 %v9059, 16
        %v9148 = vrot.slane %v9146, 5
        %v9149 = vsel %vm1941, %v9144, %v9148
        %v9151 = vshrl.u32 %v9060, 16
        %v9153 = vrot.slane %v9151, 4
        %v9154 = vshll.u32 %v9060, 16
        %v9156 = vrot.slane %v9154, 5
        %v9157 = vor.u32 %v9153, %v9156
        %v9158 = vrot.slane %v9157, 4
        %v9160 = vshll.u32 %v9061, 16
        %v9162 = vrot.slane %v9160, 5
        %v9163 = vsel %vm1941, %v9158, %v9162
        %v9164 = vshrl.u32 %v9061, 16
        %v9166 = vrot.slane %v9164, 4
        %v9167 = vor.u32 %v9166, %v9162
        %v9168 = vrot.slane %v9167, 4
        %v9170 = vshll.u32 %v9062, 16
        %v9172 = vrot.slane %v9170, 5
        %v9173 = vsel %vm1941, %v9168, %v9172
        %v9175 = vshrl.u32 %v9063, 16
        %v9177 = vrot.slane %v9175, 4
        %v9178 = vshll.u32 %v9063, 16
        %v9180 = vrot.slane %v9178, 5
        %v9181 = vor.u32 %v9177, %v9180
        %v9182 = vrot.slane %v9181, 4
        %v9184 = vshll.u32 %v9064, 16
        %v9186 = vrot.slane %v9184, 5
        %v9187 = vsel %vm1941, %v9182, %v9186
        %v9188 = vshrl.u32 %v9064, 16
        %v9190 = vrot.slane %v9188, 4
        %v9191 = vor.u32 %v9190, %v9186
        %v9192 = vrot.slane %v9191, 4
        %v9194 = vshll.u32 %v9065, 16
        %v9196 = vrot.slane %v9194, 5
        %v9197 = vsel %vm1941, %v9192, %v9196
        %v9199 = vshrl.u32 %v9066, 16
        %v9201 = vrot.slane %v9199, 4
        %v9202 = vshll.u32 %v9066, 16
        %v9204 = vrot.slane %v9202, 5
        %v9205 = vor.u32 %v9201, %v9204
        %v9206 = vrot.slane %v9205, 4
        %v9208 = vshll.u32 %v9067, 16
        %v9210 = vrot.slane %v9208, 5
        %v9211 = vsel %vm1941, %v9206, %v9210
        %v9212 = vshrl.u32 %v9067, 16
        %v9214 = vrot.slane %v9212, 4
        %v9215 = vor.u32 %v9214, %v9210
        %v9216 = vrot.slane %v9215, 4
        %v9218 = vshll.u32 %v9068, 16
        %v9220 = vrot.slane %v9218, 5
        %v9221 = vsel %vm1941, %v9216, %v9220
        %v9223 = vshrl.u32 %v9069, 16
        %v9225 = vrot.slane %v9223, 4
        %v9226 = vshll.u32 %v9069, 16
        %v9228 = vrot.slane %v9226, 5
        %v9229 = vor.u32 %v9225, %v9228
        %v9230 = vrot.slane %v9229, 4
        %v9232 = vshll.u32 %v9070, 16
        %v9234 = vrot.slane %v9232, 5
        %v9235 = vsel %vm1941, %v9230, %v9234
        %v9236 = vshrl.u32 %v9070, 16
        %v9238 = vrot.slane %v9236, 4
        %v9239 = vor.u32 %v9238, %v9234
        %v9240 = vrot.slane %v9239, 4
        %v9242 = vshll.u32 %v9071, 16
        %v9244 = vrot.slane %v9242, 5
        %v9245 = vsel %vm1941, %v9240, %v9244
        %v9247 = vshrl.u32 %v9072, 16
        %v9249 = vrot.slane %v9247, 4
        %v9250 = vshll.u32 %v9072, 16
        %v9252 = vrot.slane %v9250, 5
        %v9253 = vor.u32 %v9249, %v9252
        %v9254 = vrot.slane %v9253, 4
        %v9256 = vshll.u32 %v9073, 16
        %v9258 = vrot.slane %v9256, 5
        %v9259 = vsel %vm1941, %v9254, %v9258
        %v9260 = vshrl.u32 %v9073, 16
        %v9262 = vrot.slane %v9260, 4
        %v9263 = vor.u32 %v9262, %v9258
        %v9264 = vrot.slane %v9263, 4
        %v9266 = vshll.u32 %v9074, 16
        %v9268 = vrot.slane %v9266, 5
        %v9269 = vsel %vm1941, %v9264, %v9268
        %v9271 = vshrl.u32 %v9075, 16
        %v9273 = vrot.slane %v9271, 4
        %v9274 = vshll.u32 %v9075, 16
        %v9276 = vrot.slane %v9274, 5
        %v9277 = vor.u32 %v9273, %v9276
        %v9278 = vrot.slane %v9277, 4
        %v9280 = vshll.u32 %v9076, 16
        %v9282 = vrot.slane %v9280, 5
        %v9283 = vsel %vm1941, %v9278, %v9282
        %v9284 = vshrl.u32 %v9076, 16
        %v9286 = vrot.slane %v9284, 4
        %v9287 = vor.u32 %v9286, %v9282
        %v9288 = vrot.slane %v9287, 4
        %v9290 = vshll.u32 %v9077, 16
        %v9292 = vrot.slane %v9290, 5
        %v9293 = vsel %vm1941, %v9288, %v9292
        %v9295 = vshrl.u32 %v9078, 16
        %v9297 = vrot.slane %v9295, 4
        %v9298 = vshll.u32 %v9078, 16
        %v9300 = vrot.slane %v9298, 5
        %v9301 = vor.u32 %v9297, %v9300
        %v9302 = vrot.slane %v9301, 4
        %v9304 = vshll.u32 %v9079, 16
        %v9306 = vrot.slane %v9304, 5
        %v9307 = vsel %vm1941, %v9302, %v9306
        %v9308 = vshrl.u32 %v9079, 16
        %v9310 = vrot.slane %v9308, 4
        %v9311 = vor.u32 %v9310, %v9306
        %v9312 = vrot.slane %v9311, 4
        %v9314 = vshll.u32 %v9080, 16
        %v9316 = vrot.slane %v9314, 5
        %v9317 = vsel %vm1941, %v9312, %v9316
        %v9319 = vshrl.u32 %v9081, 16
        %v9321 = vrot.slane %v9319, 4
        %v9322 = vshll.u32 %v9081, 16
        %v9324 = vrot.slane %v9322, 5
        %v9325 = vor.u32 %v9321, %v9324
        %v9326 = vrot.slane %v9325, 4
        %v9328 = vshll.u32 %v9082, 16
        %v9330 = vrot.slane %v9328, 5
        %v9331 = vsel %vm1941, %v9326, %v9330
        %v9332 = vshrl.u32 %v9082, 16
        %v9334 = vrot.slane %v9332, 4
        %v9335 = vor.u32 %v9334, %v9330
        %v9336 = vrot.slane %v9335, 4
        %v9338 = vshll.u32 %v9083, 16
        %v9340 = vrot.slane %v9338, 5
        %v9341 = vsel %vm1941, %v9336, %v9340
        %v9343 = vshrl.u32 %v9084, 16
        %v9345 = vrot.slane %v9343, 4
        %v9346 = vshll.u32 %v9084, 16
        %v9348 = vrot.slane %v9346, 5
        %v9349 = vor.u32 %v9345, %v9348
        %v9350 = vrot.slane %v9349, 4
        %v9352 = vshll.u32 %v9085, 16
        %v9354 = vrot.slane %v9352, 5
        %v9355 = vsel %vm1941, %v9350, %v9354
        %v9356 = vshrl.u32 %v9085, 16
        %v9358 = vrot.slane %v9356, 4
        %v9359 = vor.u32 %v9358, %v9354
        %v9360 = vrot.slane %v9359, 4
        %v9362 = vshll.u32 %v9086, 16
        %v9364 = vrot.slane %v9362, 5
        %v9365 = vsel %vm1941, %v9360, %v9364
        %v9367 = vshrl.u32 %v9087, 16
        %v9369 = vrot.slane %v9367, 4
        %v9370 = vshll.u32 %v9087, 16
        %v9372 = vrot.slane %v9370, 5
        %v9373 = vor.u32 %v9369, %v9372
        %v9374 = vrot.slane %v9373, 4
        %v9376 = vshll.u32 %v9088, 16
        %v9378 = vrot.slane %v9376, 5
        %v9379 = vsel %vm1941, %v9374, %v9378
        %v9380 = vshrl.u32 %v9088, 16
        %v9382 = vrot.slane %v9380, 4
        %v9383 = vor.u32 %v9382, %v9378
        %v9384 = vrot.slane %v9383, 4
        %v9386 = vshll.u32 %v9089, 16
        %v9388 = vrot.slane %v9386, 5
        %v9389 = vsel %vm1941, %v9384, %v9388
        %v9391 = vshrl.u32 %v9090, 16
        %v9393 = vrot.slane %v9391, 4
        %v9394 = vshll.u32 %v9090, 16
        %v9396 = vrot.slane %v9394, 5
        %v9397 = vor.u32 %v9393, %v9396
        %v9398 = vrot.slane %v9397, 4
        %v9400 = vshll.u32 %v9091, 16
        %v9402 = vrot.slane %v9400, 5
        %v9403 = vsel %vm1941, %v9398, %v9402
        %v9404 = vshrl.u32 %v9091, 16
        %v9406 = vrot.slane %v9404, 4
        %v9407 = vor.u32 %v9406, %v9402
        %v9408 = vrot.slane %v9407, 4
        %v9410 = vshll.u32 %v9092, 16
        %v9412 = vrot.slane %v9410, 5
        %v9413 = vsel %vm1941, %v9408, %v9412
        %v9415 = vshrl.u32 %v9093, 16
        %v9417 = vrot.slane %v9415, 4
        %v9418 = vshll.u32 %v9093, 16
        %v9420 = vrot.slane %v9418, 5
        %v9421 = vor.u32 %v9417, %v9420
        %v9422 = vrot.slane %v9421, 4
        %v9424 = vshll.u32 %v9094, 16
        %v9426 = vrot.slane %v9424, 5
        %v9427 = vsel %vm1941, %v9422, %v9426
        %v9428 = vshrl.u32 %v9094, 16
        %v9430 = vrot.slane %v9428, 4
        %v9431 = vor.u32 %v9430, %v9426
        %v9432 = vrot.slane %v9431, 4
        %v9434 = vshll.u32 %v9095, 16
        %v9436 = vrot.slane %v9434, 5
        %v9437 = vsel %vm1941, %v9432, %v9436
        %v9439 = vshrl.u32 %v9096, 16
        %v9441 = vrot.slane %v9439, 4
        %v9442 = vshll.u32 %v9096, 16
        %v9444 = vrot.slane %v9442, 5
        %v9445 = vor.u32 %v9441, %v9444
        %v9446 = vrot.slane %v9445, 4
        %v9448 = vshll.u32 %v9097, 16
        %v9450 = vrot.slane %v9448, 5
        %v9451 = vsel %vm1941, %v9446, %v9450
        %v9452 = vshrl.u32 %v9097, 16
        %v9454 = vrot.slane %v9452, 4
        %v9455 = vor.u32 %v9454, %v9450
        %v9456 = vrot.slane %v9455, 4
        %v9458 = vshll.u32 %v9098, 16
        %v9460 = vrot.slane %v9458, 5
        %v9461 = vsel %vm1941, %v9456, %v9460
        %v9463 = vshrl.u32 %v9099, 16
        %v9465 = vrot.slane %v9463, 4
        %v9466 = vshll.u32 %v9099, 16
        %v9468 = vrot.slane %v9466, 5
        %v9469 = vor.u32 %v9465, %v9468
        %v9470 = vrot.slane %v9469, 4
        %v9472 = vshll.u32 %v9100, 16
        %v9474 = vrot.slane %v9472, 5
        %v9475 = vsel %vm1941, %v9470, %v9474
        %v9476 = vshrl.u32 %v9100, 16
        %v9478 = vrot.slane %v9476, 4
        %v9479 = vor.u32 %v9478, %v9474
        %v9480 = vrot.slane %v9479, 4
        %v9482 = vshll.u32 %v9101, 16
        %v9484 = vrot.slane %v9482, 5
        %v9485 = vsel %vm1941, %v9480, %v9484
        %v9486 = vld [vmem:[%s4 + $0x40] sm:$0xf]
        %v9487 = vld [vmem:[%s4 + $0x44] sm:$0xf]
        %v9488 = vld [vmem:[%s4 + $0x48] sm:$0xf]
        %v9489 = vld [vmem:[%s4 + $0x4c] sm:$0xf]
        %v9490 = vunpack.c.l.b16 %v9115
        %v9491 = vunpack.c.l.b16 %v9125
        %v9492 = vunpack.c.l.b16 %v9139
        %v9493 = vunpack.c.l.b16 %v9149
        %v9494 = vunpack.c.l.b16 %v9163
        %v9495 = vunpack.c.l.b16 %v9173
        %v9496 = vunpack.c.l.b16 %v9187
        %v9497 = vunpack.c.l.b16 %v9197
        %v9498 = vunpack.c.l.b16 %v9211
        %v9499 = vunpack.c.l.b16 %v9221
        %v9500 = vunpack.c.l.b16 %v9235
        %v9501 = vunpack.c.l.b16 %v9245
        %v9502 = vunpack.c.l.b16 %v9259
        %v9503 = vunpack.c.l.b16 %v9269
        %v9504 = vunpack.c.l.b16 %v9283
        %v9505 = vunpack.c.l.b16 %v9293
        %v9506 = vunpack.c.l.b16 %v9307
        %v9507 = vunpack.c.l.b16 %v9317
        %v9508 = vunpack.c.l.b16 %v9331
        %v9509 = vunpack.c.l.b16 %v9341
        %v9510 = vunpack.c.l.b16 %v9355
        %v9511 = vunpack.c.l.b16 %v9365
        %v9512 = vunpack.c.l.b16 %v9379
        %v9513 = vunpack.c.l.b16 %v9389
        %v9514 = vunpack.c.l.b16 %v9403
        %v9515 = vunpack.c.l.b16 %v9413
        %v9516 = vunpack.c.l.b16 %v9427
        %v9517 = vunpack.c.l.b16 %v9437
        %v9518 = vunpack.c.l.b16 %v9451
        %v9519 = vunpack.c.l.b16 %v9461
        %v9520 = vunpack.c.l.b16 %v9475
        %v9521 = vunpack.c.l.b16 %v9485
        %v9522 = vpack.c.b16 %v9491, %v9490
        %v9523 = vpack.c.b16 %v9493, %v9492
        %v9524 = vpack.c.b16 %v9495, %v9494
        %v9525 = vpack.c.b16 %v9497, %v9496
        %v9526 = vpack.c.b16 %v9499, %v9498
        %v9527 = vpack.c.b16 %v9501, %v9500
        %v9528 = vpack.c.b16 %v9503, %v9502
        %v9529 = vpack.c.b16 %v9505, %v9504
        %v9530 = vpack.c.b16 %v9507, %v9506
        %v9531 = vpack.c.b16 %v9509, %v9508
        %v9532 = vpack.c.b16 %v9511, %v9510
        %v9533 = vpack.c.b16 %v9513, %v9512
        %v9534 = vpack.c.b16 %v9515, %v9514
        %v9535 = vpack.c.b16 %v9517, %v9516
        %v9536 = vpack.c.b16 %v9519, %v9518
        %v9537 = vpack.c.b16 %v9521, %v9520
        %v9542 = vunpack.c.l.b16 %v9486
        %v9543 = vunpack.c.l.b16 %v9487
        %v9544 = vunpack.c.l.b16 %v9488
        %v9545 = vunpack.c.l.b16 %v9489
        %v9546 = vpack.c.b16 %v9543, %v9542
        %v9547 = vpack.c.b16 %v9545, %v9544
        %v9551 = vsel %vm2390, %v9522, 0
        %v9554 = vsel %vm2390, %v9523, 0
        %v9557 = vsel %vm2390, %v9524, 0
        %v9560 = vsel %vm2390, %v9525, 0
        %v9563 = vsel %vm2390, %v9526, 0
        %v9566 = vsel %vm2390, %v9527, 0
        %v9569 = vsel %vm2390, %v9528, 0
        %v9572 = vsel %vm2390, %v9529, 0
        %v9575 = vsel %vm2390, %v9530, 0
        %v9578 = vsel %vm2390, %v9531, 0
        %v9581 = vsel %vm2390, %v9532, 0
        %v9584 = vsel %vm2390, %v9533, 0
        %v9587 = vsel %vm2390, %v9534, 0
        %v9590 = vsel %vm2390, %v9535, 0
        %v9593 = vsel %vm2390, %v9536, 0
        %v9596 = vsel %vm2390, %v9537, 0
        %9598 = vmatprep.subr.bf16.mxu0 0
        %9599 = vmatpush1.bf16.msra.mxu0 0
        %9600 = vmatprep.subr.bf16.mxu0 0
        %9601 = vmatpush1.bf16.msra.mxu0 0
        %9602 = vmatprep.subr.bf16.mxu0 0
        %9603 = vmatpush1.bf16.msra.mxu0 0
        %9604 = vmatprep.subr.bf16.mxu0 0
        %9605 = vmatpush1.bf16.msra.mxu0 0
        %9606 = vmatprep.subr.bf16.mxu0 0
        %9607 = vmatpush1.bf16.msra.mxu0 0
        %9608 = vmatprep.subr.bf16.mxu0 0
        %9609 = vmatpush1.bf16.msra.mxu0 0
        %9610 = vmatprep.subr.bf16.mxu0 0
        %9611 = vmatpush1.bf16.msra.mxu0 %v9547
        %9612 = vmatprep.subr.bf16.mxu0 0
        %9613 = vmatpush1.bf16.msra.mxu0 %v9546
        %9614 = vmatprep.subr.bf16.mxu0 0
        %9615 = vmatpush2.bf16.msra.mxu0 0
        %9616 = vmatprep.subr.bf16.mxu0 0
        %9617 = vmatpush2.bf16.msra.mxu0 0
        %9618 = vmatprep.subr.bf16.mxu0 0
        %9619 = vmatpush2.bf16.msra.mxu0 0
        %9620 = vmatprep.subr.bf16.mxu0 0
        %9621 = vmatpush2.bf16.msra.mxu0 0
        %9622 = vmatprep.subr.bf16.mxu0 0
        %9623 = vmatpush2.bf16.msra.mxu0 0
        %9624 = vmatprep.subr.bf16.mxu0 0
        %9625 = vmatpush2.bf16.msra.mxu0 0
        %9626 = vmatprep.subr.bf16.mxu0 0
        %9627 = vmatpush2.bf16.msra.mxu0 0
        %9628 = vmatprep.subr.bf16.mxu0 0
        %9629 = vmatpush2.bf16.msra.mxu0 0
        %9630 = vmatprep.mubr.bf16.mxu0 0
        %9631 = vmatmul.mubr.bf16.gmra.mxu0 %v9551
        %v9632 = vpop.f32.mrf.mxu0
        %v9633 = vadd.f32 0.0, %v9632
        %v9634 = vpop.f32.mrf.mxu0
        %v9635 = vpop.f32.mrf.mxu0
        %v9636 = vadd.f32 0.0, %v9635
        %v9637 = vpop.f32.mrf.mxu0
        %9638 = vmatprep.mubr.bf16.mxu0 0
        %9639 = vmatmul.mubr.bf16.gmra.mxu0 %v9554
        %v9640 = vpop.f32.mrf.mxu0
        %v9641 = vadd.f32 0.0, %v9640
        %v9642 = vpop.f32.mrf.mxu0
        %v9643 = vpop.f32.mrf.mxu0
        %v9644 = vadd.f32 0.0, %v9643
        %v9645 = vpop.f32.mrf.mxu0
        %9646 = vmatprep.mubr.bf16.mxu0 0
        %9647 = vmatmul.mubr.bf16.gmra.mxu0 %v9557
        %v9648 = vpop.f32.mrf.mxu0
        %v9649 = vadd.f32 0.0, %v9648
        %v9650 = vpop.f32.mrf.mxu0
        %v9651 = vpop.f32.mrf.mxu0
        %v9652 = vadd.f32 0.0, %v9651
        %v9653 = vpop.f32.mrf.mxu0
        %9654 = vmatprep.mubr.bf16.mxu0 0
        %9655 = vmatmul.mubr.bf16.gmra.mxu0 %v9560
        %v9656 = vpop.f32.mrf.mxu0
        %v9657 = vadd.f32 0.0, %v9656
        %v9658 = vpop.f32.mrf.mxu0
        %v9659 = vpop.f32.mrf.mxu0
        %v9660 = vadd.f32 0.0, %v9659
        %v9661 = vpop.f32.mrf.mxu0
        %9662 = vmatprep.mubr.bf16.mxu0 0
        %9663 = vmatmul.mubr.bf16.gmra.mxu0 %v9563
        %v9664 = vpop.f32.mrf.mxu0
        %v9665 = vadd.f32 0.0, %v9664
        %v9666 = vpop.f32.mrf.mxu0
        %v9667 = vpop.f32.mrf.mxu0
        %v9668 = vadd.f32 0.0, %v9667
        %v9669 = vpop.f32.mrf.mxu0
        %9670 = vmatprep.mubr.bf16.mxu0 0
        %9671 = vmatmul.mubr.bf16.gmra.mxu0 %v9566
        %v9672 = vpop.f32.mrf.mxu0
        %v9673 = vadd.f32 0.0, %v9672
        %v9674 = vpop.f32.mrf.mxu0
        %v9675 = vpop.f32.mrf.mxu0
        %v9676 = vadd.f32 0.0, %v9675
        %v9677 = vpop.f32.mrf.mxu0
        %9678 = vmatprep.mubr.bf16.mxu0 0
        %9679 = vmatmul.mubr.bf16.gmra.mxu0 %v9569
        %v9680 = vpop.f32.mrf.mxu0
        %v9681 = vadd.f32 0.0, %v9680
        %v9682 = vpop.f32.mrf.mxu0
        %v9683 = vpop.f32.mrf.mxu0
        %v9684 = vadd.f32 0.0, %v9683
        %v9685 = vpop.f32.mrf.mxu0
        %9686 = vmatprep.mubr.bf16.mxu0 0
        %9687 = vmatmul.mubr.bf16.gmra.mxu0 %v9572
        %v9688 = vpop.f32.mrf.mxu0
        %v9689 = vadd.f32 0.0, %v9688
        %v9690 = vpop.f32.mrf.mxu0
        %v9691 = vpop.f32.mrf.mxu0
        %v9692 = vadd.f32 0.0, %v9691
        %v9693 = vpop.f32.mrf.mxu0
        %9694 = vmatprep.mubr.bf16.mxu0 0
        %9695 = vmatmul.mubr.bf16.gmra.mxu0 %v9575
        %v9696 = vpop.f32.mrf.mxu0
        %v9697 = vadd.f32 0.0, %v9696
        %v9698 = vpop.f32.mrf.mxu0
        %v9699 = vpop.f32.mrf.mxu0
        %v9700 = vadd.f32 0.0, %v9699
        %v9701 = vpop.f32.mrf.mxu0
        %9702 = vmatprep.mubr.bf16.mxu0 0
        %9703 = vmatmul.mubr.bf16.gmra.mxu0 %v9578
        %v9704 = vpop.f32.mrf.mxu0
        %v9705 = vadd.f32 0.0, %v9704
        %v9706 = vpop.f32.mrf.mxu0
        %v9707 = vpop.f32.mrf.mxu0
        %v9708 = vadd.f32 0.0, %v9707
        %v9709 = vpop.f32.mrf.mxu0
        %9710 = vmatprep.mubr.bf16.mxu0 0
        %9711 = vmatmul.mubr.bf16.gmra.mxu0 %v9581
        %v9712 = vpop.f32.mrf.mxu0
        %v9713 = vadd.f32 0.0, %v9712
        %v9714 = vpop.f32.mrf.mxu0
        %v9715 = vpop.f32.mrf.mxu0
        %v9716 = vadd.f32 0.0, %v9715
        %v9717 = vpop.f32.mrf.mxu0
        %9718 = vmatprep.mubr.bf16.mxu0 0
        %9719 = vmatmul.mubr.bf16.gmra.mxu0 %v9584
        %v9720 = vpop.f32.mrf.mxu0
        %v9721 = vadd.f32 0.0, %v9720
        %v9722 = vpop.f32.mrf.mxu0
        %v9723 = vpop.f32.mrf.mxu0
        %v9724 = vadd.f32 0.0, %v9723
        %v9725 = vpop.f32.mrf.mxu0
        %9726 = vmatprep.mubr.bf16.mxu0 0
        %9727 = vmatmul.mubr.bf16.gmra.mxu0 %v9587
        %v9728 = vpop.f32.mrf.mxu0
        %v9729 = vadd.f32 0.0, %v9728
        %v9730 = vpop.f32.mrf.mxu0
        %v9731 = vpop.f32.mrf.mxu0
        %v9732 = vadd.f32 0.0, %v9731
        %v9733 = vpop.f32.mrf.mxu0
        %9734 = vmatprep.mubr.bf16.mxu0 0
        %9735 = vmatmul.mubr.bf16.gmra.mxu0 %v9590
        %v9736 = vpop.f32.mrf.mxu0
        %v9737 = vadd.f32 0.0, %v9736
        %v9738 = vpop.f32.mrf.mxu0
        %v9739 = vpop.f32.mrf.mxu0
        %v9740 = vadd.f32 0.0, %v9739
        %v9741 = vpop.f32.mrf.mxu0
        %9742 = vmatprep.mubr.bf16.mxu0 0
        %9743 = vmatmul.mubr.bf16.gmra.mxu0 %v9593
        %v9744 = vpop.f32.mrf.mxu0
        %v9745 = vadd.f32 0.0, %v9744
        %v9746 = vpop.f32.mrf.mxu0
        %v9747 = vpop.f32.mrf.mxu0
        %v9748 = vadd.f32 0.0, %v9747
        %v9749 = vpop.f32.mrf.mxu0
        %9750 = vmatprep.mubr.bf16.mxu0 0
        %9751 = vmatmul.mubr.bf16.gmra.mxu0 %v9596
        %v9752 = vpop.f32.mrf.mxu0
        %v9753 = vadd.f32 0.0, %v9752
        %v9754 = vpop.f32.mrf.mxu0
        %v9755 = vpop.f32.mrf.mxu0
        %v9756 = vadd.f32 0.0, %v9755
        %v9757 = vpop.f32.mrf.mxu0
        %9758 = vdwg.mxu0
        %v9759 = vadd.f32 %v9022, %v9633
        %v9760 = vadd.f32 %v9023, %v9636
        %v9761 = vadd.f32 %v9024, %v9641
        %v9762 = vadd.f32 %v9025, %v9644
        %v9763 = vadd.f32 %v9026, %v9649
        %v9764 = vadd.f32 %v9027, %v9652
        %v9765 = vadd.f32 %v9028, %v9657
        %v9766 = vadd.f32 %v9029, %v9660
        %v9767 = vadd.f32 %v9030, %v9665
        %v9768 = vadd.f32 %v9031, %v9668
        %v9769 = vadd.f32 %v9032, %v9673
        %v9770 = vadd.f32 %v9033, %v9676
        %v9771 = vadd.f32 %v9034, %v9681
        %v9772 = vadd.f32 %v9035, %v9684
        %v9773 = vadd.f32 %v9036, %v9689
        %v9774 = vadd.f32 %v9037, %v9692
        %v9775 = vadd.f32 %v9038, %v9697
        %v9776 = vadd.f32 %v9039, %v9700
        %v9777 = vadd.f32 %v9040, %v9705
        %v9778 = vadd.f32 %v9041, %v9708
        %v9779 = vadd.f32 %v9042, %v9713
        %v9780 = vadd.f32 %v9043, %v9716
        %v9781 = vadd.f32 %v9044, %v9721
        %v9782 = vadd.f32 %v9045, %v9724
        %v9783 = vadd.f32 %v9046, %v9729
        %v9784 = vadd.f32 %v9047, %v9732
        %v9785 = vadd.f32 %v9048, %v9737
        %v9786 = vadd.f32 %v9049, %v9740
        %v9787 = vadd.f32 %v9050, %v9745
        %v9788 = vadd.f32 %v9051, %v9748
        %v9789 = vadd.f32 %v9052, %v9753
        %v9790 = vadd.f32 %v9053, %v9756
        %v9791 = vld [vmem:[%s7095] sm:$0xe]
        %v9792 = vld [vmem:[%s7095 + $0xc] sm:$0xe]
        %v9793 = vld [vmem:[%s7095 + $0x18] sm:$0xe]
        %v9794 = vld [vmem:[%s7095 + $0x24] sm:$0xe]
        %v9795 = vld [vmem:[%s7095 + $0x30] sm:$0xe]
        %v9796 = vld [vmem:[%s7095 + $0x3c] sm:$0xe]
        %v9797 = vld [vmem:[%s7095 + $0x48] sm:$0xe]
        %v9798 = vld [vmem:[%s7095 + $0x54] sm:$0xe]
        %v9799 = vld [vmem:[%s7095 + $0x60] sm:$0xe]
        %v9800 = vld [vmem:[%s7095 + $0x6c] sm:$0xe]
        %v9801 = vld [vmem:[%s7095 + $0x78] sm:$0xe]
        %v9802 = vld [vmem:[%s7095 + $0x84] sm:$0xe]
        %v9803 = vld [vmem:[%s7095 + $0x90] sm:$0xe]
        %v9804 = vld [vmem:[%s7095 + $0x9c] sm:$0xe]
        %v9805 = vld [vmem:[%s7095 + $0xa8] sm:$0xe]
        %v9806 = vld [vmem:[%s7095 + $0xb4] sm:$0xe]
        %v9855 = vrot.slane %v9791, 5
        %v9856 = vrot.slane %v9855, 4
        %v9857 = vrot.slane %v9055, 5
        %v9858 = vsel %vm2951, %v9856, %v9857
        %v9859 = vrot.slane %v9857, 4
        %v9860 = vrot.slane %v9056, 5
        %v9861 = vsel %vm2951, %v9859, %v9860
        %v9862 = vrot.slane %v9792, 5
        %v9863 = vrot.slane %v9862, 4
        %v9864 = vrot.slane %v9058, 5
        %v9865 = vsel %vm2951, %v9863, %v9864
        %v9866 = vrot.slane %v9864, 4
        %v9867 = vrot.slane %v9059, 5
        %v9868 = vsel %vm2951, %v9866, %v9867
        %v9869 = vrot.slane %v9793, 5
        %v9870 = vrot.slane %v9869, 4
        %v9871 = vrot.slane %v9061, 5
        %v9872 = vsel %vm2951, %v9870, %v9871
        %v9873 = vrot.slane %v9871, 4
        %v9874 = vrot.slane %v9062, 5
        %v9875 = vsel %vm2951, %v9873, %v9874
        %v9876 = vrot.slane %v9794, 5
        %v9877 = vrot.slane %v9876, 4
        %v9878 = vrot.slane %v9064, 5
        %v9879 = vsel %vm2951, %v9877, %v9878
        %v9880 = vrot.slane %v9878, 4
        %v9881 = vrot.slane %v9065, 5
        %v9882 = vsel %vm2951, %v9880, %v9881
        %v9883 = vrot.slane %v9795, 5
        %v9884 = vrot.slane %v9883, 4
        %v9885 = vrot.slane %v9067, 5
        %v9886 = vsel %vm2951, %v9884, %v9885
        %v9887 = vrot.slane %v9885, 4
        %v9888 = vrot.slane %v9068, 5
        %v9889 = vsel %vm2951, %v9887, %v9888
        %v9890 = vrot.slane %v9796, 5
        %v9891 = vrot.slane %v9890, 4
        %v9892 = vrot.slane %v9070, 5
        %v9893 = vsel %vm2951, %v9891, %v9892
        %v9894 = vrot.slane %v9892, 4
        %v9895 = vrot.slane %v9071, 5
        %v9896 = vsel %vm2951, %v9894, %v9895
        %v9897 = vrot.slane %v9797, 5
        %v9898 = vrot.slane %v9897, 4
        %v9899 = vrot.slane %v9073, 5
        %v9900 = vsel %vm2951, %v9898, %v9899
        %v9901 = vrot.slane %v9899, 4
        %v9902 = vrot.slane %v9074, 5
        %v9903 = vsel %vm2951, %v9901, %v9902
        %v9904 = vrot.slane %v9798, 5
        %v9905 = vrot.slane %v9904, 4
        %v9906 = vrot.slane %v9076, 5
        %v9907 = vsel %vm2951, %v9905, %v9906
        %v9908 = vrot.slane %v9906, 4
        %v9909 = vrot.slane %v9077, 5
        %v9910 = vsel %vm2951, %v9908, %v9909
        %v9911 = vrot.slane %v9799, 5
        %v9912 = vrot.slane %v9911, 4
        %v9913 = vrot.slane %v9079, 5
        %v9914 = vsel %vm2951, %v9912, %v9913
        %v9915 = vrot.slane %v9913, 4
        %v9916 = vrot.slane %v9080, 5
        %v9917 = vsel %vm2951, %v9915, %v9916
        %v9918 = vrot.slane %v9800, 5
        %v9919 = vrot.slane %v9918, 4
        %v9920 = vrot.slane %v9082, 5
        %v9921 = vsel %vm2951, %v9919, %v9920
        %v9922 = vrot.slane %v9920, 4
        %v9923 = vrot.slane %v9083, 5
        %v9924 = vsel %vm2951, %v9922, %v9923
        %v9925 = vrot.slane %v9801, 5
        %v9926 = vrot.slane %v9925, 4
        %v9927 = vrot.slane %v9085, 5
        %v9928 = vsel %vm2951, %v9926, %v9927
        %v9929 = vrot.slane %v9927, 4
        %v9930 = vrot.slane %v9086, 5
        %v9931 = vsel %vm2951, %v9929, %v9930
        %v9932 = vrot.slane %v9802, 5
        %v9933 = vrot.slane %v9932, 4
        %v9934 = vrot.slane %v9088, 5
        %v9935 = vsel %vm2951, %v9933, %v9934
        %v9936 = vrot.slane %v9934, 4
        %v9937 = vrot.slane %v9089, 5
        %v9938 = vsel %vm2951, %v9936, %v9937
        %v9939 = vrot.slane %v9803, 5
        %v9940 = vrot.slane %v9939, 4
        %v9941 = vrot.slane %v9091, 5
        %v9942 = vsel %vm2951, %v9940, %v9941
        %v9943 = vrot.slane %v9941, 4
        %v9944 = vrot.slane %v9092, 5
        %v9945 = vsel %vm2951, %v9943, %v9944
        %v9946 = vrot.slane %v9804, 5
        %v9947 = vrot.slane %v9946, 4
        %v9948 = vrot.slane %v9094, 5
        %v9949 = vsel %vm2951, %v9947, %v9948
        %v9950 = vrot.slane %v9948, 4
        %v9951 = vrot.slane %v9095, 5
        %v9952 = vsel %vm2951, %v9950, %v9951
        %v9953 = vrot.slane %v9805, 5
        %v9954 = vrot.slane %v9953, 4
        %v9955 = vrot.slane %v9097, 5
        %v9956 = vsel %vm2951, %v9954, %v9955
        %v9957 = vrot.slane %v9955, 4
        %v9958 = vrot.slane %v9098, 5
        %v9959 = vsel %vm2951, %v9957, %v9958
        %v9960 = vrot.slane %v9806, 5
        %v9961 = vrot.slane %v9960, 4
        %v9962 = vrot.slane %v9100, 5
        %v9963 = vsel %vm2951, %v9961, %v9962
        %v9964 = vrot.slane %v9962, 4
        %v9965 = vrot.slane %v9101, 5
        %v9966 = vsel %vm2951, %v9964, %v9965
        %v9967 = vld [vmem:[%s4 + $0x50] sm:$0xf]
        %v9968 = vld [vmem:[%s4 + $0x54] sm:$0xf]
        %v9969 = vld [vmem:[%s4 + $0x58] sm:$0xf]
        %v9970 = vld [vmem:[%s4 + $0x5c] sm:$0xf]
        %v9971 = vunpack.c.l.b16 %v9858
        %v9972 = vunpack.c.l.b16 %v9861
        %v9973 = vunpack.c.l.b16 %v9865
        %v9974 = vunpack.c.l.b16 %v9868
        %v9975 = vunpack.c.l.b16 %v9872
        %v9976 = vunpack.c.l.b16 %v9875
        %v9977 = vunpack.c.l.b16 %v9879
        %v9978 = vunpack.c.l.b16 %v9882
        %v9979 = vunpack.c.l.b16 %v9886
        %v9980 = vunpack.c.l.b16 %v9889
        %v9981 = vunpack.c.l.b16 %v9893
        %v9982 = vunpack.c.l.b16 %v9896
        %v9983 = vunpack.c.l.b16 %v9900
        %v9984 = vunpack.c.l.b16 %v9903
        %v9985 = vunpack.c.l.b16 %v9907
        %v9986 = vunpack.c.l.b16 %v9910
        %v9987 = vunpack.c.l.b16 %v9914
        %v9988 = vunpack.c.l.b16 %v9917
        %v9989 = vunpack.c.l.b16 %v9921
        %v9990 = vunpack.c.l.b16 %v9924
        %v9991 = vunpack.c.l.b16 %v9928
        %v9992 = vunpack.c.l.b16 %v9931
        %v9993 = vunpack.c.l.b16 %v9935
        %v9994 = vunpack.c.l.b16 %v9938
        %v9995 = vunpack.c.l.b16 %v9942
        %v9996 = vunpack.c.l.b16 %v9945
        %v9997 = vunpack.c.l.b16 %v9949
        %v9998 = vunpack.c.l.b16 %v9952
        %v9999 = vunpack.c.l.b16 %v9956
        %v10000 = vunpack.c.l.b16 %v9959
        %v10001 = vunpack.c.l.b16 %v9963
        %v10002 = vunpack.c.l.b16 %v9966
        %v10003 = vpack.c.b16 %v9972, %v9971
        %v10004 = vpack.c.b16 %v9974, %v9973
        %v10005 = vpack.c.b16 %v9976, %v9975
        %v10006 = vpack.c.b16 %v9978, %v9977
        %v10007 = vpack.c.b16 %v9980, %v9979
        %v10008 = vpack.c.b16 %v9982, %v9981
        %v10009 = vpack.c.b16 %v9984, %v9983
        %v10010 = vpack.c.b16 %v9986, %v9985
        %v10011 = vpack.c.b16 %v9988, %v9987
        %v10012 = vpack.c.b16 %v9990, %v9989
        %v10013 = vpack.c.b16 %v9992, %v9991
        %v10014 = vpack.c.b16 %v9994, %v9993
        %v10015 = vpack.c.b16 %v9996, %v9995
        %v10016 = vpack.c.b16 %v9998, %v9997
        %v10017 = vpack.c.b16 %v10000, %v9999
        %v10018 = vpack.c.b16 %v10002, %v10001
        %v10023 = vunpack.c.l.b16 %v9967
        %v10024 = vunpack.c.l.b16 %v9968
        %v10025 = vunpack.c.l.b16 %v9969
        %v10026 = vunpack.c.l.b16 %v9970
        %v10027 = vpack.c.b16 %v10024, %v10023
        %v10028 = vpack.c.b16 %v10026, %v10025
        %v10032 = vsel %vm2390, %v10003, 0
        %v10035 = vsel %vm2390, %v10004, 0
        %v10038 = vsel %vm2390, %v10005, 0
        %v10041 = vsel %vm2390, %v10006, 0
        %v10044 = vsel %vm2390, %v10007, 0
        %v10047 = vsel %vm2390, %v10008, 0
        %v10050 = vsel %vm2390, %v10009, 0
        %v10053 = vsel %vm2390, %v10010, 0
        %v10056 = vsel %vm2390, %v10011, 0
        %v10059 = vsel %vm2390, %v10012, 0
        %v10062 = vsel %vm2390, %v10013, 0
        %v10065 = vsel %vm2390, %v10014, 0
        %v10068 = vsel %vm2390, %v10015, 0
        %v10071 = vsel %vm2390, %v10016, 0
        %v10074 = vsel %vm2390, %v10017, 0
        %v10077 = vsel %vm2390, %v10018, 0
        %10079 = vmatprep.subr.bf16.mxu0 0
        %10080 = vmatpush1.bf16.msra.mxu0 0
        %10081 = vmatprep.subr.bf16.mxu0 0
        %10082 = vmatpush1.bf16.msra.mxu0 0
        %10083 = vmatprep.subr.bf16.mxu0 0
        %10084 = vmatpush1.bf16.msra.mxu0 0
        %10085 = vmatprep.subr.bf16.mxu0 0
        %10086 = vmatpush1.bf16.msra.mxu0 0
        %10087 = vmatprep.subr.bf16.mxu0 0
        %10088 = vmatpush1.bf16.msra.mxu0 0
        %10089 = vmatprep.subr.bf16.mxu0 0
        %10090 = vmatpush1.bf16.msra.mxu0 0
        %10091 = vmatprep.subr.bf16.mxu0 0
        %10092 = vmatpush1.bf16.msra.mxu0 %v10028
        %10093 = vmatprep.subr.bf16.mxu0 0
        %10094 = vmatpush1.bf16.msra.mxu0 %v10027
        %10095 = vmatprep.subr.bf16.mxu0 0
        %10096 = vmatpush2.bf16.msra.mxu0 0
        %10097 = vmatprep.subr.bf16.mxu0 0
        %10098 = vmatpush2.bf16.msra.mxu0 0
        %10099 = vmatprep.subr.bf16.mxu0 0
        %10100 = vmatpush2.bf16.msra.mxu0 0
        %10101 = vmatprep.subr.bf16.mxu0 0
        %10102 = vmatpush2.bf16.msra.mxu0 0
        %10103 = vmatprep.subr.bf16.mxu0 0
        %10104 = vmatpush2.bf16.msra.mxu0 0
        %10105 = vmatprep.subr.bf16.mxu0 0
        %10106 = vmatpush2.bf16.msra.mxu0 0
        %10107 = vmatprep.subr.bf16.mxu0 0
        %10108 = vmatpush2.bf16.msra.mxu0 0
        %10109 = vmatprep.subr.bf16.mxu0 0
        %10110 = vmatpush2.bf16.msra.mxu0 0
        %10111 = vmatprep.mubr.bf16.mxu0 0
        %10112 = vmatmul.mubr.bf16.gmra.mxu0 %v10032
        %v10113 = vpop.f32.mrf.mxu0
        %v10114 = vadd.f32 0.0, %v10113
        %v10115 = vpop.f32.mrf.mxu0
        %v10116 = vpop.f32.mrf.mxu0
        %v10117 = vadd.f32 0.0, %v10116
        %v10118 = vpop.f32.mrf.mxu0
        %10119 = vmatprep.mubr.bf16.mxu0 0
        %10120 = vmatmul.mubr.bf16.gmra.mxu0 %v10035
        %v10121 = vpop.f32.mrf.mxu0
        %v10122 = vadd.f32 0.0, %v10121
        %v10123 = vpop.f32.mrf.mxu0
        %v10124 = vpop.f32.mrf.mxu0
        %v10125 = vadd.f32 0.0, %v10124
        %v10126 = vpop.f32.mrf.mxu0
        %10127 = vmatprep.mubr.bf16.mxu0 0
        %10128 = vmatmul.mubr.bf16.gmra.mxu0 %v10038
        %v10129 = vpop.f32.mrf.mxu0
        %v10130 = vadd.f32 0.0, %v10129
        %v10131 = vpop.f32.mrf.mxu0
        %v10132 = vpop.f32.mrf.mxu0
        %v10133 = vadd.f32 0.0, %v10132
        %v10134 = vpop.f32.mrf.mxu0
        %10135 = vmatprep.mubr.bf16.mxu0 0
        %10136 = vmatmul.mubr.bf16.gmra.mxu0 %v10041
        %v10137 = vpop.f32.mrf.mxu0
        %v10138 = vadd.f32 0.0, %v10137
        %v10139 = vpop.f32.mrf.mxu0
        %v10140 = vpop.f32.mrf.mxu0
        %v10141 = vadd.f32 0.0, %v10140
        %v10142 = vpop.f32.mrf.mxu0
        %10143 = vmatprep.mubr.bf16.mxu0 0
        %10144 = vmatmul.mubr.bf16.gmra.mxu0 %v10044
        %v10145 = vpop.f32.mrf.mxu0
        %v10146 = vadd.f32 0.0, %v10145
        %v10147 = vpop.f32.mrf.mxu0
        %v10148 = vpop.f32.mrf.mxu0
        %v10149 = vadd.f32 0.0, %v10148
        %v10150 = vpop.f32.mrf.mxu0
        %10151 = vmatprep.mubr.bf16.mxu0 0
        %10152 = vmatmul.mubr.bf16.gmra.mxu0 %v10047
        %v10153 = vpop.f32.mrf.mxu0
        %v10154 = vadd.f32 0.0, %v10153
        %v10155 = vpop.f32.mrf.mxu0
        %v10156 = vpop.f32.mrf.mxu0
        %v10157 = vadd.f32 0.0, %v10156
        %v10158 = vpop.f32.mrf.mxu0
        %10159 = vmatprep.mubr.bf16.mxu0 0
        %10160 = vmatmul.mubr.bf16.gmra.mxu0 %v10050
        %v10161 = vpop.f32.mrf.mxu0
        %v10162 = vadd.f32 0.0, %v10161
        %v10163 = vpop.f32.mrf.mxu0
        %v10164 = vpop.f32.mrf.mxu0
        %v10165 = vadd.f32 0.0, %v10164
        %v10166 = vpop.f32.mrf.mxu0
        %10167 = vmatprep.mubr.bf16.mxu0 0
        %10168 = vmatmul.mubr.bf16.gmra.mxu0 %v10053
        %v10169 = vpop.f32.mrf.mxu0
        %v10170 = vadd.f32 0.0, %v10169
        %v10171 = vpop.f32.mrf.mxu0
        %v10172 = vpop.f32.mrf.mxu0
        %v10173 = vadd.f32 0.0, %v10172
        %v10174 = vpop.f32.mrf.mxu0
        %10175 = vmatprep.mubr.bf16.mxu0 0
        %10176 = vmatmul.mubr.bf16.gmra.mxu0 %v10056
        %v10177 = vpop.f32.mrf.mxu0
        %v10178 = vadd.f32 0.0, %v10177
        %v10179 = vpop.f32.mrf.mxu0
        %v10180 = vpop.f32.mrf.mxu0
        %v10181 = vadd.f32 0.0, %v10180
        %v10182 = vpop.f32.mrf.mxu0
        %10183 = vmatprep.mubr.bf16.mxu0 0
        %10184 = vmatmul.mubr.bf16.gmra.mxu0 %v10059
        %v10185 = vpop.f32.mrf.mxu0
        %v10186 = vadd.f32 0.0, %v10185
        %v10187 = vpop.f32.mrf.mxu0
        %v10188 = vpop.f32.mrf.mxu0
        %v10189 = vadd.f32 0.0, %v10188
        %v10190 = vpop.f32.mrf.mxu0
        %10191 = vmatprep.mubr.bf16.mxu0 0
        %10192 = vmatmul.mubr.bf16.gmra.mxu0 %v10062
        %v10193 = vpop.f32.mrf.mxu0
        %v10194 = vadd.f32 0.0, %v10193
        %v10195 = vpop.f32.mrf.mxu0
        %v10196 = vpop.f32.mrf.mxu0
        %v10197 = vadd.f32 0.0, %v10196
        %v10198 = vpop.f32.mrf.mxu0
        %10199 = vmatprep.mubr.bf16.mxu0 0
        %10200 = vmatmul.mubr.bf16.gmra.mxu0 %v10065
        %v10201 = vpop.f32.mrf.mxu0
        %v10202 = vadd.f32 0.0, %v10201
        %v10203 = vpop.f32.mrf.mxu0
        %v10204 = vpop.f32.mrf.mxu0
        %v10205 = vadd.f32 0.0, %v10204
        %v10206 = vpop.f32.mrf.mxu0
        %10207 = vmatprep.mubr.bf16.mxu0 0
        %10208 = vmatmul.mubr.bf16.gmra.mxu0 %v10068
        %v10209 = vpop.f32.mrf.mxu0
        %v10210 = vadd.f32 0.0, %v10209
        %v10211 = vpop.f32.mrf.mxu0
        %v10212 = vpop.f32.mrf.mxu0
        %v10213 = vadd.f32 0.0, %v10212
        %v10214 = vpop.f32.mrf.mxu0
        %10215 = vmatprep.mubr.bf16.mxu0 0
        %10216 = vmatmul.mubr.bf16.gmra.mxu0 %v10071
        %v10217 = vpop.f32.mrf.mxu0
        %v10218 = vadd.f32 0.0, %v10217
        %v10219 = vpop.f32.mrf.mxu0
        %v10220 = vpop.f32.mrf.mxu0
        %v10221 = vadd.f32 0.0, %v10220
        %v10222 = vpop.f32.mrf.mxu0
        %10223 = vmatprep.mubr.bf16.mxu0 0
        %10224 = vmatmul.mubr.bf16.gmra.mxu0 %v10074
        %v10225 = vpop.f32.mrf.mxu0
        %v10226 = vadd.f32 0.0, %v10225
        %v10227 = vpop.f32.mrf.mxu0
        %v10228 = vpop.f32.mrf.mxu0
        %v10229 = vadd.f32 0.0, %v10228
        %v10230 = vpop.f32.mrf.mxu0
        %10231 = vmatprep.mubr.bf16.mxu0 0
        %10232 = vmatmul.mubr.bf16.gmra.mxu0 %v10077
        %v10233 = vpop.f32.mrf.mxu0
        %v10234 = vadd.f32 0.0, %v10233
        %v10235 = vpop.f32.mrf.mxu0
        %v10236 = vpop.f32.mrf.mxu0
        %v10237 = vadd.f32 0.0, %v10236
        %v10238 = vpop.f32.mrf.mxu0
        %10239 = vdwg.mxu0
        %v10240 = vadd.f32 %v9759, %v10114
        %v10241 = vadd.f32 %v9760, %v10117
        %v10242 = vadd.f32 %v9761, %v10122
        %v10243 = vadd.f32 %v9762, %v10125
        %v10244 = vadd.f32 %v9763, %v10130
        %v10245 = vadd.f32 %v9764, %v10133
        %v10246 = vadd.f32 %v9765, %v10138
        %v10247 = vadd.f32 %v9766, %v10141
        %v10248 = vadd.f32 %v9767, %v10146
        %v10249 = vadd.f32 %v9768, %v10149
        %v10250 = vadd.f32 %v9769, %v10154
        %v10251 = vadd.f32 %v9770, %v10157
        %v10252 = vadd.f32 %v9771, %v10162
        %v10253 = vadd.f32 %v9772, %v10165
        %v10254 = vadd.f32 %v9773, %v10170
        %v10255 = vadd.f32 %v9774, %v10173
        %v10256 = vadd.f32 %v9775, %v10178
        %v10257 = vadd.f32 %v9776, %v10181
        %v10258 = vadd.f32 %v9777, %v10186
        %v10259 = vadd.f32 %v9778, %v10189
        %v10260 = vadd.f32 %v9779, %v10194
        %v10261 = vadd.f32 %v9780, %v10197
        %v10262 = vadd.f32 %v9781, %v10202
        %v10263 = vadd.f32 %v9782, %v10205
        %v10264 = vadd.f32 %v9783, %v10210
        %v10265 = vadd.f32 %v9784, %v10213
        %v10266 = vadd.f32 %v9785, %v10218
        %v10267 = vadd.f32 %v9786, %v10221
        %v10268 = vadd.f32 %v9787, %v10226
        %v10269 = vadd.f32 %v9788, %v10229
        %v10270 = vadd.f32 %v9789, %v10234
        %v10271 = vadd.f32 %v9790, %v10237
        %s10272 = scalar_lea.vmem [#allocation3], 24
        %v10273 = vld [vmem:[%s10272] sm:$0xf]
        %v10274 = vld [vmem:[%s10272 + $0x4] sm:$0xf]
        %v10275 = vld [vmem:[%s10272 + $0xc] sm:$0xf]
        %v10276 = vld [vmem:[%s10272 + $0x10] sm:$0xf]
        %v10277 = vld [vmem:[%s10272 + $0x18] sm:$0xf]
        %v10278 = vld [vmem:[%s10272 + $0x1c] sm:$0xf]
        %v10279 = vld [vmem:[%s10272 + $0x24] sm:$0xf]
        %v10280 = vld [vmem:[%s10272 + $0x28] sm:$0xf]
        %v10281 = vld [vmem:[%s10272 + $0x30] sm:$0xf]
        %v10282 = vld [vmem:[%s10272 + $0x34] sm:$0xf]
        %v10283 = vld [vmem:[%s10272 + $0x3c] sm:$0xf]
        %v10284 = vld [vmem:[%s10272 + $0x40] sm:$0xf]
        %v10285 = vld [vmem:[%s10272 + $0x48] sm:$0xf]
        %v10286 = vld [vmem:[%s10272 + $0x4c] sm:$0xf]
        %v10287 = vld [vmem:[%s10272 + $0x54] sm:$0xf]
        %v10288 = vld [vmem:[%s10272 + $0x58] sm:$0xf]
        %v10289 = vld [vmem:[%s10272 + $0x60] sm:$0xf]
        %v10290 = vld [vmem:[%s10272 + $0x64] sm:$0xf]
        %v10291 = vld [vmem:[%s10272 + $0x6c] sm:$0xf]
        %v10292 = vld [vmem:[%s10272 + $0x70] sm:$0xf]
        %v10293 = vld [vmem:[%s10272 + $0x78] sm:$0xf]
        %v10294 = vld [vmem:[%s10272 + $0x7c] sm:$0xf]
        %v10295 = vld [vmem:[%s10272 + $0x84] sm:$0xf]
        %v10296 = vld [vmem:[%s10272 + $0x88] sm:$0xf]
        %v10297 = vld [vmem:[%s10272 + $0x90] sm:$0xf]
        %v10298 = vld [vmem:[%s10272 + $0x94] sm:$0xf]
        %v10299 = vld [vmem:[%s10272 + $0x9c] sm:$0xf]
        %v10300 = vld [vmem:[%s10272 + $0xa0] sm:$0xf]
        %v10301 = vld [vmem:[%s10272 + $0xa8] sm:$0xf]
        %v10302 = vld [vmem:[%s10272 + $0xac] sm:$0xf]
        %v10303 = vld [vmem:[%s10272 + $0xb4] sm:$0xf]
        %v10304 = vld [vmem:[%s10272 + $0xb8] sm:$0xf]
        %v10305 = vld [vmem:[%s4 + $0x60] sm:$0xf]
        %v10306 = vld [vmem:[%s4 + $0x64] sm:$0xf]
        %v10307 = vld [vmem:[%s4 + $0x68] sm:$0xf]
        %v10308 = vld [vmem:[%s4 + $0x6c] sm:$0xf]
        %v10341 = vunpack.c.l.b16 %v10273
        %v10342 = vunpack.c.l.b16 %v10274
        %v10343 = vunpack.c.l.b16 %v10275
        %v10344 = vunpack.c.l.b16 %v10276
        %v10345 = vunpack.c.l.b16 %v10277
        %v10346 = vunpack.c.l.b16 %v10278
        %v10347 = vunpack.c.l.b16 %v10279
        %v10348 = vunpack.c.l.b16 %v10280
        %v10349 = vunpack.c.l.b16 %v10281
        %v10350 = vunpack.c.l.b16 %v10282
        %v10351 = vunpack.c.l.b16 %v10283
        %v10352 = vunpack.c.l.b16 %v10284
        %v10353 = vunpack.c.l.b16 %v10285
        %v10354 = vunpack.c.l.b16 %v10286
        %v10355 = vunpack.c.l.b16 %v10287
        %v10356 = vunpack.c.l.b16 %v10288
        %v10357 = vunpack.c.l.b16 %v10289
        %v10358 = vunpack.c.l.b16 %v10290
        %v10359 = vunpack.c.l.b16 %v10291
        %v10360 = vunpack.c.l.b16 %v10292
        %v10361 = vunpack.c.l.b16 %v10293
        %v10362 = vunpack.c.l.b16 %v10294
        %v10363 = vunpack.c.l.b16 %v10295
        %v10364 = vunpack.c.l.b16 %v10296
        %v10365 = vunpack.c.l.b16 %v10297
        %v10366 = vunpack.c.l.b16 %v10298
        %v10367 = vunpack.c.l.b16 %v10299
        %v10368 = vunpack.c.l.b16 %v10300
        %v10369 = vunpack.c.l.b16 %v10301
        %v10370 = vunpack.c.l.b16 %v10302
        %v10371 = vunpack.c.l.b16 %v10303
        %v10372 = vunpack.c.l.b16 %v10304
        %v10373 = vpack.c.b16 %v10342, %v10341
        %v10374 = vpack.c.b16 %v10344, %v10343
        %v10375 = vpack.c.b16 %v10346, %v10345
        %v10376 = vpack.c.b16 %v10348, %v10347
        %v10377 = vpack.c.b16 %v10350, %v10349
        %v10378 = vpack.c.b16 %v10352, %v10351
        %v10379 = vpack.c.b16 %v10354, %v10353
        %v10380 = vpack.c.b16 %v10356, %v10355
        %v10381 = vpack.c.b16 %v10358, %v10357
        %v10382 = vpack.c.b16 %v10360, %v10359
        %v10383 = vpack.c.b16 %v10362, %v10361
        %v10384 = vpack.c.b16 %v10364, %v10363
        %v10385 = vpack.c.b16 %v10366, %v10365
        %v10386 = vpack.c.b16 %v10368, %v10367
        %v10387 = vpack.c.b16 %v10370, %v10369
        %v10388 = vpack.c.b16 %v10372, %v10371
        %v10393 = vunpack.c.l.b16 %v10305
        %v10394 = vunpack.c.l.b16 %v10306
        %v10395 = vunpack.c.l.b16 %v10307
        %v10396 = vunpack.c.l.b16 %v10308
        %v10397 = vpack.c.b16 %v10394, %v10393
        %v10398 = vpack.c.b16 %v10396, %v10395
        %v10402 = vsel %vm2390, %v10373, 0
        %v10405 = vsel %vm2390, %v10374, 0
        %v10408 = vsel %vm2390, %v10375, 0
        %v10411 = vsel %vm2390, %v10376, 0
        %v10414 = vsel %vm2390, %v10377, 0
        %v10417 = vsel %vm2390, %v10378, 0
        %v10420 = vsel %vm2390, %v10379, 0
        %v10423 = vsel %vm2390, %v10380, 0
        %v10426 = vsel %vm2390, %v10381, 0
        %v10429 = vsel %vm2390, %v10382, 0
        %v10432 = vsel %vm2390, %v10383, 0
        %v10435 = vsel %vm2390, %v10384, 0
        %v10438 = vsel %vm2390, %v10385, 0
        %v10441 = vsel %vm2390, %v10386, 0
        %v10444 = vsel %vm2390, %v10387, 0
        %v10447 = vsel %vm2390, %v10388, 0
        %10449 = vmatprep.subr.bf16.mxu0 0
        %10450 = vmatpush1.bf16.msra.mxu0 0
        %10451 = vmatprep.subr.bf16.mxu0 0
        %10452 = vmatpush1.bf16.msra.mxu0 0
        %10453 = vmatprep.subr.bf16.mxu0 0
        %10454 = vmatpush1.bf16.msra.mxu0 0
        %10455 = vmatprep.subr.bf16.mxu0 0
        %10456 = vmatpush1.bf16.msra.mxu0 0
        %10457 = vmatprep.subr.bf16.mxu0 0
        %10458 = vmatpush1.bf16.msra.mxu0 0
        %10459 = vmatprep.subr.bf16.mxu0 0
        %10460 = vmatpush1.bf16.msra.mxu0 0
        %10461 = vmatprep.subr.bf16.mxu0 0
        %10462 = vmatpush1.bf16.msra.mxu0 %v10398
        %10463 = vmatprep.subr.bf16.mxu0 0
        %10464 = vmatpush1.bf16.msra.mxu0 %v10397
        %10465 = vmatprep.subr.bf16.mxu0 0
        %10466 = vmatpush2.bf16.msra.mxu0 0
        %10467 = vmatprep.subr.bf16.mxu0 0
        %10468 = vmatpush2.bf16.msra.mxu0 0
        %10469 = vmatprep.subr.bf16.mxu0 0
        %10470 = vmatpush2.bf16.msra.mxu0 0
        %10471 = vmatprep.subr.bf16.mxu0 0
        %10472 = vmatpush2.bf16.msra.mxu0 0
        %10473 = vmatprep.subr.bf16.mxu0 0
        %10474 = vmatpush2.bf16.msra.mxu0 0
        %10475 = vmatprep.subr.bf16.mxu0 0
        %10476 = vmatpush2.bf16.msra.mxu0 0
        %10477 = vmatprep.subr.bf16.mxu0 0
        %10478 = vmatpush2.bf16.msra.mxu0 0
        %10479 = vmatprep.subr.bf16.mxu0 0
        %10480 = vmatpush2.bf16.msra.mxu0 0
        %10481 = vmatprep.mubr.bf16.mxu0 0
        %10482 = vmatmul.mubr.bf16.gmra.mxu0 %v10402
        %v10483 = vpop.f32.mrf.mxu0
        %v10484 = vadd.f32 0.0, %v10483
        %v10485 = vpop.f32.mrf.mxu0
        %v10486 = vpop.f32.mrf.mxu0
        %v10487 = vadd.f32 0.0, %v10486
        %v10488 = vpop.f32.mrf.mxu0
        %10489 = vmatprep.mubr.bf16.mxu0 0
        %10490 = vmatmul.mubr.bf16.gmra.mxu0 %v10405
        %v10491 = vpop.f32.mrf.mxu0
        %v10492 = vadd.f32 0.0, %v10491
        %v10493 = vpop.f32.mrf.mxu0
        %v10494 = vpop.f32.mrf.mxu0
        %v10495 = vadd.f32 0.0, %v10494
        %v10496 = vpop.f32.mrf.mxu0
        %10497 = vmatprep.mubr.bf16.mxu0 0
        %10498 = vmatmul.mubr.bf16.gmra.mxu0 %v10408
        %v10499 = vpop.f32.mrf.mxu0
        %v10500 = vadd.f32 0.0, %v10499
        %v10501 = vpop.f32.mrf.mxu0
        %v10502 = vpop.f32.mrf.mxu0
        %v10503 = vadd.f32 0.0, %v10502
        %v10504 = vpop.f32.mrf.mxu0
        %10505 = vmatprep.mubr.bf16.mxu0 0
        %10506 = vmatmul.mubr.bf16.gmra.mxu0 %v10411
        %v10507 = vpop.f32.mrf.mxu0
        %v10508 = vadd.f32 0.0, %v10507
        %v10509 = vpop.f32.mrf.mxu0
        %v10510 = vpop.f32.mrf.mxu0
        %v10511 = vadd.f32 0.0, %v10510
        %v10512 = vpop.f32.mrf.mxu0
        %10513 = vmatprep.mubr.bf16.mxu0 0
        %10514 = vmatmul.mubr.bf16.gmra.mxu0 %v10414
        %v10515 = vpop.f32.mrf.mxu0
        %v10516 = vadd.f32 0.0, %v10515
        %v10517 = vpop.f32.mrf.mxu0
        %v10518 = vpop.f32.mrf.mxu0
        %v10519 = vadd.f32 0.0, %v10518
        %v10520 = vpop.f32.mrf.mxu0
        %10521 = vmatprep.mubr.bf16.mxu0 0
        %10522 = vmatmul.mubr.bf16.gmra.mxu0 %v10417
        %v10523 = vpop.f32.mrf.mxu0
        %v10524 = vadd.f32 0.0, %v10523
        %v10525 = vpop.f32.mrf.mxu0
        %v10526 = vpop.f32.mrf.mxu0
        %v10527 = vadd.f32 0.0, %v10526
        %v10528 = vpop.f32.mrf.mxu0
        %10529 = vmatprep.mubr.bf16.mxu0 0
        %10530 = vmatmul.mubr.bf16.gmra.mxu0 %v10420
        %v10531 = vpop.f32.mrf.mxu0
        %v10532 = vadd.f32 0.0, %v10531
        %v10533 = vpop.f32.mrf.mxu0
        %v10534 = vpop.f32.mrf.mxu0
        %v10535 = vadd.f32 0.0, %v10534
        %v10536 = vpop.f32.mrf.mxu0
        %10537 = vmatprep.mubr.bf16.mxu0 0
        %10538 = vmatmul.mubr.bf16.gmra.mxu0 %v10423
        %v10539 = vpop.f32.mrf.mxu0
        %v10540 = vadd.f32 0.0, %v10539
        %v10541 = vpop.f32.mrf.mxu0
        %v10542 = vpop.f32.mrf.mxu0
        %v10543 = vadd.f32 0.0, %v10542
        %v10544 = vpop.f32.mrf.mxu0
        %10545 = vmatprep.mubr.bf16.mxu0 0
        %10546 = vmatmul.mubr.bf16.gmra.mxu0 %v10426
        %v10547 = vpop.f32.mrf.mxu0
        %v10548 = vadd.f32 0.0, %v10547
        %v10549 = vpop.f32.mrf.mxu0
        %v10550 = vpop.f32.mrf.mxu0
        %v10551 = vadd.f32 0.0, %v10550
        %v10552 = vpop.f32.mrf.mxu0
        %10553 = vmatprep.mubr.bf16.mxu0 0
        %10554 = vmatmul.mubr.bf16.gmra.mxu0 %v10429
        %v10555 = vpop.f32.mrf.mxu0
        %v10556 = vadd.f32 0.0, %v10555
        %v10557 = vpop.f32.mrf.mxu0
        %v10558 = vpop.f32.mrf.mxu0
        %v10559 = vadd.f32 0.0, %v10558
        %v10560 = vpop.f32.mrf.mxu0
        %10561 = vmatprep.mubr.bf16.mxu0 0
        %10562 = vmatmul.mubr.bf16.gmra.mxu0 %v10432
        %v10563 = vpop.f32.mrf.mxu0
        %v10564 = vadd.f32 0.0, %v10563
        %v10565 = vpop.f32.mrf.mxu0
        %v10566 = vpop.f32.mrf.mxu0
        %v10567 = vadd.f32 0.0, %v10566
        %v10568 = vpop.f32.mrf.mxu0
        %10569 = vmatprep.mubr.bf16.mxu0 0
        %10570 = vmatmul.mubr.bf16.gmra.mxu0 %v10435
        %v10571 = vpop.f32.mrf.mxu0
        %v10572 = vadd.f32 0.0, %v10571
        %v10573 = vpop.f32.mrf.mxu0
        %v10574 = vpop.f32.mrf.mxu0
        %v10575 = vadd.f32 0.0, %v10574
        %v10576 = vpop.f32.mrf.mxu0
        %10577 = vmatprep.mubr.bf16.mxu0 0
        %10578 = vmatmul.mubr.bf16.gmra.mxu0 %v10438
        %v10579 = vpop.f32.mrf.mxu0
        %v10580 = vadd.f32 0.0, %v10579
        %v10581 = vpop.f32.mrf.mxu0
        %v10582 = vpop.f32.mrf.mxu0
        %v10583 = vadd.f32 0.0, %v10582
        %v10584 = vpop.f32.mrf.mxu0
        %10585 = vmatprep.mubr.bf16.mxu0 0
        %10586 = vmatmul.mubr.bf16.gmra.mxu0 %v10441
        %v10587 = vpop.f32.mrf.mxu0
        %v10588 = vadd.f32 0.0, %v10587
        %v10589 = vpop.f32.mrf.mxu0
        %v10590 = vpop.f32.mrf.mxu0
        %v10591 = vadd.f32 0.0, %v10590
        %v10592 = vpop.f32.mrf.mxu0
        %10593 = vmatprep.mubr.bf16.mxu0 0
        %10594 = vmatmul.mubr.bf16.gmra.mxu0 %v10444
        %v10595 = vpop.f32.mrf.mxu0
        %v10596 = vadd.f32 0.0, %v10595
        %v10597 = vpop.f32.mrf.mxu0
        %v10598 = vpop.f32.mrf.mxu0
        %v10599 = vadd.f32 0.0, %v10598
        %v10600 = vpop.f32.mrf.mxu0
        %10601 = vmatprep.mubr.bf16.mxu0 0
        %10602 = vmatmul.mubr.bf16.gmra.mxu0 %v10447
        %v10603 = vpop.f32.mrf.mxu0
        %v10604 = vadd.f32 0.0, %v10603
        %v10605 = vpop.f32.mrf.mxu0
        %v10606 = vpop.f32.mrf.mxu0
        %v10607 = vadd.f32 0.0, %v10606
        %v10608 = vpop.f32.mrf.mxu0
        %10609 = vdwg.mxu0
        %v10610 = vadd.f32 %v10240, %v10484
        %v10611 = vadd.f32 %v10241, %v10487
        %v10612 = vadd.f32 %v10242, %v10492
        %v10613 = vadd.f32 %v10243, %v10495
        %v10614 = vadd.f32 %v10244, %v10500
        %v10615 = vadd.f32 %v10245, %v10503
        %v10616 = vadd.f32 %v10246, %v10508
        %v10617 = vadd.f32 %v10247, %v10511
        %v10618 = vadd.f32 %v10248, %v10516
        %v10619 = vadd.f32 %v10249, %v10519
        %v10620 = vadd.f32 %v10250, %v10524
        %v10621 = vadd.f32 %v10251, %v10527
        %v10622 = vadd.f32 %v10252, %v10532
        %v10623 = vadd.f32 %v10253, %v10535
        %v10624 = vadd.f32 %v10254, %v10540
        %v10625 = vadd.f32 %v10255, %v10543
        %v10626 = vadd.f32 %v10256, %v10548
        %v10627 = vadd.f32 %v10257, %v10551
        %v10628 = vadd.f32 %v10258, %v10556
        %v10629 = vadd.f32 %v10259, %v10559
        %v10630 = vadd.f32 %v10260, %v10564
        %v10631 = vadd.f32 %v10261, %v10567
        %v10632 = vadd.f32 %v10262, %v10572
        %v10633 = vadd.f32 %v10263, %v10575
        %v10634 = vadd.f32 %v10264, %v10580
        %v10635 = vadd.f32 %v10265, %v10583
        %v10636 = vadd.f32 %v10266, %v10588
        %v10637 = vadd.f32 %v10267, %v10591
        %v10638 = vadd.f32 %v10268, %v10596
        %v10639 = vadd.f32 %v10269, %v10599
        %v10640 = vadd.f32 %v10270, %v10604
        %v10641 = vadd.f32 %v10271, %v10607
        %v10642 = vld [vmem:[%s10272] sm:$0xf]
        %v10643 = vld [vmem:[%s10272 + $0x4] sm:$0xf]
        %v10644 = vld [vmem:[%s10272 + $0x8] sm:$0x1]
        %v10645 = vld [vmem:[%s10272 + $0xc] sm:$0xf]
        %v10646 = vld [vmem:[%s10272 + $0x10] sm:$0xf]
        %v10647 = vld [vmem:[%s10272 + $0x14] sm:$0x1]
        %v10648 = vld [vmem:[%s10272 + $0x18] sm:$0xf]
        %v10649 = vld [vmem:[%s10272 + $0x1c] sm:$0xf]
        %v10650 = vld [vmem:[%s10272 + $0x20] sm:$0x1]
        %v10651 = vld [vmem:[%s10272 + $0x24] sm:$0xf]
        %v10652 = vld [vmem:[%s10272 + $0x28] sm:$0xf]
        %v10653 = vld [vmem:[%s10272 + $0x2c] sm:$0x1]
        %v10654 = vld [vmem:[%s10272 + $0x30] sm:$0xf]
        %v10655 = vld [vmem:[%s10272 + $0x34] sm:$0xf]
        %v10656 = vld [vmem:[%s10272 + $0x38] sm:$0x1]
        %v10657 = vld [vmem:[%s10272 + $0x3c] sm:$0xf]
        %v10658 = vld [vmem:[%s10272 + $0x40] sm:$0xf]
        %v10659 = vld [vmem:[%s10272 + $0x44] sm:$0x1]
        %v10660 = vld [vmem:[%s10272 + $0x48] sm:$0xf]
        %v10661 = vld [vmem:[%s10272 + $0x4c] sm:$0xf]
        %v10662 = vld [vmem:[%s10272 + $0x50] sm:$0x1]
        %v10663 = vld [vmem:[%s10272 + $0x54] sm:$0xf]
        %v10664 = vld [vmem:[%s10272 + $0x58] sm:$0xf]
        %v10665 = vld [vmem:[%s10272 + $0x5c] sm:$0x1]
        %v10666 = vld [vmem:[%s10272 + $0x60] sm:$0xf]
        %v10667 = vld [vmem:[%s10272 + $0x64] sm:$0xf]
        %v10668 = vld [vmem:[%s10272 + $0x68] sm:$0x1]
        %v10669 = vld [vmem:[%s10272 + $0x6c] sm:$0xf]
        %v10670 = vld [vmem:[%s10272 + $0x70] sm:$0xf]
        %v10671 = vld [vmem:[%s10272 + $0x74] sm:$0x1]
        %v10672 = vld [vmem:[%s10272 + $0x78] sm:$0xf]
        %v10673 = vld [vmem:[%s10272 + $0x7c] sm:$0xf]
        %v10674 = vld [vmem:[%s10272 + $0x80] sm:$0x1]
        %v10675 = vld [vmem:[%s10272 + $0x84] sm:$0xf]
        %v10676 = vld [vmem:[%s10272 + $0x88] sm:$0xf]
        %v10677 = vld [vmem:[%s10272 + $0x8c] sm:$0x1]
        %v10678 = vld [vmem:[%s10272 + $0x90] sm:$0xf]
        %v10679 = vld [vmem:[%s10272 + $0x94] sm:$0xf]
        %v10680 = vld [vmem:[%s10272 + $0x98] sm:$0x1]
        %v10681 = vld [vmem:[%s10272 + $0x9c] sm:$0xf]
        %v10682 = vld [vmem:[%s10272 + $0xa0] sm:$0xf]
        %v10683 = vld [vmem:[%s10272 + $0xa4] sm:$0x1]
        %v10684 = vld [vmem:[%s10272 + $0xa8] sm:$0xf]
        %v10685 = vld [vmem:[%s10272 + $0xac] sm:$0xf]
        %v10686 = vld [vmem:[%s10272 + $0xb0] sm:$0x1]
        %v10687 = vld [vmem:[%s10272 + $0xb4] sm:$0xf]
        %v10688 = vld [vmem:[%s10272 + $0xb8] sm:$0xf]
        %v10689 = vld [vmem:[%s10272 + $0xbc] sm:$0x1]
        %v10691 = vshrl.u32 %v10642, 16
        %v10693 = vrot.slane %v10691, 4
        %v10694 = vshll.u32 %v10642, 16
        %v10696 = vrot.slane %v10694, 5
        %v10697 = vor.u32 %v10693, %v10696
        %v10698 = vrot.slane %v10697, 4
        %v10700 = vshll.u32 %v10643, 16
        %v10702 = vrot.slane %v10700, 5
        %v10703 = vsel %vm1941, %v10698, %v10702
        %v10704 = vshrl.u32 %v10643, 16
        %v10706 = vrot.slane %v10704, 4
        %v10707 = vor.u32 %v10706, %v10702
        %v10708 = vrot.slane %v10707, 4
        %v10710 = vshll.u32 %v10644, 16
        %v10712 = vrot.slane %v10710, 5
        %v10713 = vsel %vm1941, %v10708, %v10712
        %v10715 = vshrl.u32 %v10645, 16
        %v10717 = vrot.slane %v10715, 4
        %v10718 = vshll.u32 %v10645, 16
        %v10720 = vrot.slane %v10718, 5
        %v10721 = vor.u32 %v10717, %v10720
        %v10722 = vrot.slane %v10721, 4
        %v10724 = vshll.u32 %v10646, 16
        %v10726 = vrot.slane %v10724, 5
        %v10727 = vsel %vm1941, %v10722, %v10726
        %v10728 = vshrl.u32 %v10646, 16
        %v10730 = vrot.slane %v10728, 4
        %v10731 = vor.u32 %v10730, %v10726
        %v10732 = vrot.slane %v10731, 4
        %v10734 = vshll.u32 %v10647, 16
        %v10736 = vrot.slane %v10734, 5
        %v10737 = vsel %vm1941, %v10732, %v10736
        %v10739 = vshrl.u32 %v10648, 16
        %v10741 = vrot.slane %v10739, 4
        %v10742 = vshll.u32 %v10648, 16
        %v10744 = vrot.slane %v10742, 5
        %v10745 = vor.u32 %v10741, %v10744
        %v10746 = vrot.slane %v10745, 4
        %v10748 = vshll.u32 %v10649, 16
        %v10750 = vrot.slane %v10748, 5
        %v10751 = vsel %vm1941, %v10746, %v10750
        %v10752 = vshrl.u32 %v10649, 16
        %v10754 = vrot.slane %v10752, 4
        %v10755 = vor.u32 %v10754, %v10750
        %v10756 = vrot.slane %v10755, 4
        %v10758 = vshll.u32 %v10650, 16
        %v10760 = vrot.slane %v10758, 5
        %v10761 = vsel %vm1941, %v10756, %v10760
        %v10763 = vshrl.u32 %v10651, 16
        %v10765 = vrot.slane %v10763, 4
        %v10766 = vshll.u32 %v10651, 16
        %v10768 = vrot.slane %v10766, 5
        %v10769 = vor.u32 %v10765, %v10768
        %v10770 = vrot.slane %v10769, 4
        %v10772 = vshll.u32 %v10652, 16
        %v10774 = vrot.slane %v10772, 5
        %v10775 = vsel %vm1941, %v10770, %v10774
        %v10776 = vshrl.u32 %v10652, 16
        %v10778 = vrot.slane %v10776, 4
        %v10779 = vor.u32 %v10778, %v10774
        %v10780 = vrot.slane %v10779, 4
        %v10782 = vshll.u32 %v10653, 16
        %v10784 = vrot.slane %v10782, 5
        %v10785 = vsel %vm1941, %v10780, %v10784
        %v10787 = vshrl.u32 %v10654, 16
        %v10789 = vrot.slane %v10787, 4
        %v10790 = vshll.u32 %v10654, 16
        %v10792 = vrot.slane %v10790, 5
        %v10793 = vor.u32 %v10789, %v10792
        %v10794 = vrot.slane %v10793, 4
        %v10796 = vshll.u32 %v10655, 16
        %v10798 = vrot.slane %v10796, 5
        %v10799 = vsel %vm1941, %v10794, %v10798
        %v10800 = vshrl.u32 %v10655, 16
        %v10802 = vrot.slane %v10800, 4
        %v10803 = vor.u32 %v10802, %v10798
        %v10804 = vrot.slane %v10803, 4
        %v10806 = vshll.u32 %v10656, 16
        %v10808 = vrot.slane %v10806, 5
        %v10809 = vsel %vm1941, %v10804, %v10808
        %v10811 = vshrl.u32 %v10657, 16
        %v10813 = vrot.slane %v10811, 4
        %v10814 = vshll.u32 %v10657, 16
        %v10816 = vrot.slane %v10814, 5
        %v10817 = vor.u32 %v10813, %v10816
        %v10818 = vrot.slane %v10817, 4
        %v10820 = vshll.u32 %v10658, 16
        %v10822 = vrot.slane %v10820, 5
        %v10823 = vsel %vm1941, %v10818, %v10822
        %v10824 = vshrl.u32 %v10658, 16
        %v10826 = vrot.slane %v10824, 4
        %v10827 = vor.u32 %v10826, %v10822
        %v10828 = vrot.slane %v10827, 4
        %v10830 = vshll.u32 %v10659, 16
        %v10832 = vrot.slane %v10830, 5
        %v10833 = vsel %vm1941, %v10828, %v10832
        %v10835 = vshrl.u32 %v10660, 16
        %v10837 = vrot.slane %v10835, 4
        %v10838 = vshll.u32 %v10660, 16
        %v10840 = vrot.slane %v10838, 5
        %v10841 = vor.u32 %v10837, %v10840
        %v10842 = vrot.slane %v10841, 4
        %v10844 = vshll.u32 %v10661, 16
        %v10846 = vrot.slane %v10844, 5
        %v10847 = vsel %vm1941, %v10842, %v10846
        %v10848 = vshrl.u32 %v10661, 16
        %v10850 = vrot.slane %v10848, 4
        %v10851 = vor.u32 %v10850, %v10846
        %v10852 = vrot.slane %v10851, 4
        %v10854 = vshll.u32 %v10662, 16
        %v10856 = vrot.slane %v10854, 5
        %v10857 = vsel %vm1941, %v10852, %v10856
        %v10859 = vshrl.u32 %v10663, 16
        %v10861 = vrot.slane %v10859, 4
        %v10862 = vshll.u32 %v10663, 16
        %v10864 = vrot.slane %v10862, 5
        %v10865 = vor.u32 %v10861, %v10864
        %v10866 = vrot.slane %v10865, 4
        %v10868 = vshll.u32 %v10664, 16
        %v10870 = vrot.slane %v10868, 5
        %v10871 = vsel %vm1941, %v10866, %v10870
        %v10872 = vshrl.u32 %v10664, 16
        %v10874 = vrot.slane %v10872, 4
        %v10875 = vor.u32 %v10874, %v10870
        %v10876 = vrot.slane %v10875, 4
        %v10878 = vshll.u32 %v10665, 16
        %v10880 = vrot.slane %v10878, 5
        %v10881 = vsel %vm1941, %v10876, %v10880
        %v10883 = vshrl.u32 %v10666, 16
        %v10885 = vrot.slane %v10883, 4
        %v10886 = vshll.u32 %v10666, 16
        %v10888 = vrot.slane %v10886, 5
        %v10889 = vor.u32 %v10885, %v10888
        %v10890 = vrot.slane %v10889, 4
        %v10892 = vshll.u32 %v10667, 16
        %v10894 = vrot.slane %v10892, 5
        %v10895 = vsel %vm1941, %v10890, %v10894
        %v10896 = vshrl.u32 %v10667, 16
        %v10898 = vrot.slane %v10896, 4
        %v10899 = vor.u32 %v10898, %v10894
        %v10900 = vrot.slane %v10899, 4
        %v10902 = vshll.u32 %v10668, 16
        %v10904 = vrot.slane %v10902, 5
        %v10905 = vsel %vm1941, %v10900, %v10904
        %v10907 = vshrl.u32 %v10669, 16
        %v10909 = vrot.slane %v10907, 4
        %v10910 = vshll.u32 %v10669, 16
        %v10912 = vrot.slane %v10910, 5
        %v10913 = vor.u32 %v10909, %v10912
        %v10914 = vrot.slane %v10913, 4
        %v10916 = vshll.u32 %v10670, 16
        %v10918 = vrot.slane %v10916, 5
        %v10919 = vsel %vm1941, %v10914, %v10918
        %v10920 = vshrl.u32 %v10670, 16
        %v10922 = vrot.slane %v10920, 4
        %v10923 = vor.u32 %v10922, %v10918
        %v10924 = vrot.slane %v10923, 4
        %v10926 = vshll.u32 %v10671, 16
        %v10928 = vrot.slane %v10926, 5
        %v10929 = vsel %vm1941, %v10924, %v10928
        %v10931 = vshrl.u32 %v10672, 16
        %v10933 = vrot.slane %v10931, 4
        %v10934 = vshll.u32 %v10672, 16
        %v10936 = vrot.slane %v10934, 5
        %v10937 = vor.u32 %v10933, %v10936
        %v10938 = vrot.slane %v10937, 4
        %v10940 = vshll.u32 %v10673, 16
        %v10942 = vrot.slane %v10940, 5
        %v10943 = vsel %vm1941, %v10938, %v10942
        %v10944 = vshrl.u32 %v10673, 16
        %v10946 = vrot.slane %v10944, 4
        %v10947 = vor.u32 %v10946, %v10942
        %v10948 = vrot.slane %v10947, 4
        %v10950 = vshll.u32 %v10674, 16
        %v10952 = vrot.slane %v10950, 5
        %v10953 = vsel %vm1941, %v10948, %v10952
        %v10955 = vshrl.u32 %v10675, 16
        %v10957 = vrot.slane %v10955, 4
        %v10958 = vshll.u32 %v10675, 16
        %v10960 = vrot.slane %v10958, 5
        %v10961 = vor.u32 %v10957, %v10960
        %v10962 = vrot.slane %v10961, 4
        %v10964 = vshll.u32 %v10676, 16
        %v10966 = vrot.slane %v10964, 5
        %v10967 = vsel %vm1941, %v10962, %v10966
        %v10968 = vshrl.u32 %v10676, 16
        %v10970 = vrot.slane %v10968, 4
        %v10971 = vor.u32 %v10970, %v10966
        %v10972 = vrot.slane %v10971, 4
        %v10974 = vshll.u32 %v10677, 16
        %v10976 = vrot.slane %v10974, 5
        %v10977 = vsel %vm1941, %v10972, %v10976
        %v10979 = vshrl.u32 %v10678, 16
        %v10981 = vrot.slane %v10979, 4
        %v10982 = vshll.u32 %v10678, 16
        %v10984 = vrot.slane %v10982, 5
        %v10985 = vor.u32 %v10981, %v10984
        %v10986 = vrot.slane %v10985, 4
        %v10988 = vshll.u32 %v10679, 16
        %v10990 = vrot.slane %v10988, 5
        %v10991 = vsel %vm1941, %v10986, %v10990
        %v10992 = vshrl.u32 %v10679, 16
        %v10994 = vrot.slane %v10992, 4
        %v10995 = vor.u32 %v10994, %v10990
        %v10996 = vrot.slane %v10995, 4
        %v10998 = vshll.u32 %v10680, 16
        %v11000 = vrot.slane %v10998, 5
        %v11001 = vsel %vm1941, %v10996, %v11000
        %v11003 = vshrl.u32 %v10681, 16
        %v11005 = vrot.slane %v11003, 4
        %v11006 = vshll.u32 %v10681, 16
        %v11008 = vrot.slane %v11006, 5
        %v11009 = vor.u32 %v11005, %v11008
        %v11010 = vrot.slane %v11009, 4
        %v11012 = vshll.u32 %v10682, 16
        %v11014 = vrot.slane %v11012, 5
        %v11015 = vsel %vm1941, %v11010, %v11014
        %v11016 = vshrl.u32 %v10682, 16
        %v11018 = vrot.slane %v11016, 4
        %v11019 = vor.u32 %v11018, %v11014
        %v11020 = vrot.slane %v11019, 4
        %v11022 = vshll.u32 %v10683, 16
        %v11024 = vrot.slane %v11022, 5
        %v11025 = vsel %vm1941, %v11020, %v11024
        %v11027 = vshrl.u32 %v10684, 16
        %v11029 = vrot.slane %v11027, 4
        %v11030 = vshll.u32 %v10684, 16
        %v11032 = vrot.slane %v11030, 5
        %v11033 = vor.u32 %v11029, %v11032
        %v11034 = vrot.slane %v11033, 4
        %v11036 = vshll.u32 %v10685, 16
        %v11038 = vrot.slane %v11036, 5
        %v11039 = vsel %vm1941, %v11034, %v11038
        %v11040 = vshrl.u32 %v10685, 16
        %v11042 = vrot.slane %v11040, 4
        %v11043 = vor.u32 %v11042, %v11038
        %v11044 = vrot.slane %v11043, 4
        %v11046 = vshll.u32 %v10686, 16
        %v11048 = vrot.slane %v11046, 5
        %v11049 = vsel %vm1941, %v11044, %v11048
        %v11051 = vshrl.u32 %v10687, 16
        %v11053 = vrot.slane %v11051, 4
        %v11054 = vshll.u32 %v10687, 16
        %v11056 = vrot.slane %v11054, 5
        %v11057 = vor.u32 %v11053, %v11056
        %v11058 = vrot.slane %v11057, 4
        %v11060 = vshll.u32 %v10688, 16
        %v11062 = vrot.slane %v11060, 5
        %v11063 = vsel %vm1941, %v11058, %v11062
        %v11064 = vshrl.u32 %v10688, 16
        %v11066 = vrot.slane %v11064, 4
        %v11067 = vor.u32 %v11066, %v11062
        %v11068 = vrot.slane %v11067, 4
        %v11070 = vshll.u32 %v10689, 16
        %v11072 = vrot.slane %v11070, 5
        %v11073 = vsel %vm1941, %v11068, %v11072
        %v11074 = vld [vmem:[%s4 + $0x70] sm:$0xf]
        %v11075 = vld [vmem:[%s4 + $0x74] sm:$0xf]
        %v11076 = vld [vmem:[%s4 + $0x78] sm:$0xf]
        %v11077 = vld [vmem:[%s4 + $0x7c] sm:$0xf]
        %v11078 = vunpack.c.l.b16 %v10703
        %v11079 = vunpack.c.l.b16 %v10713
        %v11080 = vunpack.c.l.b16 %v10727
        %v11081 = vunpack.c.l.b16 %v10737
        %v11082 = vunpack.c.l.b16 %v10751
        %v11083 = vunpack.c.l.b16 %v10761
        %v11084 = vunpack.c.l.b16 %v10775
        %v11085 = vunpack.c.l.b16 %v10785
        %v11086 = vunpack.c.l.b16 %v10799
        %v11087 = vunpack.c.l.b16 %v10809
        %v11088 = vunpack.c.l.b16 %v10823
        %v11089 = vunpack.c.l.b16 %v10833
        %v11090 = vunpack.c.l.b16 %v10847
        %v11091 = vunpack.c.l.b16 %v10857
        %v11092 = vunpack.c.l.b16 %v10871
        %v11093 = vunpack.c.l.b16 %v10881
        %v11094 = vunpack.c.l.b16 %v10895
        %v11095 = vunpack.c.l.b16 %v10905
        %v11096 = vunpack.c.l.b16 %v10919
        %v11097 = vunpack.c.l.b16 %v10929
        %v11098 = vunpack.c.l.b16 %v10943
        %v11099 = vunpack.c.l.b16 %v10953
        %v11100 = vunpack.c.l.b16 %v10967
        %v11101 = vunpack.c.l.b16 %v10977
        %v11102 = vunpack.c.l.b16 %v10991
        %v11103 = vunpack.c.l.b16 %v11001
        %v11104 = vunpack.c.l.b16 %v11015
        %v11105 = vunpack.c.l.b16 %v11025
        %v11106 = vunpack.c.l.b16 %v11039
        %v11107 = vunpack.c.l.b16 %v11049
        %v11108 = vunpack.c.l.b16 %v11063
        %v11109 = vunpack.c.l.b16 %v11073
        %v11110 = vpack.c.b16 %v11079, %v11078
        %v11111 = vpack.c.b16 %v11081, %v11080
        %v11112 = vpack.c.b16 %v11083, %v11082
        %v11113 = vpack.c.b16 %v11085, %v11084
        %v11114 = vpack.c.b16 %v11087, %v11086
        %v11115 = vpack.c.b16 %v11089, %v11088
        %v11116 = vpack.c.b16 %v11091, %v11090
        %v11117 = vpack.c.b16 %v11093, %v11092
        %v11118 = vpack.c.b16 %v11095, %v11094
        %v11119 = vpack.c.b16 %v11097, %v11096
        %v11120 = vpack.c.b16 %v11099, %v11098
        %v11121 = vpack.c.b16 %v11101, %v11100
        %v11122 = vpack.c.b16 %v11103, %v11102
        %v11123 = vpack.c.b16 %v11105, %v11104
        %v11124 = vpack.c.b16 %v11107, %v11106
        %v11125 = vpack.c.b16 %v11109, %v11108
        %v11130 = vunpack.c.l.b16 %v11074
        %v11131 = vunpack.c.l.b16 %v11075
        %v11132 = vunpack.c.l.b16 %v11076
        %v11133 = vunpack.c.l.b16 %v11077
        %v11134 = vpack.c.b16 %v11131, %v11130
        %v11135 = vpack.c.b16 %v11133, %v11132
        %v11139 = vsel %vm2390, %v11110, 0
        %v11142 = vsel %vm2390, %v11111, 0
        %v11145 = vsel %vm2390, %v11112, 0
        %v11148 = vsel %vm2390, %v11113, 0
        %v11151 = vsel %vm2390, %v11114, 0
        %v11154 = vsel %vm2390, %v11115, 0
        %v11157 = vsel %vm2390, %v11116, 0
        %v11160 = vsel %vm2390, %v11117, 0
        %v11163 = vsel %vm2390, %v11118, 0
        %v11166 = vsel %vm2390, %v11119, 0
        %v11169 = vsel %vm2390, %v11120, 0
        %v11172 = vsel %vm2390, %v11121, 0
        %v11175 = vsel %vm2390, %v11122, 0
        %v11178 = vsel %vm2390, %v11123, 0
        %v11181 = vsel %vm2390, %v11124, 0
        %v11184 = vsel %vm2390, %v11125, 0
        %11186 = vmatprep.subr.bf16.mxu0 0
        %11187 = vmatpush1.bf16.msra.mxu0 0
        %11188 = vmatprep.subr.bf16.mxu0 0
        %11189 = vmatpush1.bf16.msra.mxu0 0
        %11190 = vmatprep.subr.bf16.mxu0 0
        %11191 = vmatpush1.bf16.msra.mxu0 0
        %11192 = vmatprep.subr.bf16.mxu0 0
        %11193 = vmatpush1.bf16.msra.mxu0 0
        %11194 = vmatprep.subr.bf16.mxu0 0
        %11195 = vmatpush1.bf16.msra.mxu0 0
        %11196 = vmatprep.subr.bf16.mxu0 0
        %11197 = vmatpush1.bf16.msra.mxu0 0
        %11198 = vmatprep.subr.bf16.mxu0 0
        %11199 = vmatpush1.bf16.msra.mxu0 %v11135
        %11200 = vmatprep.subr.bf16.mxu0 0
        %11201 = vmatpush1.bf16.msra.mxu0 %v11134
        %11202 = vmatprep.subr.bf16.mxu0 0
        %11203 = vmatpush2.bf16.msra.mxu0 0
        %11204 = vmatprep.subr.bf16.mxu0 0
        %11205 = vmatpush2.bf16.msra.mxu0 0
        %11206 = vmatprep.subr.bf16.mxu0 0
        %11207 = vmatpush2.bf16.msra.mxu0 0
        %11208 = vmatprep.subr.bf16.mxu0 0
        %11209 = vmatpush2.bf16.msra.mxu0 0
        %11210 = vmatprep.subr.bf16.mxu0 0
        %11211 = vmatpush2.bf16.msra.mxu0 0
        %11212 = vmatprep.subr.bf16.mxu0 0
        %11213 = vmatpush2.bf16.msra.mxu0 0
        %11214 = vmatprep.subr.bf16.mxu0 0
        %11215 = vmatpush2.bf16.msra.mxu0 0
        %11216 = vmatprep.subr.bf16.mxu0 0
        %11217 = vmatpush2.bf16.msra.mxu0 0
        %11218 = vmatprep.mubr.bf16.mxu0 0
        %11219 = vmatmul.mubr.bf16.gmra.mxu0 %v11139
        %v11220 = vpop.f32.mrf.mxu0
        %v11221 = vadd.f32 0.0, %v11220
        %v11222 = vpop.f32.mrf.mxu0
        %v11223 = vpop.f32.mrf.mxu0
        %v11224 = vadd.f32 0.0, %v11223
        %v11225 = vpop.f32.mrf.mxu0
        %11226 = vmatprep.mubr.bf16.mxu0 0
        %11227 = vmatmul.mubr.bf16.gmra.mxu0 %v11142
        %v11228 = vpop.f32.mrf.mxu0
        %v11229 = vadd.f32 0.0, %v11228
        %v11230 = vpop.f32.mrf.mxu0
        %v11231 = vpop.f32.mrf.mxu0
        %v11232 = vadd.f32 0.0, %v11231
        %v11233 = vpop.f32.mrf.mxu0
        %11234 = vmatprep.mubr.bf16.mxu0 0
        %11235 = vmatmul.mubr.bf16.gmra.mxu0 %v11145
        %v11236 = vpop.f32.mrf.mxu0
        %v11237 = vadd.f32 0.0, %v11236
        %v11238 = vpop.f32.mrf.mxu0
        %v11239 = vpop.f32.mrf.mxu0
        %v11240 = vadd.f32 0.0, %v11239
        %v11241 = vpop.f32.mrf.mxu0
        %11242 = vmatprep.mubr.bf16.mxu0 0
        %11243 = vmatmul.mubr.bf16.gmra.mxu0 %v11148
        %v11244 = vpop.f32.mrf.mxu0
        %v11245 = vadd.f32 0.0, %v11244
        %v11246 = vpop.f32.mrf.mxu0
        %v11247 = vpop.f32.mrf.mxu0
        %v11248 = vadd.f32 0.0, %v11247
        %v11249 = vpop.f32.mrf.mxu0
        %11250 = vmatprep.mubr.bf16.mxu0 0
        %11251 = vmatmul.mubr.bf16.gmra.mxu0 %v11151
        %v11252 = vpop.f32.mrf.mxu0
        %v11253 = vadd.f32 0.0, %v11252
        %v11254 = vpop.f32.mrf.mxu0
        %v11255 = vpop.f32.mrf.mxu0
        %v11256 = vadd.f32 0.0, %v11255
        %v11257 = vpop.f32.mrf.mxu0
        %11258 = vmatprep.mubr.bf16.mxu0 0
        %11259 = vmatmul.mubr.bf16.gmra.mxu0 %v11154
        %v11260 = vpop.f32.mrf.mxu0
        %v11261 = vadd.f32 0.0, %v11260
        %v11262 = vpop.f32.mrf.mxu0
        %v11263 = vpop.f32.mrf.mxu0
        %v11264 = vadd.f32 0.0, %v11263
        %v11265 = vpop.f32.mrf.mxu0
        %11266 = vmatprep.mubr.bf16.mxu0 0
        %11267 = vmatmul.mubr.bf16.gmra.mxu0 %v11157
        %v11268 = vpop.f32.mrf.mxu0
        %v11269 = vadd.f32 0.0, %v11268
        %v11270 = vpop.f32.mrf.mxu0
        %v11271 = vpop.f32.mrf.mxu0
        %v11272 = vadd.f32 0.0, %v11271
        %v11273 = vpop.f32.mrf.mxu0
        %11274 = vmatprep.mubr.bf16.mxu0 0
        %11275 = vmatmul.mubr.bf16.gmra.mxu0 %v11160
        %v11276 = vpop.f32.mrf.mxu0
        %v11277 = vadd.f32 0.0, %v11276
        %v11278 = vpop.f32.mrf.mxu0
        %v11279 = vpop.f32.mrf.mxu0
        %v11280 = vadd.f32 0.0, %v11279
        %v11281 = vpop.f32.mrf.mxu0
        %11282 = vmatprep.mubr.bf16.mxu0 0
        %11283 = vmatmul.mubr.bf16.gmra.mxu0 %v11163
        %v11284 = vpop.f32.mrf.mxu0
        %v11285 = vadd.f32 0.0, %v11284
        %v11286 = vpop.f32.mrf.mxu0
        %v11287 = vpop.f32.mrf.mxu0
        %v11288 = vadd.f32 0.0, %v11287
        %v11289 = vpop.f32.mrf.mxu0
        %11290 = vmatprep.mubr.bf16.mxu0 0
        %11291 = vmatmul.mubr.bf16.gmra.mxu0 %v11166
        %v11292 = vpop.f32.mrf.mxu0
        %v11293 = vadd.f32 0.0, %v11292
        %v11294 = vpop.f32.mrf.mxu0
        %v11295 = vpop.f32.mrf.mxu0
        %v11296 = vadd.f32 0.0, %v11295
        %v11297 = vpop.f32.mrf.mxu0
        %11298 = vmatprep.mubr.bf16.mxu0 0
        %11299 = vmatmul.mubr.bf16.gmra.mxu0 %v11169
        %v11300 = vpop.f32.mrf.mxu0
        %v11301 = vadd.f32 0.0, %v11300
        %v11302 = vpop.f32.mrf.mxu0
        %v11303 = vpop.f32.mrf.mxu0
        %v11304 = vadd.f32 0.0, %v11303
        %v11305 = vpop.f32.mrf.mxu0
        %11306 = vmatprep.mubr.bf16.mxu0 0
        %11307 = vmatmul.mubr.bf16.gmra.mxu0 %v11172
        %v11308 = vpop.f32.mrf.mxu0
        %v11309 = vadd.f32 0.0, %v11308
        %v11310 = vpop.f32.mrf.mxu0
        %v11311 = vpop.f32.mrf.mxu0
        %v11312 = vadd.f32 0.0, %v11311
        %v11313 = vpop.f32.mrf.mxu0
        %11314 = vmatprep.mubr.bf16.mxu0 0
        %11315 = vmatmul.mubr.bf16.gmra.mxu0 %v11175
        %v11316 = vpop.f32.mrf.mxu0
        %v11317 = vadd.f32 0.0, %v11316
        %v11318 = vpop.f32.mrf.mxu0
        %v11319 = vpop.f32.mrf.mxu0
        %v11320 = vadd.f32 0.0, %v11319
        %v11321 = vpop.f32.mrf.mxu0
        %11322 = vmatprep.mubr.bf16.mxu0 0
        %11323 = vmatmul.mubr.bf16.gmra.mxu0 %v11178
        %v11324 = vpop.f32.mrf.mxu0
        %v11325 = vadd.f32 0.0, %v11324
        %v11326 = vpop.f32.mrf.mxu0
        %v11327 = vpop.f32.mrf.mxu0
        %v11328 = vadd.f32 0.0, %v11327
        %v11329 = vpop.f32.mrf.mxu0
        %11330 = vmatprep.mubr.bf16.mxu0 0
        %11331 = vmatmul.mubr.bf16.gmra.mxu0 %v11181
        %v11332 = vpop.f32.mrf.mxu0
        %v11333 = vadd.f32 0.0, %v11332
        %v11334 = vpop.f32.mrf.mxu0
        %v11335 = vpop.f32.mrf.mxu0
        %v11336 = vadd.f32 0.0, %v11335
        %v11337 = vpop.f32.mrf.mxu0
        %11338 = vmatprep.mubr.bf16.mxu0 0
        %11339 = vmatmul.mubr.bf16.gmra.mxu0 %v11184
        %v11340 = vpop.f32.mrf.mxu0
        %v11341 = vadd.f32 0.0, %v11340
        %v11342 = vpop.f32.mrf.mxu0
        %v11343 = vpop.f32.mrf.mxu0
        %v11344 = vadd.f32 0.0, %v11343
        %v11345 = vpop.f32.mrf.mxu0
        %11346 = vdwg.mxu0
        %v11347 = vadd.f32 %v10610, %v11221
        %v11348 = vadd.f32 %v10611, %v11224
        %v11349 = vadd.f32 %v10612, %v11229
        %v11350 = vadd.f32 %v10613, %v11232
        %v11351 = vadd.f32 %v10614, %v11237
        %v11352 = vadd.f32 %v10615, %v11240
        %v11353 = vadd.f32 %v10616, %v11245
        %v11354 = vadd.f32 %v10617, %v11248
        %v11355 = vadd.f32 %v10618, %v11253
        %v11356 = vadd.f32 %v10619, %v11256
        %v11357 = vadd.f32 %v10620, %v11261
        %v11358 = vadd.f32 %v10621, %v11264
        %v11359 = vadd.f32 %v10622, %v11269
        %v11360 = vadd.f32 %v10623, %v11272
        %v11361 = vadd.f32 %v10624, %v11277
        %v11362 = vadd.f32 %v10625, %v11280
        %v11363 = vadd.f32 %v10626, %v11285
        %v11364 = vadd.f32 %v10627, %v11288
        %v11365 = vadd.f32 %v10628, %v11293
        %v11366 = vadd.f32 %v10629, %v11296
        %v11367 = vadd.f32 %v10630, %v11301
        %v11368 = vadd.f32 %v10631, %v11304
        %v11369 = vadd.f32 %v10632, %v11309
        %v11370 = vadd.f32 %v10633, %v11312
        %v11371 = vadd.f32 %v10634, %v11317
        %v11372 = vadd.f32 %v10635, %v11320
        %v11373 = vadd.f32 %v10636, %v11325
        %v11374 = vadd.f32 %v10637, %v11328
        %v11375 = vadd.f32 %v10638, %v11333
        %v11376 = vadd.f32 %v10639, %v11336
        %v11377 = vadd.f32 %v10640, %v11341
        %v11378 = vadd.f32 %v10641, %v11344
        %v11379 = vld [vmem:[%s10272] sm:$0xe]
        %v11380 = vld [vmem:[%s10272 + $0xc] sm:$0xe]
        %v11381 = vld [vmem:[%s10272 + $0x18] sm:$0xe]
        %v11382 = vld [vmem:[%s10272 + $0x24] sm:$0xe]
        %v11383 = vld [vmem:[%s10272 + $0x30] sm:$0xe]
        %v11384 = vld [vmem:[%s10272 + $0x3c] sm:$0xe]
        %v11385 = vld [vmem:[%s10272 + $0x48] sm:$0xe]
        %v11386 = vld [vmem:[%s10272 + $0x54] sm:$0xe]
        %v11387 = vld [vmem:[%s10272 + $0x60] sm:$0xe]
        %v11388 = vld [vmem:[%s10272 + $0x6c] sm:$0xe]
        %v11389 = vld [vmem:[%s10272 + $0x78] sm:$0xe]
        %v11390 = vld [vmem:[%s10272 + $0x84] sm:$0xe]
        %v11391 = vld [vmem:[%s10272 + $0x90] sm:$0xe]
        %v11392 = vld [vmem:[%s10272 + $0x9c] sm:$0xe]
        %v11393 = vld [vmem:[%s10272 + $0xa8] sm:$0xe]
        %v11394 = vld [vmem:[%s10272 + $0xb4] sm:$0xe]
        %v11443 = vrot.slane %v11379, 5
        %v11444 = vrot.slane %v11443, 4
        %v11445 = vrot.slane %v10643, 5
        %v11446 = vsel %vm2951, %v11444, %v11445
        %v11447 = vrot.slane %v11445, 4
        %v11448 = vrot.slane %v10644, 5
        %v11449 = vsel %vm2951, %v11447, %v11448
        %v11450 = vrot.slane %v11380, 5
        %v11451 = vrot.slane %v11450, 4
        %v11452 = vrot.slane %v10646, 5
        %v11453 = vsel %vm2951, %v11451, %v11452
        %v11454 = vrot.slane %v11452, 4
        %v11455 = vrot.slane %v10647, 5
        %v11456 = vsel %vm2951, %v11454, %v11455
        %v11457 = vrot.slane %v11381, 5
        %v11458 = vrot.slane %v11457, 4
        %v11459 = vrot.slane %v10649, 5
        %v11460 = vsel %vm2951, %v11458, %v11459
        %v11461 = vrot.slane %v11459, 4
        %v11462 = vrot.slane %v10650, 5
        %v11463 = vsel %vm2951, %v11461, %v11462
        %v11464 = vrot.slane %v11382, 5
        %v11465 = vrot.slane %v11464, 4
        %v11466 = vrot.slane %v10652, 5
        %v11467 = vsel %vm2951, %v11465, %v11466
        %v11468 = vrot.slane %v11466, 4
        %v11469 = vrot.slane %v10653, 5
        %v11470 = vsel %vm2951, %v11468, %v11469
        %v11471 = vrot.slane %v11383, 5
        %v11472 = vrot.slane %v11471, 4
        %v11473 = vrot.slane %v10655, 5
        %v11474 = vsel %vm2951, %v11472, %v11473
        %v11475 = vrot.slane %v11473, 4
        %v11476 = vrot.slane %v10656, 5
        %v11477 = vsel %vm2951, %v11475, %v11476
        %v11478 = vrot.slane %v11384, 5
        %v11479 = vrot.slane %v11478, 4
        %v11480 = vrot.slane %v10658, 5
        %v11481 = vsel %vm2951, %v11479, %v11480
        %v11482 = vrot.slane %v11480, 4
        %v11483 = vrot.slane %v10659, 5
        %v11484 = vsel %vm2951, %v11482, %v11483
        %v11485 = vrot.slane %v11385, 5
        %v11486 = vrot.slane %v11485, 4
        %v11487 = vrot.slane %v10661, 5
        %v11488 = vsel %vm2951, %v11486, %v11487
        %v11489 = vrot.slane %v11487, 4
        %v11490 = vrot.slane %v10662, 5
        %v11491 = vsel %vm2951, %v11489, %v11490
        %v11492 = vrot.slane %v11386, 5
        %v11493 = vrot.slane %v11492, 4
        %v11494 = vrot.slane %v10664, 5
        %v11495 = vsel %vm2951, %v11493, %v11494
        %v11496 = vrot.slane %v11494, 4
        %v11497 = vrot.slane %v10665, 5
        %v11498 = vsel %vm2951, %v11496, %v11497
        %v11499 = vrot.slane %v11387, 5
        %v11500 = vrot.slane %v11499, 4
        %v11501 = vrot.slane %v10667, 5
        %v11502 = vsel %vm2951, %v11500, %v11501
        %v11503 = vrot.slane %v11501, 4
        %v11504 = vrot.slane %v10668, 5
        %v11505 = vsel %vm2951, %v11503, %v11504
        %v11506 = vrot.slane %v11388, 5
        %v11507 = vrot.slane %v11506, 4
        %v11508 = vrot.slane %v10670, 5
        %v11509 = vsel %vm2951, %v11507, %v11508
        %v11510 = vrot.slane %v11508, 4
        %v11511 = vrot.slane %v10671, 5
        %v11512 = vsel %vm2951, %v11510, %v11511
        %v11513 = vrot.slane %v11389, 5
        %v11514 = vrot.slane %v11513, 4
        %v11515 = vrot.slane %v10673, 5
        %v11516 = vsel %vm2951, %v11514, %v11515
        %v11517 = vrot.slane %v11515, 4
        %v11518 = vrot.slane %v10674, 5
        %v11519 = vsel %vm2951, %v11517, %v11518
        %v11520 = vrot.slane %v11390, 5
        %v11521 = vrot.slane %v11520, 4
        %v11522 = vrot.slane %v10676, 5
        %v11523 = vsel %vm2951, %v11521, %v11522
        %v11524 = vrot.slane %v11522, 4
        %v11525 = vrot.slane %v10677, 5
        %v11526 = vsel %vm2951, %v11524, %v11525
        %v11527 = vrot.slane %v11391, 5
        %v11528 = vrot.slane %v11527, 4
        %v11529 = vrot.slane %v10679, 5
        %v11530 = vsel %vm2951, %v11528, %v11529
        %v11531 = vrot.slane %v11529, 4
        %v11532 = vrot.slane %v10680, 5
        %v11533 = vsel %vm2951, %v11531, %v11532
        %v11534 = vrot.slane %v11392, 5
        %v11535 = vrot.slane %v11534, 4
        %v11536 = vrot.slane %v10682, 5
        %v11537 = vsel %vm2951, %v11535, %v11536
        %v11538 = vrot.slane %v11536, 4
        %v11539 = vrot.slane %v10683, 5
        %v11540 = vsel %vm2951, %v11538, %v11539
        %v11541 = vrot.slane %v11393, 5
        %v11542 = vrot.slane %v11541, 4
        %v11543 = vrot.slane %v10685, 5
        %v11544 = vsel %vm2951, %v11542, %v11543
        %v11545 = vrot.slane %v11543, 4
        %v11546 = vrot.slane %v10686, 5
        %v11547 = vsel %vm2951, %v11545, %v11546
        %v11548 = vrot.slane %v11394, 5
        %v11549 = vrot.slane %v11548, 4
        %v11550 = vrot.slane %v10688, 5
        %v11551 = vsel %vm2951, %v11549, %v11550
        %v11552 = vrot.slane %v11550, 4
        %v11553 = vrot.slane %v10689, 5
        %v11554 = vsel %vm2951, %v11552, %v11553
        %v11555 = vld [vmem:[%s4 + $0x80] sm:$0xf]
        %v11556 = vld [vmem:[%s4 + $0x84] sm:$0xf]
        %v11557 = vld [vmem:[%s4 + $0x88] sm:$0xf]
        %v11558 = vld [vmem:[%s4 + $0x8c] sm:$0xf]
        %v11559 = vunpack.c.l.b16 %v11446
        %v11560 = vunpack.c.l.b16 %v11449
        %v11561 = vunpack.c.l.b16 %v11453
        %v11562 = vunpack.c.l.b16 %v11456
        %v11563 = vunpack.c.l.b16 %v11460
        %v11564 = vunpack.c.l.b16 %v11463
        %v11565 = vunpack.c.l.b16 %v11467
        %v11566 = vunpack.c.l.b16 %v11470
        %v11567 = vunpack.c.l.b16 %v11474
        %v11568 = vunpack.c.l.b16 %v11477
        %v11569 = vunpack.c.l.b16 %v11481
        %v11570 = vunpack.c.l.b16 %v11484
        %v11571 = vunpack.c.l.b16 %v11488
        %v11572 = vunpack.c.l.b16 %v11491
        %v11573 = vunpack.c.l.b16 %v11495
        %v11574 = vunpack.c.l.b16 %v11498
        %v11575 = vunpack.c.l.b16 %v11502
        %v11576 = vunpack.c.l.b16 %v11505
        %v11577 = vunpack.c.l.b16 %v11509
        %v11578 = vunpack.c.l.b16 %v11512
        %v11579 = vunpack.c.l.b16 %v11516
        %v11580 = vunpack.c.l.b16 %v11519
        %v11581 = vunpack.c.l.b16 %v11523
        %v11582 = vunpack.c.l.b16 %v11526
        %v11583 = vunpack.c.l.b16 %v11530
        %v11584 = vunpack.c.l.b16 %v11533
        %v11585 = vunpack.c.l.b16 %v11537
        %v11586 = vunpack.c.l.b16 %v11540
        %v11587 = vunpack.c.l.b16 %v11544
        %v11588 = vunpack.c.l.b16 %v11547
        %v11589 = vunpack.c.l.b16 %v11551
        %v11590 = vunpack.c.l.b16 %v11554
        %v11591 = vpack.c.b16 %v11560, %v11559
        %v11592 = vpack.c.b16 %v11562, %v11561
        %v11593 = vpack.c.b16 %v11564, %v11563
        %v11594 = vpack.c.b16 %v11566, %v11565
        %v11595 = vpack.c.b16 %v11568, %v11567
        %v11596 = vpack.c.b16 %v11570, %v11569
        %v11597 = vpack.c.b16 %v11572, %v11571
        %v11598 = vpack.c.b16 %v11574, %v11573
        %v11599 = vpack.c.b16 %v11576, %v11575
        %v11600 = vpack.c.b16 %v11578, %v11577
        %v11601 = vpack.c.b16 %v11580, %v11579
        %v11602 = vpack.c.b16 %v11582, %v11581
        %v11603 = vpack.c.b16 %v11584, %v11583
        %v11604 = vpack.c.b16 %v11586, %v11585
        %v11605 = vpack.c.b16 %v11588, %v11587
        %v11606 = vpack.c.b16 %v11590, %v11589
        %v11611 = vunpack.c.l.b16 %v11555
        %v11612 = vunpack.c.l.b16 %v11556
        %v11613 = vunpack.c.l.b16 %v11557
        %v11614 = vunpack.c.l.b16 %v11558
        %v11615 = vpack.c.b16 %v11612, %v11611
        %v11616 = vpack.c.b16 %v11614, %v11613
        %v11620 = vsel %vm2390, %v11591, 0
        %v11623 = vsel %vm2390, %v11592, 0
        %v11626 = vsel %vm2390, %v11593, 0
        %v11629 = vsel %vm2390, %v11594, 0
        %v11632 = vsel %vm2390, %v11595, 0
        %v11635 = vsel %vm2390, %v11596, 0
        %v11638 = vsel %vm2390, %v11597, 0
        %v11641 = vsel %vm2390, %v11598, 0
        %v11644 = vsel %vm2390, %v11599, 0
        %v11647 = vsel %vm2390, %v11600, 0
        %v11650 = vsel %vm2390, %v11601, 0
        %v11653 = vsel %vm2390, %v11602, 0
        %v11656 = vsel %vm2390, %v11603, 0
        %v11659 = vsel %vm2390, %v11604, 0
        %v11662 = vsel %vm2390, %v11605, 0
        %v11665 = vsel %vm2390, %v11606, 0
        %11667 = vmatprep.subr.bf16.mxu0 0
        %11668 = vmatpush1.bf16.msra.mxu0 0
        %11669 = vmatprep.subr.bf16.mxu0 0
        %11670 = vmatpush1.bf16.msra.mxu0 0
        %11671 = vmatprep.subr.bf16.mxu0 0
        %11672 = vmatpush1.bf16.msra.mxu0 0
        %11673 = vmatprep.subr.bf16.mxu0 0
        %11674 = vmatpush1.bf16.msra.mxu0 0
        %11675 = vmatprep.subr.bf16.mxu0 0
        %11676 = vmatpush1.bf16.msra.mxu0 0
        %11677 = vmatprep.subr.bf16.mxu0 0
        %11678 = vmatpush1.bf16.msra.mxu0 0
        %11679 = vmatprep.subr.bf16.mxu0 0
        %11680 = vmatpush1.bf16.msra.mxu0 %v11616
        %11681 = vmatprep.subr.bf16.mxu0 0
        %11682 = vmatpush1.bf16.msra.mxu0 %v11615
        %11683 = vmatprep.subr.bf16.mxu0 0
        %11684 = vmatpush2.bf16.msra.mxu0 0
        %11685 = vmatprep.subr.bf16.mxu0 0
        %11686 = vmatpush2.bf16.msra.mxu0 0
        %11687 = vmatprep.subr.bf16.mxu0 0
        %11688 = vmatpush2.bf16.msra.mxu0 0
        %11689 = vmatprep.subr.bf16.mxu0 0
        %11690 = vmatpush2.bf16.msra.mxu0 0
        %11691 = vmatprep.subr.bf16.mxu0 0
        %11692 = vmatpush2.bf16.msra.mxu0 0
        %11693 = vmatprep.subr.bf16.mxu0 0
        %11694 = vmatpush2.bf16.msra.mxu0 0
        %11695 = vmatprep.subr.bf16.mxu0 0
        %11696 = vmatpush2.bf16.msra.mxu0 0
        %11697 = vmatprep.subr.bf16.mxu0 0
        %11698 = vmatpush2.bf16.msra.mxu0 0
        %11699 = vmatprep.mubr.bf16.mxu0 0
        %11700 = vmatmul.mubr.bf16.gmra.mxu0 %v11620
        %v11701 = vpop.f32.mrf.mxu0
        %v11702 = vadd.f32 0.0, %v11701
        %v11703 = vpop.f32.mrf.mxu0
        %v11704 = vpop.f32.mrf.mxu0
        %v11705 = vadd.f32 0.0, %v11704
        %v11706 = vpop.f32.mrf.mxu0
        %11707 = vmatprep.mubr.bf16.mxu0 0
        %11708 = vmatmul.mubr.bf16.gmra.mxu0 %v11623
        %v11709 = vpop.f32.mrf.mxu0
        %v11710 = vadd.f32 0.0, %v11709
        %v11711 = vpop.f32.mrf.mxu0
        %v11712 = vpop.f32.mrf.mxu0
        %v11713 = vadd.f32 0.0, %v11712
        %v11714 = vpop.f32.mrf.mxu0
        %11715 = vmatprep.mubr.bf16.mxu0 0
        %11716 = vmatmul.mubr.bf16.gmra.mxu0 %v11626
        %v11717 = vpop.f32.mrf.mxu0
        %v11718 = vadd.f32 0.0, %v11717
        %v11719 = vpop.f32.mrf.mxu0
        %v11720 = vpop.f32.mrf.mxu0
        %v11721 = vadd.f32 0.0, %v11720
        %v11722 = vpop.f32.mrf.mxu0
        %11723 = vmatprep.mubr.bf16.mxu0 0
        %11724 = vmatmul.mubr.bf16.gmra.mxu0 %v11629
        %v11725 = vpop.f32.mrf.mxu0
        %v11726 = vadd.f32 0.0, %v11725
        %v11727 = vpop.f32.mrf.mxu0
        %v11728 = vpop.f32.mrf.mxu0
        %v11729 = vadd.f32 0.0, %v11728
        %v11730 = vpop.f32.mrf.mxu0
        %11731 = vmatprep.mubr.bf16.mxu0 0
        %11732 = vmatmul.mubr.bf16.gmra.mxu0 %v11632
        %v11733 = vpop.f32.mrf.mxu0
        %v11734 = vadd.f32 0.0, %v11733
        %v11735 = vpop.f32.mrf.mxu0
        %v11736 = vpop.f32.mrf.mxu0
        %v11737 = vadd.f32 0.0, %v11736
        %v11738 = vpop.f32.mrf.mxu0
        %11739 = vmatprep.mubr.bf16.mxu0 0
        %11740 = vmatmul.mubr.bf16.gmra.mxu0 %v11635
        %v11741 = vpop.f32.mrf.mxu0
        %v11742 = vadd.f32 0.0, %v11741
        %v11743 = vpop.f32.mrf.mxu0
        %v11744 = vpop.f32.mrf.mxu0
        %v11745 = vadd.f32 0.0, %v11744
        %v11746 = vpop.f32.mrf.mxu0
        %11747 = vmatprep.mubr.bf16.mxu0 0
        %11748 = vmatmul.mubr.bf16.gmra.mxu0 %v11638
        %v11749 = vpop.f32.mrf.mxu0
        %v11750 = vadd.f32 0.0, %v11749
        %v11751 = vpop.f32.mrf.mxu0
        %v11752 = vpop.f32.mrf.mxu0
        %v11753 = vadd.f32 0.0, %v11752
        %v11754 = vpop.f32.mrf.mxu0
        %11755 = vmatprep.mubr.bf16.mxu0 0
        %11756 = vmatmul.mubr.bf16.gmra.mxu0 %v11641
        %v11757 = vpop.f32.mrf.mxu0
        %v11758 = vadd.f32 0.0, %v11757
        %v11759 = vpop.f32.mrf.mxu0
        %v11760 = vpop.f32.mrf.mxu0
        %v11761 = vadd.f32 0.0, %v11760
        %v11762 = vpop.f32.mrf.mxu0
        %11763 = vmatprep.mubr.bf16.mxu0 0
        %11764 = vmatmul.mubr.bf16.gmra.mxu0 %v11644
        %v11765 = vpop.f32.mrf.mxu0
        %v11766 = vadd.f32 0.0, %v11765
        %v11767 = vpop.f32.mrf.mxu0
        %v11768 = vpop.f32.mrf.mxu0
        %v11769 = vadd.f32 0.0, %v11768
        %v11770 = vpop.f32.mrf.mxu0
        %11771 = vmatprep.mubr.bf16.mxu0 0
        %11772 = vmatmul.mubr.bf16.gmra.mxu0 %v11647
        %v11773 = vpop.f32.mrf.mxu0
        %v11774 = vadd.f32 0.0, %v11773
        %v11775 = vpop.f32.mrf.mxu0
        %v11776 = vpop.f32.mrf.mxu0
        %v11777 = vadd.f32 0.0, %v11776
        %v11778 = vpop.f32.mrf.mxu0
        %11779 = vmatprep.mubr.bf16.mxu0 0
        %11780 = vmatmul.mubr.bf16.gmra.mxu0 %v11650
        %v11781 = vpop.f32.mrf.mxu0
        %v11782 = vadd.f32 0.0, %v11781
        %v11783 = vpop.f32.mrf.mxu0
        %v11784 = vpop.f32.mrf.mxu0
        %v11785 = vadd.f32 0.0, %v11784
        %v11786 = vpop.f32.mrf.mxu0
        %11787 = vmatprep.mubr.bf16.mxu0 0
        %11788 = vmatmul.mubr.bf16.gmra.mxu0 %v11653
        %v11789 = vpop.f32.mrf.mxu0
        %v11790 = vadd.f32 0.0, %v11789
        %v11791 = vpop.f32.mrf.mxu0
        %v11792 = vpop.f32.mrf.mxu0
        %v11793 = vadd.f32 0.0, %v11792
        %v11794 = vpop.f32.mrf.mxu0
        %11795 = vmatprep.mubr.bf16.mxu0 0
        %11796 = vmatmul.mubr.bf16.gmra.mxu0 %v11656
        %v11797 = vpop.f32.mrf.mxu0
        %v11798 = vadd.f32 0.0, %v11797
        %v11799 = vpop.f32.mrf.mxu0
        %v11800 = vpop.f32.mrf.mxu0
        %v11801 = vadd.f32 0.0, %v11800
        %v11802 = vpop.f32.mrf.mxu0
        %11803 = vmatprep.mubr.bf16.mxu0 0
        %11804 = vmatmul.mubr.bf16.gmra.mxu0 %v11659
        %v11805 = vpop.f32.mrf.mxu0
        %v11806 = vadd.f32 0.0, %v11805
        %v11807 = vpop.f32.mrf.mxu0
        %v11808 = vpop.f32.mrf.mxu0
        %v11809 = vadd.f32 0.0, %v11808
        %v11810 = vpop.f32.mrf.mxu0
        %11811 = vmatprep.mubr.bf16.mxu0 0
        %11812 = vmatmul.mubr.bf16.gmra.mxu0 %v11662
        %v11813 = vpop.f32.mrf.mxu0
        %v11814 = vadd.f32 0.0, %v11813
        %v11815 = vpop.f32.mrf.mxu0
        %v11816 = vpop.f32.mrf.mxu0
        %v11817 = vadd.f32 0.0, %v11816
        %v11818 = vpop.f32.mrf.mxu0
        %11819 = vmatprep.mubr.bf16.mxu0 0
        %11820 = vmatmul.mubr.bf16.gmra.mxu0 %v11665
        %v11821 = vpop.f32.mrf.mxu0
        %v11822 = vadd.f32 0.0, %v11821
        %v11823 = vpop.f32.mrf.mxu0
        %v11824 = vpop.f32.mrf.mxu0
        %v11825 = vadd.f32 0.0, %v11824
        %v11826 = vpop.f32.mrf.mxu0
        %11827 = vdwg.mxu0
        %v11828 = vadd.f32 %v11347, %v11702
        %v11829 = vadd.f32 %v11348, %v11705
        %v11830 = vadd.f32 %v11349, %v11710
        %v11831 = vadd.f32 %v11350, %v11713
        %v11832 = vadd.f32 %v11351, %v11718
        %v11833 = vadd.f32 %v11352, %v11721
        %v11834 = vadd.f32 %v11353, %v11726
        %v11835 = vadd.f32 %v11354, %v11729
        %v11836 = vadd.f32 %v11355, %v11734
        %v11837 = vadd.f32 %v11356, %v11737
        %v11838 = vadd.f32 %v11357, %v11742
        %v11839 = vadd.f32 %v11358, %v11745
        %v11840 = vadd.f32 %v11359, %v11750
        %v11841 = vadd.f32 %v11360, %v11753
        %v11842 = vadd.f32 %v11361, %v11758
        %v11843 = vadd.f32 %v11362, %v11761
        %v11844 = vadd.f32 %v11363, %v11766
        %v11845 = vadd.f32 %v11364, %v11769
        %v11846 = vadd.f32 %v11365, %v11774
        %v11847 = vadd.f32 %v11366, %v11777
        %v11848 = vadd.f32 %v11367, %v11782
        %v11849 = vadd.f32 %v11368, %v11785
        %v11850 = vadd.f32 %v11369, %v11790
        %v11851 = vadd.f32 %v11370, %v11793
        %v11852 = vadd.f32 %v11371, %v11798
        %v11853 = vadd.f32 %v11372, %v11801
        %v11854 = vadd.f32 %v11373, %v11806
        %v11855 = vadd.f32 %v11374, %v11809
        %v11856 = vadd.f32 %v11375, %v11814
        %v11857 = vadd.f32 %v11376, %v11817
        %v11858 = vadd.f32 %v11377, %v11822
        %v11859 = vadd.f32 %v11378, %v11825
        %v11860 = vld [vmem:[%s5] sm:$0x1]
        %v11862 = vlaneseq
        %v11863 = vshrl.u32 %v11862, 7
        %v11864 = vsub.s32 0, %v11863
        %v11865 = vrot.slane %v11860, %v11864
        %v11867 = vadd.f32 %v11828, %v11865
        %v11868 = vadd.f32 %v11829, %v11865
        %v11869 = vadd.f32 %v11830, %v11865
        %v11870 = vadd.f32 %v11831, %v11865
        %v11871 = vadd.f32 %v11832, %v11865
        %v11872 = vadd.f32 %v11833, %v11865
        %v11873 = vadd.f32 %v11834, %v11865
        %v11874 = vadd.f32 %v11835, %v11865
        %v11875 = vadd.f32 %v11836, %v11865
        %v11876 = vadd.f32 %v11837, %v11865
        %v11877 = vadd.f32 %v11838, %v11865
        %v11878 = vadd.f32 %v11839, %v11865
        %v11879 = vadd.f32 %v11840, %v11865
        %v11880 = vadd.f32 %v11841, %v11865
        %v11881 = vadd.f32 %v11842, %v11865
        %v11882 = vadd.f32 %v11843, %v11865
        %v11883 = vadd.f32 %v11844, %v11865
        %v11884 = vadd.f32 %v11845, %v11865
        %v11885 = vadd.f32 %v11846, %v11865
        %v11886 = vadd.f32 %v11847, %v11865
        %v11887 = vadd.f32 %v11848, %v11865
        %v11888 = vadd.f32 %v11849, %v11865
        %v11889 = vadd.f32 %v11850, %v11865
        %v11890 = vadd.f32 %v11851, %v11865
        %v11891 = vadd.f32 %v11852, %v11865
        %v11892 = vadd.f32 %v11853, %v11865
        %v11893 = vadd.f32 %v11854, %v11865
        %v11894 = vadd.f32 %v11855, %v11865
        %v11895 = vadd.f32 %v11856, %v11865
        %v11896 = vadd.f32 %v11857, %v11865
        %v11897 = vadd.f32 %v11858, %v11865
        %v11898 = vadd.f32 %v11859, %v11865
        %vm11899 = vcmask 130048
        %v11900 = vsel %vm11899, %v11867, 0.0
        %v11901 = vsel %vm11899, %v11868, 0.0
        %v11902 = vadd.f32 %v11900, %v11901
        %v11903 = vsel %vm11899, %v11869, 0.0
        %v11904 = vadd.f32 %v11902, %v11903
        %v11905 = vsel %vm11899, %v11870, 0.0
        %v11906 = vadd.f32 %v11904, %v11905
        %v11907 = vsel %vm11899, %v11871, 0.0
        %v11908 = vadd.f32 %v11906, %v11907
        %v11909 = vsel %vm11899, %v11872, 0.0
        %v11910 = vadd.f32 %v11908, %v11909
        %v11911 = vsel %vm11899, %v11873, 0.0
        %v11912 = vadd.f32 %v11910, %v11911
        %v11913 = vsel %vm11899, %v11874, 0.0
        %v11914 = vadd.f32 %v11912, %v11913
        %v11915 = vsel %vm11899, %v11875, 0.0
        %v11916 = vadd.f32 %v11914, %v11915
        %v11917 = vsel %vm11899, %v11876, 0.0
        %v11918 = vadd.f32 %v11916, %v11917
        %v11919 = vsel %vm11899, %v11877, 0.0
        %v11920 = vadd.f32 %v11918, %v11919
        %v11921 = vsel %vm11899, %v11878, 0.0
        %v11922 = vadd.f32 %v11920, %v11921
        %v11923 = vsel %vm11899, %v11879, 0.0
        %v11924 = vadd.f32 %v11922, %v11923
        %v11925 = vsel %vm11899, %v11880, 0.0
        %v11926 = vadd.f32 %v11924, %v11925
        %v11927 = vsel %vm11899, %v11881, 0.0
        %v11928 = vadd.f32 %v11926, %v11927
        %v11929 = vsel %vm11899, %v11882, 0.0
        %v11930 = vadd.f32 %v11928, %v11929
        %v11931 = vsel %vm11899, %v11883, 0.0
        %v11932 = vadd.f32 %v11930, %v11931
        %v11933 = vsel %vm11899, %v11884, 0.0
        %v11934 = vadd.f32 %v11932, %v11933
        %v11935 = vsel %vm11899, %v11885, 0.0
        %v11936 = vadd.f32 %v11934, %v11935
        %v11937 = vsel %vm11899, %v11886, 0.0
        %v11938 = vadd.f32 %v11936, %v11937
        %v11939 = vsel %vm11899, %v11887, 0.0
        %v11940 = vadd.f32 %v11938, %v11939
        %v11941 = vsel %vm11899, %v11888, 0.0
        %v11942 = vadd.f32 %v11940, %v11941
        %v11943 = vsel %vm11899, %v11889, 0.0
        %v11944 = vadd.f32 %v11942, %v11943
        %v11945 = vsel %vm11899, %v11890, 0.0
        %v11946 = vadd.f32 %v11944, %v11945
        %v11947 = vsel %vm11899, %v11891, 0.0
        %v11948 = vadd.f32 %v11946, %v11947
        %v11949 = vsel %vm11899, %v11892, 0.0
        %v11950 = vadd.f32 %v11948, %v11949
        %v11951 = vsel %vm11899, %v11893, 0.0
        %v11952 = vadd.f32 %v11950, %v11951
        %v11953 = vsel %vm11899, %v11894, 0.0
        %v11954 = vadd.f32 %v11952, %v11953
        %v11955 = vsel %vm11899, %v11895, 0.0
        %v11956 = vadd.f32 %v11954, %v11955
        %v11957 = vsel %vm11899, %v11896, 0.0
        %v11958 = vadd.f32 %v11956, %v11957
        %v11959 = vsel %vm11899, %v11897, 0.0
        %v11960 = vadd.f32 %v11958, %v11959
        %v11961 = vsel %vm11899, %v11898, 0.0
        %v11962 = vadd.f32 %v11960, %v11961
        %v11963 = vrot.slane %v11962, 4
        %v11964 = vadd.f32 %v11962, %v11963
        %v11965 = vrot.slane %v11964, 2
        %v11966 = vadd.f32 %v11964, %v11965
        %v11967 = vrot.slane %v11966, 1
        %v11968 = vadd.f32 %v11966, %v11967
        %v11969 = vmul.f32 %v11968, 0.00390625
        %v11970 = vld [vmem:[%s6] sm:$0x1]
        %v11971 = vmul.f32 %v11970, %v11969
        %vm11972 = vcmask 122880
        %v11973 = vsel %vm11972, %v11971, 0.0
        %11974 = vadd.xlane.f32.xlu0 %v11973
        %v11975 = vpop.xlane.xlu0 %11974
        %v11976 = vld [vmem:[#allocation4] sm:$0x1]
        %v11977 = vadd.f32 %v11975, %v11976
        %vm11978 = vcmp.gt.f32.partialorder %v11977, 0.0
        %v11979 = vmul.f32 %v11977, 0.2
        %v11980 = vsel %vm11978, %v11977, %v11979
        %v11981 = vld [vmem:[%s8] sm:$0x1]
        %11983 = vset.pattern.permute.xlu0 0
        %11984 = vperm.xlu0 %11983, %v11980
        %v11985 = vpop.permute.xlu0 %11984
        %v11987 = vmul.f32 %v11985, %v11981
        %v11988 = vadd.f32 %v11987, 0.0
        %v11989 = vld [vmem:[%s9] sm:$0x1]
        %v11990 = vadd.f32 %v11988, %v11989
        %v11991 = vxor.u32 %v11990, 2147483648
        %v11992 = vmul.f32 %v11991, 1.442695
        %v11993 = vpow.pop %v11992
        %v11994 = vadd.f32 %v11993, 1.0
        %v11995 = vrcp.pop %v11994
        %v11996 = vmul.f32 1.0, %v11995
        %v11997 = vlaneseq
        %v11998 = vshrl.u32 %v11997, 7
        %v11999 = vsub.s32 0, %v11998
        %v12000 = vrot.slane %v11996, %v11999
        %v12001 = vmul.f32 %v11867, %v12000
        %v12002 = vmul.f32 %v11868, %v12000
        %v12003 = vmul.f32 %v11869, %v12000
        %v12004 = vmul.f32 %v11870, %v12000
        %v12005 = vmul.f32 %v11871, %v12000
        %v12006 = vmul.f32 %v11872, %v12000
        %v12007 = vmul.f32 %v11873, %v12000
        %v12008 = vmul.f32 %v11874, %v12000
        %v12009 = vmul.f32 %v11875, %v12000
        %v12010 = vmul.f32 %v11876, %v12000
        %v12011 = vmul.f32 %v11877, %v12000
        %v12012 = vmul.f32 %v11878, %v12000
        %v12013 = vmul.f32 %v11879, %v12000
        %v12014 = vmul.f32 %v11880, %v12000
        %v12015 = vmul.f32 %v11881, %v12000
        %v12016 = vmul.f32 %v11882, %v12000
        %v12017 = vmul.f32 %v11883, %v12000
        %v12018 = vmul.f32 %v11884, %v12000
        %v12019 = vmul.f32 %v11885, %v12000
        %v12020 = vmul.f32 %v11886, %v12000
        %v12021 = vmul.f32 %v11887, %v12000
        %v12022 = vmul.f32 %v11888, %v12000
        %v12023 = vmul.f32 %v11889, %v12000
        %v12024 = vmul.f32 %v11890, %v12000
        %v12025 = vmul.f32 %v11891, %v12000
        %v12026 = vmul.f32 %v11892, %v12000
        %v12027 = vmul.f32 %v11893, %v12000
        %v12028 = vmul.f32 %v11894, %v12000
        %v12029 = vmul.f32 %v11895, %v12000
        %v12030 = vmul.f32 %v11896, %v12000
        %v12031 = vmul.f32 %v11897, %v12000
        %v12032 = vmul.f32 %v11898, %v12000
        %v12033 = vld [vmem:[%s369] sm:$0xff]
        %v12034 = vld [vmem:[%s369 + $0x8] sm:$0xff]
        %v12035 = vld [vmem:[%s369 + $0x10] sm:$0xff]
        %v12036 = vld [vmem:[%s369 + $0x18] sm:$0xff]
        %v12037 = vld [vmem:[%s369 + $0x20] sm:$0xff]
        %v12038 = vld [vmem:[%s369 + $0x28] sm:$0xff]
        %v12039 = vld [vmem:[%s369 + $0x30] sm:$0xff]
        %v12040 = vld [vmem:[%s369 + $0x38] sm:$0xff]
        %v12041 = vld [vmem:[%s369 + $0x40] sm:$0xff]
        %v12042 = vld [vmem:[%s369 + $0x48] sm:$0xff]
        %v12043 = vld [vmem:[%s369 + $0x50] sm:$0xff]
        %v12044 = vld [vmem:[%s369 + $0x58] sm:$0xff]
        %v12045 = vld [vmem:[%s369 + $0x60] sm:$0xff]
        %v12046 = vld [vmem:[%s369 + $0x68] sm:$0xff]
        %v12047 = vld [vmem:[%s369 + $0x70] sm:$0xff]
        %v12048 = vld [vmem:[%s369 + $0x78] sm:$0xff]
        %v12049 = vld [vmem:[%s369 + $0x80] sm:$0xff]
        %v12050 = vld [vmem:[%s369 + $0x88] sm:$0xff]
        %v12051 = vld [vmem:[%s369 + $0x90] sm:$0xff]
        %v12052 = vld [vmem:[%s369 + $0x98] sm:$0xff]
        %v12053 = vld [vmem:[%s369 + $0xa0] sm:$0xff]
        %v12054 = vld [vmem:[%s369 + $0xa8] sm:$0xff]
        %v12055 = vld [vmem:[%s369 + $0xb0] sm:$0xff]
        %v12056 = vld [vmem:[%s369 + $0xb8] sm:$0xff]
        %v12057 = vld [vmem:[%s369 + $0xc0] sm:$0xff]
        %v12058 = vld [vmem:[%s369 + $0xc8] sm:$0xff]
        %v12059 = vld [vmem:[%s369 + $0xd0] sm:$0xff]
        %v12060 = vld [vmem:[%s369 + $0xd8] sm:$0xff]
        %v12061 = vld [vmem:[%s369 + $0xe0] sm:$0xff]
        %v12062 = vld [vmem:[%s369 + $0xe8] sm:$0xff]
        %v12063 = vld [vmem:[%s369 + $0xf0] sm:$0xff]
        %v12064 = vld [vmem:[%s369 + $0xf8] sm:$0xff]
        %v12065 = vadd.f32 %v12001, %v12033
        %v12066 = vadd.f32 %v12002, %v12034
        %v12067 = vadd.f32 %v12003, %v12035
        %v12068 = vadd.f32 %v12004, %v12036
        %v12069 = vadd.f32 %v12005, %v12037
        %v12070 = vadd.f32 %v12006, %v12038
        %v12071 = vadd.f32 %v12007, %v12039
        %v12072 = vadd.f32 %v12008, %v12040
        %v12073 = vadd.f32 %v12009, %v12041
        %v12074 = vadd.f32 %v12010, %v12042
        %v12075 = vadd.f32 %v12011, %v12043
        %v12076 = vadd.f32 %v12012, %v12044
        %v12077 = vadd.f32 %v12013, %v12045
        %v12078 = vadd.f32 %v12014, %v12046
        %v12079 = vadd.f32 %v12015, %v12047
        %v12080 = vadd.f32 %v12016, %v12048
        %v12081 = vadd.f32 %v12017, %v12049
        %v12082 = vadd.f32 %v12018, %v12050
        %v12083 = vadd.f32 %v12019, %v12051
        %v12084 = vadd.f32 %v12020, %v12052
        %v12085 = vadd.f32 %v12021, %v12053
        %v12086 = vadd.f32 %v12022, %v12054
        %v12087 = vadd.f32 %v12023, %v12055
        %v12088 = vadd.f32 %v12024, %v12056
        %v12089 = vadd.f32 %v12025, %v12057
        %v12090 = vadd.f32 %v12026, %v12058
        %v12091 = vadd.f32 %v12027, %v12059
        %v12092 = vadd.f32 %v12028, %v12060
        %v12093 = vadd.f32 %v12029, %v12061
        %v12094 = vadd.f32 %v12030, %v12062
        %v12095 = vadd.f32 %v12031, %v12063
        %v12096 = vadd.f32 %v12032, %v12064
        %12097 = vxpose.xlu0.b32.start [1/16] %v12065, 128
        %12098 = vxpose.xlu0.b32.cont [2/16] %v12066, 128
        %12099 = vxpose.xlu0.b32.cont [3/16] %v12067, 128
        %12100 = vxpose.xlu0.b32.cont [4/16] %v12068, 128
        %12101 = vxpose.xlu0.b32.cont [5/16] %v12069, 128
        %12102 = vxpose.xlu0.b32.cont [6/16] %v12070, 128
        %12103 = vxpose.xlu0.b32.cont [7/16] %v12071, 128
        %12104 = vxpose.xlu0.b32.cont [8/16] %v12072, 128
        %12105 = vxpose.xlu0.b32.cont [9/16] %v12073, 128
        %12106 = vxpose.xlu0.b32.cont [10/16] %v12074, 128
        %12107 = vxpose.xlu0.b32.cont [11/16] %v12075, 128
        %12108 = vxpose.xlu0.b32.cont [12/16] %v12076, 128
        %12109 = vxpose.xlu0.b32.cont [13/16] %v12077, 128
        %12110 = vxpose.xlu0.b32.cont [14/16] %v12078, 128
        %12111 = vxpose.xlu0.b32.cont [15/16] %v12079, 128
        %12112 = vxpose.xlu0.b32.end [16/16] %v12080, 128
        %v12113 = vpop.trf.xlu0
        %v12114 = vpop.trf.xlu0
        %v12115 = vpop.trf.xlu0
        %v12116 = vpop.trf.xlu0
        %v12117 = vpop.trf.xlu0
        %v12118 = vpop.trf.xlu0
        %v12119 = vpop.trf.xlu0
        %v12120 = vpop.trf.xlu0
        %v12121 = vpop.trf.xlu0
        %v12122 = vpop.trf.xlu0
        %v12123 = vpop.trf.xlu0
        %v12124 = vpop.trf.xlu0
        %v12125 = vpop.trf.xlu0
        %v12126 = vpop.trf.xlu0
        %v12127 = vpop.trf.xlu0
        %v12128 = vpop.trf.xlu0
        %12129 = vxpose.xlu0.b32.start [1/16] %v12081, 128
        %12130 = vxpose.xlu0.b32.cont [2/16] %v12082, 128
        %12131 = vxpose.xlu0.b32.cont [3/16] %v12083, 128
        %12132 = vxpose.xlu0.b32.cont [4/16] %v12084, 128
        %12133 = vxpose.xlu0.b32.cont [5/16] %v12085, 128
        %12134 = vxpose.xlu0.b32.cont [6/16] %v12086, 128
        %12135 = vxpose.xlu0.b32.cont [7/16] %v12087, 128
        %12136 = vxpose.xlu0.b32.cont [8/16] %v12088, 128
        %12137 = vxpose.xlu0.b32.cont [9/16] %v12089, 128
        %12138 = vxpose.xlu0.b32.cont [10/16] %v12090, 128
        %12139 = vxpose.xlu0.b32.cont [11/16] %v12091, 128
        %12140 = vxpose.xlu0.b32.cont [12/16] %v12092, 128
        %12141 = vxpose.xlu0.b32.cont [13/16] %v12093, 128
        %12142 = vxpose.xlu0.b32.cont [14/16] %v12094, 128
        %12143 = vxpose.xlu0.b32.cont [15/16] %v12095, 128
        %12144 = vxpose.xlu0.b32.end [16/16] %v12096, 128
        %v12145 = vpop.trf.xlu0
        %v12146 = vpop.trf.xlu0
        %v12147 = vpop.trf.xlu0
        %v12148 = vpop.trf.xlu0
        %v12149 = vpop.trf.xlu0
        %v12150 = vpop.trf.xlu0
        %v12151 = vpop.trf.xlu0
        %v12152 = vpop.trf.xlu0
        %v12153 = vpop.trf.xlu0
        %v12154 = vpop.trf.xlu0
        %v12155 = vpop.trf.xlu0
        %v12156 = vpop.trf.xlu0
        %v12157 = vpop.trf.xlu0
        %v12158 = vpop.trf.xlu0
        %v12159 = vpop.trf.xlu0
        %v12160 = vpop.trf.xlu0
        %12161 = vst [vmem:[%s419] sm:$0xff] %v12113
        %12162 = vst [vmem:[%s419 + $0x8] sm:$0xff] %v12145
        %12163 = vst [vmem:[%s419 + $0x10] sm:$0xff] %v12114
        %12164 = vst [vmem:[%s419 + $0x18] sm:$0xff] %v12146
        %s12165 = sand.u32 %s260, 1
        %s12166 = scalar_lea.sflag [#allocation7], %s12165
        %s12167 = sand.u32 %s260, 1
        %s12168 = smul.addr %s12167, 32
        %s12169 = scalar_lea.vmem [#allocation10], %s12168
        // Predicated region
        $region69: #{tpu_custom_call.1} parent=59 // pred_check
          %p12170 = pneg %p270
        $region70: #{tpu_custom_call.1} parent=59 // pred_check_branch
          %12172 = sbr.rel (%p12170) target = $region72
        $region71: #{tpu_custom_call.1} parent=59 // pred_region
          %s12174 = ssub.s32 512, 512
          %12175 = vsyncadd %s12166, %s12174
          %s12176 = smul.addr %s32, 4
          %s12177 = smul.addr %s12176, 128
          %s12178 = scalar_lea.hbm %s10, %s12177
          %s12179 = sshll.u32 %s12169, 4
          %s12180 = int_to_ptr.vmem [resolvable:$true] %s12179
          %12185 = dma.vmem_to_hbm [thread:$0]  %s12180, 512, %s12178, %s12166, 256, 256, 16
        $region72: #{tpu_custom_call.1} parent=59 // pred_fallthru
          _
      $region60: #{tpu_custom_call.1} parent=5 // pred_fallthru
        _
      %p12186 = scmp.le.s32.totalorder 2, %s27
      // Predicated region
      $region73: #{tpu_custom_call.1} parent=5 // pred_check
        %p12187 = pneg %p12186
      $region74: #{tpu_custom_call.1} parent=5 // pred_check_branch
        %12189 = sbr.rel (%p12187) target = $region76
      $region75: #{tpu_custom_call.1} parent=5 // pred_region
        %s12190 = ssub.s32 %s27, 2
        // Predicated region
        $region77: #{tpu_custom_call.1} parent=75 // pred_check
          %p12191 = pneg %p276
        $region78: #{tpu_custom_call.1} parent=75 // pred_check_branch
          %12193 = sbr.rel (%p12191) target = $region80
        $region79: #{tpu_custom_call.1} parent=75 // pred_region
          %s12194 = sand.u32 %s261, 1
          %s12195 = scalar_lea.sflag [#allocation7], %s12194
          %s12196 = sand.u32 %s261, 1
          %s12197 = smul.addr %s12196, 32
          %s12198 = scalar_lea.vmem [#allocation10], %s12197
          %12199 = dma.done %s12195, 512
        $region80: #{tpu_custom_call.1} parent=75 // pred_fallthru
          _
      $region76: #{tpu_custom_call.1} parent=5 // pred_fallthru
        _
    $region6: #{tpu_custom_call.1} parent=1 // loop_footer
      %s31 = sadd.s32 1, %s27
    $region7: #{tpu_custom_call.1} parent=1 // loop_footer_branch
      %26 = sbr.rel target = $region3
    $region8: #{tpu_custom_call.1} parent=1 // loop_exit
      _
    %12200 = vsyncpa [#allocation6], 1
    %s12201 = scalar_lea.sflag [#allocation6], 1
    %12202 = vsyncpa %s12201, 1
    %12203 = vsyncpa [#allocation9], 1
    %s12204 = scalar_lea.sflag [#allocation9], 1
    %12205 = vsyncpa %s12204, 1
    %12206 = vsyncpa [#allocation7], 1
    %s12207 = scalar_lea.sflag [#allocation7], 1
    %12208 = vsyncpa %s12207, 1

</llo_original>
